<compile_context>
chip_gen: v7x
topology: tpu7x:2x2x1
jax: 0.10.0
libtpu: 0.0.40
codegen_flags: <defaults>
</compile_context>

<pallas_src>
import math

import jax
import jax.numpy as jnp
from jax.experimental import pallas as pl
from jax.experimental.pallas import tpu as pltpu

CPAD = 128          # channel / lane padding (full MXU width, lane-dense I/O)
BN_EPS = 1e-5       # PyTorch BatchNorm2d default


def _round_up(x, m):
    return (x + m - 1) // m * m


# ----------------------------------------------------------------------------
# Pallas kernel: one fused encoder stage
#   a   = relu(conv_s2(x) + b0)          stride-2 3x3 conv + BN (folded)
#   h   = relu(conv1(a)  + b1)           residual-block conv1 + BN
#   out = relu(conv2(h)  + b2 + a)       conv2 + BN + identity shortcut + ReLU
# All convs are accumulated MXU matmuls over flat-slab taps; BN scales are
# pre-folded into the bf16 weights, biases into b_ref.
# ----------------------------------------------------------------------------
def _make_stage_kernel(Ho, Wo):
    WP = Wo + 2                         # slab row width (1-pixel halo each side)
    M = Ho * WP                         # flat rows per conv result (2 garbage cols/row)
    L = (-(WP + 1)) % 16                # leading pad so the interior store is 16-aligned
    TOP = L + WP + 1                    # interior store start (multiple of 16)
    ROWS = _round_up(L + (Ho + 2) * WP + 2, 16)   # scratch rows (covers tap over-read)
    BOT = (TOP + M) // 16 * 16          # aligned start of the bottom zero strip

    def kernel(x_ref, w0_ref, w1_ref, w2_ref, b_ref, mask_ref, o_ref, pad_ref):
        # x_ref   : ((Ho+2)*WP, 128) bf16  merged-s2d input slab (flattened rows)
        # w0_ref  : (4, 128, 128)    bf16  stride-2 conv, one matmul per 2x2 offset
        # w1_ref  : (9, 128, 128)    bf16  residual-block conv1 taps (BN folded)
        # w2_ref  : (9, 128, 128)    bf16  residual-block conv2 taps (BN folded)
        # b_ref   : (3, 128)         f32   folded biases
        # mask_ref: (M, 1)           f32   1.0 on valid columns, 0.0 on garbage cols
        # o_ref   : (M, 128)         bf16  stage output (flat slab, garbage cols = 0)
        # pad_ref : (ROWS, 128)      bf16  shared zero-padded activation scratch
        C = o_ref.shape[-1]

        # Re-zero only the halo strips (tile-aligned, a handful of rows) every step;
        # rows overlapping the interior are rewritten right below.
        pad_ref[pl.ds(0, TOP), :] = jnp.zeros((TOP, C), pad_ref.dtype)
        pad_ref[pl.ds(BOT, ROWS - BOT), :] = jnp.zeros((ROWS - BOT, C), pad_ref.dtype)

        b = b_ref[...]                                   # (3, 128) f32
        valid = mask_ref[...] > 0.0                      # (M, 1) garbage-column mask

        # ---- 1) stride-2 conv + BN + ReLU: 4 MXU matmuls over merged-s2d offsets.
        acc0 = jnp.zeros((M, C), jnp.float32)
        for d in range(4):
            dh, dw = d // 2, d % 2
            acc0 = acc0 + jnp.dot(x_ref[pl.ds(dh * WP + dw, M), :], w0_ref[d],
                                  preferred_element_type=jnp.float32)
        a = jnp.where(valid, jnp.maximum(acc0 + b[0:1, :], 0.0), 0.0)   # f32 for shortcut
        # masked interior store: garbage cols land on halo positions as exact zeros
        pad_ref[pl.ds(TOP, M), :] = a.astype(pad_ref.dtype)             # cast once

        def conv3x3(w_taps):
            acc = jnp.zeros((M, C), jnp.float32)
            for kh in range(3):
                for kw in range(3):
                    acc = acc + jnp.dot(pad_ref[pl.ds(L + kh * WP + kw, M), :],
                                        w_taps[kh * 3 + kw],
                                        preferred_element_type=jnp.float32)
            return acc

        # ---- 2) residual-block conv1 + BN + ReLU (taps read `a` from the slab).
        h = jnp.where(valid, jnp.maximum(conv3x3(w1_ref) + b[1:2, :], 0.0), 0.0)
        pad_ref[pl.ds(TOP, M), :] = h.astype(pad_ref.dtype)   # reuse the same scratch

        # ---- 3) residual-block conv2 + BN + identity shortcut + ReLU.
        out = jnp.where(valid, jnp.maximum(conv3x3(w2_ref) + b[2:3, :] + a, 0.0), 0.0)
        o_ref[...] = out.astype(o_ref.dtype)

    return kernel, ROWS


# ----------------------------------------------------------------------------
# Wrapper glue
# ----------------------------------------------------------------------------
def _s2d_slab(x):
    """(N, H, W, C) real-channel NHWC (H, W even, 4*C <= 128) -> flattened
    merged space-to-depth slab (N, (H//2+2)*(W//2+2), 128) bf16 with
    slab[i, j, p*C + c] = zero_pad1(x)[2i + p//2, 2j + p%2, c]."""
    N, H, W, C = x.shape
    assert H % 2 == 0 and W % 2 == 0 and 4 * C <= CPAD
    Ho, Wo = H // 2, W // 2
    xp = jnp.pad(x, ((0, 0), (1, 1), (1, 1), (0, 0)))
    s2d = xp.reshape(N, Ho + 1, 2, Wo + 1, 2, C).transpose(0, 1, 3, 2, 4, 5)
    s2d = s2d.reshape(N, Ho + 1, Wo + 1, 4 * C)
    s2d = jnp.pad(s2d, ((0, 0), (0, 1), (0, 1), (0, CPAD - 4 * C)))     # -> (Ho+2, Wo+2, 128)
    return s2d.reshape(N, (Ho + 2) * (Wo + 2), CPAD).astype(jnp.bfloat16)


def _run_stage(x_slab, Ho, Wo, stage_params):
    """x_slab: (N, (Ho+2)*(Wo+2), 128) bf16 -> (N, Ho*(Wo+2), 128) bf16."""
    w0, w1, w2, b = stage_params
    N = x_slab.shape[0]
    WP = Wo + 2
    M = Ho * WP
    kernel, scratch_rows = _make_stage_kernel(Ho, Wo)
    mask = ((jnp.arange(M, dtype=jnp.int32) % WP) < Wo).astype(jnp.float32)
    mask = mask.reshape(M, 1)
    return pl.pallas_call(
        kernel,
        out_shape=jax.ShapeDtypeStruct((N, M, CPAD), jnp.bfloat16),
        grid=(N,),
        in_specs=[
            pl.BlockSpec((None, (Ho + 2) * WP, CPAD), lambda n: (n, 0, 0)),
            pl.BlockSpec((4, CPAD, CPAD), lambda n: (0, 0, 0)),
            pl.BlockSpec((9, CPAD, CPAD), lambda n: (0, 0, 0)),
            pl.BlockSpec((9, CPAD, CPAD), lambda n: (0, 0, 0)),
            pl.BlockSpec((3, CPAD), lambda n: (0, 0)),
            pl.BlockSpec((M, 1), lambda n: (0, 0)),
        ],
        out_specs=pl.BlockSpec((None, M, CPAD), lambda n: (n, 0, 0)),
        scratch_shapes=[pltpu.VMEM((scratch_rows, CPAD), jnp.bfloat16)],
        compiler_params=pltpu.CompilerParams(
            dimension_semantics=("parallel",),
            vmem_limit_bytes=32 * 1024 * 1024),
    )(x_slab, w0, w1, w2, b, mask)


# ----------------------------------------------------------------------------
# Parameters (deterministic, synthetic) + one-time folding / packing
# ----------------------------------------------------------------------------
def _conv_w(key, cout, cin, k=3):
    std = 1.0 / math.sqrt(cin * k * k)
    return (std * jax.random.normal(key, (cout, cin, k, k))).astype(jnp.float32)


def _bn_params(cout, seed):
    i = jnp.arange(cout, dtype=jnp.float32)
    gamma = 1.0 + 0.05 * jnp.cos(i + seed)
    beta = 0.05 * jnp.sin(i + seed)
    mean = 0.05 * jnp.cos(0.5 * i + seed)
    var = 1.0 + 0.10 * jnp.sin(i + seed) ** 2
    return (gamma, beta, mean, var)


def init_params(key):
    ks = jax.random.split(key, 12)
    p = {}
    p['conv1_w'] = _conv_w(ks[0], 16, 2)
    p['conv1_b'] = (0.01 * jax.random.normal(ks[1], (16,))).astype(jnp.float32)
    p['bn1'] = _bn_params(16, 1.0)
    p['rb1_conv1_w'] = _conv_w(ks[2], 16, 16); p['rb1_bn1'] = _bn_params(16, 2.0)
    p['rb1_conv2_w'] = _conv_w(ks[3], 16, 16); p['rb1_bn2'] = _bn_params(16, 3.0)

    p['conv2_w'] = _conv_w(ks[4], 32, 16)
    p['conv2_b'] = (0.01 * jax.random.normal(ks[5], (32,))).astype(jnp.float32)
    p['bn2'] = _bn_params(32, 4.0)
    p['rb2_conv1_w'] = _conv_w(ks[6], 32, 32); p['rb2_bn1'] = _bn_params(32, 5.0)
    p['rb2_conv2_w'] = _conv_w(ks[7], 32, 32); p['rb2_bn2'] = _bn_params(32, 6.0)

    p['conv3_w'] = _conv_w(ks[8], 64, 32)
    p['conv3_b'] = (0.01 * jax.random.normal(ks[9], (64,))).astype(jnp.float32)
    p['bn3'] = _bn_params(64, 7.0)
    p['rb3_conv1_w'] = _conv_w(ks[10], 64, 64); p['rb3_bn1'] = _bn_params(64, 8.0)
    p['rb3_conv2_w'] = _conv_w(ks[11], 64, 64); p['rb3_bn2'] = _bn_params(64, 9.0)
    return p


def _fold_bn(bn, conv_bias):
    gamma, beta, mean, var = bn
    scale = gamma / jnp.sqrt(var + BN_EPS)
    bias = beta - mean * scale
    if conv_bias is not None:
        bias = bias + conv_bias * scale
    return scale, bias


def _pack_s2_conv(w, conv_bias, bn):
    """Stride-2 3x3 conv + BN -> (4, CPAD, CPAD) bf16 merged-s2d weights + (CPAD,) f32 bias.
    Weight rows follow the merged space-to-depth channel layout (phase-major)."""
    cout, cin = w.shape[0], w.shape[1]
    scale, bias = _fold_bn(bn, conv_bias)
    wt = jnp.transpose(w, (2, 3, 1, 0)) * scale[None, None, None, :]    # (3,3,Cin,Cout)
    w4 = jnp.zeros((4, 4 * cin, cout), jnp.float32)
    for kh in range(3):
        for kw in range(3):
            d = (kh // 2) * 2 + (kw // 2)      # 2x2 spatial offset in s2d space
            p = (kh % 2) * 2 + (kw % 2)        # space-to-depth phase -> channel block
            w4 = w4.at[d, p * cin:(p + 1) * cin, :].set(wt[kh, kw])
    w4 = jnp.pad(w4, ((0, 0), (0, CPAD - 4 * cin), (0, CPAD - cout)))
    return (w4.astype(jnp.bfloat16),
            jnp.pad(bias, (0, CPAD - cout)).astype(jnp.float32))


def _pack_conv(w, bn):
    """Stride-1 3x3 conv + BN -> (9, CPAD, CPAD) bf16 tap weights + (CPAD,) f32 bias."""
    cout, cin = w.shape[0], w.shape[1]
    scale, bias = _fold_bn(bn, None)
    wt = (jnp.transpose(w, (2, 3, 1, 0)) * scale[None, None, None, :]).reshape(9, cin, cout)
    wt = jnp.pad(wt, ((0, 0), (0, CPAD - cin), (0, CPAD - cout)))
    return (wt.astype(jnp.bfloat16),
            jnp.pad(bias, (0, CPAD - cout)).astype(jnp.float32))


def prepare_params(p):
    """Fold BN into weights, repack for the kernel layouts (done ONCE)."""
    layout = [
        ('conv1_w', 'conv1_b', 'bn1', 'rb1_conv1_w', 'rb1_bn1', 'rb1_conv2_w', 'rb1_bn2'),
        ('conv2_w', 'conv2_b', 'bn2', 'rb2_conv1_w', 'rb2_bn1', 'rb2_conv2_w', 'rb2_bn2'),
        ('conv3_w', 'conv3_b', 'bn3', 'rb3_conv1_w', 'rb3_bn1', 'rb3_conv2_w', 'rb3_bn2'),
    ]
    stages = []
    for cw, cb, cbn, r1w, r1bn, r2w, r2bn in layout:
        w0, b0 = _pack_s2_conv(p[cw], p[cb], p[cbn])
        w1, b1 = _pack_conv(p[r1w], p[r1bn])
        w2, b2 = _pack_conv(p[r2w], p[r2bn])
        stages.append((w0, w1, w2, jnp.stack([b0, b1, b2], axis=0)))
    return tuple(stages)


# ----------------------------------------------------------------------------
# Model forward (Encoder_flow) — takes NCHW, returns NCHW like the PyTorch module
# ----------------------------------------------------------------------------
def encoder_flow(x_nchw, stages):
    x = jnp.transpose(x_nchw, (0, 2, 3, 1)).astype(jnp.float32)   # NCHW -> NHWC (real channels)
    N = x.shape[0]

    def stage(act, creal_out, params):
        Hi, Wi = act.shape[1], act.shape[2]
        Ho, Wo = Hi // 2, Wi // 2
        y = _run_stage(_s2d_slab(act), Ho, Wo, params)            # (N, Ho*(Wo+2), 128) bf16
        y = y.reshape(N, Ho, Wo + 2, CPAD)[:, :, :Wo, :creal_out]  # drop garbage cols / pad chans
        return y

    a1 = stage(x, 16, stages[0])      # conv1+bn1+relu + res_block1  (N, H/2,  W/2, 16)
    a2 = stage(a1, 32, stages[1])     # conv2+bn2+relu + res_block2  (N, H/4,  W/4, 32)
    skip = a2
    a3 = stage(a2, 64, stages[2])     # conv3+bn3+relu + res_block3  (N, H/8,  W/8, 64)
    return (jnp.transpose(a3, (0, 3, 1, 2)).astype(jnp.float32),
            jnp.transpose(skip, (0, 3, 1, 2)).astype(jnp.float32))


# ----------------------------------------------------------------------------
# Pure-XLA reference (numerical sanity check of the Pallas path)
# ----------------------------------------------------------------------------
def _conv_bn_ref(x, w, conv_bias, bn, stride):
    y = jax.lax.conv_general_dilated(
        x, jnp.transpose(w, (2, 3, 1, 0)), (stride, stride), ((1, 1), (1, 1)),
        dimension_numbers=('NHWC', 'HWIO', 'NHWC'),
        precision=jax.lax.Precision.HIGHEST,
        preferred_element_type=jnp.float32)
    if conv_bias is not None:
        y = y + conv_bias
    gamma, beta, mean, var = bn
    return gamma * (y - mean) / jnp.sqrt(var + BN_EPS) + beta


def encoder_flow_ref(x_nchw, p):
    x = jnp.transpose(x_nchw, (0, 2, 3, 1)).astype(jnp.float32)

    def stage(x, cw, cb, cbn, r1w, r1bn, r2w, r2bn):
        a = jax.nn.relu(_conv_bn_ref(x, p[cw], p[cb], p[cbn], 2))
        h = jax.nn.relu(_conv_bn_ref(a, p[r1w], None, p[r1bn], 1))
        return jax.nn.relu(_conv_bn_ref(h, p[r2w], None, p[r2bn], 1) + a)

    x = stage(x, 'conv1_w', 'conv1_b', 'bn1', 'rb1_conv1_w', 'rb1_bn1', 'rb1_conv2_w', 'rb1_bn2')
    x = stage(x, 'conv2_w', 'conv2_b', 'bn2', 'rb2_conv1_w', 'rb2_bn1', 'rb2_conv2_w', 'rb2_bn2')
    skip = x
    x = stage(x, 'conv3_w', 'conv3_b', 'bn3', 'rb3_conv1_w', 'rb3_bn1', 'rb3_conv2_w', 'rb3_bn2')
    return jnp.transpose(x, (0, 3, 1, 2)), jnp.transpose(skip, (0, 3, 1, 2))


if __name__ == "__main__":
    key = jax.random.PRNGKey(0)
    k_in, k_par = jax.random.split(key)
    # Encoder_flow takes a 2-channel flow map; small deterministic example input.
    x = jax.random.normal(k_in, (2, 2, 16, 16), dtype=jnp.float32)        # NCHW
    params = init_params(k_par)
    stages = prepare_params(params)        # fold/pack weights once, outside the forward

    out, skip = jax.jit(encoder_flow)(x, stages)
    out = jax.block_until_ready(out)
    skip = jax.block_until_ready(skip)

    assert out.shape == (2, 64, 2, 2), out.shape
    assert skip.shape == (2, 32, 4, 4), skip.shape
    assert bool(jnp.all(jnp.isfinite(out))) and bool(jnp.all(jnp.isfinite(skip)))

    # Numerical sanity check vs. pure-XLA f32 reference (bf16 MXU inputs and bf16
    # inter-stage activations -> loose relative tolerance).
    out_ref, skip_ref = jax.jit(encoder_flow_ref)(x, params)
    out_ref = jax.block_until_ready(out_ref)

    def _rel(a, b):
        return float(jnp.linalg.norm(a - b) / (jnp.linalg.norm(b) + 1e-8))

    assert _rel(out, out_ref) < 0.08, _rel(out, out_ref)
    assert _rel(skip, skip_ref) < 0.08, _rel(skip, skip_ref)

    print("KERNEL_OK")
</pallas_src>

<mosaic_0001>
module attributes {stable_mosaic.version = 11 : i64} {
  func.func @kernel(%arg0: i32, %arg1: memref<1x100x128xbf16, #tpu.memory_space<vmem>>, %arg2: memref<4x128x128xbf16, #tpu.memory_space<vmem>>, %arg3: memref<9x128x128xbf16, #tpu.memory_space<vmem>>, %arg4: memref<9x128x128xbf16, #tpu.memory_space<vmem>>, %arg5: memref<3x128xf32, #tpu.memory_space<vmem>>, %arg6: memref<80x1xf32, #tpu.memory_space<vmem>>, %arg7: memref<1x80x128xbf16, #tpu.memory_space<vmem>>, %arg8: memref<112x128xbf16, #tpu.memory_space<vmem>>) attributes {dimension_semantics = [#tpu.dimension_semantics<parallel>], iteration_bounds = array<i64: 2>, scalar_prefetch = 0 : i64, scratch_operands = 1 : i64, tpu.core_type = #tpu.core_type<tc>, window_params = [{transform_indices = @transform_0, window_bounds = array<i64: 1, 100, 128>}, {pipeline_mode = #tpu.pipeline_mode<synchronous>, transform_indices = @transform_1, window_bounds = array<i64: 4, 128, 128>}, {pipeline_mode = #tpu.pipeline_mode<synchronous>, transform_indices = @transform_2, window_bounds = array<i64: 9, 128, 128>}, {pipeline_mode = #tpu.pipeline_mode<synchronous>, transform_indices = @transform_3, window_bounds = array<i64: 9, 128, 128>}, {pipeline_mode = #tpu.pipeline_mode<synchronous>, transform_indices = @transform_4, window_bounds = array<i64: 3, 128>}, {pipeline_mode = #tpu.pipeline_mode<synchronous>, transform_indices = @transform_5, window_bounds = array<i64: 80, 1>}, {transform_indices = @transform_6, window_bounds = array<i64: 1, 80, 128>}]} {
    %cst = arith.constant 0.000000e+00 : bf16
    %0 = vector.broadcast %cst : bf16 to vector<16x128xbf16>
    %c0 = arith.constant 0 : index
    %c0_0 = arith.constant 0 : index
    %1 = vector.load %arg8[%c0, %c0_0] : memref<112x128xbf16, #tpu.memory_space<vmem>>, vector<16x128xbf16>
    tpu.vector_store %arg8[%c0, %c0_0], %0 {strides = array<i32>} : memref<112x128xbf16, #tpu.memory_space<vmem>>, vector<16x128xbf16>,
    %cst_1 = arith.constant 0.000000e+00 : bf16
    %2 = vector.broadcast %cst_1 : bf16 to vector<16x128xbf16>
    %c96 = arith.constant 96 : index
    %c0_2 = arith.constant 0 : index
    %3 = vector.load %arg8[%c96, %c0_2] : memref<112x128xbf16, #tpu.memory_space<vmem>>, vector<16x128xbf16>
    tpu.vector_store %arg8[%c96, %c0_2], %2 {strides = array<i32>} : memref<112x128xbf16, #tpu.memory_space<vmem>>, vector<16x128xbf16>,
    %c0_3 = arith.constant 0 : index
    %c0_4 = arith.constant 0 : index
    %4 = vector.load %arg5[%c0_3, %c0_4] : memref<3x128xf32, #tpu.memory_space<vmem>>, vector<3x128xf32>
    %c0_5 = arith.constant 0 : index
    %c0_6 = arith.constant 0 : index
    %5 = vector.load %arg6[%c0_5, %c0_6] : memref<80x1xf32, #tpu.memory_space<vmem>>, vector<80x1xf32>
    %cst_7 = arith.constant 0.000000e+00 : f32
    %6 = vector.broadcast %cst_7 : f32 to vector<80x1xf32>
    %7 = arith.cmpf ogt, %5, %6 : vector<80x1xf32>
    %cst_8 = arith.constant 0.000000e+00 : f32
    %8 = vector.broadcast %cst_8 : f32 to vector<80x128xf32>
    %c0_9 = arith.constant 0 : index
    %c0_10 = arith.constant 0 : index
    %c0_11 = arith.constant 0 : index
    %9 = vector.load %arg1[%c0_9, %c0_10, %c0_11] : memref<1x100x128xbf16, #tpu.memory_space<vmem>>, vector<1x80x128xbf16>
    %10 = vector.shape_cast %9 : vector<1x80x128xbf16> to vector<80x128xbf16>
    %c0_12 = arith.constant 0 : index
    %c0_13 = arith.constant 0 : index
    %c0_14 = arith.constant 0 : index
    %11 = vector.load %arg2[%c0_12, %c0_13, %c0_14] : memref<4x128x128xbf16, #tpu.memory_space<vmem>>, vector<1x128x128xbf16>
    %12 = vector.shape_cast %11 : vector<1x128x128xbf16> to vector<128x128xbf16>
    %cst_15 = arith.constant dense<0.000000e+00> : vector<80x128xf32>
    %13 = tpu.matmul %10, %12, %cst_15 {dimension_numbers = #tpu.dot_dimension_numbers<[1], [0], [0], [1], [0, 0, 1, 1], [], []>} : vector<80x128xbf16>, vector<128x128xbf16>, vector<80x128xf32> -> vector<80x128xf32>
    %14 = arith.addf %8, %13 : vector<80x128xf32>
    %c0_16 = arith.constant 0 : index
    %c1 = arith.constant 1 : index
    %c0_17 = arith.constant 0 : index
    %15 = vector.load %arg1[%c0_16, %c1, %c0_17] : memref<1x100x128xbf16, #tpu.memory_space<vmem>>, vector<1x80x128xbf16>
    %16 = vector.shape_cast %15 : vector<1x80x128xbf16> to vector<80x128xbf16>
    %c1_18 = arith.constant 1 : index
    %c0_19 = arith.constant 0 : index
    %c0_20 = arith.constant 0 : index
    %17 = vector.load %arg2[%c1_18, %c0_19, %c0_20] : memref<4x128x128xbf16, #tpu.memory_space<vmem>>, vector<1x128x128xbf16>
    %18 = vector.shape_cast %17 : vector<1x128x128xbf16> to vector<128x128xbf16>
    %cst_21 = arith.constant dense<0.000000e+00> : vector<80x128xf32>
    %19 = tpu.matmul %16, %18, %cst_21 {dimension_numbers = #tpu.dot_dimension_numbers<[1], [0], [0], [1], [0, 0, 1, 1], [], []>} : vector<80x128xbf16>, vector<128x128xbf16>, vector<80x128xf32> -> vector<80x128xf32>
    %20 = arith.addf %14, %19 : vector<80x128xf32>
    %c0_22 = arith.constant 0 : index
    %c10 = arith.constant 10 : index
    %c0_23 = arith.constant 0 : index
    %21 = vector.load %arg1[%c0_22, %c10, %c0_23] : memref<1x100x128xbf16, #tpu.memory_space<vmem>>, vector<1x80x128xbf16>
    %22 = vector.shape_cast %21 : vector<1x80x128xbf16> to vector<80x128xbf16>
    %c2 = arith.constant 2 : index
    %c0_24 = arith.constant 0 : index
    %c0_25 = arith.constant 0 : index
    %23 = vector.load %arg2[%c2, %c0_24, %c0_25] : memref<4x128x128xbf16, #tpu.memory_space<vmem>>, vector<1x128x128xbf16>
    %24 = vector.shape_cast %23 : vector<1x128x128xbf16> to vector<128x128xbf16>
    %cst_26 = arith.constant dense<0.000000e+00> : vector<80x128xf32>
    %25 = tpu.matmul %22, %24, %cst_26 {dimension_numbers = #tpu.dot_dimension_numbers<[1], [0], [0], [1], [0, 0, 1, 1], [], []>} : vector<80x128xbf16>, vector<128x128xbf16>, vector<80x128xf32> -> vector<80x128xf32>
    %26 = arith.addf %20, %25 : vector<80x128xf32>
    %c0_27 = arith.constant 0 : index
    %c11 = arith.constant 11 : index
    %c0_28 = arith.constant 0 : index
    %27 = vector.load %arg1[%c0_27, %c11, %c0_28] : memref<1x100x128xbf16, #tpu.memory_space<vmem>>, vector<1x80x128xbf16>
    %28 = vector.shape_cast %27 : vector<1x80x128xbf16> to vector<80x128xbf16>
    %c3 = arith.constant 3 : index
    %c0_29 = arith.constant 0 : index
    %c0_30 = arith.constant 0 : index
    %29 = vector.load %arg2[%c3, %c0_29, %c0_30] : memref<4x128x128xbf16, #tpu.memory_space<vmem>>, vector<1x128x128xbf16>
    %30 = vector.shape_cast %29 : vector<1x128x128xbf16> to vector<128x128xbf16>
    %cst_31 = arith.constant dense<0.000000e+00> : vector<80x128xf32>
    %31 = tpu.matmul %28, %30, %cst_31 {dimension_numbers = #tpu.dot_dimension_numbers<[1], [0], [0], [1], [0, 0, 1, 1], [], []>} : vector<80x128xbf16>, vector<128x128xbf16>, vector<80x128xf32> -> vector<80x128xf32>
    %32 = arith.addf %26, %31 : vector<80x128xf32>
    %33 = vector.extract_strided_slice %4 {offsets = [0, 0], sizes = [1, 128], strides = [1, 1]} : vector<3x128xf32> to vector<1x128xf32>
    %34 = vector.broadcast %33 : vector<1x128xf32> to vector<80x128xf32>
    %35 = arith.addf %32, %34 : vector<80x128xf32>
    %cst_32 = arith.constant 0.000000e+00 : f32
    %36 = vector.broadcast %cst_32 : f32 to vector<80x128xf32>
    %37 = arith.maximumf %35, %36 : vector<80x128xf32>
    %cst_33 = arith.constant 0.000000e+00 : f32
    %38 = vector.shape_cast %7 : vector<80x1xi1> to vector<80x1xi1>
    %39 = vector.broadcast %38 : vector<80x1xi1> to vector<80x128xi1>
    %40 = vector.broadcast %cst_33 : f32 to vector<80x128xf32>
    %41 = arith.select %39, %37, %40 : vector<80x128xi1>, vector<80x128xf32>
    %42 = arith.truncf %41 : vector<80x128xf32> to vector<80x128xbf16>
    %c16 = arith.constant 16 : index
    %c0_34 = arith.constant 0 : index
    %43 = vector.load %arg8[%c16, %c0_34] : memref<112x128xbf16, #tpu.memory_space<vmem>>, vector<80x128xbf16>
    tpu.vector_store %arg8[%c16, %c0_34], %42 {strides = array<i32>} : memref<112x128xbf16, #tpu.memory_space<vmem>>, vector<80x128xbf16>,
    %cst_35 = arith.constant 0.000000e+00 : f32
    %44 = vector.broadcast %cst_35 : f32 to vector<80x128xf32>
    %c5 = arith.constant 5 : index
    %c0_36 = arith.constant 0 : index
    %45 = vector.load %arg8[%c5, %c0_36] : memref<112x128xbf16, #tpu.memory_space<vmem>>, vector<80x128xbf16>
    %c0_37 = arith.constant 0 : index
    %c0_38 = arith.constant 0 : index
    %c0_39 = arith.constant 0 : index
    %46 = vector.load %arg3[%c0_37, %c0_38, %c0_39] : memref<9x128x128xbf16, #tpu.memory_space<vmem>>, vector<1x128x128xbf16>
    %47 = vector.shape_cast %46 : vector<1x128x128xbf16> to vector<128x128xbf16>
    %cst_40 = arith.constant dense<0.000000e+00> : vector<80x128xf32>
    %48 = tpu.matmul %45, %47, %cst_40 {dimension_numbers = #tpu.dot_dimension_numbers<[1], [0], [0], [1], [0, 0, 1, 1], [], []>} : vector<80x128xbf16>, vector<128x128xbf16>, vector<80x128xf32> -> vector<80x128xf32>
    %49 = arith.addf %44, %48 : vector<80x128xf32>
    %c6 = arith.constant 6 : index
    %c0_41 = arith.constant 0 : index
    %50 = vector.load %arg8[%c6, %c0_41] : memref<112x128xbf16, #tpu.memory_space<vmem>>, vector<80x128xbf16>
    %c1_42 = arith.constant 1 : index
    %c0_43 = arith.constant 0 : index
    %c0_44 = arith.constant 0 : index
    %51 = vector.load %arg3[%c1_42, %c0_43, %c0_44] : memref<9x128x128xbf16, #tpu.memory_space<vmem>>, vector<1x128x128xbf16>
    %52 = vector.shape_cast %51 : vector<1x128x128xbf16> to vector<128x128xbf16>
    %cst_45 = arith.constant dense<0.000000e+00> : vector<80x128xf32>
    %53 = tpu.matmul %50, %52, %cst_45 {dimension_numbers = #tpu.dot_dimension_numbers<[1], [0], [0], [1], [0, 0, 1, 1], [], []>} : vector<80x128xbf16>, vector<128x128xbf16>, vector<80x128xf32> -> vector<80x128xf32>
    %54 = arith.addf %49, %53 : vector<80x128xf32>
    %c7 = arith.constant 7 : index
    %c0_46 = arith.constant 0 : index
    %55 = vector.load %arg8[%c7, %c0_46] : memref<112x128xbf16, #tpu.memory_space<vmem>>, vector<80x128xbf16>
    %c2_47 = arith.constant 2 : index
    %c0_48 = arith.constant 0 : index
    %c0_49 = arith.constant 0 : index
    %56 = vector.load %arg3[%c2_47, %c0_48, %c0_49] : memref<9x128x128xbf16, #tpu.memory_space<vmem>>, vector<1x128x128xbf16>
    %57 = vector.shape_cast %56 : vector<1x128x128xbf16> to vector<128x128xbf16>
    %cst_50 = arith.constant dense<0.000000e+00> : vector<80x128xf32>
    %58 = tpu.matmul %55, %57, %cst_50 {dimension_numbers = #tpu.dot_dimension_numbers<[1], [0], [0], [1], [0, 0, 1, 1], [], []>} : vector<80x128xbf16>, vector<128x128xbf16>, vector<80x128xf32> -> vector<80x128xf32>
    %59 = arith.addf %54, %58 : vector<80x128xf32>
    %c15 = arith.constant 15 : index
    %c0_51 = arith.constant 0 : index
    %60 = vector.load %arg8[%c15, %c0_51] : memref<112x128xbf16, #tpu.memory_space<vmem>>, vector<80x128xbf16>
    %c3_52 = arith.constant 3 : index
    %c0_53 = arith.constant 0 : index
    %c0_54 = arith.constant 0 : index
    %61 = vector.load %arg3[%c3_52, %c0_53, %c0_54] : memref<9x128x128xbf16, #tpu.memory_space<vmem>>, vector<1x128x128xbf16>
    %62 = vector.shape_cast %61 : vector<1x128x128xbf16> to vector<128x128xbf16>
    %cst_55 = arith.constant dense<0.000000e+00> : vector<80x128xf32>
    %63 = tpu.matmul %60, %62, %cst_55 {dimension_numbers = #tpu.dot_dimension_numbers<[1], [0], [0], [1], [0, 0, 1, 1], [], []>} : vector<80x128xbf16>, vector<128x128xbf16>, vector<80x128xf32> -> vector<80x128xf32>
    %64 = arith.addf %59, %63 : vector<80x128xf32>
    %c16_56 = arith.constant 16 : index
    %c0_57 = arith.constant 0 : index
    %65 = vector.load %arg8[%c16_56, %c0_57] : memref<112x128xbf16, #tpu.memory_space<vmem>>, vector<80x128xbf16>
    %c4 = arith.constant 4 : index
    %c0_58 = arith.constant 0 : index
    %c0_59 = arith.constant 0 : index
    %66 = vector.load %arg3[%c4, %c0_58, %c0_59] : memref<9x128x128xbf16, #tpu.memory_space<vmem>>, vector<1x128x128xbf16>
    %67 = vector.shape_cast %66 : vector<1x128x128xbf16> to vector<128x128xbf16>
    %cst_60 = arith.constant dense<0.000000e+00> : vector<80x128xf32>
    %68 = tpu.matmul %65, %67, %cst_60 {dimension_numbers = #tpu.dot_dimension_numbers<[1], [0], [0], [1], [0, 0, 1, 1], [], []>} : vector<80x128xbf16>, vector<128x128xbf16>, vector<80x128xf32> -> vector<80x128xf32>
    %69 = arith.addf %64, %68 : vector<80x128xf32>
    %c17 = arith.constant 17 : index
    %c0_61 = arith.constant 0 : index
    %70 = vector.load %arg8[%c17, %c0_61] : memref<112x128xbf16, #tpu.memory_space<vmem>>, vector<80x128xbf16>
    %c5_62 = arith.constant 5 : index
    %c0_63 = arith.constant 0 : index
    %c0_64 = arith.constant 0 : index
    %71 = vector.load %arg3[%c5_62, %c0_63, %c0_64] : memref<9x128x128xbf16, #tpu.memory_space<vmem>>, vector<1x128x128xbf16>
    %72 = vector.shape_cast %71 : vector<1x128x128xbf16> to vector<128x128xbf16>
    %cst_65 = arith.constant dense<0.000000e+00> : vector<80x128xf32>
    %73 = tpu.matmul %70, %72, %cst_65 {dimension_numbers = #tpu.dot_dimension_numbers<[1], [0], [0], [1], [0, 0, 1, 1], [], []>} : vector<80x128xbf16>, vector<128x128xbf16>, vector<80x128xf32> -> vector<80x128xf32>
    %74 = arith.addf %69, %73 : vector<80x128xf32>
    %c25 = arith.constant 25 : index
    %c0_66 = arith.constant 0 : index
    %75 = vector.load %arg8[%c25, %c0_66] : memref<112x128xbf16, #tpu.memory_space<vmem>>, vector<80x128xbf16>
    %c6_67 = arith.constant 6 : index
    %c0_68 = arith.constant 0 : index
    %c0_69 = arith.constant 0 : index
    %76 = vector.load %arg3[%c6_67, %c0_68, %c0_69] : memref<9x128x128xbf16, #tpu.memory_space<vmem>>, vector<1x128x128xbf16>
    %77 = vector.shape_cast %76 : vector<1x128x128xbf16> to vector<128x128xbf16>
    %cst_70 = arith.constant dense<0.000000e+00> : vector<80x128xf32>
    %78 = tpu.matmul %75, %77, %cst_70 {dimension_numbers = #tpu.dot_dimension_numbers<[1], [0], [0], [1], [0, 0, 1, 1], [], []>} : vector<80x128xbf16>, vector<128x128xbf16>, vector<80x128xf32> -> vector<80x128xf32>
    %79 = arith.addf %74, %78 : vector<80x128xf32>
    %c26 = arith.constant 26 : index
    %c0_71 = arith.constant 0 : index
    %80 = vector.load %arg8[%c26, %c0_71] : memref<112x128xbf16, #tpu.memory_space<vmem>>, vector<80x128xbf16>
    %c7_72 = arith.constant 7 : index
    %c0_73 = arith.constant 0 : index
    %c0_74 = arith.constant 0 : index
    %81 = vector.load %arg3[%c7_72, %c0_73, %c0_74] : memref<9x128x128xbf16, #tpu.memory_space<vmem>>, vector<1x128x128xbf16>
    %82 = vector.shape_cast %81 : vector<1x128x128xbf16> to vector<128x128xbf16>
    %cst_75 = arith.constant dense<0.000000e+00> : vector<80x128xf32>
    %83 = tpu.matmul %80, %82, %cst_75 {dimension_numbers = #tpu.dot_dimension_numbers<[1], [0], [0], [1], [0, 0, 1, 1], [], []>} : vector<80x128xbf16>, vector<128x128xbf16>, vector<80x128xf32> -> vector<80x128xf32>
    %84 = arith.addf %79, %83 : vector<80x128xf32>
    %c27 = arith.constant 27 : index
    %c0_76 = arith.constant 0 : index
    %85 = vector.load %arg8[%c27, %c0_76] : memref<112x128xbf16, #tpu.memory_space<vmem>>, vector<80x128xbf16>
    %c8 = arith.constant 8 : index
    %c0_77 = arith.constant 0 : index
    %c0_78 = arith.constant 0 : index
    %86 = vector.load %arg3[%c8, %c0_77, %c0_78] : memref<9x128x128xbf16, #tpu.memory_space<vmem>>, vector<1x128x128xbf16>
    %87 = vector.shape_cast %86 : vector<1x128x128xbf16> to vector<128x128xbf16>
    %cst_79 = arith.constant dense<0.000000e+00> : vector<80x128xf32>
    %88 = tpu.matmul %85, %87, %cst_79 {dimension_numbers = #tpu.dot_dimension_numbers<[1], [0], [0], [1], [0, 0, 1, 1], [], []>} : vector<80x128xbf16>, vector<128x128xbf16>, vector<80x128xf32> -> vector<80x128xf32>
    %89 = arith.addf %84, %88 : vector<80x128xf32>
    %90 = vector.extract_strided_slice %4 {offsets = [1, 0], sizes = [1, 128], strides = [1, 1]} : vector<3x128xf32> to vector<1x128xf32>
    %91 = vector.broadcast %90 : vector<1x128xf32> to vector<80x128xf32>
    %92 = arith.addf %89, %91 : vector<80x128xf32>
    %cst_80 = arith.constant 0.000000e+00 : f32
    %93 = vector.broadcast %cst_80 : f32 to vector<80x128xf32>
    %94 = arith.maximumf %92, %93 : vector<80x128xf32>
    %cst_81 = arith.constant 0.000000e+00 : f32
    %95 = vector.shape_cast %7 : vector<80x1xi1> to vector<80x1xi1>
    %96 = vector.broadcast %95 : vector<80x1xi1> to vector<80x128xi1>
    %97 = vector.broadcast %cst_81 : f32 to vector<80x128xf32>
    %98 = arith.select %96, %94, %97 : vector<80x128xi1>, vector<80x128xf32>
    %99 = arith.truncf %98 : vector<80x128xf32> to vector<80x128xbf16>
    %c16_82 = arith.constant 16 : index
    %c0_83 = arith.constant 0 : index
    %100 = vector.load %arg8[%c16_82, %c0_83] : memref<112x128xbf16, #tpu.memory_space<vmem>>, vector<80x128xbf16>
    tpu.vector_store %arg8[%c16_82, %c0_83], %99 {strides = array<i32>} : memref<112x128xbf16, #tpu.memory_space<vmem>>, vector<80x128xbf16>,
    %cst_84 = arith.constant 0.000000e+00 : f32
    %101 = vector.broadcast %cst_84 : f32 to vector<80x128xf32>
    %c5_85 = arith.constant 5 : index
    %c0_86 = arith.constant 0 : index
    %102 = vector.load %arg8[%c5_85, %c0_86] : memref<112x128xbf16, #tpu.memory_space<vmem>>, vector<80x128xbf16>
    %c0_87 = arith.constant 0 : index
    %c0_88 = arith.constant 0 : index
    %c0_89 = arith.constant 0 : index
    %103 = vector.load %arg4[%c0_87, %c0_88, %c0_89] : memref<9x128x128xbf16, #tpu.memory_space<vmem>>, vector<1x128x128xbf16>
    %104 = vector.shape_cast %103 : vector<1x128x128xbf16> to vector<128x128xbf16>
    %cst_90 = arith.constant dense<0.000000e+00> : vector<80x128xf32>
    %105 = tpu.matmul %102, %104, %cst_90 {dimension_numbers = #tpu.dot_dimension_numbers<[1], [0], [0], [1], [0, 0, 1, 1], [], []>} : vector<80x128xbf16>, vector<128x128xbf16>, vector<80x128xf32> -> vector<80x128xf32>
    %106 = arith.addf %101, %105 : vector<80x128xf32>
    %c6_91 = arith.constant 6 : index
    %c0_92 = arith.constant 0 : index
    %107 = vector.load %arg8[%c6_91, %c0_92] : memref<112x128xbf16, #tpu.memory_space<vmem>>, vector<80x128xbf16>
    %c1_93 = arith.constant 1 : index
    %c0_94 = arith.constant 0 : index
    %c0_95 = arith.constant 0 : index
    %108 = vector.load %arg4[%c1_93, %c0_94, %c0_95] : memref<9x128x128xbf16, #tpu.memory_space<vmem>>, vector<1x128x128xbf16>
    %109 = vector.shape_cast %108 : vector<1x128x128xbf16> to vector<128x128xbf16>
    %cst_96 = arith.constant dense<0.000000e+00> : vector<80x128xf32>
    %110 = tpu.matmul %107, %109, %cst_96 {dimension_numbers = #tpu.dot_dimension_numbers<[1], [0], [0], [1], [0, 0, 1, 1], [], []>} : vector<80x128xbf16>, vector<128x128xbf16>, vector<80x128xf32> -> vector<80x128xf32>
    %111 = arith.addf %106, %110 : vector<80x128xf32>
    %c7_97 = arith.constant 7 : index
    %c0_98 = arith.constant 0 : index
    %112 = vector.load %arg8[%c7_97, %c0_98] : memref<112x128xbf16, #tpu.memory_space<vmem>>, vector<80x128xbf16>
    %c2_99 = arith.constant 2 : index
    %c0_100 = arith.constant 0 : index
    %c0_101 = arith.constant 0 : index
    %113 = vector.load %arg4[%c2_99, %c0_100, %c0_101] : memref<9x128x128xbf16, #tpu.memory_space<vmem>>, vector<1x128x128xbf16>
    %114 = vector.shape_cast %113 : vector<1x128x128xbf16> to vector<128x128xbf16>
    %cst_102 = arith.constant dense<0.000000e+00> : vector<80x128xf32>
    %115 = tpu.matmul %112, %114, %cst_102 {dimension_numbers = #tpu.dot_dimension_numbers<[1], [0], [0], [1], [0, 0, 1, 1], [], []>} : vector<80x128xbf16>, vector<128x128xbf16>, vector<80x128xf32> -> vector<80x128xf32>
    %116 = arith.addf %111, %115 : vector<80x128xf32>
    %c15_103 = arith.constant 15 : index
    %c0_104 = arith.constant 0 : index
    %117 = vector.load %arg8[%c15_103, %c0_104] : memref<112x128xbf16, #tpu.memory_space<vmem>>, vector<80x128xbf16>
    %c3_105 = arith.constant 3 : index
    %c0_106 = arith.constant 0 : index
    %c0_107 = arith.constant 0 : index
    %118 = vector.load %arg4[%c3_105, %c0_106, %c0_107] : memref<9x128x128xbf16, #tpu.memory_space<vmem>>, vector<1x128x128xbf16>
    %119 = vector.shape_cast %118 : vector<1x128x128xbf16> to vector<128x128xbf16>
    %cst_108 = arith.constant dense<0.000000e+00> : vector<80x128xf32>
    %120 = tpu.matmul %117, %119, %cst_108 {dimension_numbers = #tpu.dot_dimension_numbers<[1], [0], [0], [1], [0, 0, 1, 1], [], []>} : vector<80x128xbf16>, vector<128x128xbf16>, vector<80x128xf32> -> vector<80x128xf32>
    %121 = arith.addf %116, %120 : vector<80x128xf32>
    %c16_109 = arith.constant 16 : index
    %c0_110 = arith.constant 0 : index
    %122 = vector.load %arg8[%c16_109, %c0_110] : memref<112x128xbf16, #tpu.memory_space<vmem>>, vector<80x128xbf16>
    %c4_111 = arith.constant 4 : index
    %c0_112 = arith.constant 0 : index
    %c0_113 = arith.constant 0 : index
    %123 = vector.load %arg4[%c4_111, %c0_112, %c0_113] : memref<9x128x128xbf16, #tpu.memory_space<vmem>>, vector<1x128x128xbf16>
    %124 = vector.shape_cast %123 : vector<1x128x128xbf16> to vector<128x128xbf16>
    %cst_114 = arith.constant dense<0.000000e+00> : vector<80x128xf32>
    %125 = tpu.matmul %122, %124, %cst_114 {dimension_numbers = #tpu.dot_dimension_numbers<[1], [0], [0], [1], [0, 0, 1, 1], [], []>} : vector<80x128xbf16>, vector<128x128xbf16>, vector<80x128xf32> -> vector<80x128xf32>
    %126 = arith.addf %121, %125 : vector<80x128xf32>
    %c17_115 = arith.constant 17 : index
    %c0_116 = arith.constant 0 : index
    %127 = vector.load %arg8[%c17_115, %c0_116] : memref<112x128xbf16, #tpu.memory_space<vmem>>, vector<80x128xbf16>
    %c5_117 = arith.constant 5 : index
    %c0_118 = arith.constant 0 : index
    %c0_119 = arith.constant 0 : index
    %128 = vector.load %arg4[%c5_117, %c0_118, %c0_119] : memref<9x128x128xbf16, #tpu.memory_space<vmem>>, vector<1x128x128xbf16>
    %129 = vector.shape_cast %128 : vector<1x128x128xbf16> to vector<128x128xbf16>
    %cst_120 = arith.constant dense<0.000000e+00> : vector<80x128xf32>
    %130 = tpu.matmul %127, %129, %cst_120 {dimension_numbers = #tpu.dot_dimension_numbers<[1], [0], [0], [1], [0, 0, 1, 1], [], []>} : vector<80x128xbf16>, vector<128x128xbf16>, vector<80x128xf32> -> vector<80x128xf32>
    %131 = arith.addf %126, %130 : vector<80x128xf32>
    %c25_121 = arith.constant 25 : index
    %c0_122 = arith.constant 0 : index
    %132 = vector.load %arg8[%c25_121, %c0_122] : memref<112x128xbf16, #tpu.memory_space<vmem>>, vector<80x128xbf16>
    %c6_123 = arith.constant 6 : index
    %c0_124 = arith.constant 0 : index
    %c0_125 = arith.constant 0 : index
    %133 = vector.load %arg4[%c6_123, %c0_124, %c0_125] : memref<9x128x128xbf16, #tpu.memory_space<vmem>>, vector<1x128x128xbf16>
    %134 = vector.shape_cast %133 : vector<1x128x128xbf16> to vector<128x128xbf16>
    %cst_126 = arith.constant dense<0.000000e+00> : vector<80x128xf32>
    %135 = tpu.matmul %132, %134, %cst_126 {dimension_numbers = #tpu.dot_dimension_numbers<[1], [0], [0], [1], [0, 0, 1, 1], [], []>} : vector<80x128xbf16>, vector<128x128xbf16>, vector<80x128xf32> -> vector<80x128xf32>
    %136 = arith.addf %131, %135 : vector<80x128xf32>
    %c26_127 = arith.constant 26 : index
    %c0_128 = arith.constant 0 : index
    %137 = vector.load %arg8[%c26_127, %c0_128] : memref<112x128xbf16, #tpu.memory_space<vmem>>, vector<80x128xbf16>
    %c7_129 = arith.constant 7 : index
    %c0_130 = arith.constant 0 : index
    %c0_131 = arith.constant 0 : index
    %138 = vector.load %arg4[%c7_129, %c0_130, %c0_131] : memref<9x128x128xbf16, #tpu.memory_space<vmem>>, vector<1x128x128xbf16>
    %139 = vector.shape_cast %138 : vector<1x128x128xbf16> to vector<128x128xbf16>
    %cst_132 = arith.constant dense<0.000000e+00> : vector<80x128xf32>
    %140 = tpu.matmul %137, %139, %cst_132 {dimension_numbers = #tpu.dot_dimension_numbers<[1], [0], [0], [1], [0, 0, 1, 1], [], []>} : vector<80x128xbf16>, vector<128x128xbf16>, vector<80x128xf32> -> vector<80x128xf32>
    %141 = arith.addf %136, %140 : vector<80x128xf32>
    %c27_133 = arith.constant 27 : index
    %c0_134 = arith.constant 0 : index
    %142 = vector.load %arg8[%c27_133, %c0_134] : memref<112x128xbf16, #tpu.memory_space<vmem>>, vector<80x128xbf16>
    %c8_135 = arith.constant 8 : index
    %c0_136 = arith.constant 0 : index
    %c0_137 = arith.constant 0 : index
    %143 = vector.load %arg4[%c8_135, %c0_136, %c0_137] : memref<9x128x128xbf16, #tpu.memory_space<vmem>>, vector<1x128x128xbf16>
    %144 = vector.shape_cast %143 : vector<1x128x128xbf16> to vector<128x128xbf16>
    %cst_138 = arith.constant dense<0.000000e+00> : vector<80x128xf32>
    %145 = tpu.matmul %142, %144, %cst_138 {dimension_numbers = #tpu.dot_dimension_numbers<[1], [0], [0], [1], [0, 0, 1, 1], [], []>} : vector<80x128xbf16>, vector<128x128xbf16>, vector<80x128xf32> -> vector<80x128xf32>
    %146 = arith.addf %141, %145 : vector<80x128xf32>
    %147 = vector.extract_strided_slice %4 {offsets = [2, 0], sizes = [1, 128], strides = [1, 1]} : vector<3x128xf32> to vector<1x128xf32>
    %148 = vector.broadcast %147 : vector<1x128xf32> to vector<80x128xf32>
    %149 = arith.addf %146, %148 : vector<80x128xf32>
    %150 = arith.addf %149, %41 : vector<80x128xf32>
    %cst_139 = arith.constant 0.000000e+00 : f32
    %151 = vector.broadcast %cst_139 : f32 to vector<80x128xf32>
    %152 = arith.maximumf %150, %151 : vector<80x128xf32>
    %cst_140 = arith.constant 0.000000e+00 : f32
    %153 = vector.shape_cast %7 : vector<80x1xi1> to vector<80x1xi1>
    %154 = vector.broadcast %153 : vector<80x1xi1> to vector<80x128xi1>
    %155 = vector.broadcast %cst_140 : f32 to vector<80x128xf32>
    %156 = arith.select %154, %152, %155 : vector<80x128xi1>, vector<80x128xf32>
    %157 = arith.truncf %156 : vector<80x128xf32> to vector<80x128xbf16>
    %c0_141 = arith.constant 0 : index
    %c0_142 = arith.constant 0 : index
    %c0_143 = arith.constant 0 : index
    %158 = vector.load %arg7[%c0_141, %c0_142, %c0_143] : memref<1x80x128xbf16, #tpu.memory_space<vmem>>, vector<1x80x128xbf16>
    %159 = vector.shape_cast %158 : vector<1x80x128xbf16> to vector<80x128xbf16>
    %160 = vector.shape_cast %157 : vector<80x128xbf16> to vector<1x80x128xbf16>
    tpu.vector_store %arg7[%c0_141, %c0_142, %c0_143], %160 {strides = array<i32>} : memref<1x80x128xbf16, #tpu.memory_space<vmem>>, vector<1x80x128xbf16>,
    return
  }
  func.func @transform_0(%arg0: i32) -> (i32, i32, i32) {
    %c0_i32 = arith.constant 0 : i32
    %c0_i32_0 = arith.constant 0 : i32
    %c0_i32_1 = arith.constant 0 : i32
    return %arg0, %c0_i32, %c0_i32_0 : i32, i32, i32
  }
  func.func @transform_1(%arg0: i32) -> (i32, i32, i32) {
    %c0_i32 = arith.constant 0 : i32
    %c0_i32_0 = arith.constant 0 : i32
    %c0_i32_1 = arith.constant 0 : i32
    %c0_i32_2 = arith.constant 0 : i32
    return %c0_i32, %c0_i32_0, %c0_i32_1 : i32, i32, i32
  }
  func.func @transform_2(%arg0: i32) -> (i32, i32, i32) {
    %c0_i32 = arith.constant 0 : i32
    %c0_i32_0 = arith.constant 0 : i32
    %c0_i32_1 = arith.constant 0 : i32
    %c0_i32_2 = arith.constant 0 : i32
    return %c0_i32, %c0_i32_0, %c0_i32_1 : i32, i32, i32
  }
  func.func @transform_3(%arg0: i32) -> (i32, i32, i32) {
    %c0_i32 = arith.constant 0 : i32
    %c0_i32_0 = arith.constant 0 : i32
    %c0_i32_1 = arith.constant 0 : i32
    %c0_i32_2 = arith.constant 0 : i32
    return %c0_i32, %c0_i32_0, %c0_i32_1 : i32, i32, i32
  }
  func.func @transform_4(%arg0: i32) -> (i32, i32) {
    %c0_i32 = arith.constant 0 : i32
    %c0_i32_0 = arith.constant 0 : i32
    %c0_i32_1 = arith.constant 0 : i32
    return %c0_i32, %c0_i32_0 : i32, i32
  }
  func.func @transform_5(%arg0: i32) -> (i32, i32) {
    %c0_i32 = arith.constant 0 : i32
    %c0_i32_0 = arith.constant 0 : i32
    %c0_i32_1 = arith.constant 0 : i32
    return %c0_i32, %c0_i32_0 : i32, i32
  }
  func.func @transform_6(%arg0: i32) -> (i32, i32, i32) {
    %c0_i32 = arith.constant 0 : i32
    %c0_i32_0 = arith.constant 0 : i32
    %c0_i32_1 = arith.constant 0 : i32
    return %arg0, %c0_i32, %c0_i32_0 : i32, i32, i32
  }
}

module attributes {stable_mosaic.version = 11 : i64} {
  func.func @kernel(%arg0: i32, %arg1: memref<1x36x128xbf16, #tpu.memory_space<vmem>>, %arg2: memref<4x128x128xbf16, #tpu.memory_space<vmem>>, %arg3: memref<9x128x128xbf16, #tpu.memory_space<vmem>>, %arg4: memref<9x128x128xbf16, #tpu.memory_space<vmem>>, %arg5: memref<3x128xf32, #tpu.memory_space<vmem>>, %arg6: memref<24x1xf32, #tpu.memory_space<vmem>>, %arg7: memref<1x24x128xbf16, #tpu.memory_space<vmem>>, %arg8: memref<48x128xbf16, #tpu.memory_space<vmem>>) attributes {dimension_semantics = [#tpu.dimension_semantics<parallel>], iteration_bounds = array<i64: 2>, scalar_prefetch = 0 : i64, scratch_operands = 1 : i64, tpu.core_type = #tpu.core_type<tc>, window_params = [{transform_indices = @transform_0, window_bounds = array<i64: 1, 36, 128>}, {pipeline_mode = #tpu.pipeline_mode<synchronous>, transform_indices = @transform_1, window_bounds = array<i64: 4, 128, 128>}, {pipeline_mode = #tpu.pipeline_mode<synchronous>, transform_indices = @transform_2, window_bounds = array<i64: 9, 128, 128>}, {pipeline_mode = #tpu.pipeline_mode<synchronous>, transform_indices = @transform_3, window_bounds = array<i64: 9, 128, 128>}, {pipeline_mode = #tpu.pipeline_mode<synchronous>, transform_indices = @transform_4, window_bounds = array<i64: 3, 128>}, {pipeline_mode = #tpu.pipeline_mode<synchronous>, transform_indices = @transform_5, window_bounds = array<i64: 24, 1>}, {transform_indices = @transform_6, window_bounds = array<i64: 1, 24, 128>}]} {
    %cst = arith.constant 0.000000e+00 : bf16
    %0 = vector.broadcast %cst : bf16 to vector<16x128xbf16>
    %c0 = arith.constant 0 : index
    %c0_0 = arith.constant 0 : index
    %1 = vector.load %arg8[%c0, %c0_0] : memref<48x128xbf16, #tpu.memory_space<vmem>>, vector<16x128xbf16>
    tpu.vector_store %arg8[%c0, %c0_0], %0 {strides = array<i32>} : memref<48x128xbf16, #tpu.memory_space<vmem>>, vector<16x128xbf16>,
    %cst_1 = arith.constant 0.000000e+00 : bf16
    %2 = vector.broadcast %cst_1 : bf16 to vector<16x128xbf16>
    %c32 = arith.constant 32 : index
    %c0_2 = arith.constant 0 : index
    %3 = vector.load %arg8[%c32, %c0_2] : memref<48x128xbf16, #tpu.memory_space<vmem>>, vector<16x128xbf16>
    tpu.vector_store %arg8[%c32, %c0_2], %2 {strides = array<i32>} : memref<48x128xbf16, #tpu.memory_space<vmem>>, vector<16x128xbf16>,
    %c0_3 = arith.constant 0 : index
    %c0_4 = arith.constant 0 : index
    %4 = vector.load %arg5[%c0_3, %c0_4] : memref<3x128xf32, #tpu.memory_space<vmem>>, vector<3x128xf32>
    %c0_5 = arith.constant 0 : index
    %c0_6 = arith.constant 0 : index
    %5 = vector.load %arg6[%c0_5, %c0_6] : memref<24x1xf32, #tpu.memory_space<vmem>>, vector<24x1xf32>
    %cst_7 = arith.constant 0.000000e+00 : f32
    %6 = vector.broadcast %cst_7 : f32 to vector<24x1xf32>
    %7 = arith.cmpf ogt, %5, %6 : vector<24x1xf32>
    %cst_8 = arith.constant 0.000000e+00 : f32
    %8 = vector.broadcast %cst_8 : f32 to vector<24x128xf32>
    %c0_9 = arith.constant 0 : index
    %c0_10 = arith.constant 0 : index
    %c0_11 = arith.constant 0 : index
    %9 = vector.load %arg1[%c0_9, %c0_10, %c0_11] : memref<1x36x128xbf16, #tpu.memory_space<vmem>>, vector<1x24x128xbf16>
    %10 = vector.shape_cast %9 : vector<1x24x128xbf16> to vector<24x128xbf16>
    %c0_12 = arith.constant 0 : index
    %c0_13 = arith.constant 0 : index
    %c0_14 = arith.constant 0 : index
    %11 = vector.load %arg2[%c0_12, %c0_13, %c0_14] : memref<4x128x128xbf16, #tpu.memory_space<vmem>>, vector<1x128x128xbf16>
    %12 = vector.shape_cast %11 : vector<1x128x128xbf16> to vector<128x128xbf16>
    %cst_15 = arith.constant dense<0.000000e+00> : vector<24x128xf32>
    %13 = tpu.matmul %10, %12, %cst_15 {dimension_numbers = #tpu.dot_dimension_numbers<[1], [0], [0], [1], [0, 0, 1, 1], [], []>} : vector<24x128xbf16>, vector<128x128xbf16>, vector<24x128xf32> -> vector<24x128xf32>
    %14 = arith.addf %8, %13 : vector<24x128xf32>
    %c0_16 = arith.constant 0 : index
    %c1 = arith.constant 1 : index
    %c0_17 = arith.constant 0 : index
    %15 = vector.load %arg1[%c0_16, %c1, %c0_17] : memref<1x36x128xbf16, #tpu.memory_space<vmem>>, vector<1x24x128xbf16>
    %16 = vector.shape_cast %15 : vector<1x24x128xbf16> to vector<24x128xbf16>
    %c1_18 = arith.constant 1 : index
    %c0_19 = arith.constant 0 : index
    %c0_20 = arith.constant 0 : index
    %17 = vector.load %arg2[%c1_18, %c0_19, %c0_20] : memref<4x128x128xbf16, #tpu.memory_space<vmem>>, vector<1x128x128xbf16>
    %18 = vector.shape_cast %17 : vector<1x128x128xbf16> to vector<128x128xbf16>
    %cst_21 = arith.constant dense<0.000000e+00> : vector<24x128xf32>
    %19 = tpu.matmul %16, %18, %cst_21 {dimension_numbers = #tpu.dot_dimension_numbers<[1], [0], [0], [1], [0, 0, 1, 1], [], []>} : vector<24x128xbf16>, vector<128x128xbf16>, vector<24x128xf32> -> vector<24x128xf32>
    %20 = arith.addf %14, %19 : vector<24x128xf32>
    %c0_22 = arith.constant 0 : index
    %c6 = arith.constant 6 : index
    %c0_23 = arith.constant 0 : index
    %21 = vector.load %arg1[%c0_22, %c6, %c0_23] : memref<1x36x128xbf16, #tpu.memory_space<vmem>>, vector<1x24x128xbf16>
    %22 = vector.shape_cast %21 : vector<1x24x128xbf16> to vector<24x128xbf16>
    %c2 = arith.constant 2 : index
    %c0_24 = arith.constant 0 : index
    %c0_25 = arith.constant 0 : index
    %23 = vector.load %arg2[%c2, %c0_24, %c0_25] : memref<4x128x128xbf16, #tpu.memory_space<vmem>>, vector<1x128x128xbf16>
    %24 = vector.shape_cast %23 : vector<1x128x128xbf16> to vector<128x128xbf16>
    %cst_26 = arith.constant dense<0.000000e+00> : vector<24x128xf32>
    %25 = tpu.matmul %22, %24, %cst_26 {dimension_numbers = #tpu.dot_dimension_numbers<[1], [0], [0], [1], [0, 0, 1, 1], [], []>} : vector<24x128xbf16>, vector<128x128xbf16>, vector<24x128xf32> -> vector<24x128xf32>
    %26 = arith.addf %20, %25 : vector<24x128xf32>
    %c0_27 = arith.constant 0 : index
    %c7 = arith.constant 7 : index
    %c0_28 = arith.constant 0 : index
    %27 = vector.load %arg1[%c0_27, %c7, %c0_28] : memref<1x36x128xbf16, #tpu.memory_space<vmem>>, vector<1x24x128xbf16>
    %28 = vector.shape_cast %27 : vector<1x24x128xbf16> to vector<24x128xbf16>
    %c3 = arith.constant 3 : index
    %c0_29 = arith.constant 0 : index
    %c0_30 = arith.constant 0 : index
    %29 = vector.load %arg2[%c3, %c0_29, %c0_30] : memref<4x128x128xbf16, #tpu.memory_space<vmem>>, vector<1x128x128xbf16>
    %30 = vector.shape_cast %29 : vector<1x128x128xbf16> to vector<128x128xbf16>
    %cst_31 = arith.constant dense<0.000000e+00> : vector<24x128xf32>
    %31 = tpu.matmul %28, %30, %cst_31 {dimension_numbers = #tpu.dot_dimension_numbers<[1], [0], [0], [1], [0, 0, 1, 1], [], []>} : vector<24x128xbf16>, vector<128x128xbf16>, vector<24x128xf32> -> vector<24x128xf32>
    %32 = arith.addf %26, %31 : vector<24x128xf32>
    %33 = vector.extract_strided_slice %4 {offsets = [0, 0], sizes = [1, 128], strides = [1, 1]} : vector<3x128xf32> to vector<1x128xf32>
    %34 = vector.broadcast %33 : vector<1x128xf32> to vector<24x128xf32>
    %35 = arith.addf %32, %34 : vector<24x128xf32>
    %cst_32 = arith.constant 0.000000e+00 : f32
    %36 = vector.broadcast %cst_32 : f32 to vector<24x128xf32>
    %37 = arith.maximumf %35, %36 : vector<24x128xf32>
    %cst_33 = arith.constant 0.000000e+00 : f32
    %38 = vector.shape_cast %7 : vector<24x1xi1> to vector<24x1xi1>
    %39 = vector.broadcast %38 : vector<24x1xi1> to vector<24x128xi1>
    %40 = vector.broadcast %cst_33 : f32 to vector<24x128xf32>
    %41 = arith.select %39, %37, %40 : vector<24x128xi1>, vector<24x128xf32>
    %42 = arith.truncf %41 : vector<24x128xf32> to vector<24x128xbf16>
    %c16 = arith.constant 16 : index
    %c0_34 = arith.constant 0 : index
    %43 = vector.load %arg8[%c16, %c0_34] : memref<48x128xbf16, #tpu.memory_space<vmem>>, vector<24x128xbf16>
    tpu.vector_store %arg8[%c16, %c0_34], %42 {strides = array<i32>} : memref<48x128xbf16, #tpu.memory_space<vmem>>, vector<24x128xbf16>,
    %cst_35 = arith.constant 0.000000e+00 : f32
    %44 = vector.broadcast %cst_35 : f32 to vector<24x128xf32>
    %c9 = arith.constant 9 : index
    %c0_36 = arith.constant 0 : index
    %45 = vector.load %arg8[%c9, %c0_36] : memref<48x128xbf16, #tpu.memory_space<vmem>>, vector<24x128xbf16>
    %c0_37 = arith.constant 0 : index
    %c0_38 = arith.constant 0 : index
    %c0_39 = arith.constant 0 : index
    %46 = vector.load %arg3[%c0_37, %c0_38, %c0_39] : memref<9x128x128xbf16, #tpu.memory_space<vmem>>, vector<1x128x128xbf16>
    %47 = vector.shape_cast %46 : vector<1x128x128xbf16> to vector<128x128xbf16>
    %cst_40 = arith.constant dense<0.000000e+00> : vector<24x128xf32>
    %48 = tpu.matmul %45, %47, %cst_40 {dimension_numbers = #tpu.dot_dimension_numbers<[1], [0], [0], [1], [0, 0, 1, 1], [], []>} : vector<24x128xbf16>, vector<128x128xbf16>, vector<24x128xf32> -> vector<24x128xf32>
    %49 = arith.addf %44, %48 : vector<24x128xf32>
    %c10 = arith.constant 10 : index
    %c0_41 = arith.constant 0 : index
    %50 = vector.load %arg8[%c10, %c0_41] : memref<48x128xbf16, #tpu.memory_space<vmem>>, vector<24x128xbf16>
    %c1_42 = arith.constant 1 : index
    %c0_43 = arith.constant 0 : index
    %c0_44 = arith.constant 0 : index
    %51 = vector.load %arg3[%c1_42, %c0_43, %c0_44] : memref<9x128x128xbf16, #tpu.memory_space<vmem>>, vector<1x128x128xbf16>
    %52 = vector.shape_cast %51 : vector<1x128x128xbf16> to vector<128x128xbf16>
    %cst_45 = arith.constant dense<0.000000e+00> : vector<24x128xf32>
    %53 = tpu.matmul %50, %52, %cst_45 {dimension_numbers = #tpu.dot_dimension_numbers<[1], [0], [0], [1], [0, 0, 1, 1], [], []>} : vector<24x128xbf16>, vector<128x128xbf16>, vector<24x128xf32> -> vector<24x128xf32>
    %54 = arith.addf %49, %53 : vector<24x128xf32>
    %c11 = arith.constant 11 : index
    %c0_46 = arith.constant 0 : index
    %55 = vector.load %arg8[%c11, %c0_46] : memref<48x128xbf16, #tpu.memory_space<vmem>>, vector<24x128xbf16>
    %c2_47 = arith.constant 2 : index
    %c0_48 = arith.constant 0 : index
    %c0_49 = arith.constant 0 : index
    %56 = vector.load %arg3[%c2_47, %c0_48, %c0_49] : memref<9x128x128xbf16, #tpu.memory_space<vmem>>, vector<1x128x128xbf16>
    %57 = vector.shape_cast %56 : vector<1x128x128xbf16> to vector<128x128xbf16>
    %cst_50 = arith.constant dense<0.000000e+00> : vector<24x128xf32>
    %58 = tpu.matmul %55, %57, %cst_50 {dimension_numbers = #tpu.dot_dimension_numbers<[1], [0], [0], [1], [0, 0, 1, 1], [], []>} : vector<24x128xbf16>, vector<128x128xbf16>, vector<24x128xf32> -> vector<24x128xf32>
    %59 = arith.addf %54, %58 : vector<24x128xf32>
    %c15 = arith.constant 15 : index
    %c0_51 = arith.constant 0 : index
    %60 = vector.load %arg8[%c15, %c0_51] : memref<48x128xbf16, #tpu.memory_space<vmem>>, vector<24x128xbf16>
    %c3_52 = arith.constant 3 : index
    %c0_53 = arith.constant 0 : index
    %c0_54 = arith.constant 0 : index
    %61 = vector.load %arg3[%c3_52, %c0_53, %c0_54] : memref<9x128x128xbf16, #tpu.memory_space<vmem>>, vector<1x128x128xbf16>
    %62 = vector.shape_cast %61 : vector<1x128x128xbf16> to vector<128x128xbf16>
    %cst_55 = arith.constant dense<0.000000e+00> : vector<24x128xf32>
    %63 = tpu.matmul %60, %62, %cst_55 {dimension_numbers = #tpu.dot_dimension_numbers<[1], [0], [0], [1], [0, 0, 1, 1], [], []>} : vector<24x128xbf16>, vector<128x128xbf16>, vector<24x128xf32> -> vector<24x128xf32>
    %64 = arith.addf %59, %63 : vector<24x128xf32>
    %c16_56 = arith.constant 16 : index
    %c0_57 = arith.constant 0 : index
    %65 = vector.load %arg8[%c16_56, %c0_57] : memref<48x128xbf16, #tpu.memory_space<vmem>>, vector<24x128xbf16>
    %c4 = arith.constant 4 : index
    %c0_58 = arith.constant 0 : index
    %c0_59 = arith.constant 0 : index
    %66 = vector.load %arg3[%c4, %c0_58, %c0_59] : memref<9x128x128xbf16, #tpu.memory_space<vmem>>, vector<1x128x128xbf16>
    %67 = vector.shape_cast %66 : vector<1x128x128xbf16> to vector<128x128xbf16>
    %cst_60 = arith.constant dense<0.000000e+00> : vector<24x128xf32>
    %68 = tpu.matmul %65, %67, %cst_60 {dimension_numbers = #tpu.dot_dimension_numbers<[1], [0], [0], [1], [0, 0, 1, 1], [], []>} : vector<24x128xbf16>, vector<128x128xbf16>, vector<24x128xf32> -> vector<24x128xf32>
    %69 = arith.addf %64, %68 : vector<24x128xf32>
    %c17 = arith.constant 17 : index
    %c0_61 = arith.constant 0 : index
    %70 = vector.load %arg8[%c17, %c0_61] : memref<48x128xbf16, #tpu.memory_space<vmem>>, vector<24x128xbf16>
    %c5 = arith.constant 5 : index
    %c0_62 = arith.constant 0 : index
    %c0_63 = arith.constant 0 : index
    %71 = vector.load %arg3[%c5, %c0_62, %c0_63] : memref<9x128x128xbf16, #tpu.memory_space<vmem>>, vector<1x128x128xbf16>
    %72 = vector.shape_cast %71 : vector<1x128x128xbf16> to vector<128x128xbf16>
    %cst_64 = arith.constant dense<0.000000e+00> : vector<24x128xf32>
    %73 = tpu.matmul %70, %72, %cst_64 {dimension_numbers = #tpu.dot_dimension_numbers<[1], [0], [0], [1], [0, 0, 1, 1], [], []>} : vector<24x128xbf16>, vector<128x128xbf16>, vector<24x128xf32> -> vector<24x128xf32>
    %74 = arith.addf %69, %73 : vector<24x128xf32>
    %c21 = arith.constant 21 : index
    %c0_65 = arith.constant 0 : index
    %75 = vector.load %arg8[%c21, %c0_65] : memref<48x128xbf16, #tpu.memory_space<vmem>>, vector<24x128xbf16>
    %c6_66 = arith.constant 6 : index
    %c0_67 = arith.constant 0 : index
    %c0_68 = arith.constant 0 : index
    %76 = vector.load %arg3[%c6_66, %c0_67, %c0_68] : memref<9x128x128xbf16, #tpu.memory_space<vmem>>, vector<1x128x128xbf16>
    %77 = vector.shape_cast %76 : vector<1x128x128xbf16> to vector<128x128xbf16>
    %cst_69 = arith.constant dense<0.000000e+00> : vector<24x128xf32>
    %78 = tpu.matmul %75, %77, %cst_69 {dimension_numbers = #tpu.dot_dimension_numbers<[1], [0], [0], [1], [0, 0, 1, 1], [], []>} : vector<24x128xbf16>, vector<128x128xbf16>, vector<24x128xf32> -> vector<24x128xf32>
    %79 = arith.addf %74, %78 : vector<24x128xf32>
    %c22 = arith.constant 22 : index
    %c0_70 = arith.constant 0 : index
    %80 = vector.load %arg8[%c22, %c0_70] : memref<48x128xbf16, #tpu.memory_space<vmem>>, vector<24x128xbf16>
    %c7_71 = arith.constant 7 : index
    %c0_72 = arith.constant 0 : index
    %c0_73 = arith.constant 0 : index
    %81 = vector.load %arg3[%c7_71, %c0_72, %c0_73] : memref<9x128x128xbf16, #tpu.memory_space<vmem>>, vector<1x128x128xbf16>
    %82 = vector.shape_cast %81 : vector<1x128x128xbf16> to vector<128x128xbf16>
    %cst_74 = arith.constant dense<0.000000e+00> : vector<24x128xf32>
    %83 = tpu.matmul %80, %82, %cst_74 {dimension_numbers = #tpu.dot_dimension_numbers<[1], [0], [0], [1], [0, 0, 1, 1], [], []>} : vector<24x128xbf16>, vector<128x128xbf16>, vector<24x128xf32> -> vector<24x128xf32>
    %84 = arith.addf %79, %83 : vector<24x128xf32>
    %c23 = arith.constant 23 : index
    %c0_75 = arith.constant 0 : index
    %85 = vector.load %arg8[%c23, %c0_75] : memref<48x128xbf16, #tpu.memory_space<vmem>>, vector<24x128xbf16>
    %c8 = arith.constant 8 : index
    %c0_76 = arith.constant 0 : index
    %c0_77 = arith.constant 0 : index
    %86 = vector.load %arg3[%c8, %c0_76, %c0_77] : memref<9x128x128xbf16, #tpu.memory_space<vmem>>, vector<1x128x128xbf16>
    %87 = vector.shape_cast %86 : vector<1x128x128xbf16> to vector<128x128xbf16>
    %cst_78 = arith.constant dense<0.000000e+00> : vector<24x128xf32>
    %88 = tpu.matmul %85, %87, %cst_78 {dimension_numbers = #tpu.dot_dimension_numbers<[1], [0], [0], [1], [0, 0, 1, 1], [], []>} : vector<24x128xbf16>, vector<128x128xbf16>, vector<24x128xf32> -> vector<24x128xf32>
    %89 = arith.addf %84, %88 : vector<24x128xf32>
    %90 = vector.extract_strided_slice %4 {offsets = [1, 0], sizes = [1, 128], strides = [1, 1]} : vector<3x128xf32> to vector<1x128xf32>
    %91 = vector.broadcast %90 : vector<1x128xf32> to vector<24x128xf32>
    %92 = arith.addf %89, %91 : vector<24x128xf32>
    %cst_79 = arith.constant 0.000000e+00 : f32
    %93 = vector.broadcast %cst_79 : f32 to vector<24x128xf32>
    %94 = arith.maximumf %92, %93 : vector<24x128xf32>
    %cst_80 = arith.constant 0.000000e+00 : f32
    %95 = vector.shape_cast %7 : vector<24x1xi1> to vector<24x1xi1>
    %96 = vector.broadcast %95 : vector<24x1xi1> to vector<24x128xi1>
    %97 = vector.broadcast %cst_80 : f32 to vector<24x128xf32>
    %98 = arith.select %96, %94, %97 : vector<24x128xi1>, vector<24x128xf32>
    %99 = arith.truncf %98 : vector<24x128xf32> to vector<24x128xbf16>
    %c16_81 = arith.constant 16 : index
    %c0_82 = arith.constant 0 : index
    %100 = vector.load %arg8[%c16_81, %c0_82] : memref<48x128xbf16, #tpu.memory_space<vmem>>, vector<24x128xbf16>
    tpu.vector_store %arg8[%c16_81, %c0_82], %99 {strides = array<i32>} : memref<48x128xbf16, #tpu.memory_space<vmem>>, vector<24x128xbf16>,
    %cst_83 = arith.constant 0.000000e+00 : f32
    %101 = vector.broadcast %cst_83 : f32 to vector<24x128xf32>
    %c9_84 = arith.constant 9 : index
    %c0_85 = arith.constant 0 : index
    %102 = vector.load %arg8[%c9_84, %c0_85] : memref<48x128xbf16, #tpu.memory_space<vmem>>, vector<24x128xbf16>
    %c0_86 = arith.constant 0 : index
    %c0_87 = arith.constant 0 : index
    %c0_88 = arith.constant 0 : index
    %103 = vector.load %arg4[%c0_86, %c0_87, %c0_88] : memref<9x128x128xbf16, #tpu.memory_space<vmem>>, vector<1x128x128xbf16>
    %104 = vector.shape_cast %103 : vector<1x128x128xbf16> to vector<128x128xbf16>
    %cst_89 = arith.constant dense<0.000000e+00> : vector<24x128xf32>
    %105 = tpu.matmul %102, %104, %cst_89 {dimension_numbers = #tpu.dot_dimension_numbers<[1], [0], [0], [1], [0, 0, 1, 1], [], []>} : vector<24x128xbf16>, vector<128x128xbf16>, vector<24x128xf32> -> vector<24x128xf32>
    %106 = arith.addf %101, %105 : vector<24x128xf32>
    %c10_90 = arith.constant 10 : index
    %c0_91 = arith.constant 0 : index
    %107 = vector.load %arg8[%c10_90, %c0_91] : memref<48x128xbf16, #tpu.memory_space<vmem>>, vector<24x128xbf16>
    %c1_92 = arith.constant 1 : index
    %c0_93 = arith.constant 0 : index
    %c0_94 = arith.constant 0 : index
    %108 = vector.load %arg4[%c1_92, %c0_93, %c0_94] : memref<9x128x128xbf16, #tpu.memory_space<vmem>>, vector<1x128x128xbf16>
    %109 = vector.shape_cast %108 : vector<1x128x128xbf16> to vector<128x128xbf16>
    %cst_95 = arith.constant dense<0.000000e+00> : vector<24x128xf32>
    %110 = tpu.matmul %107, %109, %cst_95 {dimension_numbers = #tpu.dot_dimension_numbers<[1], [0], [0], [1], [0, 0, 1, 1], [], []>} : vector<24x128xbf16>, vector<128x128xbf16>, vector<24x128xf32> -> vector<24x128xf32>
    %111 = arith.addf %106, %110 : vector<24x128xf32>
    %c11_96 = arith.constant 11 : index
    %c0_97 = arith.constant 0 : index
    %112 = vector.load %arg8[%c11_96, %c0_97] : memref<48x128xbf16, #tpu.memory_space<vmem>>, vector<24x128xbf16>
    %c2_98 = arith.constant 2 : index
    %c0_99 = arith.constant 0 : index
    %c0_100 = arith.constant 0 : index
    %113 = vector.load %arg4[%c2_98, %c0_99, %c0_100] : memref<9x128x128xbf16, #tpu.memory_space<vmem>>, vector<1x128x128xbf16>
    %114 = vector.shape_cast %113 : vector<1x128x128xbf16> to vector<128x128xbf16>
    %cst_101 = arith.constant dense<0.000000e+00> : vector<24x128xf32>
    %115 = tpu.matmul %112, %114, %cst_101 {dimension_numbers = #tpu.dot_dimension_numbers<[1], [0], [0], [1], [0, 0, 1, 1], [], []>} : vector<24x128xbf16>, vector<128x128xbf16>, vector<24x128xf32> -> vector<24x128xf32>
    %116 = arith.addf %111, %115 : vector<24x128xf32>
    %c15_102 = arith.constant 15 : index
    %c0_103 = arith.constant 0 : index
    %117 = vector.load %arg8[%c15_102, %c0_103] : memref<48x128xbf16, #tpu.memory_space<vmem>>, vector<24x128xbf16>
    %c3_104 = arith.constant 3 : index
    %c0_105 = arith.constant 0 : index
    %c0_106 = arith.constant 0 : index
    %118 = vector.load %arg4[%c3_104, %c0_105, %c0_106] : memref<9x128x128xbf16, #tpu.memory_space<vmem>>, vector<1x128x128xbf16>
    %119 = vector.shape_cast %118 : vector<1x128x128xbf16> to vector<128x128xbf16>
    %cst_107 = arith.constant dense<0.000000e+00> : vector<24x128xf32>
    %120 = tpu.matmul %117, %119, %cst_107 {dimension_numbers = #tpu.dot_dimension_numbers<[1], [0], [0], [1], [0, 0, 1, 1], [], []>} : vector<24x128xbf16>, vector<128x128xbf16>, vector<24x128xf32> -> vector<24x128xf32>
    %121 = arith.addf %116, %120 : vector<24x128xf32>
    %c16_108 = arith.constant 16 : index
    %c0_109 = arith.constant 0 : index
    %122 = vector.load %arg8[%c16_108, %c0_109] : memref<48x128xbf16, #tpu.memory_space<vmem>>, vector<24x128xbf16>
    %c4_110 = arith.constant 4 : index
    %c0_111 = arith.constant 0 : index
    %c0_112 = arith.constant 0 : index
    %123 = vector.load %arg4[%c4_110, %c0_111, %c0_112] : memref<9x128x128xbf16, #tpu.memory_space<vmem>>, vector<1x128x128xbf16>
    %124 = vector.shape_cast %123 : vector<1x128x128xbf16> to vector<128x128xbf16>
    %cst_113 = arith.constant dense<0.000000e+00> : vector<24x128xf32>
    %125 = tpu.matmul %122, %124, %cst_113 {dimension_numbers = #tpu.dot_dimension_numbers<[1], [0], [0], [1], [0, 0, 1, 1], [], []>} : vector<24x128xbf16>, vector<128x128xbf16>, vector<24x128xf32> -> vector<24x128xf32>
    %126 = arith.addf %121, %125 : vector<24x128xf32>
    %c17_114 = arith.constant 17 : index
    %c0_115 = arith.constant 0 : index
    %127 = vector.load %arg8[%c17_114, %c0_115] : memref<48x128xbf16, #tpu.memory_space<vmem>>, vector<24x128xbf16>
    %c5_116 = arith.constant 5 : index
    %c0_117 = arith.constant 0 : index
    %c0_118 = arith.constant 0 : index
    %128 = vector.load %arg4[%c5_116, %c0_117, %c0_118] : memref<9x128x128xbf16, #tpu.memory_space<vmem>>, vector<1x128x128xbf16>
    %129 = vector.shape_cast %128 : vector<1x128x128xbf16> to vector<128x128xbf16>
    %cst_119 = arith.constant dense<0.000000e+00> : vector<24x128xf32>
    %130 = tpu.matmul %127, %129, %cst_119 {dimension_numbers = #tpu.dot_dimension_numbers<[1], [0], [0], [1], [0, 0, 1, 1], [], []>} : vector<24x128xbf16>, vector<128x128xbf16>, vector<24x128xf32> -> vector<24x128xf32>
    %131 = arith.addf %126, %130 : vector<24x128xf32>
    %c21_120 = arith.constant 21 : index
    %c0_121 = arith.constant 0 : index
    %132 = vector.load %arg8[%c21_120, %c0_121] : memref<48x128xbf16, #tpu.memory_space<vmem>>, vector<24x128xbf16>
    %c6_122 = arith.constant 6 : index
    %c0_123 = arith.constant 0 : index
    %c0_124 = arith.constant 0 : index
    %133 = vector.load %arg4[%c6_122, %c0_123, %c0_124] : memref<9x128x128xbf16, #tpu.memory_space<vmem>>, vector<1x128x128xbf16>
    %134 = vector.shape_cast %133 : vector<1x128x128xbf16> to vector<128x128xbf16>
    %cst_125 = arith.constant dense<0.000000e+00> : vector<24x128xf32>
    %135 = tpu.matmul %132, %134, %cst_125 {dimension_numbers = #tpu.dot_dimension_numbers<[1], [0], [0], [1], [0, 0, 1, 1], [], []>} : vector<24x128xbf16>, vector<128x128xbf16>, vector<24x128xf32> -> vector<24x128xf32>
    %136 = arith.addf %131, %135 : vector<24x128xf32>
    %c22_126 = arith.constant 22 : index
    %c0_127 = arith.constant 0 : index
    %137 = vector.load %arg8[%c22_126, %c0_127] : memref<48x128xbf16, #tpu.memory_space<vmem>>, vector<24x128xbf16>
    %c7_128 = arith.constant 7 : index
    %c0_129 = arith.constant 0 : index
    %c0_130 = arith.constant 0 : index
    %138 = vector.load %arg4[%c7_128, %c0_129, %c0_130] : memref<9x128x128xbf16, #tpu.memory_space<vmem>>, vector<1x128x128xbf16>
    %139 = vector.shape_cast %138 : vector<1x128x128xbf16> to vector<128x128xbf16>
    %cst_131 = arith.constant dense<0.000000e+00> : vector<24x128xf32>
    %140 = tpu.matmul %137, %139, %cst_131 {dimension_numbers = #tpu.dot_dimension_numbers<[1], [0], [0], [1], [0, 0, 1, 1], [], []>} : vector<24x128xbf16>, vector<128x128xbf16>, vector<24x128xf32> -> vector<24x128xf32>
    %141 = arith.addf %136, %140 : vector<24x128xf32>
    %c23_132 = arith.constant 23 : index
    %c0_133 = arith.constant 0 : index
    %142 = vector.load %arg8[%c23_132, %c0_133] : memref<48x128xbf16, #tpu.memory_space<vmem>>, vector<24x128xbf16>
    %c8_134 = arith.constant 8 : index
    %c0_135 = arith.constant 0 : index
    %c0_136 = arith.constant 0 : index
    %143 = vector.load %arg4[%c8_134, %c0_135, %c0_136] : memref<9x128x128xbf16, #tpu.memory_space<vmem>>, vector<1x128x128xbf16>
    %144 = vector.shape_cast %143 : vector<1x128x128xbf16> to vector<128x128xbf16>
    %cst_137 = arith.constant dense<0.000000e+00> : vector<24x128xf32>
    %145 = tpu.matmul %142, %144, %cst_137 {dimension_numbers = #tpu.dot_dimension_numbers<[1], [0], [0], [1], [0, 0, 1, 1], [], []>} : vector<24x128xbf16>, vector<128x128xbf16>, vector<24x128xf32> -> vector<24x128xf32>
    %146 = arith.addf %141, %145 : vector<24x128xf32>
    %147 = vector.extract_strided_slice %4 {offsets = [2, 0], sizes = [1, 128], strides = [1, 1]} : vector<3x128xf32> to vector<1x128xf32>
    %148 = vector.broadcast %147 : vector<1x128xf32> to vector<24x128xf32>
    %149 = arith.addf %146, %148 : vector<24x128xf32>
    %150 = arith.addf %149, %41 : vector<24x128xf32>
    %cst_138 = arith.constant 0.000000e+00 : f32
    %151 = vector.broadcast %cst_138 : f32 to vector<24x128xf32>
    %152 = arith.maximumf %150, %151 : vector<24x128xf32>
    %cst_139 = arith.constant 0.000000e+00 : f32
    %153 = vector.shape_cast %7 : vector<24x1xi1> to vector<24x1xi1>
    %154 = vector.broadcast %153 : vector<24x1xi1> to vector<24x128xi1>
    %155 = vector.broadcast %cst_139 : f32 to vector<24x128xf32>
    %156 = arith.select %154, %152, %155 : vector<24x128xi1>, vector<24x128xf32>
    %157 = arith.truncf %156 : vector<24x128xf32> to vector<24x128xbf16>
    %c0_140 = arith.constant 0 : index
    %c0_141 = arith.constant 0 : index
    %c0_142 = arith.constant 0 : index
    %158 = vector.load %arg7[%c0_140, %c0_141, %c0_142] : memref<1x24x128xbf16, #tpu.memory_space<vmem>>, vector<1x24x128xbf16>
    %159 = vector.shape_cast %158 : vector<1x24x128xbf16> to vector<24x128xbf16>
    %160 = vector.shape_cast %157 : vector<24x128xbf16> to vector<1x24x128xbf16>
    tpu.vector_store %arg7[%c0_140, %c0_141, %c0_142], %160 {strides = array<i32>} : memref<1x24x128xbf16, #tpu.memory_space<vmem>>, vector<1x24x128xbf16>,
    return
  }
  func.func @transform_0(%arg0: i32) -> (i32, i32, i32) {
    %c0_i32 = arith.constant 0 : i32
    %c0_i32_0 = arith.constant 0 : i32
    %c0_i32_1 = arith.constant 0 : i32
    return %arg0, %c0_i32, %c0_i32_0 : i32, i32, i32
  }
  func.func @transform_1(%arg0: i32) -> (i32, i32, i32) {
    %c0_i32 = arith.constant 0 : i32
    %c0_i32_0 = arith.constant 0 : i32
    %c0_i32_1 = arith.constant 0 : i32
    %c0_i32_2 = arith.constant 0 : i32
    return %c0_i32, %c0_i32_0, %c0_i32_1 : i32, i32, i32
  }
  func.func @transform_2(%arg0: i32) -> (i32, i32, i32) {
    %c0_i32 = arith.constant 0 : i32
    %c0_i32_0 = arith.constant 0 : i32
    %c0_i32_1 = arith.constant 0 : i32
    %c0_i32_2 = arith.constant 0 : i32
    return %c0_i32, %c0_i32_0, %c0_i32_1 : i32, i32, i32
  }
  func.func @transform_3(%arg0: i32) -> (i32, i32, i32) {
    %c0_i32 = arith.constant 0 : i32
    %c0_i32_0 = arith.constant 0 : i32
    %c0_i32_1 = arith.constant 0 : i32
    %c0_i32_2 = arith.constant 0 : i32
    return %c0_i32, %c0_i32_0, %c0_i32_1 : i32, i32, i32
  }
  func.func @transform_4(%arg0: i32) -> (i32, i32) {
    %c0_i32 = arith.constant 0 : i32
    %c0_i32_0 = arith.constant 0 : i32
    %c0_i32_1 = arith.constant 0 : i32
    return %c0_i32, %c0_i32_0 : i32, i32
  }
  func.func @transform_5(%arg0: i32) -> (i32, i32) {
    %c0_i32 = arith.constant 0 : i32
    %c0_i32_0 = arith.constant 0 : i32
    %c0_i32_1 = arith.constant 0 : i32
    return %c0_i32, %c0_i32_0 : i32, i32
  }
  func.func @transform_6(%arg0: i32) -> (i32, i32, i32) {
    %c0_i32 = arith.constant 0 : i32
    %c0_i32_0 = arith.constant 0 : i32
    %c0_i32_1 = arith.constant 0 : i32
    return %arg0, %c0_i32, %c0_i32_0 : i32, i32, i32
  }
}

module attributes {stable_mosaic.version = 11 : i64} {
  func.func @kernel(%arg0: i32, %arg1: memref<1x16x128xbf16, #tpu.memory_space<vmem>>, %arg2: memref<4x128x128xbf16, #tpu.memory_space<vmem>>, %arg3: memref<9x128x128xbf16, #tpu.memory_space<vmem>>, %arg4: memref<9x128x128xbf16, #tpu.memory_space<vmem>>, %arg5: memref<3x128xf32, #tpu.memory_space<vmem>>, %arg6: memref<8x1xf32, #tpu.memory_space<vmem>>, %arg7: memref<1x8x128xbf16, #tpu.memory_space<vmem>>, %arg8: memref<32x128xbf16, #tpu.memory_space<vmem>>) attributes {dimension_semantics = [#tpu.dimension_semantics<parallel>], iteration_bounds = array<i64: 2>, scalar_prefetch = 0 : i64, scratch_operands = 1 : i64, tpu.core_type = #tpu.core_type<tc>, window_params = [{transform_indices = @transform_0, window_bounds = array<i64: 1, 16, 128>}, {pipeline_mode = #tpu.pipeline_mode<synchronous>, transform_indices = @transform_1, window_bounds = array<i64: 4, 128, 128>}, {pipeline_mode = #tpu.pipeline_mode<synchronous>, transform_indices = @transform_2, window_bounds = array<i64: 9, 128, 128>}, {pipeline_mode = #tpu.pipeline_mode<synchronous>, transform_indices = @transform_3, window_bounds = array<i64: 9, 128, 128>}, {pipeline_mode = #tpu.pipeline_mode<synchronous>, transform_indices = @transform_4, window_bounds = array<i64: 3, 128>}, {pipeline_mode = #tpu.pipeline_mode<synchronous>, transform_indices = @transform_5, window_bounds = array<i64: 8, 1>}, {transform_indices = @transform_6, window_bounds = array<i64: 1, 8, 128>}]} {
    %cst = arith.constant 0.000000e+00 : bf16
    %0 = vector.broadcast %cst : bf16 to vector<16x128xbf16>
    %c0 = arith.constant 0 : index
    %c0_0 = arith.constant 0 : index
    %1 = vector.load %arg8[%c0, %c0_0] : memref<32x128xbf16, #tpu.memory_space<vmem>>, vector<16x128xbf16>
    tpu.vector_store %arg8[%c0, %c0_0], %0 {strides = array<i32>} : memref<32x128xbf16, #tpu.memory_space<vmem>>, vector<16x128xbf16>,
    %cst_1 = arith.constant 0.000000e+00 : bf16
    %2 = vector.broadcast %cst_1 : bf16 to vector<16x128xbf16>
    %c16 = arith.constant 16 : index
    %c0_2 = arith.constant 0 : index
    %3 = vector.load %arg8[%c16, %c0_2] : memref<32x128xbf16, #tpu.memory_space<vmem>>, vector<16x128xbf16>
    tpu.vector_store %arg8[%c16, %c0_2], %2 {strides = array<i32>} : memref<32x128xbf16, #tpu.memory_space<vmem>>, vector<16x128xbf16>,
    %c0_3 = arith.constant 0 : index
    %c0_4 = arith.constant 0 : index
    %4 = vector.load %arg5[%c0_3, %c0_4] : memref<3x128xf32, #tpu.memory_space<vmem>>, vector<3x128xf32>
    %c0_5 = arith.constant 0 : index
    %c0_6 = arith.constant 0 : index
    %5 = vector.load %arg6[%c0_5, %c0_6] : memref<8x1xf32, #tpu.memory_space<vmem>>, vector<8x1xf32>
    %cst_7 = arith.constant 0.000000e+00 : f32
    %6 = vector.broadcast %cst_7 : f32 to vector<8x1xf32>
    %7 = arith.cmpf ogt, %5, %6 : vector<8x1xf32>
    %cst_8 = arith.constant 0.000000e+00 : f32
    %8 = vector.broadcast %cst_8 : f32 to vector<8x128xf32>
    %c0_9 = arith.constant 0 : index
    %c0_10 = arith.constant 0 : index
    %c0_11 = arith.constant 0 : index
    %9 = vector.load %arg1[%c0_9, %c0_10, %c0_11] : memref<1x16x128xbf16, #tpu.memory_space<vmem>>, vector<1x8x128xbf16>
    %10 = vector.shape_cast %9 : vector<1x8x128xbf16> to vector<8x128xbf16>
    %c0_12 = arith.constant 0 : index
    %c0_13 = arith.constant 0 : index
    %c0_14 = arith.constant 0 : index
    %11 = vector.load %arg2[%c0_12, %c0_13, %c0_14] : memref<4x128x128xbf16, #tpu.memory_space<vmem>>, vector<1x128x128xbf16>
    %12 = vector.shape_cast %11 : vector<1x128x128xbf16> to vector<128x128xbf16>
    %cst_15 = arith.constant dense<0.000000e+00> : vector<8x128xf32>
    %13 = tpu.matmul %10, %12, %cst_15 {dimension_numbers = #tpu.dot_dimension_numbers<[1], [0], [0], [1], [0, 0, 1, 1], [], []>} : vector<8x128xbf16>, vector<128x128xbf16>, vector<8x128xf32> -> vector<8x128xf32>
    %14 = arith.addf %8, %13 : vector<8x128xf32>
    %c0_16 = arith.constant 0 : index
    %c1 = arith.constant 1 : index
    %c0_17 = arith.constant 0 : index
    %15 = vector.load %arg1[%c0_16, %c1, %c0_17] : memref<1x16x128xbf16, #tpu.memory_space<vmem>>, vector<1x8x128xbf16>
    %16 = vector.shape_cast %15 : vector<1x8x128xbf16> to vector<8x128xbf16>
    %c1_18 = arith.constant 1 : index
    %c0_19 = arith.constant 0 : index
    %c0_20 = arith.constant 0 : index
    %17 = vector.load %arg2[%c1_18, %c0_19, %c0_20] : memref<4x128x128xbf16, #tpu.memory_space<vmem>>, vector<1x128x128xbf16>
    %18 = vector.shape_cast %17 : vector<1x128x128xbf16> to vector<128x128xbf16>
    %cst_21 = arith.constant dense<0.000000e+00> : vector<8x128xf32>
    %19 = tpu.matmul %16, %18, %cst_21 {dimension_numbers = #tpu.dot_dimension_numbers<[1], [0], [0], [1], [0, 0, 1, 1], [], []>} : vector<8x128xbf16>, vector<128x128xbf16>, vector<8x128xf32> -> vector<8x128xf32>
    %20 = arith.addf %14, %19 : vector<8x128xf32>
    %c0_22 = arith.constant 0 : index
    %c4 = arith.constant 4 : index
    %c0_23 = arith.constant 0 : index
    %21 = vector.load %arg1[%c0_22, %c4, %c0_23] : memref<1x16x128xbf16, #tpu.memory_space<vmem>>, vector<1x8x128xbf16>
    %22 = vector.shape_cast %21 : vector<1x8x128xbf16> to vector<8x128xbf16>
    %c2 = arith.constant 2 : index
    %c0_24 = arith.constant 0 : index
    %c0_25 = arith.constant 0 : index
    %23 = vector.load %arg2[%c2, %c0_24, %c0_25] : memref<4x128x128xbf16, #tpu.memory_space<vmem>>, vector<1x128x128xbf16>
    %24 = vector.shape_cast %23 : vector<1x128x128xbf16> to vector<128x128xbf16>
    %cst_26 = arith.constant dense<0.000000e+00> : vector<8x128xf32>
    %25 = tpu.matmul %22, %24, %cst_26 {dimension_numbers = #tpu.dot_dimension_numbers<[1], [0], [0], [1], [0, 0, 1, 1], [], []>} : vector<8x128xbf16>, vector<128x128xbf16>, vector<8x128xf32> -> vector<8x128xf32>
    %26 = arith.addf %20, %25 : vector<8x128xf32>
    %c0_27 = arith.constant 0 : index
    %c5 = arith.constant 5 : index
    %c0_28 = arith.constant 0 : index
    %27 = vector.load %arg1[%c0_27, %c5, %c0_28] : memref<1x16x128xbf16, #tpu.memory_space<vmem>>, vector<1x8x128xbf16>
    %28 = vector.shape_cast %27 : vector<1x8x128xbf16> to vector<8x128xbf16>
    %c3 = arith.constant 3 : index
    %c0_29 = arith.constant 0 : index
    %c0_30 = arith.constant 0 : index
    %29 = vector.load %arg2[%c3, %c0_29, %c0_30] : memref<4x128x128xbf16, #tpu.memory_space<vmem>>, vector<1x128x128xbf16>
    %30 = vector.shape_cast %29 : vector<1x128x128xbf16> to vector<128x128xbf16>
    %cst_31 = arith.constant dense<0.000000e+00> : vector<8x128xf32>
    %31 = tpu.matmul %28, %30, %cst_31 {dimension_numbers = #tpu.dot_dimension_numbers<[1], [0], [0], [1], [0, 0, 1, 1], [], []>} : vector<8x128xbf16>, vector<128x128xbf16>, vector<8x128xf32> -> vector<8x128xf32>
    %32 = arith.addf %26, %31 : vector<8x128xf32>
    %33 = vector.extract_strided_slice %4 {offsets = [0, 0], sizes = [1, 128], strides = [1, 1]} : vector<3x128xf32> to vector<1x128xf32>
    %34 = vector.broadcast %33 : vector<1x128xf32> to vector<8x128xf32>
    %35 = arith.addf %32, %34 : vector<8x128xf32>
    %cst_32 = arith.constant 0.000000e+00 : f32
    %36 = vector.broadcast %cst_32 : f32 to vector<8x128xf32>
    %37 = arith.maximumf %35, %36 : vector<8x128xf32>
    %cst_33 = arith.constant 0.000000e+00 : f32
    %38 = vector.shape_cast %7 : vector<8x1xi1> to vector<8x1xi1>
    %39 = vector.broadcast %38 : vector<8x1xi1> to vector<8x128xi1>
    %40 = vector.broadcast %cst_33 : f32 to vector<8x128xf32>
    %41 = arith.select %39, %37, %40 : vector<8x128xi1>, vector<8x128xf32>
    %42 = arith.truncf %41 : vector<8x128xf32> to vector<8x128xbf16>
    %c16_34 = arith.constant 16 : index
    %c0_35 = arith.constant 0 : index
    %43 = vector.load %arg8[%c16_34, %c0_35] : memref<32x128xbf16, #tpu.memory_space<vmem>>, vector<8x128xbf16>
    tpu.vector_store %arg8[%c16_34, %c0_35], %42 {strides = array<i32>} : memref<32x128xbf16, #tpu.memory_space<vmem>>, vector<8x128xbf16>,
    %cst_36 = arith.constant 0.000000e+00 : f32
    %44 = vector.broadcast %cst_36 : f32 to vector<8x128xf32>
    %c11 = arith.constant 11 : index
    %c0_37 = arith.constant 0 : index
    %45 = vector.load %arg8[%c11, %c0_37] : memref<32x128xbf16, #tpu.memory_space<vmem>>, vector<8x128xbf16>
    %c0_38 = arith.constant 0 : index
    %c0_39 = arith.constant 0 : index
    %c0_40 = arith.constant 0 : index
    %46 = vector.load %arg3[%c0_38, %c0_39, %c0_40] : memref<9x128x128xbf16, #tpu.memory_space<vmem>>, vector<1x128x128xbf16>
    %47 = vector.shape_cast %46 : vector<1x128x128xbf16> to vector<128x128xbf16>
    %cst_41 = arith.constant dense<0.000000e+00> : vector<8x128xf32>
    %48 = tpu.matmul %45, %47, %cst_41 {dimension_numbers = #tpu.dot_dimension_numbers<[1], [0], [0], [1], [0, 0, 1, 1], [], []>} : vector<8x128xbf16>, vector<128x128xbf16>, vector<8x128xf32> -> vector<8x128xf32>
    %49 = arith.addf %44, %48 : vector<8x128xf32>
    %c12 = arith.constant 12 : index
    %c0_42 = arith.constant 0 : index
    %50 = vector.load %arg8[%c12, %c0_42] : memref<32x128xbf16, #tpu.memory_space<vmem>>, vector<8x128xbf16>
    %c1_43 = arith.constant 1 : index
    %c0_44 = arith.constant 0 : index
    %c0_45 = arith.constant 0 : index
    %51 = vector.load %arg3[%c1_43, %c0_44, %c0_45] : memref<9x128x128xbf16, #tpu.memory_space<vmem>>, vector<1x128x128xbf16>
    %52 = vector.shape_cast %51 : vector<1x128x128xbf16> to vector<128x128xbf16>
    %cst_46 = arith.constant dense<0.000000e+00> : vector<8x128xf32>
    %53 = tpu.matmul %50, %52, %cst_46 {dimension_numbers = #tpu.dot_dimension_numbers<[1], [0], [0], [1], [0, 0, 1, 1], [], []>} : vector<8x128xbf16>, vector<128x128xbf16>, vector<8x128xf32> -> vector<8x128xf32>
    %54 = arith.addf %49, %53 : vector<8x128xf32>
    %c13 = arith.constant 13 : index
    %c0_47 = arith.constant 0 : index
    %55 = vector.load %arg8[%c13, %c0_47] : memref<32x128xbf16, #tpu.memory_space<vmem>>, vector<8x128xbf16>
    %c2_48 = arith.constant 2 : index
    %c0_49 = arith.constant 0 : index
    %c0_50 = arith.constant 0 : index
    %56 = vector.load %arg3[%c2_48, %c0_49, %c0_50] : memref<9x128x128xbf16, #tpu.memory_space<vmem>>, vector<1x128x128xbf16>
    %57 = vector.shape_cast %56 : vector<1x128x128xbf16> to vector<128x128xbf16>
    %cst_51 = arith.constant dense<0.000000e+00> : vector<8x128xf32>
    %58 = tpu.matmul %55, %57, %cst_51 {dimension_numbers = #tpu.dot_dimension_numbers<[1], [0], [0], [1], [0, 0, 1, 1], [], []>} : vector<8x128xbf16>, vector<128x128xbf16>, vector<8x128xf32> -> vector<8x128xf32>
    %59 = arith.addf %54, %58 : vector<8x128xf32>
    %c15 = arith.constant 15 : index
    %c0_52 = arith.constant 0 : index
    %60 = vector.load %arg8[%c15, %c0_52] : memref<32x128xbf16, #tpu.memory_space<vmem>>, vector<8x128xbf16>
    %c3_53 = arith.constant 3 : index
    %c0_54 = arith.constant 0 : index
    %c0_55 = arith.constant 0 : index
    %61 = vector.load %arg3[%c3_53, %c0_54, %c0_55] : memref<9x128x128xbf16, #tpu.memory_space<vmem>>, vector<1x128x128xbf16>
    %62 = vector.shape_cast %61 : vector<1x128x128xbf16> to vector<128x128xbf16>
    %cst_56 = arith.constant dense<0.000000e+00> : vector<8x128xf32>
    %63 = tpu.matmul %60, %62, %cst_56 {dimension_numbers = #tpu.dot_dimension_numbers<[1], [0], [0], [1], [0, 0, 1, 1], [], []>} : vector<8x128xbf16>, vector<128x128xbf16>, vector<8x128xf32> -> vector<8x128xf32>
    %64 = arith.addf %59, %63 : vector<8x128xf32>
    %c16_57 = arith.constant 16 : index
    %c0_58 = arith.constant 0 : index
    %65 = vector.load %arg8[%c16_57, %c0_58] : memref<32x128xbf16, #tpu.memory_space<vmem>>, vector<8x128xbf16>
    %c4_59 = arith.constant 4 : index
    %c0_60 = arith.constant 0 : index
    %c0_61 = arith.constant 0 : index
    %66 = vector.load %arg3[%c4_59, %c0_60, %c0_61] : memref<9x128x128xbf16, #tpu.memory_space<vmem>>, vector<1x128x128xbf16>
    %67 = vector.shape_cast %66 : vector<1x128x128xbf16> to vector<128x128xbf16>
    %cst_62 = arith.constant dense<0.000000e+00> : vector<8x128xf32>
    %68 = tpu.matmul %65, %67, %cst_62 {dimension_numbers = #tpu.dot_dimension_numbers<[1], [0], [0], [1], [0, 0, 1, 1], [], []>} : vector<8x128xbf16>, vector<128x128xbf16>, vector<8x128xf32> -> vector<8x128xf32>
    %69 = arith.addf %64, %68 : vector<8x128xf32>
    %c17 = arith.constant 17 : index
    %c0_63 = arith.constant 0 : index
    %70 = vector.load %arg8[%c17, %c0_63] : memref<32x128xbf16, #tpu.memory_space<vmem>>, vector<8x128xbf16>
    %c5_64 = arith.constant 5 : index
    %c0_65 = arith.constant 0 : index
    %c0_66 = arith.constant 0 : index
    %71 = vector.load %arg3[%c5_64, %c0_65, %c0_66] : memref<9x128x128xbf16, #tpu.memory_space<vmem>>, vector<1x128x128xbf16>
    %72 = vector.shape_cast %71 : vector<1x128x128xbf16> to vector<128x128xbf16>
    %cst_67 = arith.constant dense<0.000000e+00> : vector<8x128xf32>
    %73 = tpu.matmul %70, %72, %cst_67 {dimension_numbers = #tpu.dot_dimension_numbers<[1], [0], [0], [1], [0, 0, 1, 1], [], []>} : vector<8x128xbf16>, vector<128x128xbf16>, vector<8x128xf32> -> vector<8x128xf32>
    %74 = arith.addf %69, %73 : vector<8x128xf32>
    %c19 = arith.constant 19 : index
    %c0_68 = arith.constant 0 : index
    %75 = vector.load %arg8[%c19, %c0_68] : memref<32x128xbf16, #tpu.memory_space<vmem>>, vector<8x128xbf16>
    %c6 = arith.constant 6 : index
    %c0_69 = arith.constant 0 : index
    %c0_70 = arith.constant 0 : index
    %76 = vector.load %arg3[%c6, %c0_69, %c0_70] : memref<9x128x128xbf16, #tpu.memory_space<vmem>>, vector<1x128x128xbf16>
    %77 = vector.shape_cast %76 : vector<1x128x128xbf16> to vector<128x128xbf16>
    %cst_71 = arith.constant dense<0.000000e+00> : vector<8x128xf32>
    %78 = tpu.matmul %75, %77, %cst_71 {dimension_numbers = #tpu.dot_dimension_numbers<[1], [0], [0], [1], [0, 0, 1, 1], [], []>} : vector<8x128xbf16>, vector<128x128xbf16>, vector<8x128xf32> -> vector<8x128xf32>
    %79 = arith.addf %74, %78 : vector<8x128xf32>
    %c20 = arith.constant 20 : index
    %c0_72 = arith.constant 0 : index
    %80 = vector.load %arg8[%c20, %c0_72] : memref<32x128xbf16, #tpu.memory_space<vmem>>, vector<8x128xbf16>
    %c7 = arith.constant 7 : index
    %c0_73 = arith.constant 0 : index
    %c0_74 = arith.constant 0 : index
    %81 = vector.load %arg3[%c7, %c0_73, %c0_74] : memref<9x128x128xbf16, #tpu.memory_space<vmem>>, vector<1x128x128xbf16>
    %82 = vector.shape_cast %81 : vector<1x128x128xbf16> to vector<128x128xbf16>
    %cst_75 = arith.constant dense<0.000000e+00> : vector<8x128xf32>
    %83 = tpu.matmul %80, %82, %cst_75 {dimension_numbers = #tpu.dot_dimension_numbers<[1], [0], [0], [1], [0, 0, 1, 1], [], []>} : vector<8x128xbf16>, vector<128x128xbf16>, vector<8x128xf32> -> vector<8x128xf32>
    %84 = arith.addf %79, %83 : vector<8x128xf32>
    %c21 = arith.constant 21 : index
    %c0_76 = arith.constant 0 : index
    %85 = vector.load %arg8[%c21, %c0_76] : memref<32x128xbf16, #tpu.memory_space<vmem>>, vector<8x128xbf16>
    %c8 = arith.constant 8 : index
    %c0_77 = arith.constant 0 : index
    %c0_78 = arith.constant 0 : index
    %86 = vector.load %arg3[%c8, %c0_77, %c0_78] : memref<9x128x128xbf16, #tpu.memory_space<vmem>>, vector<1x128x128xbf16>
    %87 = vector.shape_cast %86 : vector<1x128x128xbf16> to vector<128x128xbf16>
    %cst_79 = arith.constant dense<0.000000e+00> : vector<8x128xf32>
    %88 = tpu.matmul %85, %87, %cst_79 {dimension_numbers = #tpu.dot_dimension_numbers<[1], [0], [0], [1], [0, 0, 1, 1], [], []>} : vector<8x128xbf16>, vector<128x128xbf16>, vector<8x128xf32> -> vector<8x128xf32>
    %89 = arith.addf %84, %88 : vector<8x128xf32>
    %90 = vector.extract_strided_slice %4 {offsets = [1, 0], sizes = [1, 128], strides = [1, 1]} : vector<3x128xf32> to vector<1x128xf32>
    %91 = vector.broadcast %90 : vector<1x128xf32> to vector<8x128xf32>
    %92 = arith.addf %89, %91 : vector<8x128xf32>
    %cst_80 = arith.constant 0.000000e+00 : f32
    %93 = vector.broadcast %cst_80 : f32 to vector<8x128xf32>
    %94 = arith.maximumf %92, %93 : vector<8x128xf32>
    %cst_81 = arith.constant 0.000000e+00 : f32
    %95 = vector.shape_cast %7 : vector<8x1xi1> to vector<8x1xi1>
    %96 = vector.broadcast %95 : vector<8x1xi1> to vector<8x128xi1>
    %97 = vector.broadcast %cst_81 : f32 to vector<8x128xf32>
    %98 = arith.select %96, %94, %97 : vector<8x128xi1>, vector<8x128xf32>
    %99 = arith.truncf %98 : vector<8x128xf32> to vector<8x128xbf16>
    %c16_82 = arith.constant 16 : index
    %c0_83 = arith.constant 0 : index
    %100 = vector.load %arg8[%c16_82, %c0_83] : memref<32x128xbf16, #tpu.memory_space<vmem>>, vector<8x128xbf16>
    tpu.vector_store %arg8[%c16_82, %c0_83], %99 {strides = array<i32>} : memref<32x128xbf16, #tpu.memory_space<vmem>>, vector<8x128xbf16>,
    %cst_84 = arith.constant 0.000000e+00 : f32
    %101 = vector.broadcast %cst_84 : f32 to vector<8x128xf32>
    %c11_85 = arith.constant 11 : index
    %c0_86 = arith.constant 0 : index
    %102 = vector.load %arg8[%c11_85, %c0_86] : memref<32x128xbf16, #tpu.memory_space<vmem>>, vector<8x128xbf16>
    %c0_87 = arith.constant 0 : index
    %c0_88 = arith.constant 0 : index
    %c0_89 = arith.constant 0 : index
    %103 = vector.load %arg4[%c0_87, %c0_88, %c0_89] : memref<9x128x128xbf16, #tpu.memory_space<vmem>>, vector<1x128x128xbf16>
    %104 = vector.shape_cast %103 : vector<1x128x128xbf16> to vector<128x128xbf16>
    %cst_90 = arith.constant dense<0.000000e+00> : vector<8x128xf32>
    %105 = tpu.matmul %102, %104, %cst_90 {dimension_numbers = #tpu.dot_dimension_numbers<[1], [0], [0], [1], [0, 0, 1, 1], [], []>} : vector<8x128xbf16>, vector<128x128xbf16>, vector<8x128xf32> -> vector<8x128xf32>
    %106 = arith.addf %101, %105 : vector<8x128xf32>
    %c12_91 = arith.constant 12 : index
    %c0_92 = arith.constant 0 : index
    %107 = vector.load %arg8[%c12_91, %c0_92] : memref<32x128xbf16, #tpu.memory_space<vmem>>, vector<8x128xbf16>
    %c1_93 = arith.constant 1 : index
    %c0_94 = arith.constant 0 : index
    %c0_95 = arith.constant 0 : index
    %108 = vector.load %arg4[%c1_93, %c0_94, %c0_95] : memref<9x128x128xbf16, #tpu.memory_space<vmem>>, vector<1x128x128xbf16>
    %109 = vector.shape_cast %108 : vector<1x128x128xbf16> to vector<128x128xbf16>
    %cst_96 = arith.constant dense<0.000000e+00> : vector<8x128xf32>
    %110 = tpu.matmul %107, %109, %cst_96 {dimension_numbers = #tpu.dot_dimension_numbers<[1], [0], [0], [1], [0, 0, 1, 1], [], []>} : vector<8x128xbf16>, vector<128x128xbf16>, vector<8x128xf32> -> vector<8x128xf32>
    %111 = arith.addf %106, %110 : vector<8x128xf32>
    %c13_97 = arith.constant 13 : index
    %c0_98 = arith.constant 0 : index
    %112 = vector.load %arg8[%c13_97, %c0_98] : memref<32x128xbf16, #tpu.memory_space<vmem>>, vector<8x128xbf16>
    %c2_99 = arith.constant 2 : index
    %c0_100 = arith.constant 0 : index
    %c0_101 = arith.constant 0 : index
    %113 = vector.load %arg4[%c2_99, %c0_100, %c0_101] : memref<9x128x128xbf16, #tpu.memory_space<vmem>>, vector<1x128x128xbf16>
    %114 = vector.shape_cast %113 : vector<1x128x128xbf16> to vector<128x128xbf16>
    %cst_102 = arith.constant dense<0.000000e+00> : vector<8x128xf32>
    %115 = tpu.matmul %112, %114, %cst_102 {dimension_numbers = #tpu.dot_dimension_numbers<[1], [0], [0], [1], [0, 0, 1, 1], [], []>} : vector<8x128xbf16>, vector<128x128xbf16>, vector<8x128xf32> -> vector<8x128xf32>
    %116 = arith.addf %111, %115 : vector<8x128xf32>
    %c15_103 = arith.constant 15 : index
    %c0_104 = arith.constant 0 : index
    %117 = vector.load %arg8[%c15_103, %c0_104] : memref<32x128xbf16, #tpu.memory_space<vmem>>, vector<8x128xbf16>
    %c3_105 = arith.constant 3 : index
    %c0_106 = arith.constant 0 : index
    %c0_107 = arith.constant 0 : index
    %118 = vector.load %arg4[%c3_105, %c0_106, %c0_107] : memref<9x128x128xbf16, #tpu.memory_space<vmem>>, vector<1x128x128xbf16>
    %119 = vector.shape_cast %118 : vector<1x128x128xbf16> to vector<128x128xbf16>
    %cst_108 = arith.constant dense<0.000000e+00> : vector<8x128xf32>
    %120 = tpu.matmul %117, %119, %cst_108 {dimension_numbers = #tpu.dot_dimension_numbers<[1], [0], [0], [1], [0, 0, 1, 1], [], []>} : vector<8x128xbf16>, vector<128x128xbf16>, vector<8x128xf32> -> vector<8x128xf32>
    %121 = arith.addf %116, %120 : vector<8x128xf32>
    %c16_109 = arith.constant 16 : index
    %c0_110 = arith.constant 0 : index
    %122 = vector.load %arg8[%c16_109, %c0_110] : memref<32x128xbf16, #tpu.memory_space<vmem>>, vector<8x128xbf16>
    %c4_111 = arith.constant 4 : index
    %c0_112 = arith.constant 0 : index
    %c0_113 = arith.constant 0 : index
    %123 = vector.load %arg4[%c4_111, %c0_112, %c0_113] : memref<9x128x128xbf16, #tpu.memory_space<vmem>>, vector<1x128x128xbf16>
    %124 = vector.shape_cast %123 : vector<1x128x128xbf16> to vector<128x128xbf16>
    %cst_114 = arith.constant dense<0.000000e+00> : vector<8x128xf32>
    %125 = tpu.matmul %122, %124, %cst_114 {dimension_numbers = #tpu.dot_dimension_numbers<[1], [0], [0], [1], [0, 0, 1, 1], [], []>} : vector<8x128xbf16>, vector<128x128xbf16>, vector<8x128xf32> -> vector<8x128xf32>
    %126 = arith.addf %121, %125 : vector<8x128xf32>
    %c17_115 = arith.constant 17 : index
    %c0_116 = arith.constant 0 : index
    %127 = vector.load %arg8[%c17_115, %c0_116] : memref<32x128xbf16, #tpu.memory_space<vmem>>, vector<8x128xbf16>
    %c5_117 = arith.constant 5 : index
    %c0_118 = arith.constant 0 : index
    %c0_119 = arith.constant 0 : index
    %128 = vector.load %arg4[%c5_117, %c0_118, %c0_119] : memref<9x128x128xbf16, #tpu.memory_space<vmem>>, vector<1x128x128xbf16>
    %129 = vector.shape_cast %128 : vector<1x128x128xbf16> to vector<128x128xbf16>
    %cst_120 = arith.constant dense<0.000000e+00> : vector<8x128xf32>
    %130 = tpu.matmul %127, %129, %cst_120 {dimension_numbers = #tpu.dot_dimension_numbers<[1], [0], [0], [1], [0, 0, 1, 1], [], []>} : vector<8x128xbf16>, vector<128x128xbf16>, vector<8x128xf32> -> vector<8x128xf32>
    %131 = arith.addf %126, %130 : vector<8x128xf32>
    %c19_121 = arith.constant 19 : index
    %c0_122 = arith.constant 0 : index
    %132 = vector.load %arg8[%c19_121, %c0_122] : memref<32x128xbf16, #tpu.memory_space<vmem>>, vector<8x128xbf16>
    %c6_123 = arith.constant 6 : index
    %c0_124 = arith.constant 0 : index
    %c0_125 = arith.constant 0 : index
    %133 = vector.load %arg4[%c6_123, %c0_124, %c0_125] : memref<9x128x128xbf16, #tpu.memory_space<vmem>>, vector<1x128x128xbf16>
    %134 = vector.shape_cast %133 : vector<1x128x128xbf16> to vector<128x128xbf16>
    %cst_126 = arith.constant dense<0.000000e+00> : vector<8x128xf32>
    %135 = tpu.matmul %132, %134, %cst_126 {dimension_numbers = #tpu.dot_dimension_numbers<[1], [0], [0], [1], [0, 0, 1, 1], [], []>} : vector<8x128xbf16>, vector<128x128xbf16>, vector<8x128xf32> -> vector<8x128xf32>
    %136 = arith.addf %131, %135 : vector<8x128xf32>
    %c20_127 = arith.constant 20 : index
    %c0_128 = arith.constant 0 : index
    %137 = vector.load %arg8[%c20_127, %c0_128] : memref<32x128xbf16, #tpu.memory_space<vmem>>, vector<8x128xbf16>
    %c7_129 = arith.constant 7 : index
    %c0_130 = arith.constant 0 : index
    %c0_131 = arith.constant 0 : index
    %138 = vector.load %arg4[%c7_129, %c0_130, %c0_131] : memref<9x128x128xbf16, #tpu.memory_space<vmem>>, vector<1x128x128xbf16>
    %139 = vector.shape_cast %138 : vector<1x128x128xbf16> to vector<128x128xbf16>
    %cst_132 = arith.constant dense<0.000000e+00> : vector<8x128xf32>
    %140 = tpu.matmul %137, %139, %cst_132 {dimension_numbers = #tpu.dot_dimension_numbers<[1], [0], [0], [1], [0, 0, 1, 1], [], []>} : vector<8x128xbf16>, vector<128x128xbf16>, vector<8x128xf32> -> vector<8x128xf32>
    %141 = arith.addf %136, %140 : vector<8x128xf32>
    %c21_133 = arith.constant 21 : index
    %c0_134 = arith.constant 0 : index
    %142 = vector.load %arg8[%c21_133, %c0_134] : memref<32x128xbf16, #tpu.memory_space<vmem>>, vector<8x128xbf16>
    %c8_135 = arith.constant 8 : index
    %c0_136 = arith.constant 0 : index
    %c0_137 = arith.constant 0 : index
    %143 = vector.load %arg4[%c8_135, %c0_136, %c0_137] : memref<9x128x128xbf16, #tpu.memory_space<vmem>>, vector<1x128x128xbf16>
    %144 = vector.shape_cast %143 : vector<1x128x128xbf16> to vector<128x128xbf16>
    %cst_138 = arith.constant dense<0.000000e+00> : vector<8x128xf32>
    %145 = tpu.matmul %142, %144, %cst_138 {dimension_numbers = #tpu.dot_dimension_numbers<[1], [0], [0], [1], [0, 0, 1, 1], [], []>} : vector<8x128xbf16>, vector<128x128xbf16>, vector<8x128xf32> -> vector<8x128xf32>
    %146 = arith.addf %141, %145 : vector<8x128xf32>
    %147 = vector.extract_strided_slice %4 {offsets = [2, 0], sizes = [1, 128], strides = [1, 1]} : vector<3x128xf32> to vector<1x128xf32>
    %148 = vector.broadcast %147 : vector<1x128xf32> to vector<8x128xf32>
    %149 = arith.addf %146, %148 : vector<8x128xf32>
    %150 = arith.addf %149, %41 : vector<8x128xf32>
    %cst_139 = arith.constant 0.000000e+00 : f32
    %151 = vector.broadcast %cst_139 : f32 to vector<8x128xf32>
    %152 = arith.maximumf %150, %151 : vector<8x128xf32>
    %cst_140 = arith.constant 0.000000e+00 : f32
    %153 = vector.shape_cast %7 : vector<8x1xi1> to vector<8x1xi1>
    %154 = vector.broadcast %153 : vector<8x1xi1> to vector<8x128xi1>
    %155 = vector.broadcast %cst_140 : f32 to vector<8x128xf32>
    %156 = arith.select %154, %152, %155 : vector<8x128xi1>, vector<8x128xf32>
    %157 = arith.truncf %156 : vector<8x128xf32> to vector<8x128xbf16>
    %c0_141 = arith.constant 0 : index
    %c0_142 = arith.constant 0 : index
    %c0_143 = arith.constant 0 : index
    %158 = vector.load %arg7[%c0_141, %c0_142, %c0_143] : memref<1x8x128xbf16, #tpu.memory_space<vmem>>, vector<1x8x128xbf16>
    %159 = vector.shape_cast %158 : vector<1x8x128xbf16> to vector<8x128xbf16>
    %160 = vector.shape_cast %157 : vector<8x128xbf16> to vector<1x8x128xbf16>
    tpu.vector_store %arg7[%c0_141, %c0_142, %c0_143], %160 {strides = array<i32>} : memref<1x8x128xbf16, #tpu.memory_space<vmem>>, vector<1x8x128xbf16>,
    return
  }
  func.func @transform_0(%arg0: i32) -> (i32, i32, i32) {
    %c0_i32 = arith.constant 0 : i32
    %c0_i32_0 = arith.constant 0 : i32
    %c0_i32_1 = arith.constant 0 : i32
    return %arg0, %c0_i32, %c0_i32_0 : i32, i32, i32
  }
  func.func @transform_1(%arg0: i32) -> (i32, i32, i32) {
    %c0_i32 = arith.constant 0 : i32
    %c0_i32_0 = arith.constant 0 : i32
    %c0_i32_1 = arith.constant 0 : i32
    %c0_i32_2 = arith.constant 0 : i32
    return %c0_i32, %c0_i32_0, %c0_i32_1 : i32, i32, i32
  }
  func.func @transform_2(%arg0: i32) -> (i32, i32, i32) {
    %c0_i32 = arith.constant 0 : i32
    %c0_i32_0 = arith.constant 0 : i32
    %c0_i32_1 = arith.constant 0 : i32
    %c0_i32_2 = arith.constant 0 : i32
    return %c0_i32, %c0_i32_0, %c0_i32_1 : i32, i32, i32
  }
  func.func @transform_3(%arg0: i32) -> (i32, i32, i32) {
    %c0_i32 = arith.constant 0 : i32
    %c0_i32_0 = arith.constant 0 : i32
    %c0_i32_1 = arith.constant 0 : i32
    %c0_i32_2 = arith.constant 0 : i32
    return %c0_i32, %c0_i32_0, %c0_i32_1 : i32, i32, i32
  }
  func.func @transform_4(%arg0: i32) -> (i32, i32) {
    %c0_i32 = arith.constant 0 : i32
    %c0_i32_0 = arith.constant 0 : i32
    %c0_i32_1 = arith.constant 0 : i32
    return %c0_i32, %c0_i32_0 : i32, i32
  }
  func.func @transform_5(%arg0: i32) -> (i32, i32) {
    %c0_i32 = arith.constant 0 : i32
    %c0_i32_0 = arith.constant 0 : i32
    %c0_i32_1 = arith.constant 0 : i32
    return %c0_i32, %c0_i32_0 : i32, i32
  }
  func.func @transform_6(%arg0: i32) -> (i32, i32, i32) {
    %c0_i32 = arith.constant 0 : i32
    %c0_i32_0 = arith.constant 0 : i32
    %c0_i32_1 = arith.constant 0 : i32
    return %arg0, %c0_i32, %c0_i32_0 : i32, i32, i32
  }
}

</mosaic_0001>

<llo_original>
// kernel: encoder_flow.4
$region0: #{encoder_flow.4}
  #allocation0 [shape = 'u32[]', space=smem, size = 0x4, offset = 0x4, fixed_abs, tag = 'smem constant byte address 0x4 - core index']
  #allocation1 [shape = 'u32[144,128]{1,0:T(1,128)}', space=vmem, size = 0x12000, scoped, tag = 'internal scratch']
  #allocation2 [shape = 'bf16[48,128]{1,0:T(16,128)(2,1)}', space=vmem, size = 0x3000, scoped, tag = 'scratch operand']
  %s0 = inlined_call_operand.vmem [shape: bf16[2,36,128], index: 0, kind: input, shape index: {}]
  %s1 = inlined_call_operand.vmem [shape: bf16[4,128,128], index: 1, kind: input, shape index: {}]
  %s2 = inlined_call_operand.vmem [shape: bf16[9,128,128], index: 2, kind: input, shape index: {}]
  %s3 = inlined_call_operand.vmem [shape: bf16[9,128,128], index: 3, kind: input, shape index: {}]
  %s4 = inlined_call_operand.vmem [shape: f32[3,128], index: 4, kind: input, shape index: {}]
  %s5 = inlined_call_operand.vmem [shape: f32[24,1], index: 5, kind: input, shape index: {}]
  %s6 = inlined_call_operand.vmem [shape: bf16[2,24,128], index: 6, kind: output, shape index: {}]
  %s7 = sld [smem:[#allocation0]]
  $region57: #{encoder_flow.4} parent=0
    _
  %s9 = ssub.s32 1, %s7
  %s10 = scalar_select 0, %s9, %s7
  loop: start=0, step=1, limit=4
  $region2: #{encoder_flow.4} parent=0 // loop_pre_header
    _
  $region3: #{encoder_flow.4} parent=0 // loop_header
    %s12 = sphi 0, %s16
    %p13 = scmp.ge.s32.totalorder %s12, 4
    %s22 = sphi 0, %s24
    %s25 = sphi 0, %s22
    %s26 = sphi 0, %s25
    %s42 = sphi 0, %s26
    %s46 = sphi 0, %s46
    %s48 = sphi 0, %s46
    %s49 = sphi 0, %s48
    %s63 = sphi 0, %s49
    %s67 = sphi 0, %s67
    %s69 = sphi 0, %s67
    %s70 = sphi 0, %s69
    %s84 = sphi 0, %s70
    %s88 = sphi 0, %s88
    %s90 = sphi 0, %s88
    %s91 = sphi 0, %s90
    %s105 = sphi 0, %s91
    %s109 = sphi 0, %s109
    %s111 = sphi 0, %s109
    %s112 = sphi 0, %s111
    %s126 = sphi 0, %s112
    %s130 = sphi 0, %s130
    %s132 = sphi 0, %s130
    %s133 = sphi 0, %s132
    %s147 = sphi 0, %s133
    %s153 = sphi 0, %s155
    %s156 = sphi 0, %s153
    %s157 = sphi 0, %s156
    %s173 = sphi 0, %s157
  $region4: #{encoder_flow.4} parent=0 // loop_header_branch
    %15 = sbr.rel (%p13) target = $region8
  $region5: #{encoder_flow.4} parent=0 // loop_body
    %s17 = ssub.s32 %s12, 1
    %s18 = ssub.s32 %s12, 2
    %s19 = sadd.s32 %s12, 1
    %s20 = ssub.s32 %s12, %s19
    %p21 = scmp.eq.s32.totalorder %s20, 0
    %s23 = sadd.s32 %s22, 1
    %s24 = scalar_select %p21, %s22, %s23
    %p27 = pneg %p21
    %p28 = scmp.eq.s32.totalorder %s12, 1
    %p29 = por %p27, %p28
    %p30 = scmp.ne.s32.totalorder %s22, %s25
    %p31 = scmp.eq.s32.totalorder %s12, 0
    %p32 = por %p30, %p31
    %p33 = scmp.ne.s32.totalorder %s22, %s25
    %p34 = scmp.eq.s32.totalorder %s17, 1
    %p35 = por %p33, %p34
    %p36 = scmp.ne.s32.totalorder %s25, %s26
    %p37 = scmp.eq.s32.totalorder %s17, 0
    %p38 = por %p36, %p37
    %p39 = scmp.ne.s32.totalorder %s25, %s26
    %p40 = scmp.eq.s32.totalorder %s18, 1
    %p41 = por %p39, %p40
    %p43 = scmp.ne.s32.totalorder %s26, %s42
    %p44 = scmp.eq.s32.totalorder %s18, 0
    %p45 = por %p43, %p44
    %s47 = sadd.s32 %s46, 1
    %p50 = scmp.eq.s32.totalorder %s12, 1
    %p51 = scmp.ne.s32.totalorder %s46, %s48
    %p52 = scmp.eq.s32.totalorder %s12, 0
    %p53 = por %p51, %p52
    %p54 = scmp.ne.s32.totalorder %s46, %s48
    %p55 = scmp.eq.s32.totalorder %s17, 1
    %p56 = por %p54, %p55
    %p57 = scmp.ne.s32.totalorder %s48, %s49
    %p58 = scmp.eq.s32.totalorder %s17, 0
    %p59 = por %p57, %p58
    %p60 = scmp.ne.s32.totalorder %s48, %s49
    %p61 = scmp.eq.s32.totalorder %s18, 1
    %p62 = por %p60, %p61
    %p64 = scmp.ne.s32.totalorder %s49, %s63
    %p65 = scmp.eq.s32.totalorder %s18, 0
    %p66 = por %p64, %p65
    %s68 = sadd.s32 %s67, 1
    %p71 = scmp.eq.s32.totalorder %s12, 1
    %p72 = scmp.ne.s32.totalorder %s67, %s69
    %p73 = scmp.eq.s32.totalorder %s12, 0
    %p74 = por %p72, %p73
    %p75 = scmp.ne.s32.totalorder %s67, %s69
    %p76 = scmp.eq.s32.totalorder %s17, 1
    %p77 = por %p75, %p76
    %p78 = scmp.ne.s32.totalorder %s69, %s70
    %p79 = scmp.eq.s32.totalorder %s17, 0
    %p80 = por %p78, %p79
    %p81 = scmp.ne.s32.totalorder %s69, %s70
    %p82 = scmp.eq.s32.totalorder %s18, 1
    %p83 = por %p81, %p82
    %p85 = scmp.ne.s32.totalorder %s70, %s84
    %p86 = scmp.eq.s32.totalorder %s18, 0
    %p87 = por %p85, %p86
    %s89 = sadd.s32 %s88, 1
    %p92 = scmp.eq.s32.totalorder %s12, 1
    %p93 = scmp.ne.s32.totalorder %s88, %s90
    %p94 = scmp.eq.s32.totalorder %s12, 0
    %p95 = por %p93, %p94
    %p96 = scmp.ne.s32.totalorder %s88, %s90
    %p97 = scmp.eq.s32.totalorder %s17, 1
    %p98 = por %p96, %p97
    %p99 = scmp.ne.s32.totalorder %s90, %s91
    %p100 = scmp.eq.s32.totalorder %s17, 0
    %p101 = por %p99, %p100
    %p102 = scmp.ne.s32.totalorder %s90, %s91
    %p103 = scmp.eq.s32.totalorder %s18, 1
    %p104 = por %p102, %p103
    %p106 = scmp.ne.s32.totalorder %s91, %s105
    %p107 = scmp.eq.s32.totalorder %s18, 0
    %p108 = por %p106, %p107
    %s110 = sadd.s32 %s109, 1
    %p113 = scmp.eq.s32.totalorder %s12, 1
    %p114 = scmp.ne.s32.totalorder %s109, %s111
    %p115 = scmp.eq.s32.totalorder %s12, 0
    %p116 = por %p114, %p115
    %p117 = scmp.ne.s32.totalorder %s109, %s111
    %p118 = scmp.eq.s32.totalorder %s17, 1
    %p119 = por %p117, %p118
    %p120 = scmp.ne.s32.totalorder %s111, %s112
    %p121 = scmp.eq.s32.totalorder %s17, 0
    %p122 = por %p120, %p121
    %p123 = scmp.ne.s32.totalorder %s111, %s112
    %p124 = scmp.eq.s32.totalorder %s18, 1
    %p125 = por %p123, %p124
    %p127 = scmp.ne.s32.totalorder %s112, %s126
    %p128 = scmp.eq.s32.totalorder %s18, 0
    %p129 = por %p127, %p128
    %s131 = sadd.s32 %s130, 1
    %p134 = scmp.eq.s32.totalorder %s12, 1
    %p135 = scmp.ne.s32.totalorder %s130, %s132
    %p136 = scmp.eq.s32.totalorder %s12, 0
    %p137 = por %p135, %p136
    %p138 = scmp.ne.s32.totalorder %s130, %s132
    %p139 = scmp.eq.s32.totalorder %s17, 1
    %p140 = por %p138, %p139
    %p141 = scmp.ne.s32.totalorder %s132, %s133
    %p142 = scmp.eq.s32.totalorder %s17, 0
    %p143 = por %p141, %p142
    %p144 = scmp.ne.s32.totalorder %s132, %s133
    %p145 = scmp.eq.s32.totalorder %s18, 1
    %p146 = por %p144, %p145
    %p148 = scmp.ne.s32.totalorder %s133, %s147
    %p149 = scmp.eq.s32.totalorder %s18, 0
    %p150 = por %p148, %p149
    %s151 = ssub.s32 %s12, %s19
    %p152 = scmp.eq.s32.totalorder %s151, 0
    %s154 = sadd.s32 %s153, 1
    %s155 = scalar_select %p152, %s153, %s154
    %p158 = pneg %p152
    %p159 = scmp.eq.s32.totalorder %s12, 1
    %p160 = por %p158, %p159
    %p161 = scmp.ne.s32.totalorder %s153, %s156
    %p162 = scmp.eq.s32.totalorder %s12, 0
    %p163 = por %p161, %p162
    %p164 = scmp.ne.s32.totalorder %s153, %s156
    %p165 = scmp.eq.s32.totalorder %s17, 1
    %p166 = por %p164, %p165
    %p167 = scmp.ne.s32.totalorder %s156, %s157
    %p168 = scmp.eq.s32.totalorder %s17, 0
    %p169 = por %p167, %p168
    %p170 = scmp.ne.s32.totalorder %s156, %s157
    %p171 = scmp.eq.s32.totalorder %s18, 1
    %p172 = por %p170, %p171
    %p174 = scmp.ne.s32.totalorder %s157, %s173
    %p175 = scmp.eq.s32.totalorder %s18, 0
    %p176 = por %p174, %p175
    %p177 = scmp.le.s32.totalorder 1, %s12
    %p178 = scmp.lt.s32.totalorder %s12, 3
    %p179 = pnand %p177, %p178
    %p180 = pneg %p179
    // Predicated region
    $region9: #{encoder_flow.4} parent=5 // pred_check
      _
    $region10: #{encoder_flow.4} parent=5 // pred_check_branch
      %182 = sbr.rel (%p179) target = $region12
    $region11: #{encoder_flow.4} parent=5 // pred_region
      %s183 = ssub.s32 %s12, 1
      // Predicated region
      $region13: #{encoder_flow.4} parent=11 // pred_check
        %p184 = pneg %p59
      $region14: #{encoder_flow.4} parent=11 // pred_check_branch
        %186 = sbr.rel (%p184) target = $region16
      $region15: #{encoder_flow.4} parent=11 // pred_region
        _
      $region16: #{encoder_flow.4} parent=11 // pred_fallthru
        _
      // Predicated region
      $region17: #{encoder_flow.4} parent=11 // pred_check
        %p187 = pneg %p80
      $region18: #{encoder_flow.4} parent=11 // pred_check_branch
        %189 = sbr.rel (%p187) target = $region20
      $region19: #{encoder_flow.4} parent=11 // pred_region
        _
      $region20: #{encoder_flow.4} parent=11 // pred_fallthru
        _
      // Predicated region
      $region21: #{encoder_flow.4} parent=11 // pred_check
        %p190 = pneg %p101
      $region22: #{encoder_flow.4} parent=11 // pred_check_branch
        %192 = sbr.rel (%p190) target = $region24
      $region23: #{encoder_flow.4} parent=11 // pred_region
        _
      $region24: #{encoder_flow.4} parent=11 // pred_fallthru
        _
      // Predicated region
      $region25: #{encoder_flow.4} parent=11 // pred_check
        %p193 = pneg %p122
      $region26: #{encoder_flow.4} parent=11 // pred_check_branch
        %195 = sbr.rel (%p193) target = $region28
      $region27: #{encoder_flow.4} parent=11 // pred_region
        _
      $region28: #{encoder_flow.4} parent=11 // pred_fallthru
        _
      // Predicated region
      $region29: #{encoder_flow.4} parent=11 // pred_check
        %p196 = pneg %p143
      $region30: #{encoder_flow.4} parent=11 // pred_check_branch
        %198 = sbr.rel (%p196) target = $region32
      $region31: #{encoder_flow.4} parent=11 // pred_region
        _
      $region32: #{encoder_flow.4} parent=11 // pred_fallthru
        _
    $region12: #{encoder_flow.4} parent=5 // pred_fallthru
      _
    %p199 = scmp.lt.s32.totalorder %s12, 2
    // Predicated region
    $region33: #{encoder_flow.4} parent=5 // pred_check
      %p200 = pneg %p199
    $region34: #{encoder_flow.4} parent=5 // pred_check_branch
      %202 = sbr.rel (%p200) target = $region36
    $region35: #{encoder_flow.4} parent=5 // pred_region
      // Predicated region
      $region37: #{encoder_flow.4} parent=35 // pred_check
        %p203 = pneg %p32
      $region38: #{encoder_flow.4} parent=35 // pred_check_branch
        %205 = sbr.rel (%p203) target = $region40
      $region39: #{encoder_flow.4} parent=35 // pred_region
        %p206 = scmp.lt.s32.totalorder %s12, 1
        %s207 = scalar_select %p206, %s12, 1
        %s208 = smul.addr %s207, 5
        %s209 = smul.addr %s208, 4
        %s210 = scalar_lea.vmem %s0, %s209
      $region40: #{encoder_flow.4} parent=35 // pred_fallthru
        _
    $region36: #{encoder_flow.4} parent=5 // pred_fallthru
      _
    %p211 = scmp.le.s32.totalorder 1, %s12
    %p212 = scmp.lt.s32.totalorder %s12, 3
    %p213 = pnand %p211, %p212
    %p214 = pneg %p213
    // Predicated region
    $region41: #{encoder_flow.4} parent=5 // pred_check
      _
    $region42: #{encoder_flow.4} parent=5 // pred_check_branch
      %216 = sbr.rel (%p213) target = $region44
    $region43: #{encoder_flow.4} parent=5 // pred_region
      %s217 = ssub.s32 %s12, 1
      %p218 = scmp.lt.s32.totalorder %s17, 1
      %s219 = scalar_select %p218, %s17, 1
      %s220 = smul.addr %s219, 5
      %s221 = smul.addr %s220, 4
      %s222 = scalar_lea.vmem %s0, %s221
      %p223 = pneg %p38
      %p224 = pneg %p35
      %p225 = pneg %p59
      %p226 = pneg %p56
      %p227 = pneg %p80
      %p228 = pneg %p77
      %p229 = pneg %p101
      %p230 = pneg %p98
      %p231 = pneg %p122
      %p232 = pneg %p119
      %p233 = pneg %p143
      %p234 = pneg %p140
      %p235 = pneg %p169
      %p236 = pneg %p166
      %p237 = scmp.lt.s32.totalorder %s17, 1
      %s238 = scalar_select %p237, %s17, 1
      %s239 = smul.addr %s238, 3
      %s240 = smul.addr %s239, 4
      %s241 = scalar_lea.vmem %s6, %s240
      %p242 = scmp.lt.s32.totalorder %s17, 1
      %s243 = scalar_select %p242, %s17, 1
      %s244 = smul.addr %s243, 5
      %s245 = smul.addr %s244, 4
      %s246 = scalar_lea.vmem %s0, %s245
      %p247 = scmp.lt.s32.totalorder %s17, 1
      %s248 = scalar_select %p247, %s17, 1
      %s249 = smul.addr %s248, 3
      %s250 = smul.addr %s249, 4
      %s251 = scalar_lea.vmem %s6, %s250
      %253 = vst [vmem:[#allocation2] sm:$0xff] 0
      %254 = vst [vmem:[#allocation2 + $0x10] sm:$0xff] 0
      %v255 = vld [vmem:[%s4] sm:$0x7]
      %v256 = vld [vmem:[%s5] sm:$0xff]
      %v257 = vld [vmem:[%s5 + $0x8] sm:$0xff]
      %v258 = vld [vmem:[%s5 + $0x10] sm:$0xff]
      %vm259 = vcmp.gt.f32.partialorder %v256, 0.0
      %vm260 = vcmp.gt.f32.partialorder %v257, 0.0
      %vm261 = vcmp.gt.f32.partialorder %v258, 0.0
      %v262 = vld [vmem:[%s246] sm:$0xf]
      %v263 = vld [vmem:[%s246 + $0x4] sm:$0xf]
      %v264 = vld [vmem:[%s246 + $0x8] sm:$0xf]
      %v265 = vld [vmem:[%s1] sm:$0xf]
      %v266 = vld [vmem:[%s1 + $0x4] sm:$0xf]
      %v267 = vld [vmem:[%s1 + $0x8] sm:$0xf]
      %v268 = vld [vmem:[%s1 + $0xc] sm:$0xf]
      %v269 = vld [vmem:[%s1 + $0x10] sm:$0xf]
      %v270 = vld [vmem:[%s1 + $0x14] sm:$0xf]
      %v271 = vld [vmem:[%s1 + $0x18] sm:$0xf]
      %v272 = vld [vmem:[%s1 + $0x1c] sm:$0xf]
      %v273 = vld [vmem:[%s1 + $0x20] sm:$0xf]
      %v274 = vld [vmem:[%s1 + $0x24] sm:$0xf]
      %v275 = vld [vmem:[%s1 + $0x28] sm:$0xf]
      %v276 = vld [vmem:[%s1 + $0x2c] sm:$0xf]
      %v277 = vld [vmem:[%s1 + $0x30] sm:$0xf]
      %v278 = vld [vmem:[%s1 + $0x34] sm:$0xf]
      %v279 = vld [vmem:[%s1 + $0x38] sm:$0xf]
      %v280 = vld [vmem:[%s1 + $0x3c] sm:$0xf]
      %v281 = vld [vmem:[%s246 + $0xc] sm:$0x1]
      %s282 = scalar_lea.vmem %s1, 64
      %v283 = vld [vmem:[%s282] sm:$0xf]
      %v284 = vld [vmem:[%s282 + $0x4] sm:$0xf]
      %v285 = vld [vmem:[%s282 + $0x8] sm:$0xf]
      %v286 = vld [vmem:[%s282 + $0xc] sm:$0xf]
      %v287 = vld [vmem:[%s282 + $0x10] sm:$0xf]
      %v288 = vld [vmem:[%s282 + $0x14] sm:$0xf]
      %v289 = vld [vmem:[%s282 + $0x18] sm:$0xf]
      %v290 = vld [vmem:[%s282 + $0x1c] sm:$0xf]
      %v291 = vld [vmem:[%s282 + $0x20] sm:$0xf]
      %v292 = vld [vmem:[%s282 + $0x24] sm:$0xf]
      %v293 = vld [vmem:[%s282 + $0x28] sm:$0xf]
      %v294 = vld [vmem:[%s282 + $0x2c] sm:$0xf]
      %v295 = vld [vmem:[%s282 + $0x30] sm:$0xf]
      %v296 = vld [vmem:[%s282 + $0x34] sm:$0xf]
      %v297 = vld [vmem:[%s282 + $0x38] sm:$0xf]
      %v298 = vld [vmem:[%s282 + $0x3c] sm:$0xf]
      %v303 = vunpack.c.l.b16 %v262
      %v304 = vunpack.c.l.b16 %v263
      %v305 = vunpack.c.l.b16 %v264
      %v306 = vunpack.c.l.b16 %v281
      %v307 = vpack.c.b16 %v304, %v303
      %v308 = vpack.c.b16 %v306, %v305
      %vm309 = vsmask.f32 7424
      %v311 = vshrl.u32 %v307, 16
      %v313 = vshll.u32 %v307, 16
      %v315 = vrot.slane %v313, 1
      %v316 = vor.u32 %v311, %v315
      %v318 = vshll.u32 %v308, 16
      %v320 = vrot.slane %v318, 1
      %v321 = vsel %vm309, %v316, %v320
      %v322 = vshrl.u32 %v308, 16
      %v324 = vor.u32 %v322, %v320
      %v343 = vunpack.c.l.b16 %v283
      %v344 = vunpack.c.l.b16 %v284
      %v345 = vunpack.c.l.b16 %v285
      %v346 = vunpack.c.l.b16 %v286
      %v347 = vunpack.c.l.b16 %v287
      %v348 = vunpack.c.l.b16 %v288
      %v349 = vunpack.c.l.b16 %v289
      %v350 = vunpack.c.l.b16 %v290
      %v351 = vunpack.c.l.b16 %v291
      %v352 = vunpack.c.l.b16 %v292
      %v353 = vunpack.c.l.b16 %v293
      %v354 = vunpack.c.l.b16 %v294
      %v355 = vunpack.c.l.b16 %v295
      %v356 = vunpack.c.l.b16 %v296
      %v357 = vunpack.c.l.b16 %v297
      %v358 = vunpack.c.l.b16 %v298
      %v359 = vpack.c.b16 %v344, %v343
      %v360 = vpack.c.b16 %v346, %v345
      %v361 = vpack.c.b16 %v348, %v347
      %v362 = vpack.c.b16 %v350, %v349
      %v363 = vpack.c.b16 %v352, %v351
      %v364 = vpack.c.b16 %v354, %v353
      %v365 = vpack.c.b16 %v356, %v355
      %v366 = vpack.c.b16 %v358, %v357
      %375 = vmatprep.subr.bf16.mxu0 0
      %376 = vmatpush1.bf16.msra.mxu0 %v359
      %377 = vmatprep.subr.bf16.mxu0 0
      %378 = vmatpush1.bf16.msra.mxu0 %v360
      %379 = vmatprep.subr.bf16.mxu0 0
      %380 = vmatpush1.bf16.msra.mxu0 %v361
      %381 = vmatprep.subr.bf16.mxu0 0
      %382 = vmatpush1.bf16.msra.mxu0 %v362
      %383 = vmatprep.subr.bf16.mxu0 0
      %384 = vmatpush1.bf16.msra.mxu0 %v363
      %385 = vmatprep.subr.bf16.mxu0 0
      %386 = vmatpush1.bf16.msra.mxu0 %v364
      %387 = vmatprep.subr.bf16.mxu0 0
      %388 = vmatpush1.bf16.msra.mxu0 %v365
      %389 = vmatprep.subr.bf16.mxu0 0
      %390 = vmatpush1.bf16.msra.mxu0 %v366
      %391 = vmatprep.subr.bf16.mxu0 0
      %392 = vmatpush1.bf16.msra.mxu0 0
      %393 = vmatprep.subr.bf16.mxu0 0
      %394 = vmatpush1.bf16.msra.mxu0 0
      %395 = vmatprep.subr.bf16.mxu0 0
      %396 = vmatpush1.bf16.msra.mxu0 0
      %397 = vmatprep.subr.bf16.mxu0 0
      %398 = vmatpush1.bf16.msra.mxu0 0
      %399 = vmatprep.subr.bf16.mxu0 0
      %400 = vmatpush1.bf16.msra.mxu0 0
      %401 = vmatprep.subr.bf16.mxu0 0
      %402 = vmatpush1.bf16.msra.mxu0 0
      %403 = vmatprep.subr.bf16.mxu0 0
      %404 = vmatpush1.bf16.msra.mxu0 0
      %405 = vmatprep.subr.bf16.mxu0 0
      %406 = vmatpush1.bf16.msra.mxu0 0
      %407 = vmatprep.mubr.bf16.mxu0 0
      %408 = vmatmul.mubr.bf16.gmra.mrb[0].mxu0 %v321
      %v409 = vpop.f32.mrb[0].mxu0
      %v410 = vadd.f32 0.0, %v409
      %v411 = vpop.f32.mrb[0].mxu0
      %v412 = vpop.f32.mrb[0].mxu0
      %v413 = vadd.f32 0.0, %v412
      %v414 = vpop.f32.mrb[0].mxu0
      %415 = vmatprep.mubr.bf16.mxu0 0
      %416 = vmatmul.mubr.bf16.gmra.mrb[0].mxu0 %v324
      %v417 = vpop.f32.mrb[0].mxu0
      %v418 = vadd.f32 0.0, %v417
      %v419 = vpop.f32.mrb[0].mxu0
      %v420 = vpop.f32.mrb[0].mxu0
      %v421 = vpop.f32.mrb[0].mxu0
      %422 = vdwg.mxu0
      %v423 = vpack.c.b16 %v305, %v305
      %v442 = vunpack.c.l.b16 %v265
      %v443 = vunpack.c.l.b16 %v266
      %v444 = vunpack.c.l.b16 %v267
      %v445 = vunpack.c.l.b16 %v268
      %v446 = vunpack.c.l.b16 %v269
      %v447 = vunpack.c.l.b16 %v270
      %v448 = vunpack.c.l.b16 %v271
      %v449 = vunpack.c.l.b16 %v272
      %v450 = vunpack.c.l.b16 %v273
      %v451 = vunpack.c.l.b16 %v274
      %v452 = vunpack.c.l.b16 %v275
      %v453 = vunpack.c.l.b16 %v276
      %v454 = vunpack.c.l.b16 %v277
      %v455 = vunpack.c.l.b16 %v278
      %v456 = vunpack.c.l.b16 %v279
      %v457 = vunpack.c.l.b16 %v280
      %v458 = vpack.c.b16 %v443, %v442
      %v459 = vpack.c.b16 %v445, %v444
      %v460 = vpack.c.b16 %v447, %v446
      %v461 = vpack.c.b16 %v449, %v448
      %v462 = vpack.c.b16 %v451, %v450
      %v463 = vpack.c.b16 %v453, %v452
      %v464 = vpack.c.b16 %v455, %v454
      %v465 = vpack.c.b16 %v457, %v456
      %474 = vmatprep.subr.bf16.mxu0 0
      %475 = vmatpush1.bf16.msra.mxu0 %v458
      %476 = vmatprep.subr.bf16.mxu0 0
      %477 = vmatpush1.bf16.msra.mxu0 %v459
      %478 = vmatprep.subr.bf16.mxu0 0
      %479 = vmatpush1.bf16.msra.mxu0 %v460
      %480 = vmatprep.subr.bf16.mxu0 0
      %481 = vmatpush1.bf16.msra.mxu0 %v461
      %482 = vmatprep.subr.bf16.mxu0 0
      %483 = vmatpush1.bf16.msra.mxu0 %v462
      %484 = vmatprep.subr.bf16.mxu0 0
      %485 = vmatpush1.bf16.msra.mxu0 %v463
      %486 = vmatprep.subr.bf16.mxu0 0
      %487 = vmatpush1.bf16.msra.mxu0 %v464
      %488 = vmatprep.subr.bf16.mxu0 0
      %489 = vmatpush1.bf16.msra.mxu0 %v465
      %490 = vmatprep.subr.bf16.mxu0 0
      %491 = vmatpush1.bf16.msra.mxu0 0
      %492 = vmatprep.subr.bf16.mxu0 0
      %493 = vmatpush1.bf16.msra.mxu0 0
      %494 = vmatprep.subr.bf16.mxu0 0
      %495 = vmatpush1.bf16.msra.mxu0 0
      %496 = vmatprep.subr.bf16.mxu0 0
      %497 = vmatpush1.bf16.msra.mxu0 0
      %498 = vmatprep.subr.bf16.mxu0 0
      %499 = vmatpush1.bf16.msra.mxu0 0
      %500 = vmatprep.subr.bf16.mxu0 0
      %501 = vmatpush1.bf16.msra.mxu0 0
      %502 = vmatprep.subr.bf16.mxu0 0
      %503 = vmatpush1.bf16.msra.mxu0 0
      %504 = vmatprep.subr.bf16.mxu0 0
      %505 = vmatpush1.bf16.msra.mxu0 0
      %506 = vmatprep.mubr.bf16.mxu0 0
      %507 = vmatmul.mubr.bf16.gmra.mrb[0].mxu0 %v307
      %v508 = vpop.f32.mrb[0].mxu0
      %v509 = vadd.f32 %v410, %v508
      %v510 = vpop.f32.mrb[0].mxu0
      %v511 = vpop.f32.mrb[0].mxu0
      %v512 = vadd.f32 %v413, %v511
      %v513 = vpop.f32.mrb[0].mxu0
      %514 = vmatprep.mubr.bf16.mxu0 0
      %515 = vmatmul.mubr.bf16.gmra.mrb[0].mxu0 %v423
      %v516 = vpop.f32.mrb[0].mxu0
      %v517 = vadd.f32 %v418, %v516
      %v518 = vpop.f32.mrb[0].mxu0
      %v519 = vpop.f32.mrb[0].mxu0
      %v520 = vpop.f32.mrb[0].mxu0
      %521 = vdwg.mxu0
      %v522 = vld [vmem:[%s246] sm:$0x8]
      %v523 = vld [vmem:[%s246 + $0xc] sm:$0x7]
      %s524 = scalar_lea.vmem %s1, 128
      %v525 = vld [vmem:[%s524] sm:$0xf]
      %v526 = vld [vmem:[%s524 + $0x4] sm:$0xf]
      %v527 = vld [vmem:[%s524 + $0x8] sm:$0xf]
      %v528 = vld [vmem:[%s524 + $0xc] sm:$0xf]
      %v529 = vld [vmem:[%s524 + $0x10] sm:$0xf]
      %v530 = vld [vmem:[%s524 + $0x14] sm:$0xf]
      %v531 = vld [vmem:[%s524 + $0x18] sm:$0xf]
      %v532 = vld [vmem:[%s524 + $0x1c] sm:$0xf]
      %v533 = vld [vmem:[%s524 + $0x20] sm:$0xf]
      %v534 = vld [vmem:[%s524 + $0x24] sm:$0xf]
      %v535 = vld [vmem:[%s524 + $0x28] sm:$0xf]
      %v536 = vld [vmem:[%s524 + $0x2c] sm:$0xf]
      %v537 = vld [vmem:[%s524 + $0x30] sm:$0xf]
      %v538 = vld [vmem:[%s524 + $0x34] sm:$0xf]
      %v539 = vld [vmem:[%s524 + $0x38] sm:$0xf]
      %v540 = vld [vmem:[%s524 + $0x3c] sm:$0xf]
      %v543 = vunpack.c.l.b16 %v522
      %v544 = vunpack.c.l.b16 %v523
      %v545 = vpack.c.b16 %v304, %v543
      %v546 = vpack.c.b16 %v544, %v305
      %vm547 = vcmask 1044480
      %v548 = vrot.slane %v545, 3
      %v549 = vrot.slane %v546, 3
      %v550 = vsel %vm547, %v548, %v549
      %v569 = vunpack.c.l.b16 %v525
      %v570 = vunpack.c.l.b16 %v526
      %v571 = vunpack.c.l.b16 %v527
      %v572 = vunpack.c.l.b16 %v528
      %v573 = vunpack.c.l.b16 %v529
      %v574 = vunpack.c.l.b16 %v530
      %v575 = vunpack.c.l.b16 %v531
      %v576 = vunpack.c.l.b16 %v532
      %v577 = vunpack.c.l.b16 %v533
      %v578 = vunpack.c.l.b16 %v534
      %v579 = vunpack.c.l.b16 %v535
      %v580 = vunpack.c.l.b16 %v536
      %v581 = vunpack.c.l.b16 %v537
      %v582 = vunpack.c.l.b16 %v538
      %v583 = vunpack.c.l.b16 %v539
      %v584 = vunpack.c.l.b16 %v540
      %v585 = vpack.c.b16 %v570, %v569
      %v586 = vpack.c.b16 %v572, %v571
      %v587 = vpack.c.b16 %v574, %v573
      %v588 = vpack.c.b16 %v576, %v575
      %v589 = vpack.c.b16 %v578, %v577
      %v590 = vpack.c.b16 %v580, %v579
      %v591 = vpack.c.b16 %v582, %v581
      %v592 = vpack.c.b16 %v584, %v583
      %601 = vmatprep.subr.bf16.mxu0 0
      %602 = vmatpush1.bf16.msra.mxu0 %v585
      %603 = vmatprep.subr.bf16.mxu0 0
      %604 = vmatpush1.bf16.msra.mxu0 %v586
      %605 = vmatprep.subr.bf16.mxu0 0
      %606 = vmatpush1.bf16.msra.mxu0 %v587
      %607 = vmatprep.subr.bf16.mxu0 0
      %608 = vmatpush1.bf16.msra.mxu0 %v588
      %609 = vmatprep.subr.bf16.mxu0 0
      %610 = vmatpush1.bf16.msra.mxu0 %v589
      %611 = vmatprep.subr.bf16.mxu0 0
      %612 = vmatpush1.bf16.msra.mxu0 %v590
      %613 = vmatprep.subr.bf16.mxu0 0
      %614 = vmatpush1.bf16.msra.mxu0 %v591
      %615 = vmatprep.subr.bf16.mxu0 0
      %616 = vmatpush1.bf16.msra.mxu0 %v592
      %617 = vmatprep.subr.bf16.mxu0 0
      %618 = vmatpush1.bf16.msra.mxu0 0
      %619 = vmatprep.subr.bf16.mxu0 0
      %620 = vmatpush1.bf16.msra.mxu0 0
      %621 = vmatprep.subr.bf16.mxu0 0
      %622 = vmatpush1.bf16.msra.mxu0 0
      %623 = vmatprep.subr.bf16.mxu0 0
      %624 = vmatpush1.bf16.msra.mxu0 0
      %625 = vmatprep.subr.bf16.mxu0 0
      %626 = vmatpush1.bf16.msra.mxu0 0
      %627 = vmatprep.subr.bf16.mxu0 0
      %628 = vmatpush1.bf16.msra.mxu0 0
      %629 = vmatprep.subr.bf16.mxu0 0
      %630 = vmatpush1.bf16.msra.mxu0 0
      %631 = vmatprep.subr.bf16.mxu0 0
      %632 = vmatpush1.bf16.msra.mxu0 0
      %633 = vmatprep.mubr.bf16.mxu0 0
      %634 = vmatmul.mubr.bf16.gmra.mrb[0].mxu0 %v550
      %v635 = vpop.f32.mrb[0].mxu0
      %v636 = vadd.f32 0.0, %v635
      %v637 = vpop.f32.mrb[0].mxu0
      %v638 = vpop.f32.mrb[0].mxu0
      %v639 = vadd.f32 0.0, %v638
      %v640 = vpop.f32.mrb[0].mxu0
      %641 = vmatprep.mubr.bf16.mxu0 0
      %642 = vmatmul.mubr.bf16.gmra.mrb[0].mxu0 %v549
      %v643 = vpop.f32.mrb[0].mxu0
      %v644 = vadd.f32 0.0, %v643
      %v645 = vpop.f32.mrb[0].mxu0
      %v646 = vpop.f32.mrb[0].mxu0
      %v647 = vpop.f32.mrb[0].mxu0
      %648 = vdwg.mxu0
      %v649 = vadd.f32 %v509, %v636
      %v650 = vadd.f32 %v512, %v639
      %v651 = vadd.f32 %v517, %v644
      %v652 = vld [vmem:[%s246 + $0xc] sm:$0xf]
      %s653 = scalar_lea.vmem %s1, 192
      %v654 = vld [vmem:[%s653] sm:$0xf]
      %v655 = vld [vmem:[%s653 + $0x4] sm:$0xf]
      %v656 = vld [vmem:[%s653 + $0x8] sm:$0xf]
      %v657 = vld [vmem:[%s653 + $0xc] sm:$0xf]
      %v658 = vld [vmem:[%s653 + $0x10] sm:$0xf]
      %v659 = vld [vmem:[%s653 + $0x14] sm:$0xf]
      %v660 = vld [vmem:[%s653 + $0x18] sm:$0xf]
      %v661 = vld [vmem:[%s653 + $0x1c] sm:$0xf]
      %v662 = vld [vmem:[%s653 + $0x20] sm:$0xf]
      %v663 = vld [vmem:[%s653 + $0x24] sm:$0xf]
      %v664 = vld [vmem:[%s653 + $0x28] sm:$0xf]
      %v665 = vld [vmem:[%s653 + $0x2c] sm:$0xf]
      %v666 = vld [vmem:[%s653 + $0x30] sm:$0xf]
      %v667 = vld [vmem:[%s653 + $0x34] sm:$0xf]
      %v668 = vld [vmem:[%s653 + $0x38] sm:$0xf]
      %v669 = vld [vmem:[%s653 + $0x3c] sm:$0xf]
      %v671 = vunpack.c.l.b16 %v652
      %v672 = vpack.c.b16 %v671, %v305
      %vm673 = vsmask.f32 4352
      %v675 = vshrl.u32 %v545, 16
      %v677 = vrot.slane %v675, 3
      %v678 = vshll.u32 %v545, 16
      %v680 = vrot.slane %v678, 4
      %v681 = vor.u32 %v677, %v680
      %v683 = vshrl.u32 %v672, 16
      %v685 = vrot.slane %v683, 3
      %v686 = vshll.u32 %v672, 16
      %v688 = vrot.slane %v686, 4
      %v689 = vor.u32 %v685, %v688
      %v690 = vsel %vm673, %v681, %v689
      %v709 = vunpack.c.l.b16 %v654
      %v710 = vunpack.c.l.b16 %v655
      %v711 = vunpack.c.l.b16 %v656
      %v712 = vunpack.c.l.b16 %v657
      %v713 = vunpack.c.l.b16 %v658
      %v714 = vunpack.c.l.b16 %v659
      %v715 = vunpack.c.l.b16 %v660
      %v716 = vunpack.c.l.b16 %v661
      %v717 = vunpack.c.l.b16 %v662
      %v718 = vunpack.c.l.b16 %v663
      %v719 = vunpack.c.l.b16 %v664
      %v720 = vunpack.c.l.b16 %v665
      %v721 = vunpack.c.l.b16 %v666
      %v722 = vunpack.c.l.b16 %v667
      %v723 = vunpack.c.l.b16 %v668
      %v724 = vunpack.c.l.b16 %v669
      %v725 = vpack.c.b16 %v710, %v709
      %v726 = vpack.c.b16 %v712, %v711
      %v727 = vpack.c.b16 %v714, %v713
      %v728 = vpack.c.b16 %v716, %v715
      %v729 = vpack.c.b16 %v718, %v717
      %v730 = vpack.c.b16 %v720, %v719
      %v731 = vpack.c.b16 %v722, %v721
      %v732 = vpack.c.b16 %v724, %v723
      %741 = vmatprep.subr.bf16.mxu0 0
      %742 = vmatpush1.bf16.msra.mxu0 %v725
      %743 = vmatprep.subr.bf16.mxu0 0
      %744 = vmatpush1.bf16.msra.mxu0 %v726
      %745 = vmatprep.subr.bf16.mxu0 0
      %746 = vmatpush1.bf16.msra.mxu0 %v727
      %747 = vmatprep.subr.bf16.mxu0 0
      %748 = vmatpush1.bf16.msra.mxu0 %v728
      %749 = vmatprep.subr.bf16.mxu0 0
      %750 = vmatpush1.bf16.msra.mxu0 %v729
      %751 = vmatprep.subr.bf16.mxu0 0
      %752 = vmatpush1.bf16.msra.mxu0 %v730
      %753 = vmatprep.subr.bf16.mxu0 0
      %754 = vmatpush1.bf16.msra.mxu0 %v731
      %755 = vmatprep.subr.bf16.mxu0 0
      %756 = vmatpush1.bf16.msra.mxu0 %v732
      %757 = vmatprep.subr.bf16.mxu0 0
      %758 = vmatpush1.bf16.msra.mxu0 0
      %759 = vmatprep.subr.bf16.mxu0 0
      %760 = vmatpush1.bf16.msra.mxu0 0
      %761 = vmatprep.subr.bf16.mxu0 0
      %762 = vmatpush1.bf16.msra.mxu0 0
      %763 = vmatprep.subr.bf16.mxu0 0
      %764 = vmatpush1.bf16.msra.mxu0 0
      %765 = vmatprep.subr.bf16.mxu0 0
      %766 = vmatpush1.bf16.msra.mxu0 0
      %767 = vmatprep.subr.bf16.mxu0 0
      %768 = vmatpush1.bf16.msra.mxu0 0
      %769 = vmatprep.subr.bf16.mxu0 0
      %770 = vmatpush1.bf16.msra.mxu0 0
      %771 = vmatprep.subr.bf16.mxu0 0
      %772 = vmatpush1.bf16.msra.mxu0 0
      %773 = vmatprep.mubr.bf16.mxu0 0
      %774 = vmatmul.mubr.bf16.gmra.mrb[0].mxu0 %v690
      %v775 = vpop.f32.mrb[0].mxu0
      %v776 = vadd.f32 0.0, %v775
      %v777 = vpop.f32.mrb[0].mxu0
      %v778 = vpop.f32.mrb[0].mxu0
      %v779 = vadd.f32 0.0, %v778
      %v780 = vpop.f32.mrb[0].mxu0
      %781 = vmatprep.mubr.bf16.mxu0 0
      %782 = vmatmul.mubr.bf16.gmra.mrb[0].mxu0 %v689
      %v783 = vpop.f32.mrb[0].mxu0
      %v784 = vadd.f32 0.0, %v783
      %v785 = vpop.f32.mrb[0].mxu0
      %v786 = vpop.f32.mrb[0].mxu0
      %v787 = vpop.f32.mrb[0].mxu0
      %788 = vdwg.mxu0
      %v789 = vadd.f32 %v649, %v776
      %v790 = vadd.f32 %v650, %v779
      %v791 = vadd.f32 %v651, %v784
      %v792 = vlaneseq
      %v793 = vshrl.u32 %v792, 7
      %v794 = vsub.s32 0, %v793
      %v795 = vrot.slane %v255, %v794
      %v796 = vadd.f32 %v789, %v795
      %v797 = vadd.f32 %v790, %v795
      %v798 = vadd.f32 %v791, %v795
      %v799 = vmax.f32 %v796, 0.0
      %v800 = vmax.f32 %v797, 0.0
      %v801 = vmax.f32 %v798, 0.0
      %v802 = vsel %vm259, 1, 0
      %v803 = vsel %vm260, 1, 0
      %v804 = vsel %vm261, 1, 0
      %805 = vset.pattern.permute.xlu0 0
      %806 = vperm.xlu0 %805, %v802
      %v807 = vpop.permute.xlu0 %806
      %808 = vset.pattern.permute.xlu0 0
      %809 = vperm.xlu0 %808, %v803
      %v810 = vpop.permute.xlu0 %809
      %811 = vset.pattern.permute.xlu0 0
      %812 = vperm.xlu0 %811, %v804
      %v813 = vpop.permute.xlu0 %812
      %vm814 = vcmp.eq.s32.totalorder %v807, 1
      %vm815 = vcmp.eq.s32.totalorder %v810, 1
      %vm816 = vcmp.eq.s32.totalorder %v813, 1
      %v817 = vsel %vm814, %v799, 0.0
      %v818 = vsel %vm815, %v800, 0.0
      %v819 = vsel %vm816, %v801, 0.0
      %v820 = vpack.c.bf16 %v818, %v817
      %v821 = vpack.c.bf16 %v819, %v819
      %822 = vst [vmem:[#allocation2 + $0x8] sm:$0xff] %v820
      %823 = vst [vmem:[#allocation2 + $0x10] sm:$0xf] %v821
      %v824 = vld [vmem:[#allocation2] sm:$0xf0]
      %v825 = vld [vmem:[#allocation2 + $0x8] sm:$0xff]
      %v826 = vld [vmem:[#allocation2 + $0x10] sm:$0x1]
      %v827 = vld [vmem:[%s2] sm:$0xf]
      %v828 = vld [vmem:[%s2 + $0x4] sm:$0xf]
      %v829 = vld [vmem:[%s2 + $0x8] sm:$0xf]
      %v830 = vld [vmem:[%s2 + $0xc] sm:$0xf]
      %v831 = vld [vmem:[%s2 + $0x10] sm:$0xf]
      %v832 = vld [vmem:[%s2 + $0x14] sm:$0xf]
      %v833 = vld [vmem:[%s2 + $0x18] sm:$0xf]
      %v834 = vld [vmem:[%s2 + $0x1c] sm:$0xf]
      %v835 = vld [vmem:[%s2 + $0x20] sm:$0xf]
      %v836 = vld [vmem:[%s2 + $0x24] sm:$0xf]
      %v837 = vld [vmem:[%s2 + $0x28] sm:$0xf]
      %v838 = vld [vmem:[%s2 + $0x2c] sm:$0xf]
      %v839 = vld [vmem:[%s2 + $0x30] sm:$0xf]
      %v840 = vld [vmem:[%s2 + $0x34] sm:$0xf]
      %v841 = vld [vmem:[%s2 + $0x38] sm:$0xf]
      %v842 = vld [vmem:[%s2 + $0x3c] sm:$0xf]
      %v843 = vld [vmem:[#allocation2] sm:$0xe0]
      %s844 = scalar_lea.vmem %s2, 64
      %v845 = vld [vmem:[%s844] sm:$0xf]
      %v846 = vld [vmem:[%s844 + $0x4] sm:$0xf]
      %v847 = vld [vmem:[%s844 + $0x8] sm:$0xf]
      %v848 = vld [vmem:[%s844 + $0xc] sm:$0xf]
      %v849 = vld [vmem:[%s844 + $0x10] sm:$0xf]
      %v850 = vld [vmem:[%s844 + $0x14] sm:$0xf]
      %v851 = vld [vmem:[%s844 + $0x18] sm:$0xf]
      %v852 = vld [vmem:[%s844 + $0x1c] sm:$0xf]
      %v853 = vld [vmem:[%s844 + $0x20] sm:$0xf]
      %v854 = vld [vmem:[%s844 + $0x24] sm:$0xf]
      %v855 = vld [vmem:[%s844 + $0x28] sm:$0xf]
      %v856 = vld [vmem:[%s844 + $0x2c] sm:$0xf]
      %v857 = vld [vmem:[%s844 + $0x30] sm:$0xf]
      %v858 = vld [vmem:[%s844 + $0x34] sm:$0xf]
      %v859 = vld [vmem:[%s844 + $0x38] sm:$0xf]
      %v860 = vld [vmem:[%s844 + $0x3c] sm:$0xf]
      %vm864 = vcmask 1042432
      %v865 = vrot.slane %v843, 5
      %v866 = vrot.slane %v825, 5
      %v867 = vsel %vm864, %v865, %v866
      %v868 = vrot.slane %v826, 5
      %v869 = vsel %vm864, %v866, %v868
      %v888 = vunpack.c.l.b16 %v845
      %v889 = vunpack.c.l.b16 %v846
      %v890 = vunpack.c.l.b16 %v847
      %v891 = vunpack.c.l.b16 %v848
      %v892 = vunpack.c.l.b16 %v849
      %v893 = vunpack.c.l.b16 %v850
      %v894 = vunpack.c.l.b16 %v851
      %v895 = vunpack.c.l.b16 %v852
      %v896 = vunpack.c.l.b16 %v853
      %v897 = vunpack.c.l.b16 %v854
      %v898 = vunpack.c.l.b16 %v855
      %v899 = vunpack.c.l.b16 %v856
      %v900 = vunpack.c.l.b16 %v857
      %v901 = vunpack.c.l.b16 %v858
      %v902 = vunpack.c.l.b16 %v859
      %v903 = vunpack.c.l.b16 %v860
      %v904 = vpack.c.b16 %v889, %v888
      %v905 = vpack.c.b16 %v891, %v890
      %v906 = vpack.c.b16 %v893, %v892
      %v907 = vpack.c.b16 %v895, %v894
      %v908 = vpack.c.b16 %v897, %v896
      %v909 = vpack.c.b16 %v899, %v898
      %v910 = vpack.c.b16 %v901, %v900
      %v911 = vpack.c.b16 %v903, %v902
      %920 = vmatprep.subr.bf16.mxu0 0
      %921 = vmatpush1.bf16.msra.mxu0 %v904
      %922 = vmatprep.subr.bf16.mxu0 0
      %923 = vmatpush1.bf16.msra.mxu0 %v905
      %924 = vmatprep.subr.bf16.mxu0 0
      %925 = vmatpush1.bf16.msra.mxu0 %v906
      %926 = vmatprep.subr.bf16.mxu0 0
      %927 = vmatpush1.bf16.msra.mxu0 %v907
      %928 = vmatprep.subr.bf16.mxu0 0
      %929 = vmatpush1.bf16.msra.mxu0 %v908
      %930 = vmatprep.subr.bf16.mxu0 0
      %931 = vmatpush1.bf16.msra.mxu0 %v909
      %932 = vmatprep.subr.bf16.mxu0 0
      %933 = vmatpush1.bf16.msra.mxu0 %v910
      %934 = vmatprep.subr.bf16.mxu0 0
      %935 = vmatpush1.bf16.msra.mxu0 %v911
      %936 = vmatprep.subr.bf16.mxu0 0
      %937 = vmatpush1.bf16.msra.mxu0 0
      %938 = vmatprep.subr.bf16.mxu0 0
      %939 = vmatpush1.bf16.msra.mxu0 0
      %940 = vmatprep.subr.bf16.mxu0 0
      %941 = vmatpush1.bf16.msra.mxu0 0
      %942 = vmatprep.subr.bf16.mxu0 0
      %943 = vmatpush1.bf16.msra.mxu0 0
      %944 = vmatprep.subr.bf16.mxu0 0
      %945 = vmatpush1.bf16.msra.mxu0 0
      %946 = vmatprep.subr.bf16.mxu0 0
      %947 = vmatpush1.bf16.msra.mxu0 0
      %948 = vmatprep.subr.bf16.mxu0 0
      %949 = vmatpush1.bf16.msra.mxu0 0
      %950 = vmatprep.subr.bf16.mxu0 0
      %951 = vmatpush1.bf16.msra.mxu0 0
      %952 = vmatprep.mubr.bf16.mxu0 0
      %953 = vmatmul.mubr.bf16.gmra.mrb[0].mxu0 %v867
      %v954 = vpop.f32.mrb[0].mxu0
      %v955 = vadd.f32 0.0, %v954
      %v956 = vpop.f32.mrb[0].mxu0
      %v957 = vpop.f32.mrb[0].mxu0
      %v958 = vadd.f32 0.0, %v957
      %v959 = vpop.f32.mrb[0].mxu0
      %960 = vmatprep.mubr.bf16.mxu0 0
      %961 = vmatmul.mubr.bf16.gmra.mrb[0].mxu0 %v869
      %v962 = vpop.f32.mrb[0].mxu0
      %v963 = vadd.f32 0.0, %v962
      %v964 = vpop.f32.mrb[0].mxu0
      %v965 = vpop.f32.mrb[0].mxu0
      %v966 = vpop.f32.mrb[0].mxu0
      %967 = vdwg.mxu0
      %vm968 = vsmask.f32 3328
      %v970 = vshrl.u32 %v824, 16
      %v972 = vrot.slane %v970, 4
      %v973 = vshll.u32 %v824, 16
      %v975 = vrot.slane %v973, 5
      %v976 = vor.u32 %v972, %v975
      %v978 = vshrl.u32 %v825, 16
      %v980 = vrot.slane %v978, 4
      %v981 = vshll.u32 %v825, 16
      %v983 = vrot.slane %v981, 5
      %v984 = vor.u32 %v980, %v983
      %v985 = vsel %vm968, %v976, %v984
      %v987 = vshll.u32 %v826, 16
      %v989 = vrot.slane %v987, 5
      %v990 = vsel %vm968, %v984, %v989
      %v1009 = vunpack.c.l.b16 %v827
      %v1010 = vunpack.c.l.b16 %v828
      %v1011 = vunpack.c.l.b16 %v829
      %v1012 = vunpack.c.l.b16 %v830
      %v1013 = vunpack.c.l.b16 %v831
      %v1014 = vunpack.c.l.b16 %v832
      %v1015 = vunpack.c.l.b16 %v833
      %v1016 = vunpack.c.l.b16 %v834
      %v1017 = vunpack.c.l.b16 %v835
      %v1018 = vunpack.c.l.b16 %v836
      %v1019 = vunpack.c.l.b16 %v837
      %v1020 = vunpack.c.l.b16 %v838
      %v1021 = vunpack.c.l.b16 %v839
      %v1022 = vunpack.c.l.b16 %v840
      %v1023 = vunpack.c.l.b16 %v841
      %v1024 = vunpack.c.l.b16 %v842
      %v1025 = vpack.c.b16 %v1010, %v1009
      %v1026 = vpack.c.b16 %v1012, %v1011
      %v1027 = vpack.c.b16 %v1014, %v1013
      %v1028 = vpack.c.b16 %v1016, %v1015
      %v1029 = vpack.c.b16 %v1018, %v1017
      %v1030 = vpack.c.b16 %v1020, %v1019
      %v1031 = vpack.c.b16 %v1022, %v1021
      %v1032 = vpack.c.b16 %v1024, %v1023
      %1041 = vmatprep.subr.bf16.mxu0 0
      %1042 = vmatpush1.bf16.msra.mxu0 %v1025
      %1043 = vmatprep.subr.bf16.mxu0 0
      %1044 = vmatpush1.bf16.msra.mxu0 %v1026
      %1045 = vmatprep.subr.bf16.mxu0 0
      %1046 = vmatpush1.bf16.msra.mxu0 %v1027
      %1047 = vmatprep.subr.bf16.mxu0 0
      %1048 = vmatpush1.bf16.msra.mxu0 %v1028
      %1049 = vmatprep.subr.bf16.mxu0 0
      %1050 = vmatpush1.bf16.msra.mxu0 %v1029
      %1051 = vmatprep.subr.bf16.mxu0 0
      %1052 = vmatpush1.bf16.msra.mxu0 %v1030
      %1053 = vmatprep.subr.bf16.mxu0 0
      %1054 = vmatpush1.bf16.msra.mxu0 %v1031
      %1055 = vmatprep.subr.bf16.mxu0 0
      %1056 = vmatpush1.bf16.msra.mxu0 %v1032
      %1057 = vmatprep.subr.bf16.mxu0 0
      %1058 = vmatpush1.bf16.msra.mxu0 0
      %1059 = vmatprep.subr.bf16.mxu0 0
      %1060 = vmatpush1.bf16.msra.mxu0 0
      %1061 = vmatprep.subr.bf16.mxu0 0
      %1062 = vmatpush1.bf16.msra.mxu0 0
      %1063 = vmatprep.subr.bf16.mxu0 0
      %1064 = vmatpush1.bf16.msra.mxu0 0
      %1065 = vmatprep.subr.bf16.mxu0 0
      %1066 = vmatpush1.bf16.msra.mxu0 0
      %1067 = vmatprep.subr.bf16.mxu0 0
      %1068 = vmatpush1.bf16.msra.mxu0 0
      %1069 = vmatprep.subr.bf16.mxu0 0
      %1070 = vmatpush1.bf16.msra.mxu0 0
      %1071 = vmatprep.subr.bf16.mxu0 0
      %1072 = vmatpush1.bf16.msra.mxu0 0
      %1073 = vmatprep.mubr.bf16.mxu0 0
      %1074 = vmatmul.mubr.bf16.gmra.mrb[0].mxu0 %v985
      %v1075 = vpop.f32.mrb[0].mxu0
      %v1076 = vadd.f32 %v955, %v1075
      %v1077 = vpop.f32.mrb[0].mxu0
      %v1078 = vpop.f32.mrb[0].mxu0
      %v1079 = vadd.f32 %v958, %v1078
      %v1080 = vpop.f32.mrb[0].mxu0
      %1081 = vmatprep.mubr.bf16.mxu0 0
      %1082 = vmatmul.mubr.bf16.gmra.mrb[0].mxu0 %v990
      %v1083 = vpop.f32.mrb[0].mxu0
      %v1084 = vadd.f32 %v963, %v1083
      %v1085 = vpop.f32.mrb[0].mxu0
      %v1086 = vpop.f32.mrb[0].mxu0
      %v1087 = vpop.f32.mrb[0].mxu0
      %1088 = vdwg.mxu0
      %v1089 = vld [vmem:[#allocation2 + $0x10] sm:$0x3]
      %s1090 = scalar_lea.vmem %s2, 128
      %v1091 = vld [vmem:[%s1090] sm:$0xf]
      %v1092 = vld [vmem:[%s1090 + $0x4] sm:$0xf]
      %v1093 = vld [vmem:[%s1090 + $0x8] sm:$0xf]
      %v1094 = vld [vmem:[%s1090 + $0xc] sm:$0xf]
      %v1095 = vld [vmem:[%s1090 + $0x10] sm:$0xf]
      %v1096 = vld [vmem:[%s1090 + $0x14] sm:$0xf]
      %v1097 = vld [vmem:[%s1090 + $0x18] sm:$0xf]
      %v1098 = vld [vmem:[%s1090 + $0x1c] sm:$0xf]
      %v1099 = vld [vmem:[%s1090 + $0x20] sm:$0xf]
      %v1100 = vld [vmem:[%s1090 + $0x24] sm:$0xf]
      %v1101 = vld [vmem:[%s1090 + $0x28] sm:$0xf]
      %v1102 = vld [vmem:[%s1090 + $0x2c] sm:$0xf]
      %v1103 = vld [vmem:[%s1090 + $0x30] sm:$0xf]
      %v1104 = vld [vmem:[%s1090 + $0x34] sm:$0xf]
      %v1105 = vld [vmem:[%s1090 + $0x38] sm:$0xf]
      %v1106 = vld [vmem:[%s1090 + $0x3c] sm:$0xf]
      %vm1107 = vsmask.f32 2304
      %v1109 = vshrl.u32 %v843, 16
      %v1111 = vrot.slane %v1109, 5
      %v1112 = vshll.u32 %v843, 16
      %v1114 = vrot.slane %v1112, 6
      %v1115 = vor.u32 %v1111, %v1114
      %v1116 = vrot.slane %v978, 5
      %v1117 = vrot.slane %v981, 6
      %v1118 = vor.u32 %v1116, %v1117
      %v1119 = vsel %vm1107, %v1115, %v1118
      %v1121 = vshrl.u32 %v1089, 16
      %v1123 = vrot.slane %v1121, 5
      %v1124 = vshll.u32 %v1089, 16
      %v1126 = vrot.slane %v1124, 6
      %v1127 = vor.u32 %v1123, %v1126
      %v1128 = vsel %vm1107, %v1118, %v1127
      %v1147 = vunpack.c.l.b16 %v1091
      %v1148 = vunpack.c.l.b16 %v1092
      %v1149 = vunpack.c.l.b16 %v1093
      %v1150 = vunpack.c.l.b16 %v1094
      %v1151 = vunpack.c.l.b16 %v1095
      %v1152 = vunpack.c.l.b16 %v1096
      %v1153 = vunpack.c.l.b16 %v1097
      %v1154 = vunpack.c.l.b16 %v1098
      %v1155 = vunpack.c.l.b16 %v1099
      %v1156 = vunpack.c.l.b16 %v1100
      %v1157 = vunpack.c.l.b16 %v1101
      %v1158 = vunpack.c.l.b16 %v1102
      %v1159 = vunpack.c.l.b16 %v1103
      %v1160 = vunpack.c.l.b16 %v1104
      %v1161 = vunpack.c.l.b16 %v1105
      %v1162 = vunpack.c.l.b16 %v1106
      %v1163 = vpack.c.b16 %v1148, %v1147
      %v1164 = vpack.c.b16 %v1150, %v1149
      %v1165 = vpack.c.b16 %v1152, %v1151
      %v1166 = vpack.c.b16 %v1154, %v1153
      %v1167 = vpack.c.b16 %v1156, %v1155
      %v1168 = vpack.c.b16 %v1158, %v1157
      %v1169 = vpack.c.b16 %v1160, %v1159
      %v1170 = vpack.c.b16 %v1162, %v1161
      %1179 = vmatprep.subr.bf16.mxu0 0
      %1180 = vmatpush1.bf16.msra.mxu0 %v1163
      %1181 = vmatprep.subr.bf16.mxu0 0
      %1182 = vmatpush1.bf16.msra.mxu0 %v1164
      %1183 = vmatprep.subr.bf16.mxu0 0
      %1184 = vmatpush1.bf16.msra.mxu0 %v1165
      %1185 = vmatprep.subr.bf16.mxu0 0
      %1186 = vmatpush1.bf16.msra.mxu0 %v1166
      %1187 = vmatprep.subr.bf16.mxu0 0
      %1188 = vmatpush1.bf16.msra.mxu0 %v1167
      %1189 = vmatprep.subr.bf16.mxu0 0
      %1190 = vmatpush1.bf16.msra.mxu0 %v1168
      %1191 = vmatprep.subr.bf16.mxu0 0
      %1192 = vmatpush1.bf16.msra.mxu0 %v1169
      %1193 = vmatprep.subr.bf16.mxu0 0
      %1194 = vmatpush1.bf16.msra.mxu0 %v1170
      %1195 = vmatprep.subr.bf16.mxu0 0
      %1196 = vmatpush1.bf16.msra.mxu0 0
      %1197 = vmatprep.subr.bf16.mxu0 0
      %1198 = vmatpush1.bf16.msra.mxu0 0
      %1199 = vmatprep.subr.bf16.mxu0 0
      %1200 = vmatpush1.bf16.msra.mxu0 0
      %1201 = vmatprep.subr.bf16.mxu0 0
      %1202 = vmatpush1.bf16.msra.mxu0 0
      %1203 = vmatprep.subr.bf16.mxu0 0
      %1204 = vmatpush1.bf16.msra.mxu0 0
      %1205 = vmatprep.subr.bf16.mxu0 0
      %1206 = vmatpush1.bf16.msra.mxu0 0
      %1207 = vmatprep.subr.bf16.mxu0 0
      %1208 = vmatpush1.bf16.msra.mxu0 0
      %1209 = vmatprep.subr.bf16.mxu0 0
      %1210 = vmatpush1.bf16.msra.mxu0 0
      %1211 = vmatprep.mubr.bf16.mxu0 0
      %1212 = vmatmul.mubr.bf16.gmra.mrb[0].mxu0 %v1119
      %v1213 = vpop.f32.mrb[0].mxu0
      %v1214 = vadd.f32 0.0, %v1213
      %v1215 = vpop.f32.mrb[0].mxu0
      %v1216 = vpop.f32.mrb[0].mxu0
      %v1217 = vadd.f32 0.0, %v1216
      %v1218 = vpop.f32.mrb[0].mxu0
      %1219 = vmatprep.mubr.bf16.mxu0 0
      %1220 = vmatmul.mubr.bf16.gmra.mrb[0].mxu0 %v1128
      %v1221 = vpop.f32.mrb[0].mxu0
      %v1222 = vadd.f32 0.0, %v1221
      %v1223 = vpop.f32.mrb[0].mxu0
      %v1224 = vpop.f32.mrb[0].mxu0
      %v1225 = vpop.f32.mrb[0].mxu0
      %1226 = vdwg.mxu0
      %v1227 = vadd.f32 %v1076, %v1214
      %v1228 = vadd.f32 %v1079, %v1217
      %v1229 = vadd.f32 %v1084, %v1222
      %v1230 = vld [vmem:[#allocation2] sm:$0x80]
      %v1231 = vld [vmem:[#allocation2 + $0x10] sm:$0xf]
      %s1232 = scalar_lea.vmem %s2, 192
      %v1233 = vld [vmem:[%s1232] sm:$0xf]
      %v1234 = vld [vmem:[%s1232 + $0x4] sm:$0xf]
      %v1235 = vld [vmem:[%s1232 + $0x8] sm:$0xf]
      %v1236 = vld [vmem:[%s1232 + $0xc] sm:$0xf]
      %v1237 = vld [vmem:[%s1232 + $0x10] sm:$0xf]
      %v1238 = vld [vmem:[%s1232 + $0x14] sm:$0xf]
      %v1239 = vld [vmem:[%s1232 + $0x18] sm:$0xf]
      %v1240 = vld [vmem:[%s1232 + $0x1c] sm:$0xf]
      %v1241 = vld [vmem:[%s1232 + $0x20] sm:$0xf]
      %v1242 = vld [vmem:[%s1232 + $0x24] sm:$0xf]
      %v1243 = vld [vmem:[%s1232 + $0x28] sm:$0xf]
      %v1244 = vld [vmem:[%s1232 + $0x2c] sm:$0xf]
      %v1245 = vld [vmem:[%s1232 + $0x30] sm:$0xf]
      %v1246 = vld [vmem:[%s1232 + $0x34] sm:$0xf]
      %v1247 = vld [vmem:[%s1232 + $0x38] sm:$0xf]
      %v1248 = vld [vmem:[%s1232 + $0x3c] sm:$0xf]
      %vm1249 = vsmask.f32 256
      %v1251 = vshrl.u32 %v1230, 16
      %v1253 = vrot.slane %v1251, 7
      %v1254 = vrot.slane %v978, 7
      %v1255 = vor.u32 %v1254, %v981
      %v1256 = vsel %vm1249, %v1253, %v1255
      %v1258 = vshrl.u32 %v1231, 16
      %v1260 = vrot.slane %v1258, 7
      %v1261 = vshll.u32 %v1231, 16
      %v1263 = vor.u32 %v1260, %v1261
      %v1264 = vsel %vm1249, %v1254, %v1263
      %v1283 = vunpack.c.l.b16 %v1233
      %v1284 = vunpack.c.l.b16 %v1234
      %v1285 = vunpack.c.l.b16 %v1235
      %v1286 = vunpack.c.l.b16 %v1236
      %v1287 = vunpack.c.l.b16 %v1237
      %v1288 = vunpack.c.l.b16 %v1238
      %v1289 = vunpack.c.l.b16 %v1239
      %v1290 = vunpack.c.l.b16 %v1240
      %v1291 = vunpack.c.l.b16 %v1241
      %v1292 = vunpack.c.l.b16 %v1242
      %v1293 = vunpack.c.l.b16 %v1243
      %v1294 = vunpack.c.l.b16 %v1244
      %v1295 = vunpack.c.l.b16 %v1245
      %v1296 = vunpack.c.l.b16 %v1246
      %v1297 = vunpack.c.l.b16 %v1247
      %v1298 = vunpack.c.l.b16 %v1248
      %v1299 = vpack.c.b16 %v1284, %v1283
      %v1300 = vpack.c.b16 %v1286, %v1285
      %v1301 = vpack.c.b16 %v1288, %v1287
      %v1302 = vpack.c.b16 %v1290, %v1289
      %v1303 = vpack.c.b16 %v1292, %v1291
      %v1304 = vpack.c.b16 %v1294, %v1293
      %v1305 = vpack.c.b16 %v1296, %v1295
      %v1306 = vpack.c.b16 %v1298, %v1297
      %1315 = vmatprep.subr.bf16.mxu0 0
      %1316 = vmatpush1.bf16.msra.mxu0 %v1299
      %1317 = vmatprep.subr.bf16.mxu0 0
      %1318 = vmatpush1.bf16.msra.mxu0 %v1300
      %1319 = vmatprep.subr.bf16.mxu0 0
      %1320 = vmatpush1.bf16.msra.mxu0 %v1301
      %1321 = vmatprep.subr.bf16.mxu0 0
      %1322 = vmatpush1.bf16.msra.mxu0 %v1302
      %1323 = vmatprep.subr.bf16.mxu0 0
      %1324 = vmatpush1.bf16.msra.mxu0 %v1303
      %1325 = vmatprep.subr.bf16.mxu0 0
      %1326 = vmatpush1.bf16.msra.mxu0 %v1304
      %1327 = vmatprep.subr.bf16.mxu0 0
      %1328 = vmatpush1.bf16.msra.mxu0 %v1305
      %1329 = vmatprep.subr.bf16.mxu0 0
      %1330 = vmatpush1.bf16.msra.mxu0 %v1306
      %1331 = vmatprep.subr.bf16.mxu0 0
      %1332 = vmatpush1.bf16.msra.mxu0 0
      %1333 = vmatprep.subr.bf16.mxu0 0
      %1334 = vmatpush1.bf16.msra.mxu0 0
      %1335 = vmatprep.subr.bf16.mxu0 0
      %1336 = vmatpush1.bf16.msra.mxu0 0
      %1337 = vmatprep.subr.bf16.mxu0 0
      %1338 = vmatpush1.bf16.msra.mxu0 0
      %1339 = vmatprep.subr.bf16.mxu0 0
      %1340 = vmatpush1.bf16.msra.mxu0 0
      %1341 = vmatprep.subr.bf16.mxu0 0
      %1342 = vmatpush1.bf16.msra.mxu0 0
      %1343 = vmatprep.subr.bf16.mxu0 0
      %1344 = vmatpush1.bf16.msra.mxu0 0
      %1345 = vmatprep.subr.bf16.mxu0 0
      %1346 = vmatpush1.bf16.msra.mxu0 0
      %1347 = vmatprep.mubr.bf16.mxu0 0
      %1348 = vmatmul.mubr.bf16.gmra.mrb[0].mxu0 %v1256
      %v1349 = vpop.f32.mrb[0].mxu0
      %v1350 = vadd.f32 0.0, %v1349
      %v1351 = vpop.f32.mrb[0].mxu0
      %v1352 = vpop.f32.mrb[0].mxu0
      %v1353 = vadd.f32 0.0, %v1352
      %v1354 = vpop.f32.mrb[0].mxu0
      %1355 = vmatprep.mubr.bf16.mxu0 0
      %1356 = vmatmul.mubr.bf16.gmra.mrb[0].mxu0 %v1264
      %v1357 = vpop.f32.mrb[0].mxu0
      %v1358 = vadd.f32 0.0, %v1357
      %v1359 = vpop.f32.mrb[0].mxu0
      %v1360 = vpop.f32.mrb[0].mxu0
      %v1361 = vpop.f32.mrb[0].mxu0
      %1362 = vdwg.mxu0
      %v1363 = vadd.f32 %v1227, %v1350
      %v1364 = vadd.f32 %v1228, %v1353
      %v1365 = vadd.f32 %v1229, %v1358
      %s1366 = scalar_lea.vmem %s2, 256
      %v1367 = vld [vmem:[%s1366] sm:$0xf]
      %v1368 = vld [vmem:[%s1366 + $0x4] sm:$0xf]
      %v1369 = vld [vmem:[%s1366 + $0x8] sm:$0xf]
      %v1370 = vld [vmem:[%s1366 + $0xc] sm:$0xf]
      %v1371 = vld [vmem:[%s1366 + $0x10] sm:$0xf]
      %v1372 = vld [vmem:[%s1366 + $0x14] sm:$0xf]
      %v1373 = vld [vmem:[%s1366 + $0x18] sm:$0xf]
      %v1374 = vld [vmem:[%s1366 + $0x1c] sm:$0xf]
      %v1375 = vld [vmem:[%s1366 + $0x20] sm:$0xf]
      %v1376 = vld [vmem:[%s1366 + $0x24] sm:$0xf]
      %v1377 = vld [vmem:[%s1366 + $0x28] sm:$0xf]
      %v1378 = vld [vmem:[%s1366 + $0x2c] sm:$0xf]
      %v1379 = vld [vmem:[%s1366 + $0x30] sm:$0xf]
      %v1380 = vld [vmem:[%s1366 + $0x34] sm:$0xf]
      %v1381 = vld [vmem:[%s1366 + $0x38] sm:$0xf]
      %v1382 = vld [vmem:[%s1366 + $0x3c] sm:$0xf]
      %v1399 = vunpack.c.l.b16 %v1367
      %v1400 = vunpack.c.l.b16 %v1368
      %v1401 = vunpack.c.l.b16 %v1369
      %v1402 = vunpack.c.l.b16 %v1370
      %v1403 = vunpack.c.l.b16 %v1371
      %v1404 = vunpack.c.l.b16 %v1372
      %v1405 = vunpack.c.l.b16 %v1373
      %v1406 = vunpack.c.l.b16 %v1374
      %v1407 = vunpack.c.l.b16 %v1375
      %v1408 = vunpack.c.l.b16 %v1376
      %v1409 = vunpack.c.l.b16 %v1377
      %v1410 = vunpack.c.l.b16 %v1378
      %v1411 = vunpack.c.l.b16 %v1379
      %v1412 = vunpack.c.l.b16 %v1380
      %v1413 = vunpack.c.l.b16 %v1381
      %v1414 = vunpack.c.l.b16 %v1382
      %v1415 = vpack.c.b16 %v1400, %v1399
      %v1416 = vpack.c.b16 %v1402, %v1401
      %v1417 = vpack.c.b16 %v1404, %v1403
      %v1418 = vpack.c.b16 %v1406, %v1405
      %v1419 = vpack.c.b16 %v1408, %v1407
      %v1420 = vpack.c.b16 %v1410, %v1409
      %v1421 = vpack.c.b16 %v1412, %v1411
      %v1422 = vpack.c.b16 %v1414, %v1413
      %1431 = vmatprep.subr.bf16.mxu0 0
      %1432 = vmatpush1.bf16.msra.mxu0 %v1415
      %1433 = vmatprep.subr.bf16.mxu0 0
      %1434 = vmatpush1.bf16.msra.mxu0 %v1416
      %1435 = vmatprep.subr.bf16.mxu0 0
      %1436 = vmatpush1.bf16.msra.mxu0 %v1417
      %1437 = vmatprep.subr.bf16.mxu0 0
      %1438 = vmatpush1.bf16.msra.mxu0 %v1418
      %1439 = vmatprep.subr.bf16.mxu0 0
      %1440 = vmatpush1.bf16.msra.mxu0 %v1419
      %1441 = vmatprep.subr.bf16.mxu0 0
      %1442 = vmatpush1.bf16.msra.mxu0 %v1420
      %1443 = vmatprep.subr.bf16.mxu0 0
      %1444 = vmatpush1.bf16.msra.mxu0 %v1421
      %1445 = vmatprep.subr.bf16.mxu0 0
      %1446 = vmatpush1.bf16.msra.mxu0 %v1422
      %1447 = vmatprep.subr.bf16.mxu0 0
      %1448 = vmatpush1.bf16.msra.mxu0 0
      %1449 = vmatprep.subr.bf16.mxu0 0
      %1450 = vmatpush1.bf16.msra.mxu0 0
      %1451 = vmatprep.subr.bf16.mxu0 0
      %1452 = vmatpush1.bf16.msra.mxu0 0
      %1453 = vmatprep.subr.bf16.mxu0 0
      %1454 = vmatpush1.bf16.msra.mxu0 0
      %1455 = vmatprep.subr.bf16.mxu0 0
      %1456 = vmatpush1.bf16.msra.mxu0 0
      %1457 = vmatprep.subr.bf16.mxu0 0
      %1458 = vmatpush1.bf16.msra.mxu0 0
      %1459 = vmatprep.subr.bf16.mxu0 0
      %1460 = vmatpush1.bf16.msra.mxu0 0
      %1461 = vmatprep.subr.bf16.mxu0 0
      %1462 = vmatpush1.bf16.msra.mxu0 0
      %1463 = vmatprep.mubr.bf16.mxu0 0
      %1464 = vmatmul.mubr.bf16.gmra.mrb[0].mxu0 %v825
      %v1465 = vpop.f32.mrb[0].mxu0
      %v1466 = vadd.f32 0.0, %v1465
      %v1467 = vpop.f32.mrb[0].mxu0
      %v1468 = vpop.f32.mrb[0].mxu0
      %v1469 = vadd.f32 0.0, %v1468
      %v1470 = vpop.f32.mrb[0].mxu0
      %1471 = vmatprep.mubr.bf16.mxu0 0
      %1472 = vmatmul.mubr.bf16.gmra.mrb[0].mxu0 %v1231
      %v1473 = vpop.f32.mrb[0].mxu0
      %v1474 = vadd.f32 0.0, %v1473
      %v1475 = vpop.f32.mrb[0].mxu0
      %v1476 = vpop.f32.mrb[0].mxu0
      %v1477 = vpop.f32.mrb[0].mxu0
      %1478 = vdwg.mxu0
      %v1479 = vadd.f32 %v1363, %v1466
      %v1480 = vadd.f32 %v1364, %v1469
      %v1481 = vadd.f32 %v1365, %v1474
      %v1482 = vld [vmem:[#allocation2 + $0x10] sm:$0x1f]
      %s1483 = scalar_lea.vmem %s2, 320
      %v1484 = vld [vmem:[%s1483] sm:$0xf]
      %v1485 = vld [vmem:[%s1483 + $0x4] sm:$0xf]
      %v1486 = vld [vmem:[%s1483 + $0x8] sm:$0xf]
      %v1487 = vld [vmem:[%s1483 + $0xc] sm:$0xf]
      %v1488 = vld [vmem:[%s1483 + $0x10] sm:$0xf]
      %v1489 = vld [vmem:[%s1483 + $0x14] sm:$0xf]
      %v1490 = vld [vmem:[%s1483 + $0x18] sm:$0xf]
      %v1491 = vld [vmem:[%s1483 + $0x1c] sm:$0xf]
      %v1492 = vld [vmem:[%s1483 + $0x20] sm:$0xf]
      %v1493 = vld [vmem:[%s1483 + $0x24] sm:$0xf]
      %v1494 = vld [vmem:[%s1483 + $0x28] sm:$0xf]
      %v1495 = vld [vmem:[%s1483 + $0x2c] sm:$0xf]
      %v1496 = vld [vmem:[%s1483 + $0x30] sm:$0xf]
      %v1497 = vld [vmem:[%s1483 + $0x34] sm:$0xf]
      %v1498 = vld [vmem:[%s1483 + $0x38] sm:$0xf]
      %v1499 = vld [vmem:[%s1483 + $0x3c] sm:$0xf]
      %v1500 = vrot.slane %v981, 1
      %v1501 = vor.u32 %v978, %v1500
      %v1503 = vshll.u32 %v1482, 16
      %v1505 = vrot.slane %v1503, 1
      %v1506 = vsel %vm309, %v1501, %v1505
      %v1507 = vshrl.u32 %v1482, 16
      %v1509 = vor.u32 %v1507, %v1505
      %v1528 = vunpack.c.l.b16 %v1484
      %v1529 = vunpack.c.l.b16 %v1485
      %v1530 = vunpack.c.l.b16 %v1486
      %v1531 = vunpack.c.l.b16 %v1487
      %v1532 = vunpack.c.l.b16 %v1488
      %v1533 = vunpack.c.l.b16 %v1489
      %v1534 = vunpack.c.l.b16 %v1490
      %v1535 = vunpack.c.l.b16 %v1491
      %v1536 = vunpack.c.l.b16 %v1492
      %v1537 = vunpack.c.l.b16 %v1493
      %v1538 = vunpack.c.l.b16 %v1494
      %v1539 = vunpack.c.l.b16 %v1495
      %v1540 = vunpack.c.l.b16 %v1496
      %v1541 = vunpack.c.l.b16 %v1497
      %v1542 = vunpack.c.l.b16 %v1498
      %v1543 = vunpack.c.l.b16 %v1499
      %v1544 = vpack.c.b16 %v1529, %v1528
      %v1545 = vpack.c.b16 %v1531, %v1530
      %v1546 = vpack.c.b16 %v1533, %v1532
      %v1547 = vpack.c.b16 %v1535, %v1534
      %v1548 = vpack.c.b16 %v1537, %v1536
      %v1549 = vpack.c.b16 %v1539, %v1538
      %v1550 = vpack.c.b16 %v1541, %v1540
      %v1551 = vpack.c.b16 %v1543, %v1542
      %1560 = vmatprep.subr.bf16.mxu0 0
      %1561 = vmatpush1.bf16.msra.mxu0 %v1544
      %1562 = vmatprep.subr.bf16.mxu0 0
      %1563 = vmatpush1.bf16.msra.mxu0 %v1545
      %1564 = vmatprep.subr.bf16.mxu0 0
      %1565 = vmatpush1.bf16.msra.mxu0 %v1546
      %1566 = vmatprep.subr.bf16.mxu0 0
      %1567 = vmatpush1.bf16.msra.mxu0 %v1547
      %1568 = vmatprep.subr.bf16.mxu0 0
      %1569 = vmatpush1.bf16.msra.mxu0 %v1548
      %1570 = vmatprep.subr.bf16.mxu0 0
      %1571 = vmatpush1.bf16.msra.mxu0 %v1549
      %1572 = vmatprep.subr.bf16.mxu0 0
      %1573 = vmatpush1.bf16.msra.mxu0 %v1550
      %1574 = vmatprep.subr.bf16.mxu0 0
      %1575 = vmatpush1.bf16.msra.mxu0 %v1551
      %1576 = vmatprep.subr.bf16.mxu0 0
      %1577 = vmatpush1.bf16.msra.mxu0 0
      %1578 = vmatprep.subr.bf16.mxu0 0
      %1579 = vmatpush1.bf16.msra.mxu0 0
      %1580 = vmatprep.subr.bf16.mxu0 0
      %1581 = vmatpush1.bf16.msra.mxu0 0
      %1582 = vmatprep.subr.bf16.mxu0 0
      %1583 = vmatpush1.bf16.msra.mxu0 0
      %1584 = vmatprep.subr.bf16.mxu0 0
      %1585 = vmatpush1.bf16.msra.mxu0 0
      %1586 = vmatprep.subr.bf16.mxu0 0
      %1587 = vmatpush1.bf16.msra.mxu0 0
      %1588 = vmatprep.subr.bf16.mxu0 0
      %1589 = vmatpush1.bf16.msra.mxu0 0
      %1590 = vmatprep.subr.bf16.mxu0 0
      %1591 = vmatpush1.bf16.msra.mxu0 0
      %1592 = vmatprep.mubr.bf16.mxu0 0
      %1593 = vmatmul.mubr.bf16.gmra.mrb[0].mxu0 %v1506
      %v1594 = vpop.f32.mrb[0].mxu0
      %v1595 = vadd.f32 0.0, %v1594
      %v1596 = vpop.f32.mrb[0].mxu0
      %v1597 = vpop.f32.mrb[0].mxu0
      %v1598 = vadd.f32 0.0, %v1597
      %v1599 = vpop.f32.mrb[0].mxu0
      %1600 = vmatprep.mubr.bf16.mxu0 0
      %1601 = vmatmul.mubr.bf16.gmra.mrb[0].mxu0 %v1509
      %v1602 = vpop.f32.mrb[0].mxu0
      %v1603 = vadd.f32 0.0, %v1602
      %v1604 = vpop.f32.mrb[0].mxu0
      %v1605 = vpop.f32.mrb[0].mxu0
      %v1606 = vpop.f32.mrb[0].mxu0
      %1607 = vdwg.mxu0
      %v1608 = vadd.f32 %v1479, %v1595
      %v1609 = vadd.f32 %v1480, %v1598
      %v1610 = vadd.f32 %v1481, %v1603
      %v1611 = vld [vmem:[#allocation2 + $0x8] sm:$0xfc]
      %v1612 = vld [vmem:[#allocation2 + $0x10] sm:$0x7f]
      %s1613 = scalar_lea.vmem %s2, 384
      %v1614 = vld [vmem:[%s1613] sm:$0xf]
      %v1615 = vld [vmem:[%s1613 + $0x4] sm:$0xf]
      %v1616 = vld [vmem:[%s1613 + $0x8] sm:$0xf]
      %v1617 = vld [vmem:[%s1613 + $0xc] sm:$0xf]
      %v1618 = vld [vmem:[%s1613 + $0x10] sm:$0xf]
      %v1619 = vld [vmem:[%s1613 + $0x14] sm:$0xf]
      %v1620 = vld [vmem:[%s1613 + $0x18] sm:$0xf]
      %v1621 = vld [vmem:[%s1613 + $0x1c] sm:$0xf]
      %v1622 = vld [vmem:[%s1613 + $0x20] sm:$0xf]
      %v1623 = vld [vmem:[%s1613 + $0x24] sm:$0xf]
      %v1624 = vld [vmem:[%s1613 + $0x28] sm:$0xf]
      %v1625 = vld [vmem:[%s1613 + $0x2c] sm:$0xf]
      %v1626 = vld [vmem:[%s1613 + $0x30] sm:$0xf]
      %v1627 = vld [vmem:[%s1613 + $0x34] sm:$0xf]
      %v1628 = vld [vmem:[%s1613 + $0x38] sm:$0xf]
      %v1629 = vld [vmem:[%s1613 + $0x3c] sm:$0xf]
      %vm1630 = vsmask.f32 5376
      %v1632 = vshrl.u32 %v1611, 16
      %v1634 = vrot.slane %v1632, 2
      %v1635 = vshll.u32 %v1611, 16
      %v1637 = vrot.slane %v1635, 3
      %v1638 = vor.u32 %v1634, %v1637
      %v1640 = vshrl.u32 %v1612, 16
      %v1642 = vrot.slane %v1640, 2
      %v1643 = vshll.u32 %v1612, 16
      %v1645 = vrot.slane %v1643, 3
      %v1646 = vor.u32 %v1642, %v1645
      %v1647 = vsel %vm1630, %v1638, %v1646
      %v1666 = vunpack.c.l.b16 %v1614
      %v1667 = vunpack.c.l.b16 %v1615
      %v1668 = vunpack.c.l.b16 %v1616
      %v1669 = vunpack.c.l.b16 %v1617
      %v1670 = vunpack.c.l.b16 %v1618
      %v1671 = vunpack.c.l.b16 %v1619
      %v1672 = vunpack.c.l.b16 %v1620
      %v1673 = vunpack.c.l.b16 %v1621
      %v1674 = vunpack.c.l.b16 %v1622
      %v1675 = vunpack.c.l.b16 %v1623
      %v1676 = vunpack.c.l.b16 %v1624
      %v1677 = vunpack.c.l.b16 %v1625
      %v1678 = vunpack.c.l.b16 %v1626
      %v1679 = vunpack.c.l.b16 %v1627
      %v1680 = vunpack.c.l.b16 %v1628
      %v1681 = vunpack.c.l.b16 %v1629
      %v1682 = vpack.c.b16 %v1667, %v1666
      %v1683 = vpack.c.b16 %v1669, %v1668
      %v1684 = vpack.c.b16 %v1671, %v1670
      %v1685 = vpack.c.b16 %v1673, %v1672
      %v1686 = vpack.c.b16 %v1675, %v1674
      %v1687 = vpack.c.b16 %v1677, %v1676
      %v1688 = vpack.c.b16 %v1679, %v1678
      %v1689 = vpack.c.b16 %v1681, %v1680
      %1698 = vmatprep.subr.bf16.mxu0 0
      %1699 = vmatpush1.bf16.msra.mxu0 %v1682
      %1700 = vmatprep.subr.bf16.mxu0 0
      %1701 = vmatpush1.bf16.msra.mxu0 %v1683
      %1702 = vmatprep.subr.bf16.mxu0 0
      %1703 = vmatpush1.bf16.msra.mxu0 %v1684
      %1704 = vmatprep.subr.bf16.mxu0 0
      %1705 = vmatpush1.bf16.msra.mxu0 %v1685
      %1706 = vmatprep.subr.bf16.mxu0 0
      %1707 = vmatpush1.bf16.msra.mxu0 %v1686
      %1708 = vmatprep.subr.bf16.mxu0 0
      %1709 = vmatpush1.bf16.msra.mxu0 %v1687
      %1710 = vmatprep.subr.bf16.mxu0 0
      %1711 = vmatpush1.bf16.msra.mxu0 %v1688
      %1712 = vmatprep.subr.bf16.mxu0 0
      %1713 = vmatpush1.bf16.msra.mxu0 %v1689
      %1714 = vmatprep.subr.bf16.mxu0 0
      %1715 = vmatpush1.bf16.msra.mxu0 0
      %1716 = vmatprep.subr.bf16.mxu0 0
      %1717 = vmatpush1.bf16.msra.mxu0 0
      %1718 = vmatprep.subr.bf16.mxu0 0
      %1719 = vmatpush1.bf16.msra.mxu0 0
      %1720 = vmatprep.subr.bf16.mxu0 0
      %1721 = vmatpush1.bf16.msra.mxu0 0
      %1722 = vmatprep.subr.bf16.mxu0 0
      %1723 = vmatpush1.bf16.msra.mxu0 0
      %1724 = vmatprep.subr.bf16.mxu0 0
      %1725 = vmatpush1.bf16.msra.mxu0 0
      %1726 = vmatprep.subr.bf16.mxu0 0
      %1727 = vmatpush1.bf16.msra.mxu0 0
      %1728 = vmatprep.subr.bf16.mxu0 0
      %1729 = vmatpush1.bf16.msra.mxu0 0
      %1730 = vmatprep.mubr.bf16.mxu0 0
      %1731 = vmatmul.mubr.bf16.gmra.mrb[0].mxu0 %v1647
      %v1732 = vpop.f32.mrb[0].mxu0
      %v1733 = vadd.f32 0.0, %v1732
      %v1734 = vpop.f32.mrb[0].mxu0
      %v1735 = vpop.f32.mrb[0].mxu0
      %v1736 = vadd.f32 0.0, %v1735
      %v1737 = vpop.f32.mrb[0].mxu0
      %1738 = vmatprep.mubr.bf16.mxu0 0
      %1739 = vmatmul.mubr.bf16.gmra.mrb[0].mxu0 %v1646
      %v1740 = vpop.f32.mrb[0].mxu0
      %v1741 = vadd.f32 0.0, %v1740
      %v1742 = vpop.f32.mrb[0].mxu0
      %v1743 = vpop.f32.mrb[0].mxu0
      %v1744 = vpop.f32.mrb[0].mxu0
      %1745 = vdwg.mxu0
      %v1746 = vadd.f32 %v1608, %v1733
      %v1747 = vadd.f32 %v1609, %v1736
      %v1748 = vadd.f32 %v1610, %v1741
      %v1749 = vld [vmem:[#allocation2 + $0x8] sm:$0xf8]
      %s1750 = scalar_lea.vmem %s2, 448
      %v1751 = vld [vmem:[%s1750] sm:$0xf]
      %v1752 = vld [vmem:[%s1750 + $0x4] sm:$0xf]
      %v1753 = vld [vmem:[%s1750 + $0x8] sm:$0xf]
      %v1754 = vld [vmem:[%s1750 + $0xc] sm:$0xf]
      %v1755 = vld [vmem:[%s1750 + $0x10] sm:$0xf]
      %v1756 = vld [vmem:[%s1750 + $0x14] sm:$0xf]
      %v1757 = vld [vmem:[%s1750 + $0x18] sm:$0xf]
      %v1758 = vld [vmem:[%s1750 + $0x1c] sm:$0xf]
      %v1759 = vld [vmem:[%s1750 + $0x20] sm:$0xf]
      %v1760 = vld [vmem:[%s1750 + $0x24] sm:$0xf]
      %v1761 = vld [vmem:[%s1750 + $0x28] sm:$0xf]
      %v1762 = vld [vmem:[%s1750 + $0x2c] sm:$0xf]
      %v1763 = vld [vmem:[%s1750 + $0x30] sm:$0xf]
      %v1764 = vld [vmem:[%s1750 + $0x34] sm:$0xf]
      %v1765 = vld [vmem:[%s1750 + $0x38] sm:$0xf]
      %v1766 = vld [vmem:[%s1750 + $0x3c] sm:$0xf]
      %v1769 = vrot.slane %v1749, 3
      %v1770 = vrot.slane %v1612, 3
      %v1771 = vsel %vm547, %v1769, %v1770
      %v1790 = vunpack.c.l.b16 %v1751
      %v1791 = vunpack.c.l.b16 %v1752
      %v1792 = vunpack.c.l.b16 %v1753
      %v1793 = vunpack.c.l.b16 %v1754
      %v1794 = vunpack.c.l.b16 %v1755
      %v1795 = vunpack.c.l.b16 %v1756
      %v1796 = vunpack.c.l.b16 %v1757
      %v1797 = vunpack.c.l.b16 %v1758
      %v1798 = vunpack.c.l.b16 %v1759
      %v1799 = vunpack.c.l.b16 %v1760
      %v1800 = vunpack.c.l.b16 %v1761
      %v1801 = vunpack.c.l.b16 %v1762
      %v1802 = vunpack.c.l.b16 %v1763
      %v1803 = vunpack.c.l.b16 %v1764
      %v1804 = vunpack.c.l.b16 %v1765
      %v1805 = vunpack.c.l.b16 %v1766
      %v1806 = vpack.c.b16 %v1791, %v1790
      %v1807 = vpack.c.b16 %v1793, %v1792
      %v1808 = vpack.c.b16 %v1795, %v1794
      %v1809 = vpack.c.b16 %v1797, %v1796
      %v1810 = vpack.c.b16 %v1799, %v1798
      %v1811 = vpack.c.b16 %v1801, %v1800
      %v1812 = vpack.c.b16 %v1803, %v1802
      %v1813 = vpack.c.b16 %v1805, %v1804
      %1822 = vmatprep.subr.bf16.mxu0 0
      %1823 = vmatpush1.bf16.msra.mxu0 %v1806
      %1824 = vmatprep.subr.bf16.mxu0 0
      %1825 = vmatpush1.bf16.msra.mxu0 %v1807
      %1826 = vmatprep.subr.bf16.mxu0 0
      %1827 = vmatpush1.bf16.msra.mxu0 %v1808
      %1828 = vmatprep.subr.bf16.mxu0 0
      %1829 = vmatpush1.bf16.msra.mxu0 %v1809
      %1830 = vmatprep.subr.bf16.mxu0 0
      %1831 = vmatpush1.bf16.msra.mxu0 %v1810
      %1832 = vmatprep.subr.bf16.mxu0 0
      %1833 = vmatpush1.bf16.msra.mxu0 %v1811
      %1834 = vmatprep.subr.bf16.mxu0 0
      %1835 = vmatpush1.bf16.msra.mxu0 %v1812
      %1836 = vmatprep.subr.bf16.mxu0 0
      %1837 = vmatpush1.bf16.msra.mxu0 %v1813
      %1838 = vmatprep.subr.bf16.mxu0 0
      %1839 = vmatpush1.bf16.msra.mxu0 0
      %1840 = vmatprep.subr.bf16.mxu0 0
      %1841 = vmatpush1.bf16.msra.mxu0 0
      %1842 = vmatprep.subr.bf16.mxu0 0
      %1843 = vmatpush1.bf16.msra.mxu0 0
      %1844 = vmatprep.subr.bf16.mxu0 0
      %1845 = vmatpush1.bf16.msra.mxu0 0
      %1846 = vmatprep.subr.bf16.mxu0 0
      %1847 = vmatpush1.bf16.msra.mxu0 0
      %1848 = vmatprep.subr.bf16.mxu0 0
      %1849 = vmatpush1.bf16.msra.mxu0 0
      %1850 = vmatprep.subr.bf16.mxu0 0
      %1851 = vmatpush1.bf16.msra.mxu0 0
      %1852 = vmatprep.subr.bf16.mxu0 0
      %1853 = vmatpush1.bf16.msra.mxu0 0
      %1854 = vmatprep.mubr.bf16.mxu0 0
      %1855 = vmatmul.mubr.bf16.gmra.mrb[0].mxu0 %v1771
      %v1856 = vpop.f32.mrb[0].mxu0
      %v1857 = vadd.f32 0.0, %v1856
      %v1858 = vpop.f32.mrb[0].mxu0
      %v1859 = vpop.f32.mrb[0].mxu0
      %v1860 = vadd.f32 0.0, %v1859
      %v1861 = vpop.f32.mrb[0].mxu0
      %1862 = vmatprep.mubr.bf16.mxu0 0
      %1863 = vmatmul.mubr.bf16.gmra.mrb[0].mxu0 %v1770
      %v1864 = vpop.f32.mrb[0].mxu0
      %v1865 = vadd.f32 0.0, %v1864
      %v1866 = vpop.f32.mrb[0].mxu0
      %v1867 = vpop.f32.mrb[0].mxu0
      %v1868 = vpop.f32.mrb[0].mxu0
      %1869 = vdwg.mxu0
      %v1870 = vadd.f32 %v1746, %v1857
      %v1871 = vadd.f32 %v1747, %v1860
      %v1872 = vadd.f32 %v1748, %v1865
      %v1873 = vld [vmem:[#allocation2 + $0x10] sm:$0xff]
      %s1874 = scalar_lea.vmem %s2, 512
      %v1875 = vld [vmem:[%s1874] sm:$0xf]
      %v1876 = vld [vmem:[%s1874 + $0x4] sm:$0xf]
      %v1877 = vld [vmem:[%s1874 + $0x8] sm:$0xf]
      %v1878 = vld [vmem:[%s1874 + $0xc] sm:$0xf]
      %v1879 = vld [vmem:[%s1874 + $0x10] sm:$0xf]
      %v1880 = vld [vmem:[%s1874 + $0x14] sm:$0xf]
      %v1881 = vld [vmem:[%s1874 + $0x18] sm:$0xf]
      %v1882 = vld [vmem:[%s1874 + $0x1c] sm:$0xf]
      %v1883 = vld [vmem:[%s1874 + $0x20] sm:$0xf]
      %v1884 = vld [vmem:[%s1874 + $0x24] sm:$0xf]
      %v1885 = vld [vmem:[%s1874 + $0x28] sm:$0xf]
      %v1886 = vld [vmem:[%s1874 + $0x2c] sm:$0xf]
      %v1887 = vld [vmem:[%s1874 + $0x30] sm:$0xf]
      %v1888 = vld [vmem:[%s1874 + $0x34] sm:$0xf]
      %v1889 = vld [vmem:[%s1874 + $0x38] sm:$0xf]
      %v1890 = vld [vmem:[%s1874 + $0x3c] sm:$0xf]
      %v1892 = vshrl.u32 %v1749, 16
      %v1894 = vrot.slane %v1892, 3
      %v1895 = vshll.u32 %v1749, 16
      %v1897 = vrot.slane %v1895, 4
      %v1898 = vor.u32 %v1894, %v1897
      %v1900 = vshrl.u32 %v1873, 16
      %v1902 = vrot.slane %v1900, 3
      %v1903 = vshll.u32 %v1873, 16
      %v1905 = vrot.slane %v1903, 4
      %v1906 = vor.u32 %v1902, %v1905
      %v1907 = vsel %vm673, %v1898, %v1906
      %v1926 = vunpack.c.l.b16 %v1875
      %v1927 = vunpack.c.l.b16 %v1876
      %v1928 = vunpack.c.l.b16 %v1877
      %v1929 = vunpack.c.l.b16 %v1878
      %v1930 = vunpack.c.l.b16 %v1879
      %v1931 = vunpack.c.l.b16 %v1880
      %v1932 = vunpack.c.l.b16 %v1881
      %v1933 = vunpack.c.l.b16 %v1882
      %v1934 = vunpack.c.l.b16 %v1883
      %v1935 = vunpack.c.l.b16 %v1884
      %v1936 = vunpack.c.l.b16 %v1885
      %v1937 = vunpack.c.l.b16 %v1886
      %v1938 = vunpack.c.l.b16 %v1887
      %v1939 = vunpack.c.l.b16 %v1888
      %v1940 = vunpack.c.l.b16 %v1889
      %v1941 = vunpack.c.l.b16 %v1890
      %v1942 = vpack.c.b16 %v1927, %v1926
      %v1943 = vpack.c.b16 %v1929, %v1928
      %v1944 = vpack.c.b16 %v1931, %v1930
      %v1945 = vpack.c.b16 %v1933, %v1932
      %v1946 = vpack.c.b16 %v1935, %v1934
      %v1947 = vpack.c.b16 %v1937, %v1936
      %v1948 = vpack.c.b16 %v1939, %v1938
      %v1949 = vpack.c.b16 %v1941, %v1940
      %1958 = vmatprep.subr.bf16.mxu0 0
      %1959 = vmatpush1.bf16.msra.mxu0 %v1942
      %1960 = vmatprep.subr.bf16.mxu0 0
      %1961 = vmatpush1.bf16.msra.mxu0 %v1943
      %1962 = vmatprep.subr.bf16.mxu0 0
      %1963 = vmatpush1.bf16.msra.mxu0 %v1944
      %1964 = vmatprep.subr.bf16.mxu0 0
      %1965 = vmatpush1.bf16.msra.mxu0 %v1945
      %1966 = vmatprep.subr.bf16.mxu0 0
      %1967 = vmatpush1.bf16.msra.mxu0 %v1946
      %1968 = vmatprep.subr.bf16.mxu0 0
      %1969 = vmatpush1.bf16.msra.mxu0 %v1947
      %1970 = vmatprep.subr.bf16.mxu0 0
      %1971 = vmatpush1.bf16.msra.mxu0 %v1948
      %1972 = vmatprep.subr.bf16.mxu0 0
      %1973 = vmatpush1.bf16.msra.mxu0 %v1949
      %1974 = vmatprep.subr.bf16.mxu0 0
      %1975 = vmatpush1.bf16.msra.mxu0 0
      %1976 = vmatprep.subr.bf16.mxu0 0
      %1977 = vmatpush1.bf16.msra.mxu0 0
      %1978 = vmatprep.subr.bf16.mxu0 0
      %1979 = vmatpush1.bf16.msra.mxu0 0
      %1980 = vmatprep.subr.bf16.mxu0 0
      %1981 = vmatpush1.bf16.msra.mxu0 0
      %1982 = vmatprep.subr.bf16.mxu0 0
      %1983 = vmatpush1.bf16.msra.mxu0 0
      %1984 = vmatprep.subr.bf16.mxu0 0
      %1985 = vmatpush1.bf16.msra.mxu0 0
      %1986 = vmatprep.subr.bf16.mxu0 0
      %1987 = vmatpush1.bf16.msra.mxu0 0
      %1988 = vmatprep.subr.bf16.mxu0 0
      %1989 = vmatpush1.bf16.msra.mxu0 0
      %1990 = vmatprep.mubr.bf16.mxu0 0
      %1991 = vmatmul.mubr.bf16.gmra.mrb[0].mxu0 %v1907
      %v1992 = vpop.f32.mrb[0].mxu0
      %v1993 = vadd.f32 0.0, %v1992
      %v1994 = vpop.f32.mrb[0].mxu0
      %v1995 = vpop.f32.mrb[0].mxu0
      %v1996 = vadd.f32 0.0, %v1995
      %v1997 = vpop.f32.mrb[0].mxu0
      %1998 = vmatprep.mubr.bf16.mxu0 0
      %1999 = vmatmul.mubr.bf16.gmra.mrb[0].mxu0 %v1906
      %v2000 = vpop.f32.mrb[0].mxu0
      %v2001 = vadd.f32 0.0, %v2000
      %v2002 = vpop.f32.mrb[0].mxu0
      %v2003 = vpop.f32.mrb[0].mxu0
      %v2004 = vpop.f32.mrb[0].mxu0
      %2005 = vdwg.mxu0
      %v2006 = vadd.f32 %v1870, %v1993
      %v2007 = vadd.f32 %v1871, %v1996
      %v2008 = vadd.f32 %v1872, %v2001
      %v2009 = vlaneseq
      %v2010 = vshrl.u32 %v2009, 7
      %v2011 = vsub.s32 1, %v2010
      %v2012 = vrot.slane %v255, %v2011
      %v2013 = vadd.f32 %v2006, %v2012
      %v2014 = vadd.f32 %v2007, %v2012
      %v2015 = vadd.f32 %v2008, %v2012
      %v2016 = vmax.f32 %v2013, 0.0
      %v2017 = vmax.f32 %v2014, 0.0
      %v2018 = vmax.f32 %v2015, 0.0
      %v2019 = vsel %vm814, %v2016, 0.0
      %v2020 = vsel %vm815, %v2017, 0.0
      %v2021 = vsel %vm816, %v2018, 0.0
      %v2022 = vpack.c.bf16 %v2020, %v2019
      %v2023 = vpack.c.bf16 %v2021, %v2021
      %2024 = vst [vmem:[#allocation2 + $0x8] sm:$0xff] %v2022
      %2025 = vst [vmem:[#allocation2 + $0x10] sm:$0xf] %v2023
      %v2026 = vld [vmem:[#allocation2] sm:$0xf0]
      %v2027 = vld [vmem:[#allocation2 + $0x8] sm:$0xff]
      %v2028 = vld [vmem:[#allocation2 + $0x10] sm:$0x1]
      %v2029 = vld [vmem:[%s3] sm:$0xf]
      %v2030 = vld [vmem:[%s3 + $0x4] sm:$0xf]
      %v2031 = vld [vmem:[%s3 + $0x8] sm:$0xf]
      %v2032 = vld [vmem:[%s3 + $0xc] sm:$0xf]
      %v2033 = vld [vmem:[%s3 + $0x10] sm:$0xf]
      %v2034 = vld [vmem:[%s3 + $0x14] sm:$0xf]
      %v2035 = vld [vmem:[%s3 + $0x18] sm:$0xf]
      %v2036 = vld [vmem:[%s3 + $0x1c] sm:$0xf]
      %v2037 = vld [vmem:[%s3 + $0x20] sm:$0xf]
      %v2038 = vld [vmem:[%s3 + $0x24] sm:$0xf]
      %v2039 = vld [vmem:[%s3 + $0x28] sm:$0xf]
      %v2040 = vld [vmem:[%s3 + $0x2c] sm:$0xf]
      %v2041 = vld [vmem:[%s3 + $0x30] sm:$0xf]
      %v2042 = vld [vmem:[%s3 + $0x34] sm:$0xf]
      %v2043 = vld [vmem:[%s3 + $0x38] sm:$0xf]
      %v2044 = vld [vmem:[%s3 + $0x3c] sm:$0xf]
      %v2045 = vld [vmem:[#allocation2] sm:$0xe0]
      %s2046 = scalar_lea.vmem %s3, 64
      %v2047 = vld [vmem:[%s2046] sm:$0xf]
      %v2048 = vld [vmem:[%s2046 + $0x4] sm:$0xf]
      %v2049 = vld [vmem:[%s2046 + $0x8] sm:$0xf]
      %v2050 = vld [vmem:[%s2046 + $0xc] sm:$0xf]
      %v2051 = vld [vmem:[%s2046 + $0x10] sm:$0xf]
      %v2052 = vld [vmem:[%s2046 + $0x14] sm:$0xf]
      %v2053 = vld [vmem:[%s2046 + $0x18] sm:$0xf]
      %v2054 = vld [vmem:[%s2046 + $0x1c] sm:$0xf]
      %v2055 = vld [vmem:[%s2046 + $0x20] sm:$0xf]
      %v2056 = vld [vmem:[%s2046 + $0x24] sm:$0xf]
      %v2057 = vld [vmem:[%s2046 + $0x28] sm:$0xf]
      %v2058 = vld [vmem:[%s2046 + $0x2c] sm:$0xf]
      %v2059 = vld [vmem:[%s2046 + $0x30] sm:$0xf]
      %v2060 = vld [vmem:[%s2046 + $0x34] sm:$0xf]
      %v2061 = vld [vmem:[%s2046 + $0x38] sm:$0xf]
      %v2062 = vld [vmem:[%s2046 + $0x3c] sm:$0xf]
      %v2066 = vrot.slane %v2045, 5
      %v2067 = vrot.slane %v2027, 5
      %v2068 = vsel %vm864, %v2066, %v2067
      %v2069 = vrot.slane %v2028, 5
      %v2070 = vsel %vm864, %v2067, %v2069
      %v2089 = vunpack.c.l.b16 %v2047
      %v2090 = vunpack.c.l.b16 %v2048
      %v2091 = vunpack.c.l.b16 %v2049
      %v2092 = vunpack.c.l.b16 %v2050
      %v2093 = vunpack.c.l.b16 %v2051
      %v2094 = vunpack.c.l.b16 %v2052
      %v2095 = vunpack.c.l.b16 %v2053
      %v2096 = vunpack.c.l.b16 %v2054
      %v2097 = vunpack.c.l.b16 %v2055
      %v2098 = vunpack.c.l.b16 %v2056
      %v2099 = vunpack.c.l.b16 %v2057
      %v2100 = vunpack.c.l.b16 %v2058
      %v2101 = vunpack.c.l.b16 %v2059
      %v2102 = vunpack.c.l.b16 %v2060
      %v2103 = vunpack.c.l.b16 %v2061
      %v2104 = vunpack.c.l.b16 %v2062
      %v2105 = vpack.c.b16 %v2090, %v2089
      %v2106 = vpack.c.b16 %v2092, %v2091
      %v2107 = vpack.c.b16 %v2094, %v2093
      %v2108 = vpack.c.b16 %v2096, %v2095
      %v2109 = vpack.c.b16 %v2098, %v2097
      %v2110 = vpack.c.b16 %v2100, %v2099
      %v2111 = vpack.c.b16 %v2102, %v2101
      %v2112 = vpack.c.b16 %v2104, %v2103
      %2121 = vmatprep.subr.bf16.mxu0 0
      %2122 = vmatpush1.bf16.msra.mxu0 %v2105
      %2123 = vmatprep.subr.bf16.mxu0 0
      %2124 = vmatpush1.bf16.msra.mxu0 %v2106
      %2125 = vmatprep.subr.bf16.mxu0 0
      %2126 = vmatpush1.bf16.msra.mxu0 %v2107
      %2127 = vmatprep.subr.bf16.mxu0 0
      %2128 = vmatpush1.bf16.msra.mxu0 %v2108
      %2129 = vmatprep.subr.bf16.mxu0 0
      %2130 = vmatpush1.bf16.msra.mxu0 %v2109
      %2131 = vmatprep.subr.bf16.mxu0 0
      %2132 = vmatpush1.bf16.msra.mxu0 %v2110
      %2133 = vmatprep.subr.bf16.mxu0 0
      %2134 = vmatpush1.bf16.msra.mxu0 %v2111
      %2135 = vmatprep.subr.bf16.mxu0 0
      %2136 = vmatpush1.bf16.msra.mxu0 %v2112
      %2137 = vmatprep.subr.bf16.mxu0 0
      %2138 = vmatpush1.bf16.msra.mxu0 0
      %2139 = vmatprep.subr.bf16.mxu0 0
      %2140 = vmatpush1.bf16.msra.mxu0 0
      %2141 = vmatprep.subr.bf16.mxu0 0
      %2142 = vmatpush1.bf16.msra.mxu0 0
      %2143 = vmatprep.subr.bf16.mxu0 0
      %2144 = vmatpush1.bf16.msra.mxu0 0
      %2145 = vmatprep.subr.bf16.mxu0 0
      %2146 = vmatpush1.bf16.msra.mxu0 0
      %2147 = vmatprep.subr.bf16.mxu0 0
      %2148 = vmatpush1.bf16.msra.mxu0 0
      %2149 = vmatprep.subr.bf16.mxu0 0
      %2150 = vmatpush1.bf16.msra.mxu0 0
      %2151 = vmatprep.subr.bf16.mxu0 0
      %2152 = vmatpush1.bf16.msra.mxu0 0
      %2153 = vmatprep.mubr.bf16.mxu0 0
      %2154 = vmatmul.mubr.bf16.gmra.mrb[0].mxu0 %v2068
      %v2155 = vpop.f32.mrb[0].mxu0
      %v2156 = vadd.f32 0.0, %v2155
      %v2157 = vpop.f32.mrb[0].mxu0
      %v2158 = vpop.f32.mrb[0].mxu0
      %v2159 = vadd.f32 0.0, %v2158
      %v2160 = vpop.f32.mrb[0].mxu0
      %2161 = vmatprep.mubr.bf16.mxu0 0
      %2162 = vmatmul.mubr.bf16.gmra.mrb[0].mxu0 %v2070
      %v2163 = vpop.f32.mrb[0].mxu0
      %v2164 = vadd.f32 0.0, %v2163
      %v2165 = vpop.f32.mrb[0].mxu0
      %v2166 = vpop.f32.mrb[0].mxu0
      %v2167 = vpop.f32.mrb[0].mxu0
      %2168 = vdwg.mxu0
      %v2170 = vshrl.u32 %v2026, 16
      %v2172 = vrot.slane %v2170, 4
      %v2173 = vshll.u32 %v2026, 16
      %v2175 = vrot.slane %v2173, 5
      %v2176 = vor.u32 %v2172, %v2175
      %v2178 = vshrl.u32 %v2027, 16
      %v2180 = vrot.slane %v2178, 4
      %v2181 = vshll.u32 %v2027, 16
      %v2183 = vrot.slane %v2181, 5
      %v2184 = vor.u32 %v2180, %v2183
      %v2185 = vsel %vm968, %v2176, %v2184
      %v2187 = vshll.u32 %v2028, 16
      %v2189 = vrot.slane %v2187, 5
      %v2190 = vsel %vm968, %v2184, %v2189
      %v2209 = vunpack.c.l.b16 %v2029
      %v2210 = vunpack.c.l.b16 %v2030
      %v2211 = vunpack.c.l.b16 %v2031
      %v2212 = vunpack.c.l.b16 %v2032
      %v2213 = vunpack.c.l.b16 %v2033
      %v2214 = vunpack.c.l.b16 %v2034
      %v2215 = vunpack.c.l.b16 %v2035
      %v2216 = vunpack.c.l.b16 %v2036
      %v2217 = vunpack.c.l.b16 %v2037
      %v2218 = vunpack.c.l.b16 %v2038
      %v2219 = vunpack.c.l.b16 %v2039
      %v2220 = vunpack.c.l.b16 %v2040
      %v2221 = vunpack.c.l.b16 %v2041
      %v2222 = vunpack.c.l.b16 %v2042
      %v2223 = vunpack.c.l.b16 %v2043
      %v2224 = vunpack.c.l.b16 %v2044
      %v2225 = vpack.c.b16 %v2210, %v2209
      %v2226 = vpack.c.b16 %v2212, %v2211
      %v2227 = vpack.c.b16 %v2214, %v2213
      %v2228 = vpack.c.b16 %v2216, %v2215
      %v2229 = vpack.c.b16 %v2218, %v2217
      %v2230 = vpack.c.b16 %v2220, %v2219
      %v2231 = vpack.c.b16 %v2222, %v2221
      %v2232 = vpack.c.b16 %v2224, %v2223
      %2241 = vmatprep.subr.bf16.mxu0 0
      %2242 = vmatpush1.bf16.msra.mxu0 %v2225
      %2243 = vmatprep.subr.bf16.mxu0 0
      %2244 = vmatpush1.bf16.msra.mxu0 %v2226
      %2245 = vmatprep.subr.bf16.mxu0 0
      %2246 = vmatpush1.bf16.msra.mxu0 %v2227
      %2247 = vmatprep.subr.bf16.mxu0 0
      %2248 = vmatpush1.bf16.msra.mxu0 %v2228
      %2249 = vmatprep.subr.bf16.mxu0 0
      %2250 = vmatpush1.bf16.msra.mxu0 %v2229
      %2251 = vmatprep.subr.bf16.mxu0 0
      %2252 = vmatpush1.bf16.msra.mxu0 %v2230
      %2253 = vmatprep.subr.bf16.mxu0 0
      %2254 = vmatpush1.bf16.msra.mxu0 %v2231
      %2255 = vmatprep.subr.bf16.mxu0 0
      %2256 = vmatpush1.bf16.msra.mxu0 %v2232
      %2257 = vmatprep.subr.bf16.mxu0 0
      %2258 = vmatpush1.bf16.msra.mxu0 0
      %2259 = vmatprep.subr.bf16.mxu0 0
      %2260 = vmatpush1.bf16.msra.mxu0 0
      %2261 = vmatprep.subr.bf16.mxu0 0
      %2262 = vmatpush1.bf16.msra.mxu0 0
      %2263 = vmatprep.subr.bf16.mxu0 0
      %2264 = vmatpush1.bf16.msra.mxu0 0
      %2265 = vmatprep.subr.bf16.mxu0 0
      %2266 = vmatpush1.bf16.msra.mxu0 0
      %2267 = vmatprep.subr.bf16.mxu0 0
      %2268 = vmatpush1.bf16.msra.mxu0 0
      %2269 = vmatprep.subr.bf16.mxu0 0
      %2270 = vmatpush1.bf16.msra.mxu0 0
      %2271 = vmatprep.subr.bf16.mxu0 0
      %2272 = vmatpush1.bf16.msra.mxu0 0
      %2273 = vmatprep.mubr.bf16.mxu0 0
      %2274 = vmatmul.mubr.bf16.gmra.mrb[0].mxu0 %v2185
      %v2275 = vpop.f32.mrb[0].mxu0
      %v2276 = vadd.f32 %v2156, %v2275
      %v2277 = vpop.f32.mrb[0].mxu0
      %v2278 = vpop.f32.mrb[0].mxu0
      %v2279 = vadd.f32 %v2159, %v2278
      %v2280 = vpop.f32.mrb[0].mxu0
      %2281 = vmatprep.mubr.bf16.mxu0 0
      %2282 = vmatmul.mubr.bf16.gmra.mrb[0].mxu0 %v2190
      %v2283 = vpop.f32.mrb[0].mxu0
      %v2284 = vadd.f32 %v2164, %v2283
      %v2285 = vpop.f32.mrb[0].mxu0
      %v2286 = vpop.f32.mrb[0].mxu0
      %v2287 = vpop.f32.mrb[0].mxu0
      %2288 = vdwg.mxu0
      %v2289 = vld [vmem:[#allocation2 + $0x10] sm:$0x3]
      %s2290 = scalar_lea.vmem %s3, 128
      %v2291 = vld [vmem:[%s2290] sm:$0xf]
      %v2292 = vld [vmem:[%s2290 + $0x4] sm:$0xf]
      %v2293 = vld [vmem:[%s2290 + $0x8] sm:$0xf]
      %v2294 = vld [vmem:[%s2290 + $0xc] sm:$0xf]
      %v2295 = vld [vmem:[%s2290 + $0x10] sm:$0xf]
      %v2296 = vld [vmem:[%s2290 + $0x14] sm:$0xf]
      %v2297 = vld [vmem:[%s2290 + $0x18] sm:$0xf]
      %v2298 = vld [vmem:[%s2290 + $0x1c] sm:$0xf]
      %v2299 = vld [vmem:[%s2290 + $0x20] sm:$0xf]
      %v2300 = vld [vmem:[%s2290 + $0x24] sm:$0xf]
      %v2301 = vld [vmem:[%s2290 + $0x28] sm:$0xf]
      %v2302 = vld [vmem:[%s2290 + $0x2c] sm:$0xf]
      %v2303 = vld [vmem:[%s2290 + $0x30] sm:$0xf]
      %v2304 = vld [vmem:[%s2290 + $0x34] sm:$0xf]
      %v2305 = vld [vmem:[%s2290 + $0x38] sm:$0xf]
      %v2306 = vld [vmem:[%s2290 + $0x3c] sm:$0xf]
      %v2308 = vshrl.u32 %v2045, 16
      %v2310 = vrot.slane %v2308, 5
      %v2311 = vshll.u32 %v2045, 16
      %v2313 = vrot.slane %v2311, 6
      %v2314 = vor.u32 %v2310, %v2313
      %v2315 = vrot.slane %v2178, 5
      %v2316 = vrot.slane %v2181, 6
      %v2317 = vor.u32 %v2315, %v2316
      %v2318 = vsel %vm1107, %v2314, %v2317
      %v2320 = vshrl.u32 %v2289, 16
      %v2322 = vrot.slane %v2320, 5
      %v2323 = vshll.u32 %v2289, 16
      %v2325 = vrot.slane %v2323, 6
      %v2326 = vor.u32 %v2322, %v2325
      %v2327 = vsel %vm1107, %v2317, %v2326
      %v2346 = vunpack.c.l.b16 %v2291
      %v2347 = vunpack.c.l.b16 %v2292
      %v2348 = vunpack.c.l.b16 %v2293
      %v2349 = vunpack.c.l.b16 %v2294
      %v2350 = vunpack.c.l.b16 %v2295
      %v2351 = vunpack.c.l.b16 %v2296
      %v2352 = vunpack.c.l.b16 %v2297
      %v2353 = vunpack.c.l.b16 %v2298
      %v2354 = vunpack.c.l.b16 %v2299
      %v2355 = vunpack.c.l.b16 %v2300
      %v2356 = vunpack.c.l.b16 %v2301
      %v2357 = vunpack.c.l.b16 %v2302
      %v2358 = vunpack.c.l.b16 %v2303
      %v2359 = vunpack.c.l.b16 %v2304
      %v2360 = vunpack.c.l.b16 %v2305
      %v2361 = vunpack.c.l.b16 %v2306
      %v2362 = vpack.c.b16 %v2347, %v2346
      %v2363 = vpack.c.b16 %v2349, %v2348
      %v2364 = vpack.c.b16 %v2351, %v2350
      %v2365 = vpack.c.b16 %v2353, %v2352
      %v2366 = vpack.c.b16 %v2355, %v2354
      %v2367 = vpack.c.b16 %v2357, %v2356
      %v2368 = vpack.c.b16 %v2359, %v2358
      %v2369 = vpack.c.b16 %v2361, %v2360
      %2378 = vmatprep.subr.bf16.mxu0 0
      %2379 = vmatpush1.bf16.msra.mxu0 %v2362
      %2380 = vmatprep.subr.bf16.mxu0 0
      %2381 = vmatpush1.bf16.msra.mxu0 %v2363
      %2382 = vmatprep.subr.bf16.mxu0 0
      %2383 = vmatpush1.bf16.msra.mxu0 %v2364
      %2384 = vmatprep.subr.bf16.mxu0 0
      %2385 = vmatpush1.bf16.msra.mxu0 %v2365
      %2386 = vmatprep.subr.bf16.mxu0 0
      %2387 = vmatpush1.bf16.msra.mxu0 %v2366
      %2388 = vmatprep.subr.bf16.mxu0 0
      %2389 = vmatpush1.bf16.msra.mxu0 %v2367
      %2390 = vmatprep.subr.bf16.mxu0 0
      %2391 = vmatpush1.bf16.msra.mxu0 %v2368
      %2392 = vmatprep.subr.bf16.mxu0 0
      %2393 = vmatpush1.bf16.msra.mxu0 %v2369
      %2394 = vmatprep.subr.bf16.mxu0 0
      %2395 = vmatpush1.bf16.msra.mxu0 0
      %2396 = vmatprep.subr.bf16.mxu0 0
      %2397 = vmatpush1.bf16.msra.mxu0 0
      %2398 = vmatprep.subr.bf16.mxu0 0
      %2399 = vmatpush1.bf16.msra.mxu0 0
      %2400 = vmatprep.subr.bf16.mxu0 0
      %2401 = vmatpush1.bf16.msra.mxu0 0
      %2402 = vmatprep.subr.bf16.mxu0 0
      %2403 = vmatpush1.bf16.msra.mxu0 0
      %2404 = vmatprep.subr.bf16.mxu0 0
      %2405 = vmatpush1.bf16.msra.mxu0 0
      %2406 = vmatprep.subr.bf16.mxu0 0
      %2407 = vmatpush1.bf16.msra.mxu0 0
      %2408 = vmatprep.subr.bf16.mxu0 0
      %2409 = vmatpush1.bf16.msra.mxu0 0
      %2410 = vmatprep.mubr.bf16.mxu0 0
      %2411 = vmatmul.mubr.bf16.gmra.mrb[0].mxu0 %v2318
      %v2412 = vpop.f32.mrb[0].mxu0
      %v2413 = vadd.f32 0.0, %v2412
      %v2414 = vpop.f32.mrb[0].mxu0
      %v2415 = vpop.f32.mrb[0].mxu0
      %v2416 = vadd.f32 0.0, %v2415
      %v2417 = vpop.f32.mrb[0].mxu0
      %2418 = vmatprep.mubr.bf16.mxu0 0
      %2419 = vmatmul.mubr.bf16.gmra.mrb[0].mxu0 %v2327
      %v2420 = vpop.f32.mrb[0].mxu0
      %v2421 = vadd.f32 0.0, %v2420
      %v2422 = vpop.f32.mrb[0].mxu0
      %v2423 = vpop.f32.mrb[0].mxu0
      %v2424 = vpop.f32.mrb[0].mxu0
      %2425 = vdwg.mxu0
      %v2426 = vadd.f32 %v2276, %v2413
      %v2427 = vadd.f32 %v2279, %v2416
      %v2428 = vadd.f32 %v2284, %v2421
      %v2429 = vld [vmem:[#allocation2] sm:$0x80]
      %v2430 = vld [vmem:[#allocation2 + $0x10] sm:$0xf]
      %s2431 = scalar_lea.vmem %s3, 192
      %v2432 = vld [vmem:[%s2431] sm:$0xf]
      %v2433 = vld [vmem:[%s2431 + $0x4] sm:$0xf]
      %v2434 = vld [vmem:[%s2431 + $0x8] sm:$0xf]
      %v2435 = vld [vmem:[%s2431 + $0xc] sm:$0xf]
      %v2436 = vld [vmem:[%s2431 + $0x10] sm:$0xf]
      %v2437 = vld [vmem:[%s2431 + $0x14] sm:$0xf]
      %v2438 = vld [vmem:[%s2431 + $0x18] sm:$0xf]
      %v2439 = vld [vmem:[%s2431 + $0x1c] sm:$0xf]
      %v2440 = vld [vmem:[%s2431 + $0x20] sm:$0xf]
      %v2441 = vld [vmem:[%s2431 + $0x24] sm:$0xf]
      %v2442 = vld [vmem:[%s2431 + $0x28] sm:$0xf]
      %v2443 = vld [vmem:[%s2431 + $0x2c] sm:$0xf]
      %v2444 = vld [vmem:[%s2431 + $0x30] sm:$0xf]
      %v2445 = vld [vmem:[%s2431 + $0x34] sm:$0xf]
      %v2446 = vld [vmem:[%s2431 + $0x38] sm:$0xf]
      %v2447 = vld [vmem:[%s2431 + $0x3c] sm:$0xf]
      %v2449 = vshrl.u32 %v2429, 16
      %v2451 = vrot.slane %v2449, 7
      %v2452 = vrot.slane %v2178, 7
      %v2453 = vor.u32 %v2452, %v2181
      %v2454 = vsel %vm1249, %v2451, %v2453
      %v2456 = vshrl.u32 %v2430, 16
      %v2458 = vrot.slane %v2456, 7
      %v2459 = vshll.u32 %v2430, 16
      %v2461 = vor.u32 %v2458, %v2459
      %v2462 = vsel %vm1249, %v2452, %v2461
      %v2481 = vunpack.c.l.b16 %v2432
      %v2482 = vunpack.c.l.b16 %v2433
      %v2483 = vunpack.c.l.b16 %v2434
      %v2484 = vunpack.c.l.b16 %v2435
      %v2485 = vunpack.c.l.b16 %v2436
      %v2486 = vunpack.c.l.b16 %v2437
      %v2487 = vunpack.c.l.b16 %v2438
      %v2488 = vunpack.c.l.b16 %v2439
      %v2489 = vunpack.c.l.b16 %v2440
      %v2490 = vunpack.c.l.b16 %v2441
      %v2491 = vunpack.c.l.b16 %v2442
      %v2492 = vunpack.c.l.b16 %v2443
      %v2493 = vunpack.c.l.b16 %v2444
      %v2494 = vunpack.c.l.b16 %v2445
      %v2495 = vunpack.c.l.b16 %v2446
      %v2496 = vunpack.c.l.b16 %v2447
      %v2497 = vpack.c.b16 %v2482, %v2481
      %v2498 = vpack.c.b16 %v2484, %v2483
      %v2499 = vpack.c.b16 %v2486, %v2485
      %v2500 = vpack.c.b16 %v2488, %v2487
      %v2501 = vpack.c.b16 %v2490, %v2489
      %v2502 = vpack.c.b16 %v2492, %v2491
      %v2503 = vpack.c.b16 %v2494, %v2493
      %v2504 = vpack.c.b16 %v2496, %v2495
      %2513 = vmatprep.subr.bf16.mxu0 0
      %2514 = vmatpush1.bf16.msra.mxu0 %v2497
      %2515 = vmatprep.subr.bf16.mxu0 0
      %2516 = vmatpush1.bf16.msra.mxu0 %v2498
      %2517 = vmatprep.subr.bf16.mxu0 0
      %2518 = vmatpush1.bf16.msra.mxu0 %v2499
      %2519 = vmatprep.subr.bf16.mxu0 0
      %2520 = vmatpush1.bf16.msra.mxu0 %v2500
      %2521 = vmatprep.subr.bf16.mxu0 0
      %2522 = vmatpush1.bf16.msra.mxu0 %v2501
      %2523 = vmatprep.subr.bf16.mxu0 0
      %2524 = vmatpush1.bf16.msra.mxu0 %v2502
      %2525 = vmatprep.subr.bf16.mxu0 0
      %2526 = vmatpush1.bf16.msra.mxu0 %v2503
      %2527 = vmatprep.subr.bf16.mxu0 0
      %2528 = vmatpush1.bf16.msra.mxu0 %v2504
      %2529 = vmatprep.subr.bf16.mxu0 0
      %2530 = vmatpush1.bf16.msra.mxu0 0
      %2531 = vmatprep.subr.bf16.mxu0 0
      %2532 = vmatpush1.bf16.msra.mxu0 0
      %2533 = vmatprep.subr.bf16.mxu0 0
      %2534 = vmatpush1.bf16.msra.mxu0 0
      %2535 = vmatprep.subr.bf16.mxu0 0
      %2536 = vmatpush1.bf16.msra.mxu0 0
      %2537 = vmatprep.subr.bf16.mxu0 0
      %2538 = vmatpush1.bf16.msra.mxu0 0
      %2539 = vmatprep.subr.bf16.mxu0 0
      %2540 = vmatpush1.bf16.msra.mxu0 0
      %2541 = vmatprep.subr.bf16.mxu0 0
      %2542 = vmatpush1.bf16.msra.mxu0 0
      %2543 = vmatprep.subr.bf16.mxu0 0
      %2544 = vmatpush1.bf16.msra.mxu0 0
      %2545 = vmatprep.mubr.bf16.mxu0 0
      %2546 = vmatmul.mubr.bf16.gmra.mrb[0].mxu0 %v2454
      %v2547 = vpop.f32.mrb[0].mxu0
      %v2548 = vadd.f32 0.0, %v2547
      %v2549 = vpop.f32.mrb[0].mxu0
      %v2550 = vpop.f32.mrb[0].mxu0
      %v2551 = vadd.f32 0.0, %v2550
      %v2552 = vpop.f32.mrb[0].mxu0
      %2553 = vmatprep.mubr.bf16.mxu0 0
      %2554 = vmatmul.mubr.bf16.gmra.mrb[0].mxu0 %v2462
      %v2555 = vpop.f32.mrb[0].mxu0
      %v2556 = vadd.f32 0.0, %v2555
      %v2557 = vpop.f32.mrb[0].mxu0
      %v2558 = vpop.f32.mrb[0].mxu0
      %v2559 = vpop.f32.mrb[0].mxu0
      %2560 = vdwg.mxu0
      %v2561 = vadd.f32 %v2426, %v2548
      %v2562 = vadd.f32 %v2427, %v2551
      %v2563 = vadd.f32 %v2428, %v2556
      %s2564 = scalar_lea.vmem %s3, 256
      %v2565 = vld [vmem:[%s2564] sm:$0xf]
      %v2566 = vld [vmem:[%s2564 + $0x4] sm:$0xf]
      %v2567 = vld [vmem:[%s2564 + $0x8] sm:$0xf]
      %v2568 = vld [vmem:[%s2564 + $0xc] sm:$0xf]
      %v2569 = vld [vmem:[%s2564 + $0x10] sm:$0xf]
      %v2570 = vld [vmem:[%s2564 + $0x14] sm:$0xf]
      %v2571 = vld [vmem:[%s2564 + $0x18] sm:$0xf]
      %v2572 = vld [vmem:[%s2564 + $0x1c] sm:$0xf]
      %v2573 = vld [vmem:[%s2564 + $0x20] sm:$0xf]
      %v2574 = vld [vmem:[%s2564 + $0x24] sm:$0xf]
      %v2575 = vld [vmem:[%s2564 + $0x28] sm:$0xf]
      %v2576 = vld [vmem:[%s2564 + $0x2c] sm:$0xf]
      %v2577 = vld [vmem:[%s2564 + $0x30] sm:$0xf]
      %v2578 = vld [vmem:[%s2564 + $0x34] sm:$0xf]
      %v2579 = vld [vmem:[%s2564 + $0x38] sm:$0xf]
      %v2580 = vld [vmem:[%s2564 + $0x3c] sm:$0xf]
      %v2597 = vunpack.c.l.b16 %v2565
      %v2598 = vunpack.c.l.b16 %v2566
      %v2599 = vunpack.c.l.b16 %v2567
      %v2600 = vunpack.c.l.b16 %v2568
      %v2601 = vunpack.c.l.b16 %v2569
      %v2602 = vunpack.c.l.b16 %v2570
      %v2603 = vunpack.c.l.b16 %v2571
      %v2604 = vunpack.c.l.b16 %v2572
      %v2605 = vunpack.c.l.b16 %v2573
      %v2606 = vunpack.c.l.b16 %v2574
      %v2607 = vunpack.c.l.b16 %v2575
      %v2608 = vunpack.c.l.b16 %v2576
      %v2609 = vunpack.c.l.b16 %v2577
      %v2610 = vunpack.c.l.b16 %v2578
      %v2611 = vunpack.c.l.b16 %v2579
      %v2612 = vunpack.c.l.b16 %v2580
      %v2613 = vpack.c.b16 %v2598, %v2597
      %v2614 = vpack.c.b16 %v2600, %v2599
      %v2615 = vpack.c.b16 %v2602, %v2601
      %v2616 = vpack.c.b16 %v2604, %v2603
      %v2617 = vpack.c.b16 %v2606, %v2605
      %v2618 = vpack.c.b16 %v2608, %v2607
      %v2619 = vpack.c.b16 %v2610, %v2609
      %v2620 = vpack.c.b16 %v2612, %v2611
      %2629 = vmatprep.subr.bf16.mxu0 0
      %2630 = vmatpush1.bf16.msra.mxu0 %v2613
      %2631 = vmatprep.subr.bf16.mxu0 0
      %2632 = vmatpush1.bf16.msra.mxu0 %v2614
      %2633 = vmatprep.subr.bf16.mxu0 0
      %2634 = vmatpush1.bf16.msra.mxu0 %v2615
      %2635 = vmatprep.subr.bf16.mxu0 0
      %2636 = vmatpush1.bf16.msra.mxu0 %v2616
      %2637 = vmatprep.subr.bf16.mxu0 0
      %2638 = vmatpush1.bf16.msra.mxu0 %v2617
      %2639 = vmatprep.subr.bf16.mxu0 0
      %2640 = vmatpush1.bf16.msra.mxu0 %v2618
      %2641 = vmatprep.subr.bf16.mxu0 0
      %2642 = vmatpush1.bf16.msra.mxu0 %v2619
      %2643 = vmatprep.subr.bf16.mxu0 0
      %2644 = vmatpush1.bf16.msra.mxu0 %v2620
      %2645 = vmatprep.subr.bf16.mxu0 0
      %2646 = vmatpush1.bf16.msra.mxu0 0
      %2647 = vmatprep.subr.bf16.mxu0 0
      %2648 = vmatpush1.bf16.msra.mxu0 0
      %2649 = vmatprep.subr.bf16.mxu0 0
      %2650 = vmatpush1.bf16.msra.mxu0 0
      %2651 = vmatprep.subr.bf16.mxu0 0
      %2652 = vmatpush1.bf16.msra.mxu0 0
      %2653 = vmatprep.subr.bf16.mxu0 0
      %2654 = vmatpush1.bf16.msra.mxu0 0
      %2655 = vmatprep.subr.bf16.mxu0 0
      %2656 = vmatpush1.bf16.msra.mxu0 0
      %2657 = vmatprep.subr.bf16.mxu0 0
      %2658 = vmatpush1.bf16.msra.mxu0 0
      %2659 = vmatprep.subr.bf16.mxu0 0
      %2660 = vmatpush1.bf16.msra.mxu0 0
      %2661 = vmatprep.mubr.bf16.mxu0 0
      %2662 = vmatmul.mubr.bf16.gmra.mrb[0].mxu0 %v2027
      %v2663 = vpop.f32.mrb[0].mxu0
      %v2664 = vadd.f32 0.0, %v2663
      %v2665 = vpop.f32.mrb[0].mxu0
      %v2666 = vpop.f32.mrb[0].mxu0
      %v2667 = vadd.f32 0.0, %v2666
      %v2668 = vpop.f32.mrb[0].mxu0
      %2669 = vmatprep.mubr.bf16.mxu0 0
      %2670 = vmatmul.mubr.bf16.gmra.mrb[0].mxu0 %v2430
      %v2671 = vpop.f32.mrb[0].mxu0
      %v2672 = vadd.f32 0.0, %v2671
      %v2673 = vpop.f32.mrb[0].mxu0
      %v2674 = vpop.f32.mrb[0].mxu0
      %v2675 = vpop.f32.mrb[0].mxu0
      %2676 = vdwg.mxu0
      %v2677 = vadd.f32 %v2561, %v2664
      %v2678 = vadd.f32 %v2562, %v2667
      %v2679 = vadd.f32 %v2563, %v2672
      %v2680 = vld [vmem:[#allocation2 + $0x10] sm:$0x1f]
      %s2681 = scalar_lea.vmem %s3, 320
      %v2682 = vld [vmem:[%s2681] sm:$0xf]
      %v2683 = vld [vmem:[%s2681 + $0x4] sm:$0xf]
      %v2684 = vld [vmem:[%s2681 + $0x8] sm:$0xf]
      %v2685 = vld [vmem:[%s2681 + $0xc] sm:$0xf]
      %v2686 = vld [vmem:[%s2681 + $0x10] sm:$0xf]
      %v2687 = vld [vmem:[%s2681 + $0x14] sm:$0xf]
      %v2688 = vld [vmem:[%s2681 + $0x18] sm:$0xf]
      %v2689 = vld [vmem:[%s2681 + $0x1c] sm:$0xf]
      %v2690 = vld [vmem:[%s2681 + $0x20] sm:$0xf]
      %v2691 = vld [vmem:[%s2681 + $0x24] sm:$0xf]
      %v2692 = vld [vmem:[%s2681 + $0x28] sm:$0xf]
      %v2693 = vld [vmem:[%s2681 + $0x2c] sm:$0xf]
      %v2694 = vld [vmem:[%s2681 + $0x30] sm:$0xf]
      %v2695 = vld [vmem:[%s2681 + $0x34] sm:$0xf]
      %v2696 = vld [vmem:[%s2681 + $0x38] sm:$0xf]
      %v2697 = vld [vmem:[%s2681 + $0x3c] sm:$0xf]
      %v2698 = vrot.slane %v2181, 1
      %v2699 = vor.u32 %v2178, %v2698
      %v2701 = vshll.u32 %v2680, 16
      %v2703 = vrot.slane %v2701, 1
      %v2704 = vsel %vm309, %v2699, %v2703
      %v2705 = vshrl.u32 %v2680, 16
      %v2707 = vor.u32 %v2705, %v2703
      %v2726 = vunpack.c.l.b16 %v2682
      %v2727 = vunpack.c.l.b16 %v2683
      %v2728 = vunpack.c.l.b16 %v2684
      %v2729 = vunpack.c.l.b16 %v2685
      %v2730 = vunpack.c.l.b16 %v2686
      %v2731 = vunpack.c.l.b16 %v2687
      %v2732 = vunpack.c.l.b16 %v2688
      %v2733 = vunpack.c.l.b16 %v2689
      %v2734 = vunpack.c.l.b16 %v2690
      %v2735 = vunpack.c.l.b16 %v2691
      %v2736 = vunpack.c.l.b16 %v2692
      %v2737 = vunpack.c.l.b16 %v2693
      %v2738 = vunpack.c.l.b16 %v2694
      %v2739 = vunpack.c.l.b16 %v2695
      %v2740 = vunpack.c.l.b16 %v2696
      %v2741 = vunpack.c.l.b16 %v2697
      %v2742 = vpack.c.b16 %v2727, %v2726
      %v2743 = vpack.c.b16 %v2729, %v2728
      %v2744 = vpack.c.b16 %v2731, %v2730
      %v2745 = vpack.c.b16 %v2733, %v2732
      %v2746 = vpack.c.b16 %v2735, %v2734
      %v2747 = vpack.c.b16 %v2737, %v2736
      %v2748 = vpack.c.b16 %v2739, %v2738
      %v2749 = vpack.c.b16 %v2741, %v2740
      %2758 = vmatprep.subr.bf16.mxu0 0
      %2759 = vmatpush1.bf16.msra.mxu0 %v2742
      %2760 = vmatprep.subr.bf16.mxu0 0
      %2761 = vmatpush1.bf16.msra.mxu0 %v2743
      %2762 = vmatprep.subr.bf16.mxu0 0
      %2763 = vmatpush1.bf16.msra.mxu0 %v2744
      %2764 = vmatprep.subr.bf16.mxu0 0
      %2765 = vmatpush1.bf16.msra.mxu0 %v2745
      %2766 = vmatprep.subr.bf16.mxu0 0
      %2767 = vmatpush1.bf16.msra.mxu0 %v2746
      %2768 = vmatprep.subr.bf16.mxu0 0
      %2769 = vmatpush1.bf16.msra.mxu0 %v2747
      %2770 = vmatprep.subr.bf16.mxu0 0
      %2771 = vmatpush1.bf16.msra.mxu0 %v2748
      %2772 = vmatprep.subr.bf16.mxu0 0
      %2773 = vmatpush1.bf16.msra.mxu0 %v2749
      %2774 = vmatprep.subr.bf16.mxu0 0
      %2775 = vmatpush1.bf16.msra.mxu0 0
      %2776 = vmatprep.subr.bf16.mxu0 0
      %2777 = vmatpush1.bf16.msra.mxu0 0
      %2778 = vmatprep.subr.bf16.mxu0 0
      %2779 = vmatpush1.bf16.msra.mxu0 0
      %2780 = vmatprep.subr.bf16.mxu0 0
      %2781 = vmatpush1.bf16.msra.mxu0 0
      %2782 = vmatprep.subr.bf16.mxu0 0
      %2783 = vmatpush1.bf16.msra.mxu0 0
      %2784 = vmatprep.subr.bf16.mxu0 0
      %2785 = vmatpush1.bf16.msra.mxu0 0
      %2786 = vmatprep.subr.bf16.mxu0 0
      %2787 = vmatpush1.bf16.msra.mxu0 0
      %2788 = vmatprep.subr.bf16.mxu0 0
      %2789 = vmatpush1.bf16.msra.mxu0 0
      %2790 = vmatprep.mubr.bf16.mxu0 0
      %2791 = vmatmul.mubr.bf16.gmra.mrb[0].mxu0 %v2704
      %v2792 = vpop.f32.mrb[0].mxu0
      %v2793 = vadd.f32 0.0, %v2792
      %v2794 = vpop.f32.mrb[0].mxu0
      %v2795 = vpop.f32.mrb[0].mxu0
      %v2796 = vadd.f32 0.0, %v2795
      %v2797 = vpop.f32.mrb[0].mxu0
      %2798 = vmatprep.mubr.bf16.mxu0 0
      %2799 = vmatmul.mubr.bf16.gmra.mrb[0].mxu0 %v2707
      %v2800 = vpop.f32.mrb[0].mxu0
      %v2801 = vadd.f32 0.0, %v2800
      %v2802 = vpop.f32.mrb[0].mxu0
      %v2803 = vpop.f32.mrb[0].mxu0
      %v2804 = vpop.f32.mrb[0].mxu0
      %2805 = vdwg.mxu0
      %v2806 = vadd.f32 %v2677, %v2793
      %v2807 = vadd.f32 %v2678, %v2796
      %v2808 = vadd.f32 %v2679, %v2801
      %v2809 = vld [vmem:[#allocation2 + $0x8] sm:$0xfc]
      %v2810 = vld [vmem:[#allocation2 + $0x10] sm:$0x7f]
      %s2811 = scalar_lea.vmem %s3, 384
      %v2812 = vld [vmem:[%s2811] sm:$0xf]
      %v2813 = vld [vmem:[%s2811 + $0x4] sm:$0xf]
      %v2814 = vld [vmem:[%s2811 + $0x8] sm:$0xf]
      %v2815 = vld [vmem:[%s2811 + $0xc] sm:$0xf]
      %v2816 = vld [vmem:[%s2811 + $0x10] sm:$0xf]
      %v2817 = vld [vmem:[%s2811 + $0x14] sm:$0xf]
      %v2818 = vld [vmem:[%s2811 + $0x18] sm:$0xf]
      %v2819 = vld [vmem:[%s2811 + $0x1c] sm:$0xf]
      %v2820 = vld [vmem:[%s2811 + $0x20] sm:$0xf]
      %v2821 = vld [vmem:[%s2811 + $0x24] sm:$0xf]
      %v2822 = vld [vmem:[%s2811 + $0x28] sm:$0xf]
      %v2823 = vld [vmem:[%s2811 + $0x2c] sm:$0xf]
      %v2824 = vld [vmem:[%s2811 + $0x30] sm:$0xf]
      %v2825 = vld [vmem:[%s2811 + $0x34] sm:$0xf]
      %v2826 = vld [vmem:[%s2811 + $0x38] sm:$0xf]
      %v2827 = vld [vmem:[%s2811 + $0x3c] sm:$0xf]
      %v2829 = vshrl.u32 %v2809, 16
      %v2831 = vrot.slane %v2829, 2
      %v2832 = vshll.u32 %v2809, 16
      %v2834 = vrot.slane %v2832, 3
      %v2835 = vor.u32 %v2831, %v2834
      %v2837 = vshrl.u32 %v2810, 16
      %v2839 = vrot.slane %v2837, 2
      %v2840 = vshll.u32 %v2810, 16
      %v2842 = vrot.slane %v2840, 3
      %v2843 = vor.u32 %v2839, %v2842
      %v2844 = vsel %vm1630, %v2835, %v2843
      %v2863 = vunpack.c.l.b16 %v2812
      %v2864 = vunpack.c.l.b16 %v2813
      %v2865 = vunpack.c.l.b16 %v2814
      %v2866 = vunpack.c.l.b16 %v2815
      %v2867 = vunpack.c.l.b16 %v2816
      %v2868 = vunpack.c.l.b16 %v2817
      %v2869 = vunpack.c.l.b16 %v2818
      %v2870 = vunpack.c.l.b16 %v2819
      %v2871 = vunpack.c.l.b16 %v2820
      %v2872 = vunpack.c.l.b16 %v2821
      %v2873 = vunpack.c.l.b16 %v2822
      %v2874 = vunpack.c.l.b16 %v2823
      %v2875 = vunpack.c.l.b16 %v2824
      %v2876 = vunpack.c.l.b16 %v2825
      %v2877 = vunpack.c.l.b16 %v2826
      %v2878 = vunpack.c.l.b16 %v2827
      %v2879 = vpack.c.b16 %v2864, %v2863
      %v2880 = vpack.c.b16 %v2866, %v2865
      %v2881 = vpack.c.b16 %v2868, %v2867
      %v2882 = vpack.c.b16 %v2870, %v2869
      %v2883 = vpack.c.b16 %v2872, %v2871
      %v2884 = vpack.c.b16 %v2874, %v2873
      %v2885 = vpack.c.b16 %v2876, %v2875
      %v2886 = vpack.c.b16 %v2878, %v2877
      %2895 = vmatprep.subr.bf16.mxu0 0
      %2896 = vmatpush1.bf16.msra.mxu0 %v2879
      %2897 = vmatprep.subr.bf16.mxu0 0
      %2898 = vmatpush1.bf16.msra.mxu0 %v2880
      %2899 = vmatprep.subr.bf16.mxu0 0
      %2900 = vmatpush1.bf16.msra.mxu0 %v2881
      %2901 = vmatprep.subr.bf16.mxu0 0
      %2902 = vmatpush1.bf16.msra.mxu0 %v2882
      %2903 = vmatprep.subr.bf16.mxu0 0
      %2904 = vmatpush1.bf16.msra.mxu0 %v2883
      %2905 = vmatprep.subr.bf16.mxu0 0
      %2906 = vmatpush1.bf16.msra.mxu0 %v2884
      %2907 = vmatprep.subr.bf16.mxu0 0
      %2908 = vmatpush1.bf16.msra.mxu0 %v2885
      %2909 = vmatprep.subr.bf16.mxu0 0
      %2910 = vmatpush1.bf16.msra.mxu0 %v2886
      %2911 = vmatprep.subr.bf16.mxu0 0
      %2912 = vmatpush1.bf16.msra.mxu0 0
      %2913 = vmatprep.subr.bf16.mxu0 0
      %2914 = vmatpush1.bf16.msra.mxu0 0
      %2915 = vmatprep.subr.bf16.mxu0 0
      %2916 = vmatpush1.bf16.msra.mxu0 0
      %2917 = vmatprep.subr.bf16.mxu0 0
      %2918 = vmatpush1.bf16.msra.mxu0 0
      %2919 = vmatprep.subr.bf16.mxu0 0
      %2920 = vmatpush1.bf16.msra.mxu0 0
      %2921 = vmatprep.subr.bf16.mxu0 0
      %2922 = vmatpush1.bf16.msra.mxu0 0
      %2923 = vmatprep.subr.bf16.mxu0 0
      %2924 = vmatpush1.bf16.msra.mxu0 0
      %2925 = vmatprep.subr.bf16.mxu0 0
      %2926 = vmatpush1.bf16.msra.mxu0 0
      %2927 = vmatprep.mubr.bf16.mxu0 0
      %2928 = vmatmul.mubr.bf16.gmra.mrb[0].mxu0 %v2844
      %v2929 = vpop.f32.mrb[0].mxu0
      %v2930 = vadd.f32 0.0, %v2929
      %v2931 = vpop.f32.mrb[0].mxu0
      %v2932 = vpop.f32.mrb[0].mxu0
      %v2933 = vadd.f32 0.0, %v2932
      %v2934 = vpop.f32.mrb[0].mxu0
      %2935 = vmatprep.mubr.bf16.mxu0 0
      %2936 = vmatmul.mubr.bf16.gmra.mrb[0].mxu0 %v2843
      %v2937 = vpop.f32.mrb[0].mxu0
      %v2938 = vadd.f32 0.0, %v2937
      %v2939 = vpop.f32.mrb[0].mxu0
      %v2940 = vpop.f32.mrb[0].mxu0
      %v2941 = vpop.f32.mrb[0].mxu0
      %2942 = vdwg.mxu0
      %v2943 = vadd.f32 %v2806, %v2930
      %v2944 = vadd.f32 %v2807, %v2933
      %v2945 = vadd.f32 %v2808, %v2938
      %v2946 = vld [vmem:[#allocation2 + $0x8] sm:$0xf8]
      %s2947 = scalar_lea.vmem %s3, 448
      %v2948 = vld [vmem:[%s2947] sm:$0xf]
      %v2949 = vld [vmem:[%s2947 + $0x4] sm:$0xf]
      %v2950 = vld [vmem:[%s2947 + $0x8] sm:$0xf]
      %v2951 = vld [vmem:[%s2947 + $0xc] sm:$0xf]
      %v2952 = vld [vmem:[%s2947 + $0x10] sm:$0xf]
      %v2953 = vld [vmem:[%s2947 + $0x14] sm:$0xf]
      %v2954 = vld [vmem:[%s2947 + $0x18] sm:$0xf]
      %v2955 = vld [vmem:[%s2947 + $0x1c] sm:$0xf]
      %v2956 = vld [vmem:[%s2947 + $0x20] sm:$0xf]
      %v2957 = vld [vmem:[%s2947 + $0x24] sm:$0xf]
      %v2958 = vld [vmem:[%s2947 + $0x28] sm:$0xf]
      %v2959 = vld [vmem:[%s2947 + $0x2c] sm:$0xf]
      %v2960 = vld [vmem:[%s2947 + $0x30] sm:$0xf]
      %v2961 = vld [vmem:[%s2947 + $0x34] sm:$0xf]
      %v2962 = vld [vmem:[%s2947 + $0x38] sm:$0xf]
      %v2963 = vld [vmem:[%s2947 + $0x3c] sm:$0xf]
      %v2966 = vrot.slane %v2946, 3
      %v2967 = vrot.slane %v2810, 3
      %v2968 = vsel %vm547, %v2966, %v2967
      %v2987 = vunpack.c.l.b16 %v2948
      %v2988 = vunpack.c.l.b16 %v2949
      %v2989 = vunpack.c.l.b16 %v2950
      %v2990 = vunpack.c.l.b16 %v2951
      %v2991 = vunpack.c.l.b16 %v2952
      %v2992 = vunpack.c.l.b16 %v2953
      %v2993 = vunpack.c.l.b16 %v2954
      %v2994 = vunpack.c.l.b16 %v2955
      %v2995 = vunpack.c.l.b16 %v2956
      %v2996 = vunpack.c.l.b16 %v2957
      %v2997 = vunpack.c.l.b16 %v2958
      %v2998 = vunpack.c.l.b16 %v2959
      %v2999 = vunpack.c.l.b16 %v2960
      %v3000 = vunpack.c.l.b16 %v2961
      %v3001 = vunpack.c.l.b16 %v2962
      %v3002 = vunpack.c.l.b16 %v2963
      %v3003 = vpack.c.b16 %v2988, %v2987
      %v3004 = vpack.c.b16 %v2990, %v2989
      %v3005 = vpack.c.b16 %v2992, %v2991
      %v3006 = vpack.c.b16 %v2994, %v2993
      %v3007 = vpack.c.b16 %v2996, %v2995
      %v3008 = vpack.c.b16 %v2998, %v2997
      %v3009 = vpack.c.b16 %v3000, %v2999
      %v3010 = vpack.c.b16 %v3002, %v3001
      %3019 = vmatprep.subr.bf16.mxu0 0
      %3020 = vmatpush1.bf16.msra.mxu0 %v3003
      %3021 = vmatprep.subr.bf16.mxu0 0
      %3022 = vmatpush1.bf16.msra.mxu0 %v3004
      %3023 = vmatprep.subr.bf16.mxu0 0
      %3024 = vmatpush1.bf16.msra.mxu0 %v3005
      %3025 = vmatprep.subr.bf16.mxu0 0
      %3026 = vmatpush1.bf16.msra.mxu0 %v3006
      %3027 = vmatprep.subr.bf16.mxu0 0
      %3028 = vmatpush1.bf16.msra.mxu0 %v3007
      %3029 = vmatprep.subr.bf16.mxu0 0
      %3030 = vmatpush1.bf16.msra.mxu0 %v3008
      %3031 = vmatprep.subr.bf16.mxu0 0
      %3032 = vmatpush1.bf16.msra.mxu0 %v3009
      %3033 = vmatprep.subr.bf16.mxu0 0
      %3034 = vmatpush1.bf16.msra.mxu0 %v3010
      %3035 = vmatprep.subr.bf16.mxu0 0
      %3036 = vmatpush1.bf16.msra.mxu0 0
      %3037 = vmatprep.subr.bf16.mxu0 0
      %3038 = vmatpush1.bf16.msra.mxu0 0
      %3039 = vmatprep.subr.bf16.mxu0 0
      %3040 = vmatpush1.bf16.msra.mxu0 0
      %3041 = vmatprep.subr.bf16.mxu0 0
      %3042 = vmatpush1.bf16.msra.mxu0 0
      %3043 = vmatprep.subr.bf16.mxu0 0
      %3044 = vmatpush1.bf16.msra.mxu0 0
      %3045 = vmatprep.subr.bf16.mxu0 0
      %3046 = vmatpush1.bf16.msra.mxu0 0
      %3047 = vmatprep.subr.bf16.mxu0 0
      %3048 = vmatpush1.bf16.msra.mxu0 0
      %3049 = vmatprep.subr.bf16.mxu0 0
      %3050 = vmatpush1.bf16.msra.mxu0 0
      %3051 = vmatprep.mubr.bf16.mxu0 0
      %3052 = vmatmul.mubr.bf16.gmra.mrb[0].mxu0 %v2968
      %v3053 = vpop.f32.mrb[0].mxu0
      %v3054 = vadd.f32 0.0, %v3053
      %v3055 = vpop.f32.mrb[0].mxu0
      %v3056 = vpop.f32.mrb[0].mxu0
      %v3057 = vadd.f32 0.0, %v3056
      %v3058 = vpop.f32.mrb[0].mxu0
      %3059 = vmatprep.mubr.bf16.mxu0 0
      %3060 = vmatmul.mubr.bf16.gmra.mrb[0].mxu0 %v2967
      %v3061 = vpop.f32.mrb[0].mxu0
      %v3062 = vadd.f32 0.0, %v3061
      %v3063 = vpop.f32.mrb[0].mxu0
      %v3064 = vpop.f32.mrb[0].mxu0
      %v3065 = vpop.f32.mrb[0].mxu0
      %3066 = vdwg.mxu0
      %v3067 = vadd.f32 %v2943, %v3054
      %v3068 = vadd.f32 %v2944, %v3057
      %v3069 = vadd.f32 %v2945, %v3062
      %v3070 = vld [vmem:[#allocation2 + $0x10] sm:$0xff]
      %s3071 = scalar_lea.vmem %s3, 512
      %v3072 = vld [vmem:[%s3071] sm:$0xf]
      %v3073 = vld [vmem:[%s3071 + $0x4] sm:$0xf]
      %v3074 = vld [vmem:[%s3071 + $0x8] sm:$0xf]
      %v3075 = vld [vmem:[%s3071 + $0xc] sm:$0xf]
      %v3076 = vld [vmem:[%s3071 + $0x10] sm:$0xf]
      %v3077 = vld [vmem:[%s3071 + $0x14] sm:$0xf]
      %v3078 = vld [vmem:[%s3071 + $0x18] sm:$0xf]
      %v3079 = vld [vmem:[%s3071 + $0x1c] sm:$0xf]
      %v3080 = vld [vmem:[%s3071 + $0x20] sm:$0xf]
      %v3081 = vld [vmem:[%s3071 + $0x24] sm:$0xf]
      %v3082 = vld [vmem:[%s3071 + $0x28] sm:$0xf]
      %v3083 = vld [vmem:[%s3071 + $0x2c] sm:$0xf]
      %v3084 = vld [vmem:[%s3071 + $0x30] sm:$0xf]
      %v3085 = vld [vmem:[%s3071 + $0x34] sm:$0xf]
      %v3086 = vld [vmem:[%s3071 + $0x38] sm:$0xf]
      %v3087 = vld [vmem:[%s3071 + $0x3c] sm:$0xf]
      %v3089 = vshrl.u32 %v2946, 16
      %v3091 = vrot.slane %v3089, 3
      %v3092 = vshll.u32 %v2946, 16
      %v3094 = vrot.slane %v3092, 4
      %v3095 = vor.u32 %v3091, %v3094
      %v3097 = vshrl.u32 %v3070, 16
      %v3099 = vrot.slane %v3097, 3
      %v3100 = vshll.u32 %v3070, 16
      %v3102 = vrot.slane %v3100, 4
      %v3103 = vor.u32 %v3099, %v3102
      %v3104 = vsel %vm673, %v3095, %v3103
      %v3123 = vunpack.c.l.b16 %v3072
      %v3124 = vunpack.c.l.b16 %v3073
      %v3125 = vunpack.c.l.b16 %v3074
      %v3126 = vunpack.c.l.b16 %v3075
      %v3127 = vunpack.c.l.b16 %v3076
      %v3128 = vunpack.c.l.b16 %v3077
      %v3129 = vunpack.c.l.b16 %v3078
      %v3130 = vunpack.c.l.b16 %v3079
      %v3131 = vunpack.c.l.b16 %v3080
      %v3132 = vunpack.c.l.b16 %v3081
      %v3133 = vunpack.c.l.b16 %v3082
      %v3134 = vunpack.c.l.b16 %v3083
      %v3135 = vunpack.c.l.b16 %v3084
      %v3136 = vunpack.c.l.b16 %v3085
      %v3137 = vunpack.c.l.b16 %v3086
      %v3138 = vunpack.c.l.b16 %v3087
      %v3139 = vpack.c.b16 %v3124, %v3123
      %v3140 = vpack.c.b16 %v3126, %v3125
      %v3141 = vpack.c.b16 %v3128, %v3127
      %v3142 = vpack.c.b16 %v3130, %v3129
      %v3143 = vpack.c.b16 %v3132, %v3131
      %v3144 = vpack.c.b16 %v3134, %v3133
      %v3145 = vpack.c.b16 %v3136, %v3135
      %v3146 = vpack.c.b16 %v3138, %v3137
      %3155 = vmatprep.subr.bf16.mxu0 0
      %3156 = vmatpush1.bf16.msra.mxu0 %v3139
      %3157 = vmatprep.subr.bf16.mxu0 0
      %3158 = vmatpush1.bf16.msra.mxu0 %v3140
      %3159 = vmatprep.subr.bf16.mxu0 0
      %3160 = vmatpush1.bf16.msra.mxu0 %v3141
      %3161 = vmatprep.subr.bf16.mxu0 0
      %3162 = vmatpush1.bf16.msra.mxu0 %v3142
      %3163 = vmatprep.subr.bf16.mxu0 0
      %3164 = vmatpush1.bf16.msra.mxu0 %v3143
      %3165 = vmatprep.subr.bf16.mxu0 0
      %3166 = vmatpush1.bf16.msra.mxu0 %v3144
      %3167 = vmatprep.subr.bf16.mxu0 0
      %3168 = vmatpush1.bf16.msra.mxu0 %v3145
      %3169 = vmatprep.subr.bf16.mxu0 0
      %3170 = vmatpush1.bf16.msra.mxu0 %v3146
      %3171 = vmatprep.subr.bf16.mxu0 0
      %3172 = vmatpush1.bf16.msra.mxu0 0
      %3173 = vmatprep.subr.bf16.mxu0 0
      %3174 = vmatpush1.bf16.msra.mxu0 0
      %3175 = vmatprep.subr.bf16.mxu0 0
      %3176 = vmatpush1.bf16.msra.mxu0 0
      %3177 = vmatprep.subr.bf16.mxu0 0
      %3178 = vmatpush1.bf16.msra.mxu0 0
      %3179 = vmatprep.subr.bf16.mxu0 0
      %3180 = vmatpush1.bf16.msra.mxu0 0
      %3181 = vmatprep.subr.bf16.mxu0 0
      %3182 = vmatpush1.bf16.msra.mxu0 0
      %3183 = vmatprep.subr.bf16.mxu0 0
      %3184 = vmatpush1.bf16.msra.mxu0 0
      %3185 = vmatprep.subr.bf16.mxu0 0
      %3186 = vmatpush1.bf16.msra.mxu0 0
      %3187 = vmatprep.mubr.bf16.mxu0 0
      %3188 = vmatmul.mubr.bf16.gmra.mrb[0].mxu0 %v3104
      %v3189 = vpop.f32.mrb[0].mxu0
      %v3190 = vadd.f32 0.0, %v3189
      %v3191 = vpop.f32.mrb[0].mxu0
      %v3192 = vpop.f32.mrb[0].mxu0
      %v3193 = vadd.f32 0.0, %v3192
      %v3194 = vpop.f32.mrb[0].mxu0
      %3195 = vmatprep.mubr.bf16.mxu0 0
      %3196 = vmatmul.mubr.bf16.gmra.mrb[0].mxu0 %v3103
      %v3197 = vpop.f32.mrb[0].mxu0
      %v3198 = vadd.f32 0.0, %v3197
      %v3199 = vpop.f32.mrb[0].mxu0
      %v3200 = vpop.f32.mrb[0].mxu0
      %v3201 = vpop.f32.mrb[0].mxu0
      %3202 = vdwg.mxu0
      %v3203 = vadd.f32 %v3067, %v3190
      %v3204 = vadd.f32 %v3068, %v3193
      %v3205 = vadd.f32 %v3069, %v3198
      %v3206 = vlaneseq
      %v3207 = vshrl.u32 %v3206, 7
      %v3208 = vsub.s32 2, %v3207
      %v3209 = vrot.slane %v255, %v3208
      %v3210 = vadd.f32 %v3203, %v3209
      %v3211 = vadd.f32 %v3204, %v3209
      %v3212 = vadd.f32 %v3205, %v3209
      %v3213 = vadd.f32 %v3210, %v817
      %v3214 = vadd.f32 %v3211, %v818
      %v3215 = vadd.f32 %v3212, %v819
      %v3216 = vmax.f32 %v3213, 0.0
      %v3217 = vmax.f32 %v3214, 0.0
      %v3218 = vmax.f32 %v3215, 0.0
      %v3219 = vsel %vm814, %v3216, 0.0
      %v3220 = vsel %vm815, %v3217, 0.0
      %v3221 = vsel %vm816, %v3218, 0.0
      %v3222 = vpack.c.bf16 %v3220, %v3219
      %v3223 = vpack.c.bf16 %v3221, %v3221
      %v3226 = vunpack.c.l.b16 %v3222
      %v3227 = vunpack.c.h.b16 %v3222
      %v3228 = vunpack.c.l.b16 %v3223
      %v3229 = vpack.c.b16 %v3226, %v3226
      %v3230 = vpack.c.b16 %v3227, %v3227
      %v3231 = vpack.c.b16 %v3228, %v3228
      %3235 = vst [vmem:[%s251] sm:$0xf] %v3229
      %3236 = vst [vmem:[%s251 + $0x4] sm:$0xf] %v3230
      %3237 = vst [vmem:[%s251 + $0x8] sm:$0xf] %v3231
      %p3238 = scmp.lt.s32.totalorder %s17, 1
      %s3239 = scalar_select %p3238, %s17, 1
      %s3240 = smul.addr %s3239, 3
      %s3241 = smul.addr %s3240, 4
      %s3242 = scalar_lea.vmem %s6, %s3241
      // Predicated region
      $region45: #{encoder_flow.4} parent=43 // pred_check
        %p3243 = pneg %p166
      $region46: #{encoder_flow.4} parent=43 // pred_check_branch
        %3245 = sbr.rel (%p3243) target = $region48
      $region47: #{encoder_flow.4} parent=43 // pred_region
        _
      $region48: #{encoder_flow.4} parent=43 // pred_fallthru
        _
    $region44: #{encoder_flow.4} parent=5 // pred_fallthru
      _
    %p3246 = scmp.le.s32.totalorder 2, %s12
    // Predicated region
    $region49: #{encoder_flow.4} parent=5 // pred_check
      %p3247 = pneg %p3246
    $region50: #{encoder_flow.4} parent=5 // pred_check_branch
      %3249 = sbr.rel (%p3247) target = $region52
    $region51: #{encoder_flow.4} parent=5 // pred_region
      %s3250 = ssub.s32 %s12, 2
      // Predicated region
      $region53: #{encoder_flow.4} parent=51 // pred_check
        %p3251 = pneg %p172
      $region54: #{encoder_flow.4} parent=51 // pred_check_branch
        %3253 = sbr.rel (%p3251) target = $region56
      $region55: #{encoder_flow.4} parent=51 // pred_region
        %p3254 = scmp.lt.s32.totalorder %s18, 1
        %s3255 = scalar_select %p3254, %s18, 1
        %s3256 = smul.addr %s3255, 3
        %s3257 = smul.addr %s3256, 4
        %s3258 = scalar_lea.vmem %s6, %s3257
      $region56: #{encoder_flow.4} parent=51 // pred_fallthru
        _
    $region52: #{encoder_flow.4} parent=5 // pred_fallthru
      _
  $region6: #{encoder_flow.4} parent=0 // loop_footer
    %s16 = sadd.s32 1, %s12
  $region7: #{encoder_flow.4} parent=0 // loop_footer_branch
    %11 = sbr.rel target = $region3
  $region8: #{encoder_flow.4} parent=0 // loop_exit
    _

// kernel: encoder_flow.3
$region0: #{encoder_flow.3}
  #allocation0 [shape = 'u32[]', space=smem, size = 0x4, offset = 0x4, fixed_abs, tag = 'smem constant byte address 0x4 - core index']
  #allocation1 [shape = 'u32[144,128]{1,0:T(1,128)}', space=vmem, size = 0x12000, scoped, tag = 'internal scratch']
  #allocation2 [shape = 'bf16[112,128]{1,0:T(16,128)(2,1)}', space=vmem, size = 0x7000, scoped, tag = 'scratch operand']
  %s0 = inlined_call_operand.vmem [shape: bf16[2,100,128], index: 0, kind: input, shape index: {}]
  %s1 = inlined_call_operand.vmem [shape: bf16[4,128,128], index: 1, kind: input, shape index: {}]
  %s2 = inlined_call_operand.vmem [shape: bf16[9,128,128], index: 2, kind: input, shape index: {}]
  %s3 = inlined_call_operand.vmem [shape: bf16[9,128,128], index: 3, kind: input, shape index: {}]
  %s4 = inlined_call_operand.vmem [shape: f32[3,128], index: 4, kind: input, shape index: {}]
  %s5 = inlined_call_operand.vmem [shape: f32[80,1], index: 5, kind: input, shape index: {}]
  %s6 = inlined_call_operand.vmem [shape: bf16[2,80,128], index: 6, kind: output, shape index: {}]
  %s7 = sld [smem:[#allocation0]]
  $region57: #{encoder_flow.3} parent=0
    _
  %s9 = ssub.s32 1, %s7
  %s10 = scalar_select 0, %s9, %s7
  loop: start=0, step=1, limit=4
  $region2: #{encoder_flow.3} parent=0 // loop_pre_header
    _
  $region3: #{encoder_flow.3} parent=0 // loop_header
    %s12 = sphi 0, %s16
    %p13 = scmp.ge.s32.totalorder %s12, 4
    %s22 = sphi 0, %s24
    %s25 = sphi 0, %s22
    %s26 = sphi 0, %s25
    %s42 = sphi 0, %s26
    %s46 = sphi 0, %s46
    %s48 = sphi 0, %s46
    %s49 = sphi 0, %s48
    %s63 = sphi 0, %s49
    %s67 = sphi 0, %s67
    %s69 = sphi 0, %s67
    %s70 = sphi 0, %s69
    %s84 = sphi 0, %s70
    %s88 = sphi 0, %s88
    %s90 = sphi 0, %s88
    %s91 = sphi 0, %s90
    %s105 = sphi 0, %s91
    %s109 = sphi 0, %s109
    %s111 = sphi 0, %s109
    %s112 = sphi 0, %s111
    %s126 = sphi 0, %s112
    %s130 = sphi 0, %s130
    %s132 = sphi 0, %s130
    %s133 = sphi 0, %s132
    %s147 = sphi 0, %s133
    %s153 = sphi 0, %s155
    %s156 = sphi 0, %s153
    %s157 = sphi 0, %s156
    %s173 = sphi 0, %s157
  $region4: #{encoder_flow.3} parent=0 // loop_header_branch
    %15 = sbr.rel (%p13) target = $region8
  $region5: #{encoder_flow.3} parent=0 // loop_body
    %s17 = ssub.s32 %s12, 1
    %s18 = ssub.s32 %s12, 2
    %s19 = sadd.s32 %s12, 1
    %s20 = ssub.s32 %s12, %s19
    %p21 = scmp.eq.s32.totalorder %s20, 0
    %s23 = sadd.s32 %s22, 1
    %s24 = scalar_select %p21, %s22, %s23
    %p27 = pneg %p21
    %p28 = scmp.eq.s32.totalorder %s12, 1
    %p29 = por %p27, %p28
    %p30 = scmp.ne.s32.totalorder %s22, %s25
    %p31 = scmp.eq.s32.totalorder %s12, 0
    %p32 = por %p30, %p31
    %p33 = scmp.ne.s32.totalorder %s22, %s25
    %p34 = scmp.eq.s32.totalorder %s17, 1
    %p35 = por %p33, %p34
    %p36 = scmp.ne.s32.totalorder %s25, %s26
    %p37 = scmp.eq.s32.totalorder %s17, 0
    %p38 = por %p36, %p37
    %p39 = scmp.ne.s32.totalorder %s25, %s26
    %p40 = scmp.eq.s32.totalorder %s18, 1
    %p41 = por %p39, %p40
    %p43 = scmp.ne.s32.totalorder %s26, %s42
    %p44 = scmp.eq.s32.totalorder %s18, 0
    %p45 = por %p43, %p44
    %s47 = sadd.s32 %s46, 1
    %p50 = scmp.eq.s32.totalorder %s12, 1
    %p51 = scmp.ne.s32.totalorder %s46, %s48
    %p52 = scmp.eq.s32.totalorder %s12, 0
    %p53 = por %p51, %p52
    %p54 = scmp.ne.s32.totalorder %s46, %s48
    %p55 = scmp.eq.s32.totalorder %s17, 1
    %p56 = por %p54, %p55
    %p57 = scmp.ne.s32.totalorder %s48, %s49
    %p58 = scmp.eq.s32.totalorder %s17, 0
    %p59 = por %p57, %p58
    %p60 = scmp.ne.s32.totalorder %s48, %s49
    %p61 = scmp.eq.s32.totalorder %s18, 1
    %p62 = por %p60, %p61
    %p64 = scmp.ne.s32.totalorder %s49, %s63
    %p65 = scmp.eq.s32.totalorder %s18, 0
    %p66 = por %p64, %p65
    %s68 = sadd.s32 %s67, 1
    %p71 = scmp.eq.s32.totalorder %s12, 1
    %p72 = scmp.ne.s32.totalorder %s67, %s69
    %p73 = scmp.eq.s32.totalorder %s12, 0
    %p74 = por %p72, %p73
    %p75 = scmp.ne.s32.totalorder %s67, %s69
    %p76 = scmp.eq.s32.totalorder %s17, 1
    %p77 = por %p75, %p76
    %p78 = scmp.ne.s32.totalorder %s69, %s70
    %p79 = scmp.eq.s32.totalorder %s17, 0
    %p80 = por %p78, %p79
    %p81 = scmp.ne.s32.totalorder %s69, %s70
    %p82 = scmp.eq.s32.totalorder %s18, 1
    %p83 = por %p81, %p82
    %p85 = scmp.ne.s32.totalorder %s70, %s84
    %p86 = scmp.eq.s32.totalorder %s18, 0
    %p87 = por %p85, %p86
    %s89 = sadd.s32 %s88, 1
    %p92 = scmp.eq.s32.totalorder %s12, 1
    %p93 = scmp.ne.s32.totalorder %s88, %s90
    %p94 = scmp.eq.s32.totalorder %s12, 0
    %p95 = por %p93, %p94
    %p96 = scmp.ne.s32.totalorder %s88, %s90
    %p97 = scmp.eq.s32.totalorder %s17, 1
    %p98 = por %p96, %p97
    %p99 = scmp.ne.s32.totalorder %s90, %s91
    %p100 = scmp.eq.s32.totalorder %s17, 0
    %p101 = por %p99, %p100
    %p102 = scmp.ne.s32.totalorder %s90, %s91
    %p103 = scmp.eq.s32.totalorder %s18, 1
    %p104 = por %p102, %p103
    %p106 = scmp.ne.s32.totalorder %s91, %s105
    %p107 = scmp.eq.s32.totalorder %s18, 0
    %p108 = por %p106, %p107
    %s110 = sadd.s32 %s109, 1
    %p113 = scmp.eq.s32.totalorder %s12, 1
    %p114 = scmp.ne.s32.totalorder %s109, %s111
    %p115 = scmp.eq.s32.totalorder %s12, 0
    %p116 = por %p114, %p115
    %p117 = scmp.ne.s32.totalorder %s109, %s111
    %p118 = scmp.eq.s32.totalorder %s17, 1
    %p119 = por %p117, %p118
    %p120 = scmp.ne.s32.totalorder %s111, %s112
    %p121 = scmp.eq.s32.totalorder %s17, 0
    %p122 = por %p120, %p121
    %p123 = scmp.ne.s32.totalorder %s111, %s112
    %p124 = scmp.eq.s32.totalorder %s18, 1
    %p125 = por %p123, %p124
    %p127 = scmp.ne.s32.totalorder %s112, %s126
    %p128 = scmp.eq.s32.totalorder %s18, 0
    %p129 = por %p127, %p128
    %s131 = sadd.s32 %s130, 1
    %p134 = scmp.eq.s32.totalorder %s12, 1
    %p135 = scmp.ne.s32.totalorder %s130, %s132
    %p136 = scmp.eq.s32.totalorder %s12, 0
    %p137 = por %p135, %p136
    %p138 = scmp.ne.s32.totalorder %s130, %s132
    %p139 = scmp.eq.s32.totalorder %s17, 1
    %p140 = por %p138, %p139
    %p141 = scmp.ne.s32.totalorder %s132, %s133
    %p142 = scmp.eq.s32.totalorder %s17, 0
    %p143 = por %p141, %p142
    %p144 = scmp.ne.s32.totalorder %s132, %s133
    %p145 = scmp.eq.s32.totalorder %s18, 1
    %p146 = por %p144, %p145
    %p148 = scmp.ne.s32.totalorder %s133, %s147
    %p149 = scmp.eq.s32.totalorder %s18, 0
    %p150 = por %p148, %p149
    %s151 = ssub.s32 %s12, %s19
    %p152 = scmp.eq.s32.totalorder %s151, 0
    %s154 = sadd.s32 %s153, 1
    %s155 = scalar_select %p152, %s153, %s154
    %p158 = pneg %p152
    %p159 = scmp.eq.s32.totalorder %s12, 1
    %p160 = por %p158, %p159
    %p161 = scmp.ne.s32.totalorder %s153, %s156
    %p162 = scmp.eq.s32.totalorder %s12, 0
    %p163 = por %p161, %p162
    %p164 = scmp.ne.s32.totalorder %s153, %s156
    %p165 = scmp.eq.s32.totalorder %s17, 1
    %p166 = por %p164, %p165
    %p167 = scmp.ne.s32.totalorder %s156, %s157
    %p168 = scmp.eq.s32.totalorder %s17, 0
    %p169 = por %p167, %p168
    %p170 = scmp.ne.s32.totalorder %s156, %s157
    %p171 = scmp.eq.s32.totalorder %s18, 1
    %p172 = por %p170, %p171
    %p174 = scmp.ne.s32.totalorder %s157, %s173
    %p175 = scmp.eq.s32.totalorder %s18, 0
    %p176 = por %p174, %p175
    %p177 = scmp.le.s32.totalorder 1, %s12
    %p178 = scmp.lt.s32.totalorder %s12, 3
    %p179 = pnand %p177, %p178
    %p180 = pneg %p179
    // Predicated region
    $region9: #{encoder_flow.3} parent=5 // pred_check
      _
    $region10: #{encoder_flow.3} parent=5 // pred_check_branch
      %182 = sbr.rel (%p179) target = $region12
    $region11: #{encoder_flow.3} parent=5 // pred_region
      %s183 = ssub.s32 %s12, 1
      // Predicated region
      $region13: #{encoder_flow.3} parent=11 // pred_check
        %p184 = pneg %p59
      $region14: #{encoder_flow.3} parent=11 // pred_check_branch
        %186 = sbr.rel (%p184) target = $region16
      $region15: #{encoder_flow.3} parent=11 // pred_region
        _
      $region16: #{encoder_flow.3} parent=11 // pred_fallthru
        _
      // Predicated region
      $region17: #{encoder_flow.3} parent=11 // pred_check
        %p187 = pneg %p80
      $region18: #{encoder_flow.3} parent=11 // pred_check_branch
        %189 = sbr.rel (%p187) target = $region20
      $region19: #{encoder_flow.3} parent=11 // pred_region
        _
      $region20: #{encoder_flow.3} parent=11 // pred_fallthru
        _
      // Predicated region
      $region21: #{encoder_flow.3} parent=11 // pred_check
        %p190 = pneg %p101
      $region22: #{encoder_flow.3} parent=11 // pred_check_branch
        %192 = sbr.rel (%p190) target = $region24
      $region23: #{encoder_flow.3} parent=11 // pred_region
        _
      $region24: #{encoder_flow.3} parent=11 // pred_fallthru
        _
      // Predicated region
      $region25: #{encoder_flow.3} parent=11 // pred_check
        %p193 = pneg %p122
      $region26: #{encoder_flow.3} parent=11 // pred_check_branch
        %195 = sbr.rel (%p193) target = $region28
      $region27: #{encoder_flow.3} parent=11 // pred_region
        _
      $region28: #{encoder_flow.3} parent=11 // pred_fallthru
        _
      // Predicated region
      $region29: #{encoder_flow.3} parent=11 // pred_check
        %p196 = pneg %p143
      $region30: #{encoder_flow.3} parent=11 // pred_check_branch
        %198 = sbr.rel (%p196) target = $region32
      $region31: #{encoder_flow.3} parent=11 // pred_region
        _
      $region32: #{encoder_flow.3} parent=11 // pred_fallthru
        _
    $region12: #{encoder_flow.3} parent=5 // pred_fallthru
      _
    %p199 = scmp.lt.s32.totalorder %s12, 2
    // Predicated region
    $region33: #{encoder_flow.3} parent=5 // pred_check
      %p200 = pneg %p199
    $region34: #{encoder_flow.3} parent=5 // pred_check_branch
      %202 = sbr.rel (%p200) target = $region36
    $region35: #{encoder_flow.3} parent=5 // pred_region
      // Predicated region
      $region37: #{encoder_flow.3} parent=35 // pred_check
        %p203 = pneg %p32
      $region38: #{encoder_flow.3} parent=35 // pred_check_branch
        %205 = sbr.rel (%p203) target = $region40
      $region39: #{encoder_flow.3} parent=35 // pred_region
        %p206 = scmp.lt.s32.totalorder %s12, 1
        %s207 = scalar_select %p206, %s12, 1
        %s208 = smul.addr %s207, 13
        %s209 = smul.addr %s208, 4
        %s210 = scalar_lea.vmem %s0, %s209
      $region40: #{encoder_flow.3} parent=35 // pred_fallthru
        _
    $region36: #{encoder_flow.3} parent=5 // pred_fallthru
      _
    %p211 = scmp.le.s32.totalorder 1, %s12
    %p212 = scmp.lt.s32.totalorder %s12, 3
    %p213 = pnand %p211, %p212
    %p214 = pneg %p213
    // Predicated region
    $region41: #{encoder_flow.3} parent=5 // pred_check
      _
    $region42: #{encoder_flow.3} parent=5 // pred_check_branch
      %216 = sbr.rel (%p213) target = $region44
    $region43: #{encoder_flow.3} parent=5 // pred_region
      %s217 = ssub.s32 %s12, 1
      %p218 = scmp.lt.s32.totalorder %s17, 1
      %s219 = scalar_select %p218, %s17, 1
      %s220 = smul.addr %s219, 13
      %s221 = smul.addr %s220, 4
      %s222 = scalar_lea.vmem %s0, %s221
      %p223 = pneg %p38
      %p224 = pneg %p35
      %p225 = pneg %p59
      %p226 = pneg %p56
      %p227 = pneg %p80
      %p228 = pneg %p77
      %p229 = pneg %p101
      %p230 = pneg %p98
      %p231 = pneg %p122
      %p232 = pneg %p119
      %p233 = pneg %p143
      %p234 = pneg %p140
      %p235 = pneg %p169
      %p236 = pneg %p166
      %p237 = scmp.lt.s32.totalorder %s17, 1
      %s238 = scalar_select %p237, %s17, 1
      %s239 = smul.addr %s238, 10
      %s240 = smul.addr %s239, 4
      %s241 = scalar_lea.vmem %s6, %s240
      %p242 = scmp.lt.s32.totalorder %s17, 1
      %s243 = scalar_select %p242, %s17, 1
      %s244 = smul.addr %s243, 13
      %s245 = smul.addr %s244, 4
      %s246 = scalar_lea.vmem %s0, %s245
      %p247 = scmp.lt.s32.totalorder %s17, 1
      %s248 = scalar_select %p247, %s17, 1
      %s249 = smul.addr %s248, 10
      %s250 = smul.addr %s249, 4
      %s251 = scalar_lea.vmem %s6, %s250
      %253 = vst [vmem:[#allocation2] sm:$0xff] 0
      %254 = vst [vmem:[#allocation2 + $0x30] sm:$0xff] 0
      %v255 = vld [vmem:[%s4] sm:$0x7]
      %v256 = vld [vmem:[%s5] sm:$0xff]
      %v257 = vld [vmem:[%s5 + $0x8] sm:$0xff]
      %v258 = vld [vmem:[%s5 + $0x10] sm:$0xff]
      %v259 = vld [vmem:[%s5 + $0x18] sm:$0xff]
      %v260 = vld [vmem:[%s5 + $0x20] sm:$0xff]
      %v261 = vld [vmem:[%s5 + $0x28] sm:$0xff]
      %v262 = vld [vmem:[%s5 + $0x30] sm:$0xff]
      %v263 = vld [vmem:[%s5 + $0x38] sm:$0xff]
      %v264 = vld [vmem:[%s5 + $0x40] sm:$0xff]
      %v265 = vld [vmem:[%s5 + $0x48] sm:$0xff]
      %vm266 = vcmp.gt.f32.partialorder %v256, 0.0
      %vm267 = vcmp.gt.f32.partialorder %v257, 0.0
      %vm268 = vcmp.gt.f32.partialorder %v258, 0.0
      %vm269 = vcmp.gt.f32.partialorder %v259, 0.0
      %vm270 = vcmp.gt.f32.partialorder %v260, 0.0
      %vm271 = vcmp.gt.f32.partialorder %v261, 0.0
      %vm272 = vcmp.gt.f32.partialorder %v262, 0.0
      %vm273 = vcmp.gt.f32.partialorder %v263, 0.0
      %vm274 = vcmp.gt.f32.partialorder %v264, 0.0
      %vm275 = vcmp.gt.f32.partialorder %v265, 0.0
      %v276 = vld [vmem:[%s246] sm:$0xf]
      %v277 = vld [vmem:[%s246 + $0x4] sm:$0xf]
      %v278 = vld [vmem:[%s246 + $0x8] sm:$0xf]
      %v279 = vld [vmem:[%s246 + $0xc] sm:$0xf]
      %v280 = vld [vmem:[%s246 + $0x10] sm:$0xf]
      %v281 = vld [vmem:[%s246 + $0x14] sm:$0xf]
      %v282 = vld [vmem:[%s246 + $0x18] sm:$0xf]
      %v283 = vld [vmem:[%s246 + $0x1c] sm:$0xf]
      %v284 = vld [vmem:[%s246 + $0x20] sm:$0xf]
      %v285 = vld [vmem:[%s246 + $0x24] sm:$0xf]
      %v286 = vld [vmem:[%s1] sm:$0xf]
      %v287 = vld [vmem:[%s1 + $0x4] sm:$0xf]
      %v288 = vld [vmem:[%s1 + $0x8] sm:$0xf]
      %v289 = vld [vmem:[%s1 + $0xc] sm:$0xf]
      %v290 = vld [vmem:[%s1 + $0x10] sm:$0xf]
      %v291 = vld [vmem:[%s1 + $0x14] sm:$0xf]
      %v292 = vld [vmem:[%s1 + $0x18] sm:$0xf]
      %v293 = vld [vmem:[%s1 + $0x1c] sm:$0xf]
      %v294 = vld [vmem:[%s1 + $0x20] sm:$0xf]
      %v295 = vld [vmem:[%s1 + $0x24] sm:$0xf]
      %v296 = vld [vmem:[%s1 + $0x28] sm:$0xf]
      %v297 = vld [vmem:[%s1 + $0x2c] sm:$0xf]
      %v298 = vld [vmem:[%s1 + $0x30] sm:$0xf]
      %v299 = vld [vmem:[%s1 + $0x34] sm:$0xf]
      %v300 = vld [vmem:[%s1 + $0x38] sm:$0xf]
      %v301 = vld [vmem:[%s1 + $0x3c] sm:$0xf]
      %v302 = vld [vmem:[%s246 + $0x28] sm:$0x1]
      %s303 = scalar_lea.vmem %s1, 64
      %v304 = vld [vmem:[%s303] sm:$0xf]
      %v305 = vld [vmem:[%s303 + $0x4] sm:$0xf]
      %v306 = vld [vmem:[%s303 + $0x8] sm:$0xf]
      %v307 = vld [vmem:[%s303 + $0xc] sm:$0xf]
      %v308 = vld [vmem:[%s303 + $0x10] sm:$0xf]
      %v309 = vld [vmem:[%s303 + $0x14] sm:$0xf]
      %v310 = vld [vmem:[%s303 + $0x18] sm:$0xf]
      %v311 = vld [vmem:[%s303 + $0x1c] sm:$0xf]
      %v312 = vld [vmem:[%s303 + $0x20] sm:$0xf]
      %v313 = vld [vmem:[%s303 + $0x24] sm:$0xf]
      %v314 = vld [vmem:[%s303 + $0x28] sm:$0xf]
      %v315 = vld [vmem:[%s303 + $0x2c] sm:$0xf]
      %v316 = vld [vmem:[%s303 + $0x30] sm:$0xf]
      %v317 = vld [vmem:[%s303 + $0x34] sm:$0xf]
      %v318 = vld [vmem:[%s303 + $0x38] sm:$0xf]
      %v319 = vld [vmem:[%s303 + $0x3c] sm:$0xf]
      %v331 = vunpack.c.l.b16 %v276
      %v332 = vunpack.c.l.b16 %v277
      %v333 = vunpack.c.l.b16 %v278
      %v334 = vunpack.c.l.b16 %v279
      %v335 = vunpack.c.l.b16 %v280
      %v336 = vunpack.c.l.b16 %v281
      %v337 = vunpack.c.l.b16 %v282
      %v338 = vunpack.c.l.b16 %v283
      %v339 = vunpack.c.l.b16 %v284
      %v340 = vunpack.c.l.b16 %v285
      %v341 = vunpack.c.l.b16 %v302
      %v342 = vpack.c.b16 %v332, %v331
      %v343 = vpack.c.b16 %v334, %v333
      %v344 = vpack.c.b16 %v336, %v335
      %v345 = vpack.c.b16 %v338, %v337
      %v346 = vpack.c.b16 %v340, %v339
      %v347 = vpack.c.b16 %v341, %v341
      %vm348 = vsmask.f32 7424
      %v350 = vshrl.u32 %v342, 16
      %v352 = vshll.u32 %v342, 16
      %v354 = vrot.slane %v352, 1
      %v355 = vor.u32 %v350, %v354
      %v357 = vshll.u32 %v343, 16
      %v359 = vrot.slane %v357, 1
      %v360 = vsel %vm348, %v355, %v359
      %v361 = vshrl.u32 %v343, 16
      %v363 = vor.u32 %v361, %v359
      %v365 = vshll.u32 %v344, 16
      %v367 = vrot.slane %v365, 1
      %v368 = vsel %vm348, %v363, %v367
      %v369 = vshrl.u32 %v344, 16
      %v371 = vor.u32 %v369, %v367
      %v373 = vshll.u32 %v345, 16
      %v375 = vrot.slane %v373, 1
      %v376 = vsel %vm348, %v371, %v375
      %v377 = vshrl.u32 %v345, 16
      %v379 = vor.u32 %v377, %v375
      %v381 = vshll.u32 %v346, 16
      %v383 = vrot.slane %v381, 1
      %v384 = vsel %vm348, %v379, %v383
      %v385 = vshrl.u32 %v346, 16
      %v387 = vor.u32 %v385, %v383
      %v389 = vshll.u32 %v347, 16
      %v391 = vrot.slane %v389, 1
      %v392 = vsel %vm348, %v387, %v391
      %v414 = vunpack.c.l.b16 %v304
      %v415 = vunpack.c.l.b16 %v305
      %v416 = vunpack.c.l.b16 %v306
      %v417 = vunpack.c.l.b16 %v307
      %v418 = vunpack.c.l.b16 %v308
      %v419 = vunpack.c.l.b16 %v309
      %v420 = vunpack.c.l.b16 %v310
      %v421 = vunpack.c.l.b16 %v311
      %v422 = vunpack.c.l.b16 %v312
      %v423 = vunpack.c.l.b16 %v313
      %v424 = vunpack.c.l.b16 %v314
      %v425 = vunpack.c.l.b16 %v315
      %v426 = vunpack.c.l.b16 %v316
      %v427 = vunpack.c.l.b16 %v317
      %v428 = vunpack.c.l.b16 %v318
      %v429 = vunpack.c.l.b16 %v319
      %v430 = vpack.c.b16 %v415, %v414
      %v431 = vpack.c.b16 %v417, %v416
      %v432 = vpack.c.b16 %v419, %v418
      %v433 = vpack.c.b16 %v421, %v420
      %v434 = vpack.c.b16 %v423, %v422
      %v435 = vpack.c.b16 %v425, %v424
      %v436 = vpack.c.b16 %v427, %v426
      %v437 = vpack.c.b16 %v429, %v428
      %446 = vmatprep.subr.bf16.mxu0 0
      %447 = vmatpush1.bf16.msra.mxu0 %v430
      %448 = vmatprep.subr.bf16.mxu0 0
      %449 = vmatpush1.bf16.msra.mxu0 %v431
      %450 = vmatprep.subr.bf16.mxu0 0
      %451 = vmatpush1.bf16.msra.mxu0 %v432
      %452 = vmatprep.subr.bf16.mxu0 0
      %453 = vmatpush1.bf16.msra.mxu0 %v433
      %454 = vmatprep.subr.bf16.mxu0 0
      %455 = vmatpush1.bf16.msra.mxu0 %v434
      %456 = vmatprep.subr.bf16.mxu0 0
      %457 = vmatpush1.bf16.msra.mxu0 %v435
      %458 = vmatprep.subr.bf16.mxu0 0
      %459 = vmatpush1.bf16.msra.mxu0 %v436
      %460 = vmatprep.subr.bf16.mxu0 0
      %461 = vmatpush1.bf16.msra.mxu0 %v437
      %462 = vmatprep.subr.bf16.mxu0 0
      %463 = vmatpush1.bf16.msra.mxu0 0
      %464 = vmatprep.subr.bf16.mxu0 0
      %465 = vmatpush1.bf16.msra.mxu0 0
      %466 = vmatprep.subr.bf16.mxu0 0
      %467 = vmatpush1.bf16.msra.mxu0 0
      %468 = vmatprep.subr.bf16.mxu0 0
      %469 = vmatpush1.bf16.msra.mxu0 0
      %470 = vmatprep.subr.bf16.mxu0 0
      %471 = vmatpush1.bf16.msra.mxu0 0
      %472 = vmatprep.subr.bf16.mxu0 0
      %473 = vmatpush1.bf16.msra.mxu0 0
      %474 = vmatprep.subr.bf16.mxu0 0
      %475 = vmatpush1.bf16.msra.mxu0 0
      %476 = vmatprep.subr.bf16.mxu0 0
      %477 = vmatpush1.bf16.msra.mxu0 0
      %478 = vmatprep.mubr.bf16.mxu0 0
      %479 = vmatmul.mubr.bf16.gmra.mrb[0].mxu0 %v360
      %v480 = vpop.f32.mrb[0].mxu0
      %v481 = vadd.f32 0.0, %v480
      %v482 = vpop.f32.mrb[0].mxu0
      %v483 = vpop.f32.mrb[0].mxu0
      %v484 = vadd.f32 0.0, %v483
      %v485 = vpop.f32.mrb[0].mxu0
      %486 = vmatprep.mubr.bf16.mxu0 0
      %487 = vmatmul.mubr.bf16.gmra.mrb[0].mxu0 %v368
      %v488 = vpop.f32.mrb[0].mxu0
      %v489 = vadd.f32 0.0, %v488
      %v490 = vpop.f32.mrb[0].mxu0
      %v491 = vpop.f32.mrb[0].mxu0
      %v492 = vadd.f32 0.0, %v491
      %v493 = vpop.f32.mrb[0].mxu0
      %494 = vmatprep.mubr.bf16.mxu0 0
      %495 = vmatmul.mubr.bf16.gmra.mrb[0].mxu0 %v376
      %v496 = vpop.f32.mrb[0].mxu0
      %v497 = vadd.f32 0.0, %v496
      %v498 = vpop.f32.mrb[0].mxu0
      %v499 = vpop.f32.mrb[0].mxu0
      %v500 = vadd.f32 0.0, %v499
      %v501 = vpop.f32.mrb[0].mxu0
      %502 = vmatprep.mubr.bf16.mxu0 0
      %503 = vmatmul.mubr.bf16.gmra.mrb[0].mxu0 %v384
      %v504 = vpop.f32.mrb[0].mxu0
      %v505 = vadd.f32 0.0, %v504
      %v506 = vpop.f32.mrb[0].mxu0
      %v507 = vpop.f32.mrb[0].mxu0
      %v508 = vadd.f32 0.0, %v507
      %v509 = vpop.f32.mrb[0].mxu0
      %510 = vmatprep.mubr.bf16.mxu0 0
      %511 = vmatmul.mubr.bf16.gmra.mrb[0].mxu0 %v392
      %v512 = vpop.f32.mrb[0].mxu0
      %v513 = vadd.f32 0.0, %v512
      %v514 = vpop.f32.mrb[0].mxu0
      %v515 = vpop.f32.mrb[0].mxu0
      %v516 = vadd.f32 0.0, %v515
      %v517 = vpop.f32.mrb[0].mxu0
      %518 = vdwg.mxu0
      %v540 = vunpack.c.l.b16 %v286
      %v541 = vunpack.c.l.b16 %v287
      %v542 = vunpack.c.l.b16 %v288
      %v543 = vunpack.c.l.b16 %v289
      %v544 = vunpack.c.l.b16 %v290
      %v545 = vunpack.c.l.b16 %v291
      %v546 = vunpack.c.l.b16 %v292
      %v547 = vunpack.c.l.b16 %v293
      %v548 = vunpack.c.l.b16 %v294
      %v549 = vunpack.c.l.b16 %v295
      %v550 = vunpack.c.l.b16 %v296
      %v551 = vunpack.c.l.b16 %v297
      %v552 = vunpack.c.l.b16 %v298
      %v553 = vunpack.c.l.b16 %v299
      %v554 = vunpack.c.l.b16 %v300
      %v555 = vunpack.c.l.b16 %v301
      %v556 = vpack.c.b16 %v541, %v540
      %v557 = vpack.c.b16 %v543, %v542
      %v558 = vpack.c.b16 %v545, %v544
      %v559 = vpack.c.b16 %v547, %v546
      %v560 = vpack.c.b16 %v549, %v548
      %v561 = vpack.c.b16 %v551, %v550
      %v562 = vpack.c.b16 %v553, %v552
      %v563 = vpack.c.b16 %v555, %v554
      %572 = vmatprep.subr.bf16.mxu0 0
      %573 = vmatpush1.bf16.msra.mxu0 %v556
      %574 = vmatprep.subr.bf16.mxu0 0
      %575 = vmatpush1.bf16.msra.mxu0 %v557
      %576 = vmatprep.subr.bf16.mxu0 0
      %577 = vmatpush1.bf16.msra.mxu0 %v558
      %578 = vmatprep.subr.bf16.mxu0 0
      %579 = vmatpush1.bf16.msra.mxu0 %v559
      %580 = vmatprep.subr.bf16.mxu0 0
      %581 = vmatpush1.bf16.msra.mxu0 %v560
      %582 = vmatprep.subr.bf16.mxu0 0
      %583 = vmatpush1.bf16.msra.mxu0 %v561
      %584 = vmatprep.subr.bf16.mxu0 0
      %585 = vmatpush1.bf16.msra.mxu0 %v562
      %586 = vmatprep.subr.bf16.mxu0 0
      %587 = vmatpush1.bf16.msra.mxu0 %v563
      %588 = vmatprep.subr.bf16.mxu0 0
      %589 = vmatpush1.bf16.msra.mxu0 0
      %590 = vmatprep.subr.bf16.mxu0 0
      %591 = vmatpush1.bf16.msra.mxu0 0
      %592 = vmatprep.subr.bf16.mxu0 0
      %593 = vmatpush1.bf16.msra.mxu0 0
      %594 = vmatprep.subr.bf16.mxu0 0
      %595 = vmatpush1.bf16.msra.mxu0 0
      %596 = vmatprep.subr.bf16.mxu0 0
      %597 = vmatpush1.bf16.msra.mxu0 0
      %598 = vmatprep.subr.bf16.mxu0 0
      %599 = vmatpush1.bf16.msra.mxu0 0
      %600 = vmatprep.subr.bf16.mxu0 0
      %601 = vmatpush1.bf16.msra.mxu0 0
      %602 = vmatprep.subr.bf16.mxu0 0
      %603 = vmatpush1.bf16.msra.mxu0 0
      %604 = vmatprep.mubr.bf16.mxu0 0
      %605 = vmatmul.mubr.bf16.gmra.mrb[0].mxu0 %v342
      %v606 = vpop.f32.mrb[0].mxu0
      %v607 = vadd.f32 %v481, %v606
      %v608 = vpop.f32.mrb[0].mxu0
      %v609 = vpop.f32.mrb[0].mxu0
      %v610 = vadd.f32 %v484, %v609
      %v611 = vpop.f32.mrb[0].mxu0
      %612 = vmatprep.mubr.bf16.mxu0 0
      %613 = vmatmul.mubr.bf16.gmra.mrb[0].mxu0 %v343
      %v614 = vpop.f32.mrb[0].mxu0
      %v615 = vadd.f32 %v489, %v614
      %v616 = vpop.f32.mrb[0].mxu0
      %v617 = vpop.f32.mrb[0].mxu0
      %v618 = vadd.f32 %v492, %v617
      %v619 = vpop.f32.mrb[0].mxu0
      %620 = vmatprep.mubr.bf16.mxu0 0
      %621 = vmatmul.mubr.bf16.gmra.mrb[0].mxu0 %v344
      %v622 = vpop.f32.mrb[0].mxu0
      %v623 = vadd.f32 %v497, %v622
      %v624 = vpop.f32.mrb[0].mxu0
      %v625 = vpop.f32.mrb[0].mxu0
      %v626 = vadd.f32 %v500, %v625
      %v627 = vpop.f32.mrb[0].mxu0
      %628 = vmatprep.mubr.bf16.mxu0 0
      %629 = vmatmul.mubr.bf16.gmra.mrb[0].mxu0 %v345
      %v630 = vpop.f32.mrb[0].mxu0
      %v631 = vadd.f32 %v505, %v630
      %v632 = vpop.f32.mrb[0].mxu0
      %v633 = vpop.f32.mrb[0].mxu0
      %v634 = vadd.f32 %v508, %v633
      %v635 = vpop.f32.mrb[0].mxu0
      %636 = vmatprep.mubr.bf16.mxu0 0
      %637 = vmatmul.mubr.bf16.gmra.mrb[0].mxu0 %v346
      %v638 = vpop.f32.mrb[0].mxu0
      %v639 = vadd.f32 %v513, %v638
      %v640 = vpop.f32.mrb[0].mxu0
      %v641 = vpop.f32.mrb[0].mxu0
      %v642 = vadd.f32 %v516, %v641
      %v643 = vpop.f32.mrb[0].mxu0
      %644 = vdwg.mxu0
      %v645 = vld [vmem:[%s246 + $0x4] sm:$0xe]
      %v646 = vld [vmem:[%s246 + $0x8] sm:$0xf]
      %v647 = vld [vmem:[%s246 + $0xc] sm:$0xf]
      %v648 = vld [vmem:[%s246 + $0x10] sm:$0xf]
      %v649 = vld [vmem:[%s246 + $0x14] sm:$0xf]
      %v650 = vld [vmem:[%s246 + $0x18] sm:$0xf]
      %v651 = vld [vmem:[%s246 + $0x1c] sm:$0xf]
      %v652 = vld [vmem:[%s246 + $0x20] sm:$0xf]
      %v653 = vld [vmem:[%s246 + $0x24] sm:$0xf]
      %v654 = vld [vmem:[%s246 + $0x28] sm:$0xf]
      %v655 = vld [vmem:[%s246 + $0x2c] sm:$0x1]
      %s656 = scalar_lea.vmem %s1, 128
      %v657 = vld [vmem:[%s656] sm:$0xf]
      %v658 = vld [vmem:[%s656 + $0x4] sm:$0xf]
      %v659 = vld [vmem:[%s656 + $0x8] sm:$0xf]
      %v660 = vld [vmem:[%s656 + $0xc] sm:$0xf]
      %v661 = vld [vmem:[%s656 + $0x10] sm:$0xf]
      %v662 = vld [vmem:[%s656 + $0x14] sm:$0xf]
      %v663 = vld [vmem:[%s656 + $0x18] sm:$0xf]
      %v664 = vld [vmem:[%s656 + $0x1c] sm:$0xf]
      %v665 = vld [vmem:[%s656 + $0x20] sm:$0xf]
      %v666 = vld [vmem:[%s656 + $0x24] sm:$0xf]
      %v667 = vld [vmem:[%s656 + $0x28] sm:$0xf]
      %v668 = vld [vmem:[%s656 + $0x2c] sm:$0xf]
      %v669 = vld [vmem:[%s656 + $0x30] sm:$0xf]
      %v670 = vld [vmem:[%s656 + $0x34] sm:$0xf]
      %v671 = vld [vmem:[%s656 + $0x38] sm:$0xf]
      %v672 = vld [vmem:[%s656 + $0x3c] sm:$0xf]
      %v684 = vunpack.c.l.b16 %v645
      %v685 = vunpack.c.l.b16 %v646
      %v686 = vunpack.c.l.b16 %v647
      %v687 = vunpack.c.l.b16 %v648
      %v688 = vunpack.c.l.b16 %v649
      %v689 = vunpack.c.l.b16 %v650
      %v690 = vunpack.c.l.b16 %v651
      %v691 = vunpack.c.l.b16 %v652
      %v692 = vunpack.c.l.b16 %v653
      %v693 = vunpack.c.l.b16 %v654
      %v694 = vunpack.c.l.b16 %v655
      %v695 = vpack.c.b16 %v685, %v684
      %v696 = vpack.c.b16 %v687, %v686
      %v697 = vpack.c.b16 %v689, %v688
      %v698 = vpack.c.b16 %v691, %v690
      %v699 = vpack.c.b16 %v693, %v692
      %v700 = vpack.c.b16 %v694, %v694
      %vm701 = vcmask 1046528
      %v702 = vrot.slane %v695, 1
      %v703 = vrot.slane %v696, 1
      %v704 = vsel %vm701, %v702, %v703
      %v705 = vrot.slane %v697, 1
      %v706 = vsel %vm701, %v703, %v705
      %v707 = vrot.slane %v698, 1
      %v708 = vsel %vm701, %v705, %v707
      %v709 = vrot.slane %v699, 1
      %v710 = vsel %vm701, %v707, %v709
      %v711 = vrot.slane %v700, 1
      %v712 = vsel %vm701, %v709, %v711
      %v734 = vunpack.c.l.b16 %v657
      %v735 = vunpack.c.l.b16 %v658
      %v736 = vunpack.c.l.b16 %v659
      %v737 = vunpack.c.l.b16 %v660
      %v738 = vunpack.c.l.b16 %v661
      %v739 = vunpack.c.l.b16 %v662
      %v740 = vunpack.c.l.b16 %v663
      %v741 = vunpack.c.l.b16 %v664
      %v742 = vunpack.c.l.b16 %v665
      %v743 = vunpack.c.l.b16 %v666
      %v744 = vunpack.c.l.b16 %v667
      %v745 = vunpack.c.l.b16 %v668
      %v746 = vunpack.c.l.b16 %v669
      %v747 = vunpack.c.l.b16 %v670
      %v748 = vunpack.c.l.b16 %v671
      %v749 = vunpack.c.l.b16 %v672
      %v750 = vpack.c.b16 %v735, %v734
      %v751 = vpack.c.b16 %v737, %v736
      %v752 = vpack.c.b16 %v739, %v738
      %v753 = vpack.c.b16 %v741, %v740
      %v754 = vpack.c.b16 %v743, %v742
      %v755 = vpack.c.b16 %v745, %v744
      %v756 = vpack.c.b16 %v747, %v746
      %v757 = vpack.c.b16 %v749, %v748
      %766 = vmatprep.subr.bf16.mxu0 0
      %767 = vmatpush1.bf16.msra.mxu0 %v750
      %768 = vmatprep.subr.bf16.mxu0 0
      %769 = vmatpush1.bf16.msra.mxu0 %v751
      %770 = vmatprep.subr.bf16.mxu0 0
      %771 = vmatpush1.bf16.msra.mxu0 %v752
      %772 = vmatprep.subr.bf16.mxu0 0
      %773 = vmatpush1.bf16.msra.mxu0 %v753
      %774 = vmatprep.subr.bf16.mxu0 0
      %775 = vmatpush1.bf16.msra.mxu0 %v754
      %776 = vmatprep.subr.bf16.mxu0 0
      %777 = vmatpush1.bf16.msra.mxu0 %v755
      %778 = vmatprep.subr.bf16.mxu0 0
      %779 = vmatpush1.bf16.msra.mxu0 %v756
      %780 = vmatprep.subr.bf16.mxu0 0
      %781 = vmatpush1.bf16.msra.mxu0 %v757
      %782 = vmatprep.subr.bf16.mxu0 0
      %783 = vmatpush1.bf16.msra.mxu0 0
      %784 = vmatprep.subr.bf16.mxu0 0
      %785 = vmatpush1.bf16.msra.mxu0 0
      %786 = vmatprep.subr.bf16.mxu0 0
      %787 = vmatpush1.bf16.msra.mxu0 0
      %788 = vmatprep.subr.bf16.mxu0 0
      %789 = vmatpush1.bf16.msra.mxu0 0
      %790 = vmatprep.subr.bf16.mxu0 0
      %791 = vmatpush1.bf16.msra.mxu0 0
      %792 = vmatprep.subr.bf16.mxu0 0
      %793 = vmatpush1.bf16.msra.mxu0 0
      %794 = vmatprep.subr.bf16.mxu0 0
      %795 = vmatpush1.bf16.msra.mxu0 0
      %796 = vmatprep.subr.bf16.mxu0 0
      %797 = vmatpush1.bf16.msra.mxu0 0
      %798 = vmatprep.mubr.bf16.mxu0 0
      %799 = vmatmul.mubr.bf16.gmra.mrb[0].mxu0 %v704
      %v800 = vpop.f32.mrb[0].mxu0
      %v801 = vadd.f32 0.0, %v800
      %v802 = vpop.f32.mrb[0].mxu0
      %v803 = vpop.f32.mrb[0].mxu0
      %v804 = vadd.f32 0.0, %v803
      %v805 = vpop.f32.mrb[0].mxu0
      %806 = vmatprep.mubr.bf16.mxu0 0
      %807 = vmatmul.mubr.bf16.gmra.mrb[0].mxu0 %v706
      %v808 = vpop.f32.mrb[0].mxu0
      %v809 = vadd.f32 0.0, %v808
      %v810 = vpop.f32.mrb[0].mxu0
      %v811 = vpop.f32.mrb[0].mxu0
      %v812 = vadd.f32 0.0, %v811
      %v813 = vpop.f32.mrb[0].mxu0
      %814 = vmatprep.mubr.bf16.mxu0 0
      %815 = vmatmul.mubr.bf16.gmra.mrb[0].mxu0 %v708
      %v816 = vpop.f32.mrb[0].mxu0
      %v817 = vadd.f32 0.0, %v816
      %v818 = vpop.f32.mrb[0].mxu0
      %v819 = vpop.f32.mrb[0].mxu0
      %v820 = vadd.f32 0.0, %v819
      %v821 = vpop.f32.mrb[0].mxu0
      %822 = vmatprep.mubr.bf16.mxu0 0
      %823 = vmatmul.mubr.bf16.gmra.mrb[0].mxu0 %v710
      %v824 = vpop.f32.mrb[0].mxu0
      %v825 = vadd.f32 0.0, %v824
      %v826 = vpop.f32.mrb[0].mxu0
      %v827 = vpop.f32.mrb[0].mxu0
      %v828 = vadd.f32 0.0, %v827
      %v829 = vpop.f32.mrb[0].mxu0
      %830 = vmatprep.mubr.bf16.mxu0 0
      %831 = vmatmul.mubr.bf16.gmra.mrb[0].mxu0 %v712
      %v832 = vpop.f32.mrb[0].mxu0
      %v833 = vadd.f32 0.0, %v832
      %v834 = vpop.f32.mrb[0].mxu0
      %v835 = vpop.f32.mrb[0].mxu0
      %v836 = vadd.f32 0.0, %v835
      %v837 = vpop.f32.mrb[0].mxu0
      %838 = vdwg.mxu0
      %v839 = vadd.f32 %v607, %v801
      %v840 = vadd.f32 %v610, %v804
      %v841 = vadd.f32 %v615, %v809
      %v842 = vadd.f32 %v618, %v812
      %v843 = vadd.f32 %v623, %v817
      %v844 = vadd.f32 %v626, %v820
      %v845 = vadd.f32 %v631, %v825
      %v846 = vadd.f32 %v634, %v828
      %v847 = vadd.f32 %v639, %v833
      %v848 = vadd.f32 %v642, %v836
      %v849 = vld [vmem:[%s246 + $0x2c] sm:$0x3]
      %s850 = scalar_lea.vmem %s1, 192
      %v851 = vld [vmem:[%s850] sm:$0xf]
      %v852 = vld [vmem:[%s850 + $0x4] sm:$0xf]
      %v853 = vld [vmem:[%s850 + $0x8] sm:$0xf]
      %v854 = vld [vmem:[%s850 + $0xc] sm:$0xf]
      %v855 = vld [vmem:[%s850 + $0x10] sm:$0xf]
      %v856 = vld [vmem:[%s850 + $0x14] sm:$0xf]
      %v857 = vld [vmem:[%s850 + $0x18] sm:$0xf]
      %v858 = vld [vmem:[%s850 + $0x1c] sm:$0xf]
      %v859 = vld [vmem:[%s850 + $0x20] sm:$0xf]
      %v860 = vld [vmem:[%s850 + $0x24] sm:$0xf]
      %v861 = vld [vmem:[%s850 + $0x28] sm:$0xf]
      %v862 = vld [vmem:[%s850 + $0x2c] sm:$0xf]
      %v863 = vld [vmem:[%s850 + $0x30] sm:$0xf]
      %v864 = vld [vmem:[%s850 + $0x34] sm:$0xf]
      %v865 = vld [vmem:[%s850 + $0x38] sm:$0xf]
      %v866 = vld [vmem:[%s850 + $0x3c] sm:$0xf]
      %v868 = vunpack.c.l.b16 %v849
      %v869 = vpack.c.b16 %v868, %v868
      %vm870 = vsmask.f32 6400
      %v872 = vshrl.u32 %v695, 16
      %v874 = vrot.slane %v872, 1
      %v875 = vshll.u32 %v695, 16
      %v877 = vrot.slane %v875, 2
      %v878 = vor.u32 %v874, %v877
      %v880 = vshrl.u32 %v696, 16
      %v882 = vrot.slane %v880, 1
      %v883 = vshll.u32 %v696, 16
      %v885 = vrot.slane %v883, 2
      %v886 = vor.u32 %v882, %v885
      %v887 = vsel %vm870, %v878, %v886
      %v889 = vshrl.u32 %v697, 16
      %v891 = vrot.slane %v889, 1
      %v892 = vshll.u32 %v697, 16
      %v894 = vrot.slane %v892, 2
      %v895 = vor.u32 %v891, %v894
      %v896 = vsel %vm870, %v886, %v895
      %v898 = vshrl.u32 %v698, 16
      %v900 = vrot.slane %v898, 1
      %v901 = vshll.u32 %v698, 16
      %v903 = vrot.slane %v901, 2
      %v904 = vor.u32 %v900, %v903
      %v905 = vsel %vm870, %v895, %v904
      %v907 = vshrl.u32 %v699, 16
      %v909 = vrot.slane %v907, 1
      %v910 = vshll.u32 %v699, 16
      %v912 = vrot.slane %v910, 2
      %v913 = vor.u32 %v909, %v912
      %v914 = vsel %vm870, %v904, %v913
      %v916 = vshrl.u32 %v869, 16
      %v918 = vrot.slane %v916, 1
      %v919 = vshll.u32 %v869, 16
      %v921 = vrot.slane %v919, 2
      %v922 = vor.u32 %v918, %v921
      %v923 = vsel %vm870, %v913, %v922
      %v945 = vunpack.c.l.b16 %v851
      %v946 = vunpack.c.l.b16 %v852
      %v947 = vunpack.c.l.b16 %v853
      %v948 = vunpack.c.l.b16 %v854
      %v949 = vunpack.c.l.b16 %v855
      %v950 = vunpack.c.l.b16 %v856
      %v951 = vunpack.c.l.b16 %v857
      %v952 = vunpack.c.l.b16 %v858
      %v953 = vunpack.c.l.b16 %v859
      %v954 = vunpack.c.l.b16 %v860
      %v955 = vunpack.c.l.b16 %v861
      %v956 = vunpack.c.l.b16 %v862
      %v957 = vunpack.c.l.b16 %v863
      %v958 = vunpack.c.l.b16 %v864
      %v959 = vunpack.c.l.b16 %v865
      %v960 = vunpack.c.l.b16 %v866
      %v961 = vpack.c.b16 %v946, %v945
      %v962 = vpack.c.b16 %v948, %v947
      %v963 = vpack.c.b16 %v950, %v949
      %v964 = vpack.c.b16 %v952, %v951
      %v965 = vpack.c.b16 %v954, %v953
      %v966 = vpack.c.b16 %v956, %v955
      %v967 = vpack.c.b16 %v958, %v957
      %v968 = vpack.c.b16 %v960, %v959
      %977 = vmatprep.subr.bf16.mxu0 0
      %978 = vmatpush1.bf16.msra.mxu0 %v961
      %979 = vmatprep.subr.bf16.mxu0 0
      %980 = vmatpush1.bf16.msra.mxu0 %v962
      %981 = vmatprep.subr.bf16.mxu0 0
      %982 = vmatpush1.bf16.msra.mxu0 %v963
      %983 = vmatprep.subr.bf16.mxu0 0
      %984 = vmatpush1.bf16.msra.mxu0 %v964
      %985 = vmatprep.subr.bf16.mxu0 0
      %986 = vmatpush1.bf16.msra.mxu0 %v965
      %987 = vmatprep.subr.bf16.mxu0 0
      %988 = vmatpush1.bf16.msra.mxu0 %v966
      %989 = vmatprep.subr.bf16.mxu0 0
      %990 = vmatpush1.bf16.msra.mxu0 %v967
      %991 = vmatprep.subr.bf16.mxu0 0
      %992 = vmatpush1.bf16.msra.mxu0 %v968
      %993 = vmatprep.subr.bf16.mxu0 0
      %994 = vmatpush1.bf16.msra.mxu0 0
      %995 = vmatprep.subr.bf16.mxu0 0
      %996 = vmatpush1.bf16.msra.mxu0 0
      %997 = vmatprep.subr.bf16.mxu0 0
      %998 = vmatpush1.bf16.msra.mxu0 0
      %999 = vmatprep.subr.bf16.mxu0 0
      %1000 = vmatpush1.bf16.msra.mxu0 0
      %1001 = vmatprep.subr.bf16.mxu0 0
      %1002 = vmatpush1.bf16.msra.mxu0 0
      %1003 = vmatprep.subr.bf16.mxu0 0
      %1004 = vmatpush1.bf16.msra.mxu0 0
      %1005 = vmatprep.subr.bf16.mxu0 0
      %1006 = vmatpush1.bf16.msra.mxu0 0
      %1007 = vmatprep.subr.bf16.mxu0 0
      %1008 = vmatpush1.bf16.msra.mxu0 0
      %1009 = vmatprep.mubr.bf16.mxu0 0
      %1010 = vmatmul.mubr.bf16.gmra.mrb[0].mxu0 %v887
      %v1011 = vpop.f32.mrb[0].mxu0
      %v1012 = vadd.f32 0.0, %v1011
      %v1013 = vpop.f32.mrb[0].mxu0
      %v1014 = vpop.f32.mrb[0].mxu0
      %v1015 = vadd.f32 0.0, %v1014
      %v1016 = vpop.f32.mrb[0].mxu0
      %1017 = vmatprep.mubr.bf16.mxu0 0
      %1018 = vmatmul.mubr.bf16.gmra.mrb[0].mxu0 %v896
      %v1019 = vpop.f32.mrb[0].mxu0
      %v1020 = vadd.f32 0.0, %v1019
      %v1021 = vpop.f32.mrb[0].mxu0
      %v1022 = vpop.f32.mrb[0].mxu0
      %v1023 = vadd.f32 0.0, %v1022
      %v1024 = vpop.f32.mrb[0].mxu0
      %1025 = vmatprep.mubr.bf16.mxu0 0
      %1026 = vmatmul.mubr.bf16.gmra.mrb[0].mxu0 %v905
      %v1027 = vpop.f32.mrb[0].mxu0
      %v1028 = vadd.f32 0.0, %v1027
      %v1029 = vpop.f32.mrb[0].mxu0
      %v1030 = vpop.f32.mrb[0].mxu0
      %v1031 = vadd.f32 0.0, %v1030
      %v1032 = vpop.f32.mrb[0].mxu0
      %1033 = vmatprep.mubr.bf16.mxu0 0
      %1034 = vmatmul.mubr.bf16.gmra.mrb[0].mxu0 %v914
      %v1035 = vpop.f32.mrb[0].mxu0
      %v1036 = vadd.f32 0.0, %v1035
      %v1037 = vpop.f32.mrb[0].mxu0
      %v1038 = vpop.f32.mrb[0].mxu0
      %v1039 = vadd.f32 0.0, %v1038
      %v1040 = vpop.f32.mrb[0].mxu0
      %1041 = vmatprep.mubr.bf16.mxu0 0
      %1042 = vmatmul.mubr.bf16.gmra.mrb[0].mxu0 %v923
      %v1043 = vpop.f32.mrb[0].mxu0
      %v1044 = vadd.f32 0.0, %v1043
      %v1045 = vpop.f32.mrb[0].mxu0
      %v1046 = vpop.f32.mrb[0].mxu0
      %v1047 = vadd.f32 0.0, %v1046
      %v1048 = vpop.f32.mrb[0].mxu0
      %1049 = vdwg.mxu0
      %v1050 = vadd.f32 %v839, %v1012
      %v1051 = vadd.f32 %v840, %v1015
      %v1052 = vadd.f32 %v841, %v1020
      %v1053 = vadd.f32 %v842, %v1023
      %v1054 = vadd.f32 %v843, %v1028
      %v1055 = vadd.f32 %v844, %v1031
      %v1056 = vadd.f32 %v845, %v1036
      %v1057 = vadd.f32 %v846, %v1039
      %v1058 = vadd.f32 %v847, %v1044
      %v1059 = vadd.f32 %v848, %v1047
      %v1060 = vlaneseq
      %v1061 = vshrl.u32 %v1060, 7
      %v1062 = vsub.s32 0, %v1061
      %v1063 = vrot.slane %v255, %v1062
      %v1064 = vadd.f32 %v1050, %v1063
      %v1065 = vadd.f32 %v1051, %v1063
      %v1066 = vadd.f32 %v1052, %v1063
      %v1067 = vadd.f32 %v1053, %v1063
      %v1068 = vadd.f32 %v1054, %v1063
      %v1069 = vadd.f32 %v1055, %v1063
      %v1070 = vadd.f32 %v1056, %v1063
      %v1071 = vadd.f32 %v1057, %v1063
      %v1072 = vadd.f32 %v1058, %v1063
      %v1073 = vadd.f32 %v1059, %v1063
      %v1074 = vmax.f32 %v1064, 0.0
      %v1075 = vmax.f32 %v1065, 0.0
      %v1076 = vmax.f32 %v1066, 0.0
      %v1077 = vmax.f32 %v1067, 0.0
      %v1078 = vmax.f32 %v1068, 0.0
      %v1079 = vmax.f32 %v1069, 0.0
      %v1080 = vmax.f32 %v1070, 0.0
      %v1081 = vmax.f32 %v1071, 0.0
      %v1082 = vmax.f32 %v1072, 0.0
      %v1083 = vmax.f32 %v1073, 0.0
      %v1084 = vsel %vm266, 1, 0
      %v1085 = vsel %vm267, 1, 0
      %v1086 = vsel %vm268, 1, 0
      %v1087 = vsel %vm269, 1, 0
      %v1088 = vsel %vm270, 1, 0
      %v1089 = vsel %vm271, 1, 0
      %v1090 = vsel %vm272, 1, 0
      %v1091 = vsel %vm273, 1, 0
      %v1092 = vsel %vm274, 1, 0
      %v1093 = vsel %vm275, 1, 0
      %1094 = vset.pattern.permute.xlu0 0
      %1095 = vperm.xlu0 %1094, %v1084
      %v1096 = vpop.permute.xlu0 %1095
      %1097 = vset.pattern.permute.xlu0 0
      %1098 = vperm.xlu0 %1097, %v1085
      %v1099 = vpop.permute.xlu0 %1098
      %1100 = vset.pattern.permute.xlu0 0
      %1101 = vperm.xlu0 %1100, %v1086
      %v1102 = vpop.permute.xlu0 %1101
      %1103 = vset.pattern.permute.xlu0 0
      %1104 = vperm.xlu0 %1103, %v1087
      %v1105 = vpop.permute.xlu0 %1104
      %1106 = vset.pattern.permute.xlu0 0
      %1107 = vperm.xlu0 %1106, %v1088
      %v1108 = vpop.permute.xlu0 %1107
      %1109 = vset.pattern.permute.xlu0 0
      %1110 = vperm.xlu0 %1109, %v1089
      %v1111 = vpop.permute.xlu0 %1110
      %1112 = vset.pattern.permute.xlu0 0
      %1113 = vperm.xlu0 %1112, %v1090
      %v1114 = vpop.permute.xlu0 %1113
      %1115 = vset.pattern.permute.xlu0 0
      %1116 = vperm.xlu0 %1115, %v1091
      %v1117 = vpop.permute.xlu0 %1116
      %1118 = vset.pattern.permute.xlu0 0
      %1119 = vperm.xlu0 %1118, %v1092
      %v1120 = vpop.permute.xlu0 %1119
      %1121 = vset.pattern.permute.xlu0 0
      %1122 = vperm.xlu0 %1121, %v1093
      %v1123 = vpop.permute.xlu0 %1122
      %vm1124 = vcmp.eq.s32.totalorder %v1096, 1
      %vm1125 = vcmp.eq.s32.totalorder %v1099, 1
      %vm1126 = vcmp.eq.s32.totalorder %v1102, 1
      %vm1127 = vcmp.eq.s32.totalorder %v1105, 1
      %vm1128 = vcmp.eq.s32.totalorder %v1108, 1
      %vm1129 = vcmp.eq.s32.totalorder %v1111, 1
      %vm1130 = vcmp.eq.s32.totalorder %v1114, 1
      %vm1131 = vcmp.eq.s32.totalorder %v1117, 1
      %vm1132 = vcmp.eq.s32.totalorder %v1120, 1
      %vm1133 = vcmp.eq.s32.totalorder %v1123, 1
      %v1134 = vsel %vm1124, %v1074, 0.0
      %v1135 = vsel %vm1125, %v1075, 0.0
      %v1136 = vsel %vm1126, %v1076, 0.0
      %v1137 = vsel %vm1127, %v1077, 0.0
      %v1138 = vsel %vm1128, %v1078, 0.0
      %v1139 = vsel %vm1129, %v1079, 0.0
      %v1140 = vsel %vm1130, %v1080, 0.0
      %v1141 = vsel %vm1131, %v1081, 0.0
      %v1142 = vsel %vm1132, %v1082, 0.0
      %v1143 = vsel %vm1133, %v1083, 0.0
      %v1144 = vpack.c.bf16 %v1135, %v1134
      %v1145 = vpack.c.bf16 %v1137, %v1136
      %v1146 = vpack.c.bf16 %v1139, %v1138
      %v1147 = vpack.c.bf16 %v1141, %v1140
      %v1148 = vpack.c.bf16 %v1143, %v1142
      %1149 = vst [vmem:[#allocation2 + $0x8] sm:$0xff] %v1144
      %1150 = vst [vmem:[#allocation2 + $0x10] sm:$0xff] %v1145
      %1151 = vst [vmem:[#allocation2 + $0x18] sm:$0xff] %v1146
      %1152 = vst [vmem:[#allocation2 + $0x20] sm:$0xff] %v1147
      %1153 = vst [vmem:[#allocation2 + $0x28] sm:$0xff] %v1148
      %v1154 = vld [vmem:[#allocation2] sm:$0xfc]
      %v1155 = vld [vmem:[#allocation2 + $0x8] sm:$0xff]
      %v1156 = vld [vmem:[#allocation2 + $0x10] sm:$0xff]
      %v1157 = vld [vmem:[#allocation2 + $0x18] sm:$0xff]
      %v1158 = vld [vmem:[#allocation2 + $0x20] sm:$0xff]
      %v1159 = vld [vmem:[#allocation2 + $0x28] sm:$0x7]
      %v1160 = vld [vmem:[%s2] sm:$0xf]
      %v1161 = vld [vmem:[%s2 + $0x4] sm:$0xf]
      %v1162 = vld [vmem:[%s2 + $0x8] sm:$0xf]
      %v1163 = vld [vmem:[%s2 + $0xc] sm:$0xf]
      %v1164 = vld [vmem:[%s2 + $0x10] sm:$0xf]
      %v1165 = vld [vmem:[%s2 + $0x14] sm:$0xf]
      %v1166 = vld [vmem:[%s2 + $0x18] sm:$0xf]
      %v1167 = vld [vmem:[%s2 + $0x1c] sm:$0xf]
      %v1168 = vld [vmem:[%s2 + $0x20] sm:$0xf]
      %v1169 = vld [vmem:[%s2 + $0x24] sm:$0xf]
      %v1170 = vld [vmem:[%s2 + $0x28] sm:$0xf]
      %v1171 = vld [vmem:[%s2 + $0x2c] sm:$0xf]
      %v1172 = vld [vmem:[%s2 + $0x30] sm:$0xf]
      %v1173 = vld [vmem:[%s2 + $0x34] sm:$0xf]
      %v1174 = vld [vmem:[%s2 + $0x38] sm:$0xf]
      %v1175 = vld [vmem:[%s2 + $0x3c] sm:$0xf]
      %v1176 = vld [vmem:[#allocation2] sm:$0xf8]
      %s1177 = scalar_lea.vmem %s2, 64
      %v1178 = vld [vmem:[%s1177] sm:$0xf]
      %v1179 = vld [vmem:[%s1177 + $0x4] sm:$0xf]
      %v1180 = vld [vmem:[%s1177 + $0x8] sm:$0xf]
      %v1181 = vld [vmem:[%s1177 + $0xc] sm:$0xf]
      %v1182 = vld [vmem:[%s1177 + $0x10] sm:$0xf]
      %v1183 = vld [vmem:[%s1177 + $0x14] sm:$0xf]
      %v1184 = vld [vmem:[%s1177 + $0x18] sm:$0xf]
      %v1185 = vld [vmem:[%s1177 + $0x1c] sm:$0xf]
      %v1186 = vld [vmem:[%s1177 + $0x20] sm:$0xf]
      %v1187 = vld [vmem:[%s1177 + $0x24] sm:$0xf]
      %v1188 = vld [vmem:[%s1177 + $0x28] sm:$0xf]
      %v1189 = vld [vmem:[%s1177 + $0x2c] sm:$0xf]
      %v1190 = vld [vmem:[%s1177 + $0x30] sm:$0xf]
      %v1191 = vld [vmem:[%s1177 + $0x34] sm:$0xf]
      %v1192 = vld [vmem:[%s1177 + $0x38] sm:$0xf]
      %v1193 = vld [vmem:[%s1177 + $0x3c] sm:$0xf]
      %vm1200 = vcmask 1044480
      %v1201 = vrot.slane %v1176, 3
      %v1202 = vrot.slane %v1155, 3
      %v1203 = vsel %vm1200, %v1201, %v1202
      %v1204 = vrot.slane %v1156, 3
      %v1205 = vsel %vm1200, %v1202, %v1204
      %v1206 = vrot.slane %v1157, 3
      %v1207 = vsel %vm1200, %v1204, %v1206
      %v1208 = vrot.slane %v1158, 3
      %v1209 = vsel %vm1200, %v1206, %v1208
      %v1210 = vrot.slane %v1159, 3
      %v1211 = vsel %vm1200, %v1208, %v1210
      %v1233 = vunpack.c.l.b16 %v1178
      %v1234 = vunpack.c.l.b16 %v1179
      %v1235 = vunpack.c.l.b16 %v1180
      %v1236 = vunpack.c.l.b16 %v1181
      %v1237 = vunpack.c.l.b16 %v1182
      %v1238 = vunpack.c.l.b16 %v1183
      %v1239 = vunpack.c.l.b16 %v1184
      %v1240 = vunpack.c.l.b16 %v1185
      %v1241 = vunpack.c.l.b16 %v1186
      %v1242 = vunpack.c.l.b16 %v1187
      %v1243 = vunpack.c.l.b16 %v1188
      %v1244 = vunpack.c.l.b16 %v1189
      %v1245 = vunpack.c.l.b16 %v1190
      %v1246 = vunpack.c.l.b16 %v1191
      %v1247 = vunpack.c.l.b16 %v1192
      %v1248 = vunpack.c.l.b16 %v1193
      %v1249 = vpack.c.b16 %v1234, %v1233
      %v1250 = vpack.c.b16 %v1236, %v1235
      %v1251 = vpack.c.b16 %v1238, %v1237
      %v1252 = vpack.c.b16 %v1240, %v1239
      %v1253 = vpack.c.b16 %v1242, %v1241
      %v1254 = vpack.c.b16 %v1244, %v1243
      %v1255 = vpack.c.b16 %v1246, %v1245
      %v1256 = vpack.c.b16 %v1248, %v1247
      %1265 = vmatprep.subr.bf16.mxu0 0
      %1266 = vmatpush1.bf16.msra.mxu0 %v1249
      %1267 = vmatprep.subr.bf16.mxu0 0
      %1268 = vmatpush1.bf16.msra.mxu0 %v1250
      %1269 = vmatprep.subr.bf16.mxu0 0
      %1270 = vmatpush1.bf16.msra.mxu0 %v1251
      %1271 = vmatprep.subr.bf16.mxu0 0
      %1272 = vmatpush1.bf16.msra.mxu0 %v1252
      %1273 = vmatprep.subr.bf16.mxu0 0
      %1274 = vmatpush1.bf16.msra.mxu0 %v1253
      %1275 = vmatprep.subr.bf16.mxu0 0
      %1276 = vmatpush1.bf16.msra.mxu0 %v1254
      %1277 = vmatprep.subr.bf16.mxu0 0
      %1278 = vmatpush1.bf16.msra.mxu0 %v1255
      %1279 = vmatprep.subr.bf16.mxu0 0
      %1280 = vmatpush1.bf16.msra.mxu0 %v1256
      %1281 = vmatprep.subr.bf16.mxu0 0
      %1282 = vmatpush1.bf16.msra.mxu0 0
      %1283 = vmatprep.subr.bf16.mxu0 0
      %1284 = vmatpush1.bf16.msra.mxu0 0
      %1285 = vmatprep.subr.bf16.mxu0 0
      %1286 = vmatpush1.bf16.msra.mxu0 0
      %1287 = vmatprep.subr.bf16.mxu0 0
      %1288 = vmatpush1.bf16.msra.mxu0 0
      %1289 = vmatprep.subr.bf16.mxu0 0
      %1290 = vmatpush1.bf16.msra.mxu0 0
      %1291 = vmatprep.subr.bf16.mxu0 0
      %1292 = vmatpush1.bf16.msra.mxu0 0
      %1293 = vmatprep.subr.bf16.mxu0 0
      %1294 = vmatpush1.bf16.msra.mxu0 0
      %1295 = vmatprep.subr.bf16.mxu0 0
      %1296 = vmatpush1.bf16.msra.mxu0 0
      %1297 = vmatprep.mubr.bf16.mxu0 0
      %1298 = vmatmul.mubr.bf16.gmra.mrb[0].mxu0 %v1203
      %v1299 = vpop.f32.mrb[0].mxu0
      %v1300 = vadd.f32 0.0, %v1299
      %v1301 = vpop.f32.mrb[0].mxu0
      %v1302 = vpop.f32.mrb[0].mxu0
      %v1303 = vadd.f32 0.0, %v1302
      %v1304 = vpop.f32.mrb[0].mxu0
      %1305 = vmatprep.mubr.bf16.mxu0 0
      %1306 = vmatmul.mubr.bf16.gmra.mrb[0].mxu0 %v1205
      %v1307 = vpop.f32.mrb[0].mxu0
      %v1308 = vadd.f32 0.0, %v1307
      %v1309 = vpop.f32.mrb[0].mxu0
      %v1310 = vpop.f32.mrb[0].mxu0
      %v1311 = vadd.f32 0.0, %v1310
      %v1312 = vpop.f32.mrb[0].mxu0
      %1313 = vmatprep.mubr.bf16.mxu0 0
      %1314 = vmatmul.mubr.bf16.gmra.mrb[0].mxu0 %v1207
      %v1315 = vpop.f32.mrb[0].mxu0
      %v1316 = vadd.f32 0.0, %v1315
      %v1317 = vpop.f32.mrb[0].mxu0
      %v1318 = vpop.f32.mrb[0].mxu0
      %v1319 = vadd.f32 0.0, %v1318
      %v1320 = vpop.f32.mrb[0].mxu0
      %1321 = vmatprep.mubr.bf16.mxu0 0
      %1322 = vmatmul.mubr.bf16.gmra.mrb[0].mxu0 %v1209
      %v1323 = vpop.f32.mrb[0].mxu0
      %v1324 = vadd.f32 0.0, %v1323
      %v1325 = vpop.f32.mrb[0].mxu0
      %v1326 = vpop.f32.mrb[0].mxu0
      %v1327 = vadd.f32 0.0, %v1326
      %v1328 = vpop.f32.mrb[0].mxu0
      %1329 = vmatprep.mubr.bf16.mxu0 0
      %1330 = vmatmul.mubr.bf16.gmra.mrb[0].mxu0 %v1211
      %v1331 = vpop.f32.mrb[0].mxu0
      %v1332 = vadd.f32 0.0, %v1331
      %v1333 = vpop.f32.mrb[0].mxu0
      %v1334 = vpop.f32.mrb[0].mxu0
      %v1335 = vadd.f32 0.0, %v1334
      %v1336 = vpop.f32.mrb[0].mxu0
      %1337 = vdwg.mxu0
      %vm1338 = vsmask.f32 5376
      %v1340 = vshrl.u32 %v1154, 16
      %v1342 = vrot.slane %v1340, 2
      %v1343 = vshll.u32 %v1154, 16
      %v1345 = vrot.slane %v1343, 3
      %v1346 = vor.u32 %v1342, %v1345
      %v1348 = vshrl.u32 %v1155, 16
      %v1350 = vrot.slane %v1348, 2
      %v1351 = vshll.u32 %v1155, 16
      %v1353 = vrot.slane %v1351, 3
      %v1354 = vor.u32 %v1350, %v1353
      %v1355 = vsel %vm1338, %v1346, %v1354
      %v1357 = vshrl.u32 %v1156, 16
      %v1359 = vrot.slane %v1357, 2
      %v1360 = vshll.u32 %v1156, 16
      %v1362 = vrot.slane %v1360, 3
      %v1363 = vor.u32 %v1359, %v1362
      %v1364 = vsel %vm1338, %v1354, %v1363
      %v1366 = vshrl.u32 %v1157, 16
      %v1368 = vrot.slane %v1366, 2
      %v1369 = vshll.u32 %v1157, 16
      %v1371 = vrot.slane %v1369, 3
      %v1372 = vor.u32 %v1368, %v1371
      %v1373 = vsel %vm1338, %v1363, %v1372
      %v1375 = vshrl.u32 %v1158, 16
      %v1377 = vrot.slane %v1375, 2
      %v1378 = vshll.u32 %v1158, 16
      %v1380 = vrot.slane %v1378, 3
      %v1381 = vor.u32 %v1377, %v1380
      %v1382 = vsel %vm1338, %v1372, %v1381
      %v1384 = vshrl.u32 %v1159, 16
      %v1386 = vrot.slane %v1384, 2
      %v1387 = vshll.u32 %v1159, 16
      %v1389 = vrot.slane %v1387, 3
      %v1390 = vor.u32 %v1386, %v1389
      %v1391 = vsel %vm1338, %v1381, %v1390
      %v1413 = vunpack.c.l.b16 %v1160
      %v1414 = vunpack.c.l.b16 %v1161
      %v1415 = vunpack.c.l.b16 %v1162
      %v1416 = vunpack.c.l.b16 %v1163
      %v1417 = vunpack.c.l.b16 %v1164
      %v1418 = vunpack.c.l.b16 %v1165
      %v1419 = vunpack.c.l.b16 %v1166
      %v1420 = vunpack.c.l.b16 %v1167
      %v1421 = vunpack.c.l.b16 %v1168
      %v1422 = vunpack.c.l.b16 %v1169
      %v1423 = vunpack.c.l.b16 %v1170
      %v1424 = vunpack.c.l.b16 %v1171
      %v1425 = vunpack.c.l.b16 %v1172
      %v1426 = vunpack.c.l.b16 %v1173
      %v1427 = vunpack.c.l.b16 %v1174
      %v1428 = vunpack.c.l.b16 %v1175
      %v1429 = vpack.c.b16 %v1414, %v1413
      %v1430 = vpack.c.b16 %v1416, %v1415
      %v1431 = vpack.c.b16 %v1418, %v1417
      %v1432 = vpack.c.b16 %v1420, %v1419
      %v1433 = vpack.c.b16 %v1422, %v1421
      %v1434 = vpack.c.b16 %v1424, %v1423
      %v1435 = vpack.c.b16 %v1426, %v1425
      %v1436 = vpack.c.b16 %v1428, %v1427
      %1445 = vmatprep.subr.bf16.mxu0 0
      %1446 = vmatpush1.bf16.msra.mxu0 %v1429
      %1447 = vmatprep.subr.bf16.mxu0 0
      %1448 = vmatpush1.bf16.msra.mxu0 %v1430
      %1449 = vmatprep.subr.bf16.mxu0 0
      %1450 = vmatpush1.bf16.msra.mxu0 %v1431
      %1451 = vmatprep.subr.bf16.mxu0 0
      %1452 = vmatpush1.bf16.msra.mxu0 %v1432
      %1453 = vmatprep.subr.bf16.mxu0 0
      %1454 = vmatpush1.bf16.msra.mxu0 %v1433
      %1455 = vmatprep.subr.bf16.mxu0 0
      %1456 = vmatpush1.bf16.msra.mxu0 %v1434
      %1457 = vmatprep.subr.bf16.mxu0 0
      %1458 = vmatpush1.bf16.msra.mxu0 %v1435
      %1459 = vmatprep.subr.bf16.mxu0 0
      %1460 = vmatpush1.bf16.msra.mxu0 %v1436
      %1461 = vmatprep.subr.bf16.mxu0 0
      %1462 = vmatpush1.bf16.msra.mxu0 0
      %1463 = vmatprep.subr.bf16.mxu0 0
      %1464 = vmatpush1.bf16.msra.mxu0 0
      %1465 = vmatprep.subr.bf16.mxu0 0
      %1466 = vmatpush1.bf16.msra.mxu0 0
      %1467 = vmatprep.subr.bf16.mxu0 0
      %1468 = vmatpush1.bf16.msra.mxu0 0
      %1469 = vmatprep.subr.bf16.mxu0 0
      %1470 = vmatpush1.bf16.msra.mxu0 0
      %1471 = vmatprep.subr.bf16.mxu0 0
      %1472 = vmatpush1.bf16.msra.mxu0 0
      %1473 = vmatprep.subr.bf16.mxu0 0
      %1474 = vmatpush1.bf16.msra.mxu0 0
      %1475 = vmatprep.subr.bf16.mxu0 0
      %1476 = vmatpush1.bf16.msra.mxu0 0
      %1477 = vmatprep.mubr.bf16.mxu0 0
      %1478 = vmatmul.mubr.bf16.gmra.mrb[0].mxu0 %v1355
      %v1479 = vpop.f32.mrb[0].mxu0
      %v1480 = vadd.f32 %v1300, %v1479
      %v1481 = vpop.f32.mrb[0].mxu0
      %v1482 = vpop.f32.mrb[0].mxu0
      %v1483 = vadd.f32 %v1303, %v1482
      %v1484 = vpop.f32.mrb[0].mxu0
      %1485 = vmatprep.mubr.bf16.mxu0 0
      %1486 = vmatmul.mubr.bf16.gmra.mrb[0].mxu0 %v1364
      %v1487 = vpop.f32.mrb[0].mxu0
      %v1488 = vadd.f32 %v1308, %v1487
      %v1489 = vpop.f32.mrb[0].mxu0
      %v1490 = vpop.f32.mrb[0].mxu0
      %v1491 = vadd.f32 %v1311, %v1490
      %v1492 = vpop.f32.mrb[0].mxu0
      %1493 = vmatprep.mubr.bf16.mxu0 0
      %1494 = vmatmul.mubr.bf16.gmra.mrb[0].mxu0 %v1373
      %v1495 = vpop.f32.mrb[0].mxu0
      %v1496 = vadd.f32 %v1316, %v1495
      %v1497 = vpop.f32.mrb[0].mxu0
      %v1498 = vpop.f32.mrb[0].mxu0
      %v1499 = vadd.f32 %v1319, %v1498
      %v1500 = vpop.f32.mrb[0].mxu0
      %1501 = vmatprep.mubr.bf16.mxu0 0
      %1502 = vmatmul.mubr.bf16.gmra.mrb[0].mxu0 %v1382
      %v1503 = vpop.f32.mrb[0].mxu0
      %v1504 = vadd.f32 %v1324, %v1503
      %v1505 = vpop.f32.mrb[0].mxu0
      %v1506 = vpop.f32.mrb[0].mxu0
      %v1507 = vadd.f32 %v1327, %v1506
      %v1508 = vpop.f32.mrb[0].mxu0
      %1509 = vmatprep.mubr.bf16.mxu0 0
      %1510 = vmatmul.mubr.bf16.gmra.mrb[0].mxu0 %v1391
      %v1511 = vpop.f32.mrb[0].mxu0
      %v1512 = vadd.f32 %v1332, %v1511
      %v1513 = vpop.f32.mrb[0].mxu0
      %v1514 = vpop.f32.mrb[0].mxu0
      %v1515 = vadd.f32 %v1335, %v1514
      %v1516 = vpop.f32.mrb[0].mxu0
      %1517 = vdwg.mxu0
      %v1518 = vld [vmem:[#allocation2 + $0x28] sm:$0xf]
      %s1519 = scalar_lea.vmem %s2, 128
      %v1520 = vld [vmem:[%s1519] sm:$0xf]
      %v1521 = vld [vmem:[%s1519 + $0x4] sm:$0xf]
      %v1522 = vld [vmem:[%s1519 + $0x8] sm:$0xf]
      %v1523 = vld [vmem:[%s1519 + $0xc] sm:$0xf]
      %v1524 = vld [vmem:[%s1519 + $0x10] sm:$0xf]
      %v1525 = vld [vmem:[%s1519 + $0x14] sm:$0xf]
      %v1526 = vld [vmem:[%s1519 + $0x18] sm:$0xf]
      %v1527 = vld [vmem:[%s1519 + $0x1c] sm:$0xf]
      %v1528 = vld [vmem:[%s1519 + $0x20] sm:$0xf]
      %v1529 = vld [vmem:[%s1519 + $0x24] sm:$0xf]
      %v1530 = vld [vmem:[%s1519 + $0x28] sm:$0xf]
      %v1531 = vld [vmem:[%s1519 + $0x2c] sm:$0xf]
      %v1532 = vld [vmem:[%s1519 + $0x30] sm:$0xf]
      %v1533 = vld [vmem:[%s1519 + $0x34] sm:$0xf]
      %v1534 = vld [vmem:[%s1519 + $0x38] sm:$0xf]
      %v1535 = vld [vmem:[%s1519 + $0x3c] sm:$0xf]
      %vm1536 = vsmask.f32 4352
      %v1538 = vshrl.u32 %v1176, 16
      %v1540 = vrot.slane %v1538, 3
      %v1541 = vshll.u32 %v1176, 16
      %v1543 = vrot.slane %v1541, 4
      %v1544 = vor.u32 %v1540, %v1543
      %v1545 = vrot.slane %v1348, 3
      %v1546 = vrot.slane %v1351, 4
      %v1547 = vor.u32 %v1545, %v1546
      %v1548 = vsel %vm1536, %v1544, %v1547
      %v1549 = vrot.slane %v1357, 3
      %v1550 = vrot.slane %v1360, 4
      %v1551 = vor.u32 %v1549, %v1550
      %v1552 = vsel %vm1536, %v1547, %v1551
      %v1553 = vrot.slane %v1366, 3
      %v1554 = vrot.slane %v1369, 4
      %v1555 = vor.u32 %v1553, %v1554
      %v1556 = vsel %vm1536, %v1551, %v1555
      %v1557 = vrot.slane %v1375, 3
      %v1558 = vrot.slane %v1378, 4
      %v1559 = vor.u32 %v1557, %v1558
      %v1560 = vsel %vm1536, %v1555, %v1559
      %v1562 = vshrl.u32 %v1518, 16
      %v1564 = vrot.slane %v1562, 3
      %v1565 = vshll.u32 %v1518, 16
      %v1567 = vrot.slane %v1565, 4
      %v1568 = vor.u32 %v1564, %v1567
      %v1569 = vsel %vm1536, %v1559, %v1568
      %v1591 = vunpack.c.l.b16 %v1520
      %v1592 = vunpack.c.l.b16 %v1521
      %v1593 = vunpack.c.l.b16 %v1522
      %v1594 = vunpack.c.l.b16 %v1523
      %v1595 = vunpack.c.l.b16 %v1524
      %v1596 = vunpack.c.l.b16 %v1525
      %v1597 = vunpack.c.l.b16 %v1526
      %v1598 = vunpack.c.l.b16 %v1527
      %v1599 = vunpack.c.l.b16 %v1528
      %v1600 = vunpack.c.l.b16 %v1529
      %v1601 = vunpack.c.l.b16 %v1530
      %v1602 = vunpack.c.l.b16 %v1531
      %v1603 = vunpack.c.l.b16 %v1532
      %v1604 = vunpack.c.l.b16 %v1533
      %v1605 = vunpack.c.l.b16 %v1534
      %v1606 = vunpack.c.l.b16 %v1535
      %v1607 = vpack.c.b16 %v1592, %v1591
      %v1608 = vpack.c.b16 %v1594, %v1593
      %v1609 = vpack.c.b16 %v1596, %v1595
      %v1610 = vpack.c.b16 %v1598, %v1597
      %v1611 = vpack.c.b16 %v1600, %v1599
      %v1612 = vpack.c.b16 %v1602, %v1601
      %v1613 = vpack.c.b16 %v1604, %v1603
      %v1614 = vpack.c.b16 %v1606, %v1605
      %1623 = vmatprep.subr.bf16.mxu0 0
      %1624 = vmatpush1.bf16.msra.mxu0 %v1607
      %1625 = vmatprep.subr.bf16.mxu0 0
      %1626 = vmatpush1.bf16.msra.mxu0 %v1608
      %1627 = vmatprep.subr.bf16.mxu0 0
      %1628 = vmatpush1.bf16.msra.mxu0 %v1609
      %1629 = vmatprep.subr.bf16.mxu0 0
      %1630 = vmatpush1.bf16.msra.mxu0 %v1610
      %1631 = vmatprep.subr.bf16.mxu0 0
      %1632 = vmatpush1.bf16.msra.mxu0 %v1611
      %1633 = vmatprep.subr.bf16.mxu0 0
      %1634 = vmatpush1.bf16.msra.mxu0 %v1612
      %1635 = vmatprep.subr.bf16.mxu0 0
      %1636 = vmatpush1.bf16.msra.mxu0 %v1613
      %1637 = vmatprep.subr.bf16.mxu0 0
      %1638 = vmatpush1.bf16.msra.mxu0 %v1614
      %1639 = vmatprep.subr.bf16.mxu0 0
      %1640 = vmatpush1.bf16.msra.mxu0 0
      %1641 = vmatprep.subr.bf16.mxu0 0
      %1642 = vmatpush1.bf16.msra.mxu0 0
      %1643 = vmatprep.subr.bf16.mxu0 0
      %1644 = vmatpush1.bf16.msra.mxu0 0
      %1645 = vmatprep.subr.bf16.mxu0 0
      %1646 = vmatpush1.bf16.msra.mxu0 0
      %1647 = vmatprep.subr.bf16.mxu0 0
      %1648 = vmatpush1.bf16.msra.mxu0 0
      %1649 = vmatprep.subr.bf16.mxu0 0
      %1650 = vmatpush1.bf16.msra.mxu0 0
      %1651 = vmatprep.subr.bf16.mxu0 0
      %1652 = vmatpush1.bf16.msra.mxu0 0
      %1653 = vmatprep.subr.bf16.mxu0 0
      %1654 = vmatpush1.bf16.msra.mxu0 0
      %1655 = vmatprep.mubr.bf16.mxu0 0
      %1656 = vmatmul.mubr.bf16.gmra.mrb[0].mxu0 %v1548
      %v1657 = vpop.f32.mrb[0].mxu0
      %v1658 = vadd.f32 0.0, %v1657
      %v1659 = vpop.f32.mrb[0].mxu0
      %v1660 = vpop.f32.mrb[0].mxu0
      %v1661 = vadd.f32 0.0, %v1660
      %v1662 = vpop.f32.mrb[0].mxu0
      %1663 = vmatprep.mubr.bf16.mxu0 0
      %1664 = vmatmul.mubr.bf16.gmra.mrb[0].mxu0 %v1552
      %v1665 = vpop.f32.mrb[0].mxu0
      %v1666 = vadd.f32 0.0, %v1665
      %v1667 = vpop.f32.mrb[0].mxu0
      %v1668 = vpop.f32.mrb[0].mxu0
      %v1669 = vadd.f32 0.0, %v1668
      %v1670 = vpop.f32.mrb[0].mxu0
      %1671 = vmatprep.mubr.bf16.mxu0 0
      %1672 = vmatmul.mubr.bf16.gmra.mrb[0].mxu0 %v1556
      %v1673 = vpop.f32.mrb[0].mxu0
      %v1674 = vadd.f32 0.0, %v1673
      %v1675 = vpop.f32.mrb[0].mxu0
      %v1676 = vpop.f32.mrb[0].mxu0
      %v1677 = vadd.f32 0.0, %v1676
      %v1678 = vpop.f32.mrb[0].mxu0
      %1679 = vmatprep.mubr.bf16.mxu0 0
      %1680 = vmatmul.mubr.bf16.gmra.mrb[0].mxu0 %v1560
      %v1681 = vpop.f32.mrb[0].mxu0
      %v1682 = vadd.f32 0.0, %v1681
      %v1683 = vpop.f32.mrb[0].mxu0
      %v1684 = vpop.f32.mrb[0].mxu0
      %v1685 = vadd.f32 0.0, %v1684
      %v1686 = vpop.f32.mrb[0].mxu0
      %1687 = vmatprep.mubr.bf16.mxu0 0
      %1688 = vmatmul.mubr.bf16.gmra.mrb[0].mxu0 %v1569
      %v1689 = vpop.f32.mrb[0].mxu0
      %v1690 = vadd.f32 0.0, %v1689
      %v1691 = vpop.f32.mrb[0].mxu0
      %v1692 = vpop.f32.mrb[0].mxu0
      %v1693 = vadd.f32 0.0, %v1692
      %v1694 = vpop.f32.mrb[0].mxu0
      %1695 = vdwg.mxu0
      %v1696 = vadd.f32 %v1480, %v1658
      %v1697 = vadd.f32 %v1483, %v1661
      %v1698 = vadd.f32 %v1488, %v1666
      %v1699 = vadd.f32 %v1491, %v1669
      %v1700 = vadd.f32 %v1496, %v1674
      %v1701 = vadd.f32 %v1499, %v1677
      %v1702 = vadd.f32 %v1504, %v1682
      %v1703 = vadd.f32 %v1507, %v1685
      %v1704 = vadd.f32 %v1512, %v1690
      %v1705 = vadd.f32 %v1515, %v1693
      %v1706 = vld [vmem:[#allocation2] sm:$0x80]
      %v1707 = vld [vmem:[#allocation2 + $0x28] sm:$0xff]
      %s1708 = scalar_lea.vmem %s2, 192
      %v1709 = vld [vmem:[%s1708] sm:$0xf]
      %v1710 = vld [vmem:[%s1708 + $0x4] sm:$0xf]
      %v1711 = vld [vmem:[%s1708 + $0x8] sm:$0xf]
      %v1712 = vld [vmem:[%s1708 + $0xc] sm:$0xf]
      %v1713 = vld [vmem:[%s1708 + $0x10] sm:$0xf]
      %v1714 = vld [vmem:[%s1708 + $0x14] sm:$0xf]
      %v1715 = vld [vmem:[%s1708 + $0x18] sm:$0xf]
      %v1716 = vld [vmem:[%s1708 + $0x1c] sm:$0xf]
      %v1717 = vld [vmem:[%s1708 + $0x20] sm:$0xf]
      %v1718 = vld [vmem:[%s1708 + $0x24] sm:$0xf]
      %v1719 = vld [vmem:[%s1708 + $0x28] sm:$0xf]
      %v1720 = vld [vmem:[%s1708 + $0x2c] sm:$0xf]
      %v1721 = vld [vmem:[%s1708 + $0x30] sm:$0xf]
      %v1722 = vld [vmem:[%s1708 + $0x34] sm:$0xf]
      %v1723 = vld [vmem:[%s1708 + $0x38] sm:$0xf]
      %v1724 = vld [vmem:[%s1708 + $0x3c] sm:$0xf]
      %vm1725 = vsmask.f32 256
      %v1727 = vshrl.u32 %v1706, 16
      %v1729 = vrot.slane %v1727, 7
      %v1730 = vrot.slane %v1348, 7
      %v1731 = vor.u32 %v1730, %v1351
      %v1732 = vsel %vm1725, %v1729, %v1731
      %v1733 = vrot.slane %v1357, 7
      %v1734 = vor.u32 %v1733, %v1360
      %v1735 = vsel %vm1725, %v1730, %v1734
      %v1736 = vrot.slane %v1366, 7
      %v1737 = vor.u32 %v1736, %v1369
      %v1738 = vsel %vm1725, %v1733, %v1737
      %v1739 = vrot.slane %v1375, 7
      %v1740 = vor.u32 %v1739, %v1378
      %v1741 = vsel %vm1725, %v1736, %v1740
      %v1743 = vshrl.u32 %v1707, 16
      %v1745 = vrot.slane %v1743, 7
      %v1746 = vshll.u32 %v1707, 16
      %v1748 = vor.u32 %v1745, %v1746
      %v1749 = vsel %vm1725, %v1739, %v1748
      %v1771 = vunpack.c.l.b16 %v1709
      %v1772 = vunpack.c.l.b16 %v1710
      %v1773 = vunpack.c.l.b16 %v1711
      %v1774 = vunpack.c.l.b16 %v1712
      %v1775 = vunpack.c.l.b16 %v1713
      %v1776 = vunpack.c.l.b16 %v1714
      %v1777 = vunpack.c.l.b16 %v1715
      %v1778 = vunpack.c.l.b16 %v1716
      %v1779 = vunpack.c.l.b16 %v1717
      %v1780 = vunpack.c.l.b16 %v1718
      %v1781 = vunpack.c.l.b16 %v1719
      %v1782 = vunpack.c.l.b16 %v1720
      %v1783 = vunpack.c.l.b16 %v1721
      %v1784 = vunpack.c.l.b16 %v1722
      %v1785 = vunpack.c.l.b16 %v1723
      %v1786 = vunpack.c.l.b16 %v1724
      %v1787 = vpack.c.b16 %v1772, %v1771
      %v1788 = vpack.c.b16 %v1774, %v1773
      %v1789 = vpack.c.b16 %v1776, %v1775
      %v1790 = vpack.c.b16 %v1778, %v1777
      %v1791 = vpack.c.b16 %v1780, %v1779
      %v1792 = vpack.c.b16 %v1782, %v1781
      %v1793 = vpack.c.b16 %v1784, %v1783
      %v1794 = vpack.c.b16 %v1786, %v1785
      %1803 = vmatprep.subr.bf16.mxu0 0
      %1804 = vmatpush1.bf16.msra.mxu0 %v1787
      %1805 = vmatprep.subr.bf16.mxu0 0
      %1806 = vmatpush1.bf16.msra.mxu0 %v1788
      %1807 = vmatprep.subr.bf16.mxu0 0
      %1808 = vmatpush1.bf16.msra.mxu0 %v1789
      %1809 = vmatprep.subr.bf16.mxu0 0
      %1810 = vmatpush1.bf16.msra.mxu0 %v1790
      %1811 = vmatprep.subr.bf16.mxu0 0
      %1812 = vmatpush1.bf16.msra.mxu0 %v1791
      %1813 = vmatprep.subr.bf16.mxu0 0
      %1814 = vmatpush1.bf16.msra.mxu0 %v1792
      %1815 = vmatprep.subr.bf16.mxu0 0
      %1816 = vmatpush1.bf16.msra.mxu0 %v1793
      %1817 = vmatprep.subr.bf16.mxu0 0
      %1818 = vmatpush1.bf16.msra.mxu0 %v1794
      %1819 = vmatprep.subr.bf16.mxu0 0
      %1820 = vmatpush1.bf16.msra.mxu0 0
      %1821 = vmatprep.subr.bf16.mxu0 0
      %1822 = vmatpush1.bf16.msra.mxu0 0
      %1823 = vmatprep.subr.bf16.mxu0 0
      %1824 = vmatpush1.bf16.msra.mxu0 0
      %1825 = vmatprep.subr.bf16.mxu0 0
      %1826 = vmatpush1.bf16.msra.mxu0 0
      %1827 = vmatprep.subr.bf16.mxu0 0
      %1828 = vmatpush1.bf16.msra.mxu0 0
      %1829 = vmatprep.subr.bf16.mxu0 0
      %1830 = vmatpush1.bf16.msra.mxu0 0
      %1831 = vmatprep.subr.bf16.mxu0 0
      %1832 = vmatpush1.bf16.msra.mxu0 0
      %1833 = vmatprep.subr.bf16.mxu0 0
      %1834 = vmatpush1.bf16.msra.mxu0 0
      %1835 = vmatprep.mubr.bf16.mxu0 0
      %1836 = vmatmul.mubr.bf16.gmra.mrb[0].mxu0 %v1732
      %v1837 = vpop.f32.mrb[0].mxu0
      %v1838 = vadd.f32 0.0, %v1837
      %v1839 = vpop.f32.mrb[0].mxu0
      %v1840 = vpop.f32.mrb[0].mxu0
      %v1841 = vadd.f32 0.0, %v1840
      %v1842 = vpop.f32.mrb[0].mxu0
      %1843 = vmatprep.mubr.bf16.mxu0 0
      %1844 = vmatmul.mubr.bf16.gmra.mrb[0].mxu0 %v1735
      %v1845 = vpop.f32.mrb[0].mxu0
      %v1846 = vadd.f32 0.0, %v1845
      %v1847 = vpop.f32.mrb[0].mxu0
      %v1848 = vpop.f32.mrb[0].mxu0
      %v1849 = vadd.f32 0.0, %v1848
      %v1850 = vpop.f32.mrb[0].mxu0
      %1851 = vmatprep.mubr.bf16.mxu0 0
      %1852 = vmatmul.mubr.bf16.gmra.mrb[0].mxu0 %v1738
      %v1853 = vpop.f32.mrb[0].mxu0
      %v1854 = vadd.f32 0.0, %v1853
      %v1855 = vpop.f32.mrb[0].mxu0
      %v1856 = vpop.f32.mrb[0].mxu0
      %v1857 = vadd.f32 0.0, %v1856
      %v1858 = vpop.f32.mrb[0].mxu0
      %1859 = vmatprep.mubr.bf16.mxu0 0
      %1860 = vmatmul.mubr.bf16.gmra.mrb[0].mxu0 %v1741
      %v1861 = vpop.f32.mrb[0].mxu0
      %v1862 = vadd.f32 0.0, %v1861
      %v1863 = vpop.f32.mrb[0].mxu0
      %v1864 = vpop.f32.mrb[0].mxu0
      %v1865 = vadd.f32 0.0, %v1864
      %v1866 = vpop.f32.mrb[0].mxu0
      %1867 = vmatprep.mubr.bf16.mxu0 0
      %1868 = vmatmul.mubr.bf16.gmra.mrb[0].mxu0 %v1749
      %v1869 = vpop.f32.mrb[0].mxu0
      %v1870 = vadd.f32 0.0, %v1869
      %v1871 = vpop.f32.mrb[0].mxu0
      %v1872 = vpop.f32.mrb[0].mxu0
      %v1873 = vadd.f32 0.0, %v1872
      %v1874 = vpop.f32.mrb[0].mxu0
      %1875 = vdwg.mxu0
      %v1876 = vadd.f32 %v1696, %v1838
      %v1877 = vadd.f32 %v1697, %v1841
      %v1878 = vadd.f32 %v1698, %v1846
      %v1879 = vadd.f32 %v1699, %v1849
      %v1880 = vadd.f32 %v1700, %v1854
      %v1881 = vadd.f32 %v1701, %v1857
      %v1882 = vadd.f32 %v1702, %v1862
      %v1883 = vadd.f32 %v1703, %v1865
      %v1884 = vadd.f32 %v1704, %v1870
      %v1885 = vadd.f32 %v1705, %v1873
      %s1886 = scalar_lea.vmem %s2, 256
      %v1887 = vld [vmem:[%s1886] sm:$0xf]
      %v1888 = vld [vmem:[%s1886 + $0x4] sm:$0xf]
      %v1889 = vld [vmem:[%s1886 + $0x8] sm:$0xf]
      %v1890 = vld [vmem:[%s1886 + $0xc] sm:$0xf]
      %v1891 = vld [vmem:[%s1886 + $0x10] sm:$0xf]
      %v1892 = vld [vmem:[%s1886 + $0x14] sm:$0xf]
      %v1893 = vld [vmem:[%s1886 + $0x18] sm:$0xf]
      %v1894 = vld [vmem:[%s1886 + $0x1c] sm:$0xf]
      %v1895 = vld [vmem:[%s1886 + $0x20] sm:$0xf]
      %v1896 = vld [vmem:[%s1886 + $0x24] sm:$0xf]
      %v1897 = vld [vmem:[%s1886 + $0x28] sm:$0xf]
      %v1898 = vld [vmem:[%s1886 + $0x2c] sm:$0xf]
      %v1899 = vld [vmem:[%s1886 + $0x30] sm:$0xf]
      %v1900 = vld [vmem:[%s1886 + $0x34] sm:$0xf]
      %v1901 = vld [vmem:[%s1886 + $0x38] sm:$0xf]
      %v1902 = vld [vmem:[%s1886 + $0x3c] sm:$0xf]
      %v1919 = vunpack.c.l.b16 %v1887
      %v1920 = vunpack.c.l.b16 %v1888
      %v1921 = vunpack.c.l.b16 %v1889
      %v1922 = vunpack.c.l.b16 %v1890
      %v1923 = vunpack.c.l.b16 %v1891
      %v1924 = vunpack.c.l.b16 %v1892
      %v1925 = vunpack.c.l.b16 %v1893
      %v1926 = vunpack.c.l.b16 %v1894
      %v1927 = vunpack.c.l.b16 %v1895
      %v1928 = vunpack.c.l.b16 %v1896
      %v1929 = vunpack.c.l.b16 %v1897
      %v1930 = vunpack.c.l.b16 %v1898
      %v1931 = vunpack.c.l.b16 %v1899
      %v1932 = vunpack.c.l.b16 %v1900
      %v1933 = vunpack.c.l.b16 %v1901
      %v1934 = vunpack.c.l.b16 %v1902
      %v1935 = vpack.c.b16 %v1920, %v1919
      %v1936 = vpack.c.b16 %v1922, %v1921
      %v1937 = vpack.c.b16 %v1924, %v1923
      %v1938 = vpack.c.b16 %v1926, %v1925
      %v1939 = vpack.c.b16 %v1928, %v1927
      %v1940 = vpack.c.b16 %v1930, %v1929
      %v1941 = vpack.c.b16 %v1932, %v1931
      %v1942 = vpack.c.b16 %v1934, %v1933
      %1951 = vmatprep.subr.bf16.mxu0 0
      %1952 = vmatpush1.bf16.msra.mxu0 %v1935
      %1953 = vmatprep.subr.bf16.mxu0 0
      %1954 = vmatpush1.bf16.msra.mxu0 %v1936
      %1955 = vmatprep.subr.bf16.mxu0 0
      %1956 = vmatpush1.bf16.msra.mxu0 %v1937
      %1957 = vmatprep.subr.bf16.mxu0 0
      %1958 = vmatpush1.bf16.msra.mxu0 %v1938
      %1959 = vmatprep.subr.bf16.mxu0 0
      %1960 = vmatpush1.bf16.msra.mxu0 %v1939
      %1961 = vmatprep.subr.bf16.mxu0 0
      %1962 = vmatpush1.bf16.msra.mxu0 %v1940
      %1963 = vmatprep.subr.bf16.mxu0 0
      %1964 = vmatpush1.bf16.msra.mxu0 %v1941
      %1965 = vmatprep.subr.bf16.mxu0 0
      %1966 = vmatpush1.bf16.msra.mxu0 %v1942
      %1967 = vmatprep.subr.bf16.mxu0 0
      %1968 = vmatpush1.bf16.msra.mxu0 0
      %1969 = vmatprep.subr.bf16.mxu0 0
      %1970 = vmatpush1.bf16.msra.mxu0 0
      %1971 = vmatprep.subr.bf16.mxu0 0
      %1972 = vmatpush1.bf16.msra.mxu0 0
      %1973 = vmatprep.subr.bf16.mxu0 0
      %1974 = vmatpush1.bf16.msra.mxu0 0
      %1975 = vmatprep.subr.bf16.mxu0 0
      %1976 = vmatpush1.bf16.msra.mxu0 0
      %1977 = vmatprep.subr.bf16.mxu0 0
      %1978 = vmatpush1.bf16.msra.mxu0 0
      %1979 = vmatprep.subr.bf16.mxu0 0
      %1980 = vmatpush1.bf16.msra.mxu0 0
      %1981 = vmatprep.subr.bf16.mxu0 0
      %1982 = vmatpush1.bf16.msra.mxu0 0
      %1983 = vmatprep.mubr.bf16.mxu0 0
      %1984 = vmatmul.mubr.bf16.gmra.mrb[0].mxu0 %v1155
      %v1985 = vpop.f32.mrb[0].mxu0
      %v1986 = vadd.f32 0.0, %v1985
      %v1987 = vpop.f32.mrb[0].mxu0
      %v1988 = vpop.f32.mrb[0].mxu0
      %v1989 = vadd.f32 0.0, %v1988
      %v1990 = vpop.f32.mrb[0].mxu0
      %1991 = vmatprep.mubr.bf16.mxu0 0
      %1992 = vmatmul.mubr.bf16.gmra.mrb[0].mxu0 %v1156
      %v1993 = vpop.f32.mrb[0].mxu0
      %v1994 = vadd.f32 0.0, %v1993
      %v1995 = vpop.f32.mrb[0].mxu0
      %v1996 = vpop.f32.mrb[0].mxu0
      %v1997 = vadd.f32 0.0, %v1996
      %v1998 = vpop.f32.mrb[0].mxu0
      %1999 = vmatprep.mubr.bf16.mxu0 0
      %2000 = vmatmul.mubr.bf16.gmra.mrb[0].mxu0 %v1157
      %v2001 = vpop.f32.mrb[0].mxu0
      %v2002 = vadd.f32 0.0, %v2001
      %v2003 = vpop.f32.mrb[0].mxu0
      %v2004 = vpop.f32.mrb[0].mxu0
      %v2005 = vadd.f32 0.0, %v2004
      %v2006 = vpop.f32.mrb[0].mxu0
      %2007 = vmatprep.mubr.bf16.mxu0 0
      %2008 = vmatmul.mubr.bf16.gmra.mrb[0].mxu0 %v1158
      %v2009 = vpop.f32.mrb[0].mxu0
      %v2010 = vadd.f32 0.0, %v2009
      %v2011 = vpop.f32.mrb[0].mxu0
      %v2012 = vpop.f32.mrb[0].mxu0
      %v2013 = vadd.f32 0.0, %v2012
      %v2014 = vpop.f32.mrb[0].mxu0
      %2015 = vmatprep.mubr.bf16.mxu0 0
      %2016 = vmatmul.mubr.bf16.gmra.mrb[0].mxu0 %v1707
      %v2017 = vpop.f32.mrb[0].mxu0
      %v2018 = vadd.f32 0.0, %v2017
      %v2019 = vpop.f32.mrb[0].mxu0
      %v2020 = vpop.f32.mrb[0].mxu0
      %v2021 = vadd.f32 0.0, %v2020
      %v2022 = vpop.f32.mrb[0].mxu0
      %2023 = vdwg.mxu0
      %v2024 = vadd.f32 %v1876, %v1986
      %v2025 = vadd.f32 %v1877, %v1989
      %v2026 = vadd.f32 %v1878, %v1994
      %v2027 = vadd.f32 %v1879, %v1997
      %v2028 = vadd.f32 %v1880, %v2002
      %v2029 = vadd.f32 %v1881, %v2005
      %v2030 = vadd.f32 %v1882, %v2010
      %v2031 = vadd.f32 %v1883, %v2013
      %v2032 = vadd.f32 %v1884, %v2018
      %v2033 = vadd.f32 %v1885, %v2021
      %v2034 = vld [vmem:[#allocation2 + $0x8] sm:$0xff]
      %v2035 = vld [vmem:[#allocation2 + $0x10] sm:$0xff]
      %v2036 = vld [vmem:[#allocation2 + $0x18] sm:$0xff]
      %v2037 = vld [vmem:[#allocation2 + $0x20] sm:$0xff]
      %v2038 = vld [vmem:[#allocation2 + $0x28] sm:$0xff]
      %v2039 = vld [vmem:[#allocation2 + $0x30] sm:$0x1]
      %s2040 = scalar_lea.vmem %s2, 320
      %v2041 = vld [vmem:[%s2040] sm:$0xf]
      %v2042 = vld [vmem:[%s2040 + $0x4] sm:$0xf]
      %v2043 = vld [vmem:[%s2040 + $0x8] sm:$0xf]
      %v2044 = vld [vmem:[%s2040 + $0xc] sm:$0xf]
      %v2045 = vld [vmem:[%s2040 + $0x10] sm:$0xf]
      %v2046 = vld [vmem:[%s2040 + $0x14] sm:$0xf]
      %v2047 = vld [vmem:[%s2040 + $0x18] sm:$0xf]
      %v2048 = vld [vmem:[%s2040 + $0x1c] sm:$0xf]
      %v2049 = vld [vmem:[%s2040 + $0x20] sm:$0xf]
      %v2050 = vld [vmem:[%s2040 + $0x24] sm:$0xf]
      %v2051 = vld [vmem:[%s2040 + $0x28] sm:$0xf]
      %v2052 = vld [vmem:[%s2040 + $0x2c] sm:$0xf]
      %v2053 = vld [vmem:[%s2040 + $0x30] sm:$0xf]
      %v2054 = vld [vmem:[%s2040 + $0x34] sm:$0xf]
      %v2055 = vld [vmem:[%s2040 + $0x38] sm:$0xf]
      %v2056 = vld [vmem:[%s2040 + $0x3c] sm:$0xf]
      %v2058 = vshrl.u32 %v2034, 16
      %v2060 = vshll.u32 %v2034, 16
      %v2062 = vrot.slane %v2060, 1
      %v2063 = vor.u32 %v2058, %v2062
      %v2065 = vshll.u32 %v2035, 16
      %v2067 = vrot.slane %v2065, 1
      %v2068 = vsel %vm348, %v2063, %v2067
      %v2069 = vshrl.u32 %v2035, 16
      %v2071 = vor.u32 %v2069, %v2067
      %v2073 = vshll.u32 %v2036, 16
      %v2075 = vrot.slane %v2073, 1
      %v2076 = vsel %vm348, %v2071, %v2075
      %v2077 = vshrl.u32 %v2036, 16
      %v2079 = vor.u32 %v2077, %v2075
      %v2081 = vshll.u32 %v2037, 16
      %v2083 = vrot.slane %v2081, 1
      %v2084 = vsel %vm348, %v2079, %v2083
      %v2085 = vshrl.u32 %v2037, 16
      %v2087 = vor.u32 %v2085, %v2083
      %v2089 = vshll.u32 %v2038, 16
      %v2091 = vrot.slane %v2089, 1
      %v2092 = vsel %vm348, %v2087, %v2091
      %v2093 = vshrl.u32 %v2038, 16
      %v2095 = vor.u32 %v2093, %v2091
      %v2097 = vshll.u32 %v2039, 16
      %v2099 = vrot.slane %v2097, 1
      %v2100 = vsel %vm348, %v2095, %v2099
      %v2122 = vunpack.c.l.b16 %v2041
      %v2123 = vunpack.c.l.b16 %v2042
      %v2124 = vunpack.c.l.b16 %v2043
      %v2125 = vunpack.c.l.b16 %v2044
      %v2126 = vunpack.c.l.b16 %v2045
      %v2127 = vunpack.c.l.b16 %v2046
      %v2128 = vunpack.c.l.b16 %v2047
      %v2129 = vunpack.c.l.b16 %v2048
      %v2130 = vunpack.c.l.b16 %v2049
      %v2131 = vunpack.c.l.b16 %v2050
      %v2132 = vunpack.c.l.b16 %v2051
      %v2133 = vunpack.c.l.b16 %v2052
      %v2134 = vunpack.c.l.b16 %v2053
      %v2135 = vunpack.c.l.b16 %v2054
      %v2136 = vunpack.c.l.b16 %v2055
      %v2137 = vunpack.c.l.b16 %v2056
      %v2138 = vpack.c.b16 %v2123, %v2122
      %v2139 = vpack.c.b16 %v2125, %v2124
      %v2140 = vpack.c.b16 %v2127, %v2126
      %v2141 = vpack.c.b16 %v2129, %v2128
      %v2142 = vpack.c.b16 %v2131, %v2130
      %v2143 = vpack.c.b16 %v2133, %v2132
      %v2144 = vpack.c.b16 %v2135, %v2134
      %v2145 = vpack.c.b16 %v2137, %v2136
      %2154 = vmatprep.subr.bf16.mxu0 0
      %2155 = vmatpush1.bf16.msra.mxu0 %v2138
      %2156 = vmatprep.subr.bf16.mxu0 0
      %2157 = vmatpush1.bf16.msra.mxu0 %v2139
      %2158 = vmatprep.subr.bf16.mxu0 0
      %2159 = vmatpush1.bf16.msra.mxu0 %v2140
      %2160 = vmatprep.subr.bf16.mxu0 0
      %2161 = vmatpush1.bf16.msra.mxu0 %v2141
      %2162 = vmatprep.subr.bf16.mxu0 0
      %2163 = vmatpush1.bf16.msra.mxu0 %v2142
      %2164 = vmatprep.subr.bf16.mxu0 0
      %2165 = vmatpush1.bf16.msra.mxu0 %v2143
      %2166 = vmatprep.subr.bf16.mxu0 0
      %2167 = vmatpush1.bf16.msra.mxu0 %v2144
      %2168 = vmatprep.subr.bf16.mxu0 0
      %2169 = vmatpush1.bf16.msra.mxu0 %v2145
      %2170 = vmatprep.subr.bf16.mxu0 0
      %2171 = vmatpush1.bf16.msra.mxu0 0
      %2172 = vmatprep.subr.bf16.mxu0 0
      %2173 = vmatpush1.bf16.msra.mxu0 0
      %2174 = vmatprep.subr.bf16.mxu0 0
      %2175 = vmatpush1.bf16.msra.mxu0 0
      %2176 = vmatprep.subr.bf16.mxu0 0
      %2177 = vmatpush1.bf16.msra.mxu0 0
      %2178 = vmatprep.subr.bf16.mxu0 0
      %2179 = vmatpush1.bf16.msra.mxu0 0
      %2180 = vmatprep.subr.bf16.mxu0 0
      %2181 = vmatpush1.bf16.msra.mxu0 0
      %2182 = vmatprep.subr.bf16.mxu0 0
      %2183 = vmatpush1.bf16.msra.mxu0 0
      %2184 = vmatprep.subr.bf16.mxu0 0
      %2185 = vmatpush1.bf16.msra.mxu0 0
      %2186 = vmatprep.mubr.bf16.mxu0 0
      %2187 = vmatmul.mubr.bf16.gmra.mrb[0].mxu0 %v2068
      %v2188 = vpop.f32.mrb[0].mxu0
      %v2189 = vadd.f32 0.0, %v2188
      %v2190 = vpop.f32.mrb[0].mxu0
      %v2191 = vpop.f32.mrb[0].mxu0
      %v2192 = vadd.f32 0.0, %v2191
      %v2193 = vpop.f32.mrb[0].mxu0
      %2194 = vmatprep.mubr.bf16.mxu0 0
      %2195 = vmatmul.mubr.bf16.gmra.mrb[0].mxu0 %v2076
      %v2196 = vpop.f32.mrb[0].mxu0
      %v2197 = vadd.f32 0.0, %v2196
      %v2198 = vpop.f32.mrb[0].mxu0
      %v2199 = vpop.f32.mrb[0].mxu0
      %v2200 = vadd.f32 0.0, %v2199
      %v2201 = vpop.f32.mrb[0].mxu0
      %2202 = vmatprep.mubr.bf16.mxu0 0
      %2203 = vmatmul.mubr.bf16.gmra.mrb[0].mxu0 %v2084
      %v2204 = vpop.f32.mrb[0].mxu0
      %v2205 = vadd.f32 0.0, %v2204
      %v2206 = vpop.f32.mrb[0].mxu0
      %v2207 = vpop.f32.mrb[0].mxu0
      %v2208 = vadd.f32 0.0, %v2207
      %v2209 = vpop.f32.mrb[0].mxu0
      %2210 = vmatprep.mubr.bf16.mxu0 0
      %2211 = vmatmul.mubr.bf16.gmra.mrb[0].mxu0 %v2092
      %v2212 = vpop.f32.mrb[0].mxu0
      %v2213 = vadd.f32 0.0, %v2212
      %v2214 = vpop.f32.mrb[0].mxu0
      %v2215 = vpop.f32.mrb[0].mxu0
      %v2216 = vadd.f32 0.0, %v2215
      %v2217 = vpop.f32.mrb[0].mxu0
      %2218 = vmatprep.mubr.bf16.mxu0 0
      %2219 = vmatmul.mubr.bf16.gmra.mrb[0].mxu0 %v2100
      %v2220 = vpop.f32.mrb[0].mxu0
      %v2221 = vadd.f32 0.0, %v2220
      %v2222 = vpop.f32.mrb[0].mxu0
      %v2223 = vpop.f32.mrb[0].mxu0
      %v2224 = vadd.f32 0.0, %v2223
      %v2225 = vpop.f32.mrb[0].mxu0
      %2226 = vdwg.mxu0
      %v2227 = vadd.f32 %v2024, %v2189
      %v2228 = vadd.f32 %v2025, %v2192
      %v2229 = vadd.f32 %v2026, %v2197
      %v2230 = vadd.f32 %v2027, %v2200
      %v2231 = vadd.f32 %v2028, %v2205
      %v2232 = vadd.f32 %v2029, %v2208
      %v2233 = vadd.f32 %v2030, %v2213
      %v2234 = vadd.f32 %v2031, %v2216
      %v2235 = vadd.f32 %v2032, %v2221
      %v2236 = vadd.f32 %v2033, %v2224
      %v2237 = vld [vmem:[#allocation2 + $0x8] sm:$0xf0]
      %v2238 = vld [vmem:[#allocation2 + $0x30] sm:$0x1f]
      %s2239 = scalar_lea.vmem %s2, 384
      %v2240 = vld [vmem:[%s2239] sm:$0xf]
      %v2241 = vld [vmem:[%s2239 + $0x4] sm:$0xf]
      %v2242 = vld [vmem:[%s2239 + $0x8] sm:$0xf]
      %v2243 = vld [vmem:[%s2239 + $0xc] sm:$0xf]
      %v2244 = vld [vmem:[%s2239 + $0x10] sm:$0xf]
      %v2245 = vld [vmem:[%s2239 + $0x14] sm:$0xf]
      %v2246 = vld [vmem:[%s2239 + $0x18] sm:$0xf]
      %v2247 = vld [vmem:[%s2239 + $0x1c] sm:$0xf]
      %v2248 = vld [vmem:[%s2239 + $0x20] sm:$0xf]
      %v2249 = vld [vmem:[%s2239 + $0x24] sm:$0xf]
      %v2250 = vld [vmem:[%s2239 + $0x28] sm:$0xf]
      %v2251 = vld [vmem:[%s2239 + $0x2c] sm:$0xf]
      %v2252 = vld [vmem:[%s2239 + $0x30] sm:$0xf]
      %v2253 = vld [vmem:[%s2239 + $0x34] sm:$0xf]
      %v2254 = vld [vmem:[%s2239 + $0x38] sm:$0xf]
      %v2255 = vld [vmem:[%s2239 + $0x3c] sm:$0xf]
      %vm2256 = vsmask.f32 3328
      %v2258 = vshrl.u32 %v2237, 16
      %v2260 = vrot.slane %v2258, 4
      %v2261 = vshll.u32 %v2237, 16
      %v2263 = vrot.slane %v2261, 5
      %v2264 = vor.u32 %v2260, %v2263
      %v2265 = vrot.slane %v2069, 4
      %v2266 = vrot.slane %v2065, 5
      %v2267 = vor.u32 %v2265, %v2266
      %v2268 = vsel %vm2256, %v2264, %v2267
      %v2269 = vrot.slane %v2077, 4
      %v2270 = vrot.slane %v2073, 5
      %v2271 = vor.u32 %v2269, %v2270
      %v2272 = vsel %vm2256, %v2267, %v2271
      %v2273 = vrot.slane %v2085, 4
      %v2274 = vrot.slane %v2081, 5
      %v2275 = vor.u32 %v2273, %v2274
      %v2276 = vsel %vm2256, %v2271, %v2275
      %v2277 = vrot.slane %v2093, 4
      %v2278 = vrot.slane %v2089, 5
      %v2279 = vor.u32 %v2277, %v2278
      %v2280 = vsel %vm2256, %v2275, %v2279
      %v2282 = vshrl.u32 %v2238, 16
      %v2284 = vrot.slane %v2282, 4
      %v2285 = vshll.u32 %v2238, 16
      %v2287 = vrot.slane %v2285, 5
      %v2288 = vor.u32 %v2284, %v2287
      %v2289 = vsel %vm2256, %v2279, %v2288
      %v2311 = vunpack.c.l.b16 %v2240
      %v2312 = vunpack.c.l.b16 %v2241
      %v2313 = vunpack.c.l.b16 %v2242
      %v2314 = vunpack.c.l.b16 %v2243
      %v2315 = vunpack.c.l.b16 %v2244
      %v2316 = vunpack.c.l.b16 %v2245
      %v2317 = vunpack.c.l.b16 %v2246
      %v2318 = vunpack.c.l.b16 %v2247
      %v2319 = vunpack.c.l.b16 %v2248
      %v2320 = vunpack.c.l.b16 %v2249
      %v2321 = vunpack.c.l.b16 %v2250
      %v2322 = vunpack.c.l.b16 %v2251
      %v2323 = vunpack.c.l.b16 %v2252
      %v2324 = vunpack.c.l.b16 %v2253
      %v2325 = vunpack.c.l.b16 %v2254
      %v2326 = vunpack.c.l.b16 %v2255
      %v2327 = vpack.c.b16 %v2312, %v2311
      %v2328 = vpack.c.b16 %v2314, %v2313
      %v2329 = vpack.c.b16 %v2316, %v2315
      %v2330 = vpack.c.b16 %v2318, %v2317
      %v2331 = vpack.c.b16 %v2320, %v2319
      %v2332 = vpack.c.b16 %v2322, %v2321
      %v2333 = vpack.c.b16 %v2324, %v2323
      %v2334 = vpack.c.b16 %v2326, %v2325
      %2343 = vmatprep.subr.bf16.mxu0 0
      %2344 = vmatpush1.bf16.msra.mxu0 %v2327
      %2345 = vmatprep.subr.bf16.mxu0 0
      %2346 = vmatpush1.bf16.msra.mxu0 %v2328
      %2347 = vmatprep.subr.bf16.mxu0 0
      %2348 = vmatpush1.bf16.msra.mxu0 %v2329
      %2349 = vmatprep.subr.bf16.mxu0 0
      %2350 = vmatpush1.bf16.msra.mxu0 %v2330
      %2351 = vmatprep.subr.bf16.mxu0 0
      %2352 = vmatpush1.bf16.msra.mxu0 %v2331
      %2353 = vmatprep.subr.bf16.mxu0 0
      %2354 = vmatpush1.bf16.msra.mxu0 %v2332
      %2355 = vmatprep.subr.bf16.mxu0 0
      %2356 = vmatpush1.bf16.msra.mxu0 %v2333
      %2357 = vmatprep.subr.bf16.mxu0 0
      %2358 = vmatpush1.bf16.msra.mxu0 %v2334
      %2359 = vmatprep.subr.bf16.mxu0 0
      %2360 = vmatpush1.bf16.msra.mxu0 0
      %2361 = vmatprep.subr.bf16.mxu0 0
      %2362 = vmatpush1.bf16.msra.mxu0 0
      %2363 = vmatprep.subr.bf16.mxu0 0
      %2364 = vmatpush1.bf16.msra.mxu0 0
      %2365 = vmatprep.subr.bf16.mxu0 0
      %2366 = vmatpush1.bf16.msra.mxu0 0
      %2367 = vmatprep.subr.bf16.mxu0 0
      %2368 = vmatpush1.bf16.msra.mxu0 0
      %2369 = vmatprep.subr.bf16.mxu0 0
      %2370 = vmatpush1.bf16.msra.mxu0 0
      %2371 = vmatprep.subr.bf16.mxu0 0
      %2372 = vmatpush1.bf16.msra.mxu0 0
      %2373 = vmatprep.subr.bf16.mxu0 0
      %2374 = vmatpush1.bf16.msra.mxu0 0
      %2375 = vmatprep.mubr.bf16.mxu0 0
      %2376 = vmatmul.mubr.bf16.gmra.mrb[0].mxu0 %v2268
      %v2377 = vpop.f32.mrb[0].mxu0
      %v2378 = vadd.f32 0.0, %v2377
      %v2379 = vpop.f32.mrb[0].mxu0
      %v2380 = vpop.f32.mrb[0].mxu0
      %v2381 = vadd.f32 0.0, %v2380
      %v2382 = vpop.f32.mrb[0].mxu0
      %2383 = vmatprep.mubr.bf16.mxu0 0
      %2384 = vmatmul.mubr.bf16.gmra.mrb[0].mxu0 %v2272
      %v2385 = vpop.f32.mrb[0].mxu0
      %v2386 = vadd.f32 0.0, %v2385
      %v2387 = vpop.f32.mrb[0].mxu0
      %v2388 = vpop.f32.mrb[0].mxu0
      %v2389 = vadd.f32 0.0, %v2388
      %v2390 = vpop.f32.mrb[0].mxu0
      %2391 = vmatprep.mubr.bf16.mxu0 0
      %2392 = vmatmul.mubr.bf16.gmra.mrb[0].mxu0 %v2276
      %v2393 = vpop.f32.mrb[0].mxu0
      %v2394 = vadd.f32 0.0, %v2393
      %v2395 = vpop.f32.mrb[0].mxu0
      %v2396 = vpop.f32.mrb[0].mxu0
      %v2397 = vadd.f32 0.0, %v2396
      %v2398 = vpop.f32.mrb[0].mxu0
      %2399 = vmatprep.mubr.bf16.mxu0 0
      %2400 = vmatmul.mubr.bf16.gmra.mrb[0].mxu0 %v2280
      %v2401 = vpop.f32.mrb[0].mxu0
      %v2402 = vadd.f32 0.0, %v2401
      %v2403 = vpop.f32.mrb[0].mxu0
      %v2404 = vpop.f32.mrb[0].mxu0
      %v2405 = vadd.f32 0.0, %v2404
      %v2406 = vpop.f32.mrb[0].mxu0
      %2407 = vmatprep.mubr.bf16.mxu0 0
      %2408 = vmatmul.mubr.bf16.gmra.mrb[0].mxu0 %v2289
      %v2409 = vpop.f32.mrb[0].mxu0
      %v2410 = vadd.f32 0.0, %v2409
      %v2411 = vpop.f32.mrb[0].mxu0
      %v2412 = vpop.f32.mrb[0].mxu0
      %v2413 = vadd.f32 0.0, %v2412
      %v2414 = vpop.f32.mrb[0].mxu0
      %2415 = vdwg.mxu0
      %v2416 = vadd.f32 %v2227, %v2378
      %v2417 = vadd.f32 %v2228, %v2381
      %v2418 = vadd.f32 %v2229, %v2386
      %v2419 = vadd.f32 %v2230, %v2389
      %v2420 = vadd.f32 %v2231, %v2394
      %v2421 = vadd.f32 %v2232, %v2397
      %v2422 = vadd.f32 %v2233, %v2402
      %v2423 = vadd.f32 %v2234, %v2405
      %v2424 = vadd.f32 %v2235, %v2410
      %v2425 = vadd.f32 %v2236, %v2413
      %v2426 = vld [vmem:[#allocation2 + $0x8] sm:$0xe0]
      %s2427 = scalar_lea.vmem %s2, 448
      %v2428 = vld [vmem:[%s2427] sm:$0xf]
      %v2429 = vld [vmem:[%s2427 + $0x4] sm:$0xf]
      %v2430 = vld [vmem:[%s2427 + $0x8] sm:$0xf]
      %v2431 = vld [vmem:[%s2427 + $0xc] sm:$0xf]
      %v2432 = vld [vmem:[%s2427 + $0x10] sm:$0xf]
      %v2433 = vld [vmem:[%s2427 + $0x14] sm:$0xf]
      %v2434 = vld [vmem:[%s2427 + $0x18] sm:$0xf]
      %v2435 = vld [vmem:[%s2427 + $0x1c] sm:$0xf]
      %v2436 = vld [vmem:[%s2427 + $0x20] sm:$0xf]
      %v2437 = vld [vmem:[%s2427 + $0x24] sm:$0xf]
      %v2438 = vld [vmem:[%s2427 + $0x28] sm:$0xf]
      %v2439 = vld [vmem:[%s2427 + $0x2c] sm:$0xf]
      %v2440 = vld [vmem:[%s2427 + $0x30] sm:$0xf]
      %v2441 = vld [vmem:[%s2427 + $0x34] sm:$0xf]
      %v2442 = vld [vmem:[%s2427 + $0x38] sm:$0xf]
      %v2443 = vld [vmem:[%s2427 + $0x3c] sm:$0xf]
      %vm2450 = vcmask 1042432
      %v2451 = vrot.slane %v2426, 5
      %v2452 = vrot.slane %v2035, 5
      %v2453 = vsel %vm2450, %v2451, %v2452
      %v2454 = vrot.slane %v2036, 5
      %v2455 = vsel %vm2450, %v2452, %v2454
      %v2456 = vrot.slane %v2037, 5
      %v2457 = vsel %vm2450, %v2454, %v2456
      %v2458 = vrot.slane %v2038, 5
      %v2459 = vsel %vm2450, %v2456, %v2458
      %v2460 = vrot.slane %v2238, 5
      %v2461 = vsel %vm2450, %v2458, %v2460
      %v2483 = vunpack.c.l.b16 %v2428
      %v2484 = vunpack.c.l.b16 %v2429
      %v2485 = vunpack.c.l.b16 %v2430
      %v2486 = vunpack.c.l.b16 %v2431
      %v2487 = vunpack.c.l.b16 %v2432
      %v2488 = vunpack.c.l.b16 %v2433
      %v2489 = vunpack.c.l.b16 %v2434
      %v2490 = vunpack.c.l.b16 %v2435
      %v2491 = vunpack.c.l.b16 %v2436
      %v2492 = vunpack.c.l.b16 %v2437
      %v2493 = vunpack.c.l.b16 %v2438
      %v2494 = vunpack.c.l.b16 %v2439
      %v2495 = vunpack.c.l.b16 %v2440
      %v2496 = vunpack.c.l.b16 %v2441
      %v2497 = vunpack.c.l.b16 %v2442
      %v2498 = vunpack.c.l.b16 %v2443
      %v2499 = vpack.c.b16 %v2484, %v2483
      %v2500 = vpack.c.b16 %v2486, %v2485
      %v2501 = vpack.c.b16 %v2488, %v2487
      %v2502 = vpack.c.b16 %v2490, %v2489
      %v2503 = vpack.c.b16 %v2492, %v2491
      %v2504 = vpack.c.b16 %v2494, %v2493
      %v2505 = vpack.c.b16 %v2496, %v2495
      %v2506 = vpack.c.b16 %v2498, %v2497
      %2515 = vmatprep.subr.bf16.mxu0 0
      %2516 = vmatpush1.bf16.msra.mxu0 %v2499
      %2517 = vmatprep.subr.bf16.mxu0 0
      %2518 = vmatpush1.bf16.msra.mxu0 %v2500
      %2519 = vmatprep.subr.bf16.mxu0 0
      %2520 = vmatpush1.bf16.msra.mxu0 %v2501
      %2521 = vmatprep.subr.bf16.mxu0 0
      %2522 = vmatpush1.bf16.msra.mxu0 %v2502
      %2523 = vmatprep.subr.bf16.mxu0 0
      %2524 = vmatpush1.bf16.msra.mxu0 %v2503
      %2525 = vmatprep.subr.bf16.mxu0 0
      %2526 = vmatpush1.bf16.msra.mxu0 %v2504
      %2527 = vmatprep.subr.bf16.mxu0 0
      %2528 = vmatpush1.bf16.msra.mxu0 %v2505
      %2529 = vmatprep.subr.bf16.mxu0 0
      %2530 = vmatpush1.bf16.msra.mxu0 %v2506
      %2531 = vmatprep.subr.bf16.mxu0 0
      %2532 = vmatpush1.bf16.msra.mxu0 0
      %2533 = vmatprep.subr.bf16.mxu0 0
      %2534 = vmatpush1.bf16.msra.mxu0 0
      %2535 = vmatprep.subr.bf16.mxu0 0
      %2536 = vmatpush1.bf16.msra.mxu0 0
      %2537 = vmatprep.subr.bf16.mxu0 0
      %2538 = vmatpush1.bf16.msra.mxu0 0
      %2539 = vmatprep.subr.bf16.mxu0 0
      %2540 = vmatpush1.bf16.msra.mxu0 0
      %2541 = vmatprep.subr.bf16.mxu0 0
      %2542 = vmatpush1.bf16.msra.mxu0 0
      %2543 = vmatprep.subr.bf16.mxu0 0
      %2544 = vmatpush1.bf16.msra.mxu0 0
      %2545 = vmatprep.subr.bf16.mxu0 0
      %2546 = vmatpush1.bf16.msra.mxu0 0
      %2547 = vmatprep.mubr.bf16.mxu0 0
      %2548 = vmatmul.mubr.bf16.gmra.mrb[0].mxu0 %v2453
      %v2549 = vpop.f32.mrb[0].mxu0
      %v2550 = vadd.f32 0.0, %v2549
      %v2551 = vpop.f32.mrb[0].mxu0
      %v2552 = vpop.f32.mrb[0].mxu0
      %v2553 = vadd.f32 0.0, %v2552
      %v2554 = vpop.f32.mrb[0].mxu0
      %2555 = vmatprep.mubr.bf16.mxu0 0
      %2556 = vmatmul.mubr.bf16.gmra.mrb[0].mxu0 %v2455
      %v2557 = vpop.f32.mrb[0].mxu0
      %v2558 = vadd.f32 0.0, %v2557
      %v2559 = vpop.f32.mrb[0].mxu0
      %v2560 = vpop.f32.mrb[0].mxu0
      %v2561 = vadd.f32 0.0, %v2560
      %v2562 = vpop.f32.mrb[0].mxu0
      %2563 = vmatprep.mubr.bf16.mxu0 0
      %2564 = vmatmul.mubr.bf16.gmra.mrb[0].mxu0 %v2457
      %v2565 = vpop.f32.mrb[0].mxu0
      %v2566 = vadd.f32 0.0, %v2565
      %v2567 = vpop.f32.mrb[0].mxu0
      %v2568 = vpop.f32.mrb[0].mxu0
      %v2569 = vadd.f32 0.0, %v2568
      %v2570 = vpop.f32.mrb[0].mxu0
      %2571 = vmatprep.mubr.bf16.mxu0 0
      %2572 = vmatmul.mubr.bf16.gmra.mrb[0].mxu0 %v2459
      %v2573 = vpop.f32.mrb[0].mxu0
      %v2574 = vadd.f32 0.0, %v2573
      %v2575 = vpop.f32.mrb[0].mxu0
      %v2576 = vpop.f32.mrb[0].mxu0
      %v2577 = vadd.f32 0.0, %v2576
      %v2578 = vpop.f32.mrb[0].mxu0
      %2579 = vmatprep.mubr.bf16.mxu0 0
      %2580 = vmatmul.mubr.bf16.gmra.mrb[0].mxu0 %v2461
      %v2581 = vpop.f32.mrb[0].mxu0
      %v2582 = vadd.f32 0.0, %v2581
      %v2583 = vpop.f32.mrb[0].mxu0
      %v2584 = vpop.f32.mrb[0].mxu0
      %v2585 = vadd.f32 0.0, %v2584
      %v2586 = vpop.f32.mrb[0].mxu0
      %2587 = vdwg.mxu0
      %v2588 = vadd.f32 %v2416, %v2550
      %v2589 = vadd.f32 %v2417, %v2553
      %v2590 = vadd.f32 %v2418, %v2558
      %v2591 = vadd.f32 %v2419, %v2561
      %v2592 = vadd.f32 %v2420, %v2566
      %v2593 = vadd.f32 %v2421, %v2569
      %v2594 = vadd.f32 %v2422, %v2574
      %v2595 = vadd.f32 %v2423, %v2577
      %v2596 = vadd.f32 %v2424, %v2582
      %v2597 = vadd.f32 %v2425, %v2585
      %v2598 = vld [vmem:[#allocation2 + $0x30] sm:$0x3f]
      %s2599 = scalar_lea.vmem %s2, 512
      %v2600 = vld [vmem:[%s2599] sm:$0xf]
      %v2601 = vld [vmem:[%s2599 + $0x4] sm:$0xf]
      %v2602 = vld [vmem:[%s2599 + $0x8] sm:$0xf]
      %v2603 = vld [vmem:[%s2599 + $0xc] sm:$0xf]
      %v2604 = vld [vmem:[%s2599 + $0x10] sm:$0xf]
      %v2605 = vld [vmem:[%s2599 + $0x14] sm:$0xf]
      %v2606 = vld [vmem:[%s2599 + $0x18] sm:$0xf]
      %v2607 = vld [vmem:[%s2599 + $0x1c] sm:$0xf]
      %v2608 = vld [vmem:[%s2599 + $0x20] sm:$0xf]
      %v2609 = vld [vmem:[%s2599 + $0x24] sm:$0xf]
      %v2610 = vld [vmem:[%s2599 + $0x28] sm:$0xf]
      %v2611 = vld [vmem:[%s2599 + $0x2c] sm:$0xf]
      %v2612 = vld [vmem:[%s2599 + $0x30] sm:$0xf]
      %v2613 = vld [vmem:[%s2599 + $0x34] sm:$0xf]
      %v2614 = vld [vmem:[%s2599 + $0x38] sm:$0xf]
      %v2615 = vld [vmem:[%s2599 + $0x3c] sm:$0xf]
      %vm2616 = vsmask.f32 2304
      %v2618 = vshrl.u32 %v2426, 16
      %v2620 = vrot.slane %v2618, 5
      %v2621 = vshll.u32 %v2426, 16
      %v2623 = vrot.slane %v2621, 6
      %v2624 = vor.u32 %v2620, %v2623
      %v2625 = vrot.slane %v2069, 5
      %v2626 = vrot.slane %v2065, 6
      %v2627 = vor.u32 %v2625, %v2626
      %v2628 = vsel %vm2616, %v2624, %v2627
      %v2629 = vrot.slane %v2077, 5
      %v2630 = vrot.slane %v2073, 6
      %v2631 = vor.u32 %v2629, %v2630
      %v2632 = vsel %vm2616, %v2627, %v2631
      %v2633 = vrot.slane %v2085, 5
      %v2634 = vrot.slane %v2081, 6
      %v2635 = vor.u32 %v2633, %v2634
      %v2636 = vsel %vm2616, %v2631, %v2635
      %v2637 = vrot.slane %v2093, 5
      %v2638 = vrot.slane %v2089, 6
      %v2639 = vor.u32 %v2637, %v2638
      %v2640 = vsel %vm2616, %v2635, %v2639
      %v2642 = vshrl.u32 %v2598, 16
      %v2644 = vrot.slane %v2642, 5
      %v2645 = vshll.u32 %v2598, 16
      %v2647 = vrot.slane %v2645, 6
      %v2648 = vor.u32 %v2644, %v2647
      %v2649 = vsel %vm2616, %v2639, %v2648
      %v2671 = vunpack.c.l.b16 %v2600
      %v2672 = vunpack.c.l.b16 %v2601
      %v2673 = vunpack.c.l.b16 %v2602
      %v2674 = vunpack.c.l.b16 %v2603
      %v2675 = vunpack.c.l.b16 %v2604
      %v2676 = vunpack.c.l.b16 %v2605
      %v2677 = vunpack.c.l.b16 %v2606
      %v2678 = vunpack.c.l.b16 %v2607
      %v2679 = vunpack.c.l.b16 %v2608
      %v2680 = vunpack.c.l.b16 %v2609
      %v2681 = vunpack.c.l.b16 %v2610
      %v2682 = vunpack.c.l.b16 %v2611
      %v2683 = vunpack.c.l.b16 %v2612
      %v2684 = vunpack.c.l.b16 %v2613
      %v2685 = vunpack.c.l.b16 %v2614
      %v2686 = vunpack.c.l.b16 %v2615
      %v2687 = vpack.c.b16 %v2672, %v2671
      %v2688 = vpack.c.b16 %v2674, %v2673
      %v2689 = vpack.c.b16 %v2676, %v2675
      %v2690 = vpack.c.b16 %v2678, %v2677
      %v2691 = vpack.c.b16 %v2680, %v2679
      %v2692 = vpack.c.b16 %v2682, %v2681
      %v2693 = vpack.c.b16 %v2684, %v2683
      %v2694 = vpack.c.b16 %v2686, %v2685
      %2703 = vmatprep.subr.bf16.mxu0 0
      %2704 = vmatpush1.bf16.msra.mxu0 %v2687
      %2705 = vmatprep.subr.bf16.mxu0 0
      %2706 = vmatpush1.bf16.msra.mxu0 %v2688
      %2707 = vmatprep.subr.bf16.mxu0 0
      %2708 = vmatpush1.bf16.msra.mxu0 %v2689
      %2709 = vmatprep.subr.bf16.mxu0 0
      %2710 = vmatpush1.bf16.msra.mxu0 %v2690
      %2711 = vmatprep.subr.bf16.mxu0 0
      %2712 = vmatpush1.bf16.msra.mxu0 %v2691
      %2713 = vmatprep.subr.bf16.mxu0 0
      %2714 = vmatpush1.bf16.msra.mxu0 %v2692
      %2715 = vmatprep.subr.bf16.mxu0 0
      %2716 = vmatpush1.bf16.msra.mxu0 %v2693
      %2717 = vmatprep.subr.bf16.mxu0 0
      %2718 = vmatpush1.bf16.msra.mxu0 %v2694
      %2719 = vmatprep.subr.bf16.mxu0 0
      %2720 = vmatpush1.bf16.msra.mxu0 0
      %2721 = vmatprep.subr.bf16.mxu0 0
      %2722 = vmatpush1.bf16.msra.mxu0 0
      %2723 = vmatprep.subr.bf16.mxu0 0
      %2724 = vmatpush1.bf16.msra.mxu0 0
      %2725 = vmatprep.subr.bf16.mxu0 0
      %2726 = vmatpush1.bf16.msra.mxu0 0
      %2727 = vmatprep.subr.bf16.mxu0 0
      %2728 = vmatpush1.bf16.msra.mxu0 0
      %2729 = vmatprep.subr.bf16.mxu0 0
      %2730 = vmatpush1.bf16.msra.mxu0 0
      %2731 = vmatprep.subr.bf16.mxu0 0
      %2732 = vmatpush1.bf16.msra.mxu0 0
      %2733 = vmatprep.subr.bf16.mxu0 0
      %2734 = vmatpush1.bf16.msra.mxu0 0
      %2735 = vmatprep.mubr.bf16.mxu0 0
      %2736 = vmatmul.mubr.bf16.gmra.mrb[0].mxu0 %v2628
      %v2737 = vpop.f32.mrb[0].mxu0
      %v2738 = vadd.f32 0.0, %v2737
      %v2739 = vpop.f32.mrb[0].mxu0
      %v2740 = vpop.f32.mrb[0].mxu0
      %v2741 = vadd.f32 0.0, %v2740
      %v2742 = vpop.f32.mrb[0].mxu0
      %2743 = vmatprep.mubr.bf16.mxu0 0
      %2744 = vmatmul.mubr.bf16.gmra.mrb[0].mxu0 %v2632
      %v2745 = vpop.f32.mrb[0].mxu0
      %v2746 = vadd.f32 0.0, %v2745
      %v2747 = vpop.f32.mrb[0].mxu0
      %v2748 = vpop.f32.mrb[0].mxu0
      %v2749 = vadd.f32 0.0, %v2748
      %v2750 = vpop.f32.mrb[0].mxu0
      %2751 = vmatprep.mubr.bf16.mxu0 0
      %2752 = vmatmul.mubr.bf16.gmra.mrb[0].mxu0 %v2636
      %v2753 = vpop.f32.mrb[0].mxu0
      %v2754 = vadd.f32 0.0, %v2753
      %v2755 = vpop.f32.mrb[0].mxu0
      %v2756 = vpop.f32.mrb[0].mxu0
      %v2757 = vadd.f32 0.0, %v2756
      %v2758 = vpop.f32.mrb[0].mxu0
      %2759 = vmatprep.mubr.bf16.mxu0 0
      %2760 = vmatmul.mubr.bf16.gmra.mrb[0].mxu0 %v2640
      %v2761 = vpop.f32.mrb[0].mxu0
      %v2762 = vadd.f32 0.0, %v2761
      %v2763 = vpop.f32.mrb[0].mxu0
      %v2764 = vpop.f32.mrb[0].mxu0
      %v2765 = vadd.f32 0.0, %v2764
      %v2766 = vpop.f32.mrb[0].mxu0
      %2767 = vmatprep.mubr.bf16.mxu0 0
      %2768 = vmatmul.mubr.bf16.gmra.mrb[0].mxu0 %v2649
      %v2769 = vpop.f32.mrb[0].mxu0
      %v2770 = vadd.f32 0.0, %v2769
      %v2771 = vpop.f32.mrb[0].mxu0
      %v2772 = vpop.f32.mrb[0].mxu0
      %v2773 = vadd.f32 0.0, %v2772
      %v2774 = vpop.f32.mrb[0].mxu0
      %2775 = vdwg.mxu0
      %v2776 = vadd.f32 %v2588, %v2738
      %v2777 = vadd.f32 %v2589, %v2741
      %v2778 = vadd.f32 %v2590, %v2746
      %v2779 = vadd.f32 %v2591, %v2749
      %v2780 = vadd.f32 %v2592, %v2754
      %v2781 = vadd.f32 %v2593, %v2757
      %v2782 = vadd.f32 %v2594, %v2762
      %v2783 = vadd.f32 %v2595, %v2765
      %v2784 = vadd.f32 %v2596, %v2770
      %v2785 = vadd.f32 %v2597, %v2773
      %v2786 = vlaneseq
      %v2787 = vshrl.u32 %v2786, 7
      %v2788 = vsub.s32 1, %v2787
      %v2789 = vrot.slane %v255, %v2788
      %v2790 = vadd.f32 %v2776, %v2789
      %v2791 = vadd.f32 %v2777, %v2789
      %v2792 = vadd.f32 %v2778, %v2789
      %v2793 = vadd.f32 %v2779, %v2789
      %v2794 = vadd.f32 %v2780, %v2789
      %v2795 = vadd.f32 %v2781, %v2789
      %v2796 = vadd.f32 %v2782, %v2789
      %v2797 = vadd.f32 %v2783, %v2789
      %v2798 = vadd.f32 %v2784, %v2789
      %v2799 = vadd.f32 %v2785, %v2789
      %v2800 = vmax.f32 %v2790, 0.0
      %v2801 = vmax.f32 %v2791, 0.0
      %v2802 = vmax.f32 %v2792, 0.0
      %v2803 = vmax.f32 %v2793, 0.0
      %v2804 = vmax.f32 %v2794, 0.0
      %v2805 = vmax.f32 %v2795, 0.0
      %v2806 = vmax.f32 %v2796, 0.0
      %v2807 = vmax.f32 %v2797, 0.0
      %v2808 = vmax.f32 %v2798, 0.0
      %v2809 = vmax.f32 %v2799, 0.0
      %v2810 = vsel %vm1124, %v2800, 0.0
      %v2811 = vsel %vm1125, %v2801, 0.0
      %v2812 = vsel %vm1126, %v2802, 0.0
      %v2813 = vsel %vm1127, %v2803, 0.0
      %v2814 = vsel %vm1128, %v2804, 0.0
      %v2815 = vsel %vm1129, %v2805, 0.0
      %v2816 = vsel %vm1130, %v2806, 0.0
      %v2817 = vsel %vm1131, %v2807, 0.0
      %v2818 = vsel %vm1132, %v2808, 0.0
      %v2819 = vsel %vm1133, %v2809, 0.0
      %v2820 = vpack.c.bf16 %v2811, %v2810
      %v2821 = vpack.c.bf16 %v2813, %v2812
      %v2822 = vpack.c.bf16 %v2815, %v2814
      %v2823 = vpack.c.bf16 %v2817, %v2816
      %v2824 = vpack.c.bf16 %v2819, %v2818
      %2825 = vst [vmem:[#allocation2 + $0x8] sm:$0xff] %v2820
      %2826 = vst [vmem:[#allocation2 + $0x10] sm:$0xff] %v2821
      %2827 = vst [vmem:[#allocation2 + $0x18] sm:$0xff] %v2822
      %2828 = vst [vmem:[#allocation2 + $0x20] sm:$0xff] %v2823
      %2829 = vst [vmem:[#allocation2 + $0x28] sm:$0xff] %v2824
      %v2830 = vld [vmem:[#allocation2] sm:$0xfc]
      %v2831 = vld [vmem:[#allocation2 + $0x8] sm:$0xff]
      %v2832 = vld [vmem:[#allocation2 + $0x10] sm:$0xff]
      %v2833 = vld [vmem:[#allocation2 + $0x18] sm:$0xff]
      %v2834 = vld [vmem:[#allocation2 + $0x20] sm:$0xff]
      %v2835 = vld [vmem:[#allocation2 + $0x28] sm:$0x7]
      %v2836 = vld [vmem:[%s3] sm:$0xf]
      %v2837 = vld [vmem:[%s3 + $0x4] sm:$0xf]
      %v2838 = vld [vmem:[%s3 + $0x8] sm:$0xf]
      %v2839 = vld [vmem:[%s3 + $0xc] sm:$0xf]
      %v2840 = vld [vmem:[%s3 + $0x10] sm:$0xf]
      %v2841 = vld [vmem:[%s3 + $0x14] sm:$0xf]
      %v2842 = vld [vmem:[%s3 + $0x18] sm:$0xf]
      %v2843 = vld [vmem:[%s3 + $0x1c] sm:$0xf]
      %v2844 = vld [vmem:[%s3 + $0x20] sm:$0xf]
      %v2845 = vld [vmem:[%s3 + $0x24] sm:$0xf]
      %v2846 = vld [vmem:[%s3 + $0x28] sm:$0xf]
      %v2847 = vld [vmem:[%s3 + $0x2c] sm:$0xf]
      %v2848 = vld [vmem:[%s3 + $0x30] sm:$0xf]
      %v2849 = vld [vmem:[%s3 + $0x34] sm:$0xf]
      %v2850 = vld [vmem:[%s3 + $0x38] sm:$0xf]
      %v2851 = vld [vmem:[%s3 + $0x3c] sm:$0xf]
      %v2852 = vld [vmem:[#allocation2] sm:$0xf8]
      %s2853 = scalar_lea.vmem %s3, 64
      %v2854 = vld [vmem:[%s2853] sm:$0xf]
      %v2855 = vld [vmem:[%s2853 + $0x4] sm:$0xf]
      %v2856 = vld [vmem:[%s2853 + $0x8] sm:$0xf]
      %v2857 = vld [vmem:[%s2853 + $0xc] sm:$0xf]
      %v2858 = vld [vmem:[%s2853 + $0x10] sm:$0xf]
      %v2859 = vld [vmem:[%s2853 + $0x14] sm:$0xf]
      %v2860 = vld [vmem:[%s2853 + $0x18] sm:$0xf]
      %v2861 = vld [vmem:[%s2853 + $0x1c] sm:$0xf]
      %v2862 = vld [vmem:[%s2853 + $0x20] sm:$0xf]
      %v2863 = vld [vmem:[%s2853 + $0x24] sm:$0xf]
      %v2864 = vld [vmem:[%s2853 + $0x28] sm:$0xf]
      %v2865 = vld [vmem:[%s2853 + $0x2c] sm:$0xf]
      %v2866 = vld [vmem:[%s2853 + $0x30] sm:$0xf]
      %v2867 = vld [vmem:[%s2853 + $0x34] sm:$0xf]
      %v2868 = vld [vmem:[%s2853 + $0x38] sm:$0xf]
      %v2869 = vld [vmem:[%s2853 + $0x3c] sm:$0xf]
      %v2876 = vrot.slane %v2852, 3
      %v2877 = vrot.slane %v2831, 3
      %v2878 = vsel %vm1200, %v2876, %v2877
      %v2879 = vrot.slane %v2832, 3
      %v2880 = vsel %vm1200, %v2877, %v2879
      %v2881 = vrot.slane %v2833, 3
      %v2882 = vsel %vm1200, %v2879, %v2881
      %v2883 = vrot.slane %v2834, 3
      %v2884 = vsel %vm1200, %v2881, %v2883
      %v2885 = vrot.slane %v2835, 3
      %v2886 = vsel %vm1200, %v2883, %v2885
      %v2908 = vunpack.c.l.b16 %v2854
      %v2909 = vunpack.c.l.b16 %v2855
      %v2910 = vunpack.c.l.b16 %v2856
      %v2911 = vunpack.c.l.b16 %v2857
      %v2912 = vunpack.c.l.b16 %v2858
      %v2913 = vunpack.c.l.b16 %v2859
      %v2914 = vunpack.c.l.b16 %v2860
      %v2915 = vunpack.c.l.b16 %v2861
      %v2916 = vunpack.c.l.b16 %v2862
      %v2917 = vunpack.c.l.b16 %v2863
      %v2918 = vunpack.c.l.b16 %v2864
      %v2919 = vunpack.c.l.b16 %v2865
      %v2920 = vunpack.c.l.b16 %v2866
      %v2921 = vunpack.c.l.b16 %v2867
      %v2922 = vunpack.c.l.b16 %v2868
      %v2923 = vunpack.c.l.b16 %v2869
      %v2924 = vpack.c.b16 %v2909, %v2908
      %v2925 = vpack.c.b16 %v2911, %v2910
      %v2926 = vpack.c.b16 %v2913, %v2912
      %v2927 = vpack.c.b16 %v2915, %v2914
      %v2928 = vpack.c.b16 %v2917, %v2916
      %v2929 = vpack.c.b16 %v2919, %v2918
      %v2930 = vpack.c.b16 %v2921, %v2920
      %v2931 = vpack.c.b16 %v2923, %v2922
      %2940 = vmatprep.subr.bf16.mxu0 0
      %2941 = vmatpush1.bf16.msra.mxu0 %v2924
      %2942 = vmatprep.subr.bf16.mxu0 0
      %2943 = vmatpush1.bf16.msra.mxu0 %v2925
      %2944 = vmatprep.subr.bf16.mxu0 0
      %2945 = vmatpush1.bf16.msra.mxu0 %v2926
      %2946 = vmatprep.subr.bf16.mxu0 0
      %2947 = vmatpush1.bf16.msra.mxu0 %v2927
      %2948 = vmatprep.subr.bf16.mxu0 0
      %2949 = vmatpush1.bf16.msra.mxu0 %v2928
      %2950 = vmatprep.subr.bf16.mxu0 0
      %2951 = vmatpush1.bf16.msra.mxu0 %v2929
      %2952 = vmatprep.subr.bf16.mxu0 0
      %2953 = vmatpush1.bf16.msra.mxu0 %v2930
      %2954 = vmatprep.subr.bf16.mxu0 0
      %2955 = vmatpush1.bf16.msra.mxu0 %v2931
      %2956 = vmatprep.subr.bf16.mxu0 0
      %2957 = vmatpush1.bf16.msra.mxu0 0
      %2958 = vmatprep.subr.bf16.mxu0 0
      %2959 = vmatpush1.bf16.msra.mxu0 0
      %2960 = vmatprep.subr.bf16.mxu0 0
      %2961 = vmatpush1.bf16.msra.mxu0 0
      %2962 = vmatprep.subr.bf16.mxu0 0
      %2963 = vmatpush1.bf16.msra.mxu0 0
      %2964 = vmatprep.subr.bf16.mxu0 0
      %2965 = vmatpush1.bf16.msra.mxu0 0
      %2966 = vmatprep.subr.bf16.mxu0 0
      %2967 = vmatpush1.bf16.msra.mxu0 0
      %2968 = vmatprep.subr.bf16.mxu0 0
      %2969 = vmatpush1.bf16.msra.mxu0 0
      %2970 = vmatprep.subr.bf16.mxu0 0
      %2971 = vmatpush1.bf16.msra.mxu0 0
      %2972 = vmatprep.mubr.bf16.mxu0 0
      %2973 = vmatmul.mubr.bf16.gmra.mrb[0].mxu0 %v2878
      %v2974 = vpop.f32.mrb[0].mxu0
      %v2975 = vadd.f32 0.0, %v2974
      %v2976 = vpop.f32.mrb[0].mxu0
      %v2977 = vpop.f32.mrb[0].mxu0
      %v2978 = vadd.f32 0.0, %v2977
      %v2979 = vpop.f32.mrb[0].mxu0
      %2980 = vmatprep.mubr.bf16.mxu0 0
      %2981 = vmatmul.mubr.bf16.gmra.mrb[0].mxu0 %v2880
      %v2982 = vpop.f32.mrb[0].mxu0
      %v2983 = vadd.f32 0.0, %v2982
      %v2984 = vpop.f32.mrb[0].mxu0
      %v2985 = vpop.f32.mrb[0].mxu0
      %v2986 = vadd.f32 0.0, %v2985
      %v2987 = vpop.f32.mrb[0].mxu0
      %2988 = vmatprep.mubr.bf16.mxu0 0
      %2989 = vmatmul.mubr.bf16.gmra.mrb[0].mxu0 %v2882
      %v2990 = vpop.f32.mrb[0].mxu0
      %v2991 = vadd.f32 0.0, %v2990
      %v2992 = vpop.f32.mrb[0].mxu0
      %v2993 = vpop.f32.mrb[0].mxu0
      %v2994 = vadd.f32 0.0, %v2993
      %v2995 = vpop.f32.mrb[0].mxu0
      %2996 = vmatprep.mubr.bf16.mxu0 0
      %2997 = vmatmul.mubr.bf16.gmra.mrb[0].mxu0 %v2884
      %v2998 = vpop.f32.mrb[0].mxu0
      %v2999 = vadd.f32 0.0, %v2998
      %v3000 = vpop.f32.mrb[0].mxu0
      %v3001 = vpop.f32.mrb[0].mxu0
      %v3002 = vadd.f32 0.0, %v3001
      %v3003 = vpop.f32.mrb[0].mxu0
      %3004 = vmatprep.mubr.bf16.mxu0 0
      %3005 = vmatmul.mubr.bf16.gmra.mrb[0].mxu0 %v2886
      %v3006 = vpop.f32.mrb[0].mxu0
      %v3007 = vadd.f32 0.0, %v3006
      %v3008 = vpop.f32.mrb[0].mxu0
      %v3009 = vpop.f32.mrb[0].mxu0
      %v3010 = vadd.f32 0.0, %v3009
      %v3011 = vpop.f32.mrb[0].mxu0
      %3012 = vdwg.mxu0
      %v3014 = vshrl.u32 %v2830, 16
      %v3016 = vrot.slane %v3014, 2
      %v3017 = vshll.u32 %v2830, 16
      %v3019 = vrot.slane %v3017, 3
      %v3020 = vor.u32 %v3016, %v3019
      %v3022 = vshrl.u32 %v2831, 16
      %v3024 = vrot.slane %v3022, 2
      %v3025 = vshll.u32 %v2831, 16
      %v3027 = vrot.slane %v3025, 3
      %v3028 = vor.u32 %v3024, %v3027
      %v3029 = vsel %vm1338, %v3020, %v3028
      %v3031 = vshrl.u32 %v2832, 16
      %v3033 = vrot.slane %v3031, 2
      %v3034 = vshll.u32 %v2832, 16
      %v3036 = vrot.slane %v3034, 3
      %v3037 = vor.u32 %v3033, %v3036
      %v3038 = vsel %vm1338, %v3028, %v3037
      %v3040 = vshrl.u32 %v2833, 16
      %v3042 = vrot.slane %v3040, 2
      %v3043 = vshll.u32 %v2833, 16
      %v3045 = vrot.slane %v3043, 3
      %v3046 = vor.u32 %v3042, %v3045
      %v3047 = vsel %vm1338, %v3037, %v3046
      %v3049 = vshrl.u32 %v2834, 16
      %v3051 = vrot.slane %v3049, 2
      %v3052 = vshll.u32 %v2834, 16
      %v3054 = vrot.slane %v3052, 3
      %v3055 = vor.u32 %v3051, %v3054
      %v3056 = vsel %vm1338, %v3046, %v3055
      %v3058 = vshrl.u32 %v2835, 16
      %v3060 = vrot.slane %v3058, 2
      %v3061 = vshll.u32 %v2835, 16
      %v3063 = vrot.slane %v3061, 3
      %v3064 = vor.u32 %v3060, %v3063
      %v3065 = vsel %vm1338, %v3055, %v3064
      %v3087 = vunpack.c.l.b16 %v2836
      %v3088 = vunpack.c.l.b16 %v2837
      %v3089 = vunpack.c.l.b16 %v2838
      %v3090 = vunpack.c.l.b16 %v2839
      %v3091 = vunpack.c.l.b16 %v2840
      %v3092 = vunpack.c.l.b16 %v2841
      %v3093 = vunpack.c.l.b16 %v2842
      %v3094 = vunpack.c.l.b16 %v2843
      %v3095 = vunpack.c.l.b16 %v2844
      %v3096 = vunpack.c.l.b16 %v2845
      %v3097 = vunpack.c.l.b16 %v2846
      %v3098 = vunpack.c.l.b16 %v2847
      %v3099 = vunpack.c.l.b16 %v2848
      %v3100 = vunpack.c.l.b16 %v2849
      %v3101 = vunpack.c.l.b16 %v2850
      %v3102 = vunpack.c.l.b16 %v2851
      %v3103 = vpack.c.b16 %v3088, %v3087
      %v3104 = vpack.c.b16 %v3090, %v3089
      %v3105 = vpack.c.b16 %v3092, %v3091
      %v3106 = vpack.c.b16 %v3094, %v3093
      %v3107 = vpack.c.b16 %v3096, %v3095
      %v3108 = vpack.c.b16 %v3098, %v3097
      %v3109 = vpack.c.b16 %v3100, %v3099
      %v3110 = vpack.c.b16 %v3102, %v3101
      %3119 = vmatprep.subr.bf16.mxu0 0
      %3120 = vmatpush1.bf16.msra.mxu0 %v3103
      %3121 = vmatprep.subr.bf16.mxu0 0
      %3122 = vmatpush1.bf16.msra.mxu0 %v3104
      %3123 = vmatprep.subr.bf16.mxu0 0
      %3124 = vmatpush1.bf16.msra.mxu0 %v3105
      %3125 = vmatprep.subr.bf16.mxu0 0
      %3126 = vmatpush1.bf16.msra.mxu0 %v3106
      %3127 = vmatprep.subr.bf16.mxu0 0
      %3128 = vmatpush1.bf16.msra.mxu0 %v3107
      %3129 = vmatprep.subr.bf16.mxu0 0
      %3130 = vmatpush1.bf16.msra.mxu0 %v3108
      %3131 = vmatprep.subr.bf16.mxu0 0
      %3132 = vmatpush1.bf16.msra.mxu0 %v3109
      %3133 = vmatprep.subr.bf16.mxu0 0
      %3134 = vmatpush1.bf16.msra.mxu0 %v3110
      %3135 = vmatprep.subr.bf16.mxu0 0
      %3136 = vmatpush1.bf16.msra.mxu0 0
      %3137 = vmatprep.subr.bf16.mxu0 0
      %3138 = vmatpush1.bf16.msra.mxu0 0
      %3139 = vmatprep.subr.bf16.mxu0 0
      %3140 = vmatpush1.bf16.msra.mxu0 0
      %3141 = vmatprep.subr.bf16.mxu0 0
      %3142 = vmatpush1.bf16.msra.mxu0 0
      %3143 = vmatprep.subr.bf16.mxu0 0
      %3144 = vmatpush1.bf16.msra.mxu0 0
      %3145 = vmatprep.subr.bf16.mxu0 0
      %3146 = vmatpush1.bf16.msra.mxu0 0
      %3147 = vmatprep.subr.bf16.mxu0 0
      %3148 = vmatpush1.bf16.msra.mxu0 0
      %3149 = vmatprep.subr.bf16.mxu0 0
      %3150 = vmatpush1.bf16.msra.mxu0 0
      %3151 = vmatprep.mubr.bf16.mxu0 0
      %3152 = vmatmul.mubr.bf16.gmra.mrb[0].mxu0 %v3029
      %v3153 = vpop.f32.mrb[0].mxu0
      %v3154 = vadd.f32 %v2975, %v3153
      %v3155 = vpop.f32.mrb[0].mxu0
      %v3156 = vpop.f32.mrb[0].mxu0
      %v3157 = vadd.f32 %v2978, %v3156
      %v3158 = vpop.f32.mrb[0].mxu0
      %3159 = vmatprep.mubr.bf16.mxu0 0
      %3160 = vmatmul.mubr.bf16.gmra.mrb[0].mxu0 %v3038
      %v3161 = vpop.f32.mrb[0].mxu0
      %v3162 = vadd.f32 %v2983, %v3161
      %v3163 = vpop.f32.mrb[0].mxu0
      %v3164 = vpop.f32.mrb[0].mxu0
      %v3165 = vadd.f32 %v2986, %v3164
      %v3166 = vpop.f32.mrb[0].mxu0
      %3167 = vmatprep.mubr.bf16.mxu0 0
      %3168 = vmatmul.mubr.bf16.gmra.mrb[0].mxu0 %v3047
      %v3169 = vpop.f32.mrb[0].mxu0
      %v3170 = vadd.f32 %v2991, %v3169
      %v3171 = vpop.f32.mrb[0].mxu0
      %v3172 = vpop.f32.mrb[0].mxu0
      %v3173 = vadd.f32 %v2994, %v3172
      %v3174 = vpop.f32.mrb[0].mxu0
      %3175 = vmatprep.mubr.bf16.mxu0 0
      %3176 = vmatmul.mubr.bf16.gmra.mrb[0].mxu0 %v3056
      %v3177 = vpop.f32.mrb[0].mxu0
      %v3178 = vadd.f32 %v2999, %v3177
      %v3179 = vpop.f32.mrb[0].mxu0
      %v3180 = vpop.f32.mrb[0].mxu0
      %v3181 = vadd.f32 %v3002, %v3180
      %v3182 = vpop.f32.mrb[0].mxu0
      %3183 = vmatprep.mubr.bf16.mxu0 0
      %3184 = vmatmul.mubr.bf16.gmra.mrb[0].mxu0 %v3065
      %v3185 = vpop.f32.mrb[0].mxu0
      %v3186 = vadd.f32 %v3007, %v3185
      %v3187 = vpop.f32.mrb[0].mxu0
      %v3188 = vpop.f32.mrb[0].mxu0
      %v3189 = vadd.f32 %v3010, %v3188
      %v3190 = vpop.f32.mrb[0].mxu0
      %3191 = vdwg.mxu0
      %v3192 = vld [vmem:[#allocation2 + $0x28] sm:$0xf]
      %s3193 = scalar_lea.vmem %s3, 128
      %v3194 = vld [vmem:[%s3193] sm:$0xf]
      %v3195 = vld [vmem:[%s3193 + $0x4] sm:$0xf]
      %v3196 = vld [vmem:[%s3193 + $0x8] sm:$0xf]
      %v3197 = vld [vmem:[%s3193 + $0xc] sm:$0xf]
      %v3198 = vld [vmem:[%s3193 + $0x10] sm:$0xf]
      %v3199 = vld [vmem:[%s3193 + $0x14] sm:$0xf]
      %v3200 = vld [vmem:[%s3193 + $0x18] sm:$0xf]
      %v3201 = vld [vmem:[%s3193 + $0x1c] sm:$0xf]
      %v3202 = vld [vmem:[%s3193 + $0x20] sm:$0xf]
      %v3203 = vld [vmem:[%s3193 + $0x24] sm:$0xf]
      %v3204 = vld [vmem:[%s3193 + $0x28] sm:$0xf]
      %v3205 = vld [vmem:[%s3193 + $0x2c] sm:$0xf]
      %v3206 = vld [vmem:[%s3193 + $0x30] sm:$0xf]
      %v3207 = vld [vmem:[%s3193 + $0x34] sm:$0xf]
      %v3208 = vld [vmem:[%s3193 + $0x38] sm:$0xf]
      %v3209 = vld [vmem:[%s3193 + $0x3c] sm:$0xf]
      %v3211 = vshrl.u32 %v2852, 16
      %v3213 = vrot.slane %v3211, 3
      %v3214 = vshll.u32 %v2852, 16
      %v3216 = vrot.slane %v3214, 4
      %v3217 = vor.u32 %v3213, %v3216
      %v3218 = vrot.slane %v3022, 3
      %v3219 = vrot.slane %v3025, 4
      %v3220 = vor.u32 %v3218, %v3219
      %v3221 = vsel %vm1536, %v3217, %v3220
      %v3222 = vrot.slane %v3031, 3
      %v3223 = vrot.slane %v3034, 4
      %v3224 = vor.u32 %v3222, %v3223
      %v3225 = vsel %vm1536, %v3220, %v3224
      %v3226 = vrot.slane %v3040, 3
      %v3227 = vrot.slane %v3043, 4
      %v3228 = vor.u32 %v3226, %v3227
      %v3229 = vsel %vm1536, %v3224, %v3228
      %v3230 = vrot.slane %v3049, 3
      %v3231 = vrot.slane %v3052, 4
      %v3232 = vor.u32 %v3230, %v3231
      %v3233 = vsel %vm1536, %v3228, %v3232
      %v3235 = vshrl.u32 %v3192, 16
      %v3237 = vrot.slane %v3235, 3
      %v3238 = vshll.u32 %v3192, 16
      %v3240 = vrot.slane %v3238, 4
      %v3241 = vor.u32 %v3237, %v3240
      %v3242 = vsel %vm1536, %v3232, %v3241
      %v3264 = vunpack.c.l.b16 %v3194
      %v3265 = vunpack.c.l.b16 %v3195
      %v3266 = vunpack.c.l.b16 %v3196
      %v3267 = vunpack.c.l.b16 %v3197
      %v3268 = vunpack.c.l.b16 %v3198
      %v3269 = vunpack.c.l.b16 %v3199
      %v3270 = vunpack.c.l.b16 %v3200
      %v3271 = vunpack.c.l.b16 %v3201
      %v3272 = vunpack.c.l.b16 %v3202
      %v3273 = vunpack.c.l.b16 %v3203
      %v3274 = vunpack.c.l.b16 %v3204
      %v3275 = vunpack.c.l.b16 %v3205
      %v3276 = vunpack.c.l.b16 %v3206
      %v3277 = vunpack.c.l.b16 %v3207
      %v3278 = vunpack.c.l.b16 %v3208
      %v3279 = vunpack.c.l.b16 %v3209
      %v3280 = vpack.c.b16 %v3265, %v3264
      %v3281 = vpack.c.b16 %v3267, %v3266
      %v3282 = vpack.c.b16 %v3269, %v3268
      %v3283 = vpack.c.b16 %v3271, %v3270
      %v3284 = vpack.c.b16 %v3273, %v3272
      %v3285 = vpack.c.b16 %v3275, %v3274
      %v3286 = vpack.c.b16 %v3277, %v3276
      %v3287 = vpack.c.b16 %v3279, %v3278
      %3296 = vmatprep.subr.bf16.mxu0 0
      %3297 = vmatpush1.bf16.msra.mxu0 %v3280
      %3298 = vmatprep.subr.bf16.mxu0 0
      %3299 = vmatpush1.bf16.msra.mxu0 %v3281
      %3300 = vmatprep.subr.bf16.mxu0 0
      %3301 = vmatpush1.bf16.msra.mxu0 %v3282
      %3302 = vmatprep.subr.bf16.mxu0 0
      %3303 = vmatpush1.bf16.msra.mxu0 %v3283
      %3304 = vmatprep.subr.bf16.mxu0 0
      %3305 = vmatpush1.bf16.msra.mxu0 %v3284
      %3306 = vmatprep.subr.bf16.mxu0 0
      %3307 = vmatpush1.bf16.msra.mxu0 %v3285
      %3308 = vmatprep.subr.bf16.mxu0 0
      %3309 = vmatpush1.bf16.msra.mxu0 %v3286
      %3310 = vmatprep.subr.bf16.mxu0 0
      %3311 = vmatpush1.bf16.msra.mxu0 %v3287
      %3312 = vmatprep.subr.bf16.mxu0 0
      %3313 = vmatpush1.bf16.msra.mxu0 0
      %3314 = vmatprep.subr.bf16.mxu0 0
      %3315 = vmatpush1.bf16.msra.mxu0 0
      %3316 = vmatprep.subr.bf16.mxu0 0
      %3317 = vmatpush1.bf16.msra.mxu0 0
      %3318 = vmatprep.subr.bf16.mxu0 0
      %3319 = vmatpush1.bf16.msra.mxu0 0
      %3320 = vmatprep.subr.bf16.mxu0 0
      %3321 = vmatpush1.bf16.msra.mxu0 0
      %3322 = vmatprep.subr.bf16.mxu0 0
      %3323 = vmatpush1.bf16.msra.mxu0 0
      %3324 = vmatprep.subr.bf16.mxu0 0
      %3325 = vmatpush1.bf16.msra.mxu0 0
      %3326 = vmatprep.subr.bf16.mxu0 0
      %3327 = vmatpush1.bf16.msra.mxu0 0
      %3328 = vmatprep.mubr.bf16.mxu0 0
      %3329 = vmatmul.mubr.bf16.gmra.mrb[0].mxu0 %v3221
      %v3330 = vpop.f32.mrb[0].mxu0
      %v3331 = vadd.f32 0.0, %v3330
      %v3332 = vpop.f32.mrb[0].mxu0
      %v3333 = vpop.f32.mrb[0].mxu0
      %v3334 = vadd.f32 0.0, %v3333
      %v3335 = vpop.f32.mrb[0].mxu0
      %3336 = vmatprep.mubr.bf16.mxu0 0
      %3337 = vmatmul.mubr.bf16.gmra.mrb[0].mxu0 %v3225
      %v3338 = vpop.f32.mrb[0].mxu0
      %v3339 = vadd.f32 0.0, %v3338
      %v3340 = vpop.f32.mrb[0].mxu0
      %v3341 = vpop.f32.mrb[0].mxu0
      %v3342 = vadd.f32 0.0, %v3341
      %v3343 = vpop.f32.mrb[0].mxu0
      %3344 = vmatprep.mubr.bf16.mxu0 0
      %3345 = vmatmul.mubr.bf16.gmra.mrb[0].mxu0 %v3229
      %v3346 = vpop.f32.mrb[0].mxu0
      %v3347 = vadd.f32 0.0, %v3346
      %v3348 = vpop.f32.mrb[0].mxu0
      %v3349 = vpop.f32.mrb[0].mxu0
      %v3350 = vadd.f32 0.0, %v3349
      %v3351 = vpop.f32.mrb[0].mxu0
      %3352 = vmatprep.mubr.bf16.mxu0 0
      %3353 = vmatmul.mubr.bf16.gmra.mrb[0].mxu0 %v3233
      %v3354 = vpop.f32.mrb[0].mxu0
      %v3355 = vadd.f32 0.0, %v3354
      %v3356 = vpop.f32.mrb[0].mxu0
      %v3357 = vpop.f32.mrb[0].mxu0
      %v3358 = vadd.f32 0.0, %v3357
      %v3359 = vpop.f32.mrb[0].mxu0
      %3360 = vmatprep.mubr.bf16.mxu0 0
      %3361 = vmatmul.mubr.bf16.gmra.mrb[0].mxu0 %v3242
      %v3362 = vpop.f32.mrb[0].mxu0
      %v3363 = vadd.f32 0.0, %v3362
      %v3364 = vpop.f32.mrb[0].mxu0
      %v3365 = vpop.f32.mrb[0].mxu0
      %v3366 = vadd.f32 0.0, %v3365
      %v3367 = vpop.f32.mrb[0].mxu0
      %3368 = vdwg.mxu0
      %v3369 = vadd.f32 %v3154, %v3331
      %v3370 = vadd.f32 %v3157, %v3334
      %v3371 = vadd.f32 %v3162, %v3339
      %v3372 = vadd.f32 %v3165, %v3342
      %v3373 = vadd.f32 %v3170, %v3347
      %v3374 = vadd.f32 %v3173, %v3350
      %v3375 = vadd.f32 %v3178, %v3355
      %v3376 = vadd.f32 %v3181, %v3358
      %v3377 = vadd.f32 %v3186, %v3363
      %v3378 = vadd.f32 %v3189, %v3366
      %v3379 = vld [vmem:[#allocation2] sm:$0x80]
      %v3380 = vld [vmem:[#allocation2 + $0x28] sm:$0xff]
      %s3381 = scalar_lea.vmem %s3, 192
      %v3382 = vld [vmem:[%s3381] sm:$0xf]
      %v3383 = vld [vmem:[%s3381 + $0x4] sm:$0xf]
      %v3384 = vld [vmem:[%s3381 + $0x8] sm:$0xf]
      %v3385 = vld [vmem:[%s3381 + $0xc] sm:$0xf]
      %v3386 = vld [vmem:[%s3381 + $0x10] sm:$0xf]
      %v3387 = vld [vmem:[%s3381 + $0x14] sm:$0xf]
      %v3388 = vld [vmem:[%s3381 + $0x18] sm:$0xf]
      %v3389 = vld [vmem:[%s3381 + $0x1c] sm:$0xf]
      %v3390 = vld [vmem:[%s3381 + $0x20] sm:$0xf]
      %v3391 = vld [vmem:[%s3381 + $0x24] sm:$0xf]
      %v3392 = vld [vmem:[%s3381 + $0x28] sm:$0xf]
      %v3393 = vld [vmem:[%s3381 + $0x2c] sm:$0xf]
      %v3394 = vld [vmem:[%s3381 + $0x30] sm:$0xf]
      %v3395 = vld [vmem:[%s3381 + $0x34] sm:$0xf]
      %v3396 = vld [vmem:[%s3381 + $0x38] sm:$0xf]
      %v3397 = vld [vmem:[%s3381 + $0x3c] sm:$0xf]
      %v3399 = vshrl.u32 %v3379, 16
      %v3401 = vrot.slane %v3399, 7
      %v3402 = vrot.slane %v3022, 7
      %v3403 = vor.u32 %v3402, %v3025
      %v3404 = vsel %vm1725, %v3401, %v3403
      %v3405 = vrot.slane %v3031, 7
      %v3406 = vor.u32 %v3405, %v3034
      %v3407 = vsel %vm1725, %v3402, %v3406
      %v3408 = vrot.slane %v3040, 7
      %v3409 = vor.u32 %v3408, %v3043
      %v3410 = vsel %vm1725, %v3405, %v3409
      %v3411 = vrot.slane %v3049, 7
      %v3412 = vor.u32 %v3411, %v3052
      %v3413 = vsel %vm1725, %v3408, %v3412
      %v3415 = vshrl.u32 %v3380, 16
      %v3417 = vrot.slane %v3415, 7
      %v3418 = vshll.u32 %v3380, 16
      %v3420 = vor.u32 %v3417, %v3418
      %v3421 = vsel %vm1725, %v3411, %v3420
      %v3443 = vunpack.c.l.b16 %v3382
      %v3444 = vunpack.c.l.b16 %v3383
      %v3445 = vunpack.c.l.b16 %v3384
      %v3446 = vunpack.c.l.b16 %v3385
      %v3447 = vunpack.c.l.b16 %v3386
      %v3448 = vunpack.c.l.b16 %v3387
      %v3449 = vunpack.c.l.b16 %v3388
      %v3450 = vunpack.c.l.b16 %v3389
      %v3451 = vunpack.c.l.b16 %v3390
      %v3452 = vunpack.c.l.b16 %v3391
      %v3453 = vunpack.c.l.b16 %v3392
      %v3454 = vunpack.c.l.b16 %v3393
      %v3455 = vunpack.c.l.b16 %v3394
      %v3456 = vunpack.c.l.b16 %v3395
      %v3457 = vunpack.c.l.b16 %v3396
      %v3458 = vunpack.c.l.b16 %v3397
      %v3459 = vpack.c.b16 %v3444, %v3443
      %v3460 = vpack.c.b16 %v3446, %v3445
      %v3461 = vpack.c.b16 %v3448, %v3447
      %v3462 = vpack.c.b16 %v3450, %v3449
      %v3463 = vpack.c.b16 %v3452, %v3451
      %v3464 = vpack.c.b16 %v3454, %v3453
      %v3465 = vpack.c.b16 %v3456, %v3455
      %v3466 = vpack.c.b16 %v3458, %v3457
      %3475 = vmatprep.subr.bf16.mxu0 0
      %3476 = vmatpush1.bf16.msra.mxu0 %v3459
      %3477 = vmatprep.subr.bf16.mxu0 0
      %3478 = vmatpush1.bf16.msra.mxu0 %v3460
      %3479 = vmatprep.subr.bf16.mxu0 0
      %3480 = vmatpush1.bf16.msra.mxu0 %v3461
      %3481 = vmatprep.subr.bf16.mxu0 0
      %3482 = vmatpush1.bf16.msra.mxu0 %v3462
      %3483 = vmatprep.subr.bf16.mxu0 0
      %3484 = vmatpush1.bf16.msra.mxu0 %v3463
      %3485 = vmatprep.subr.bf16.mxu0 0
      %3486 = vmatpush1.bf16.msra.mxu0 %v3464
      %3487 = vmatprep.subr.bf16.mxu0 0
      %3488 = vmatpush1.bf16.msra.mxu0 %v3465
      %3489 = vmatprep.subr.bf16.mxu0 0
      %3490 = vmatpush1.bf16.msra.mxu0 %v3466
      %3491 = vmatprep.subr.bf16.mxu0 0
      %3492 = vmatpush1.bf16.msra.mxu0 0
      %3493 = vmatprep.subr.bf16.mxu0 0
      %3494 = vmatpush1.bf16.msra.mxu0 0
      %3495 = vmatprep.subr.bf16.mxu0 0
      %3496 = vmatpush1.bf16.msra.mxu0 0
      %3497 = vmatprep.subr.bf16.mxu0 0
      %3498 = vmatpush1.bf16.msra.mxu0 0
      %3499 = vmatprep.subr.bf16.mxu0 0
      %3500 = vmatpush1.bf16.msra.mxu0 0
      %3501 = vmatprep.subr.bf16.mxu0 0
      %3502 = vmatpush1.bf16.msra.mxu0 0
      %3503 = vmatprep.subr.bf16.mxu0 0
      %3504 = vmatpush1.bf16.msra.mxu0 0
      %3505 = vmatprep.subr.bf16.mxu0 0
      %3506 = vmatpush1.bf16.msra.mxu0 0
      %3507 = vmatprep.mubr.bf16.mxu0 0
      %3508 = vmatmul.mubr.bf16.gmra.mrb[0].mxu0 %v3404
      %v3509 = vpop.f32.mrb[0].mxu0
      %v3510 = vadd.f32 0.0, %v3509
      %v3511 = vpop.f32.mrb[0].mxu0
      %v3512 = vpop.f32.mrb[0].mxu0
      %v3513 = vadd.f32 0.0, %v3512
      %v3514 = vpop.f32.mrb[0].mxu0
      %3515 = vmatprep.mubr.bf16.mxu0 0
      %3516 = vmatmul.mubr.bf16.gmra.mrb[0].mxu0 %v3407
      %v3517 = vpop.f32.mrb[0].mxu0
      %v3518 = vadd.f32 0.0, %v3517
      %v3519 = vpop.f32.mrb[0].mxu0
      %v3520 = vpop.f32.mrb[0].mxu0
      %v3521 = vadd.f32 0.0, %v3520
      %v3522 = vpop.f32.mrb[0].mxu0
      %3523 = vmatprep.mubr.bf16.mxu0 0
      %3524 = vmatmul.mubr.bf16.gmra.mrb[0].mxu0 %v3410
      %v3525 = vpop.f32.mrb[0].mxu0
      %v3526 = vadd.f32 0.0, %v3525
      %v3527 = vpop.f32.mrb[0].mxu0
      %v3528 = vpop.f32.mrb[0].mxu0
      %v3529 = vadd.f32 0.0, %v3528
      %v3530 = vpop.f32.mrb[0].mxu0
      %3531 = vmatprep.mubr.bf16.mxu0 0
      %3532 = vmatmul.mubr.bf16.gmra.mrb[0].mxu0 %v3413
      %v3533 = vpop.f32.mrb[0].mxu0
      %v3534 = vadd.f32 0.0, %v3533
      %v3535 = vpop.f32.mrb[0].mxu0
      %v3536 = vpop.f32.mrb[0].mxu0
      %v3537 = vadd.f32 0.0, %v3536
      %v3538 = vpop.f32.mrb[0].mxu0
      %3539 = vmatprep.mubr.bf16.mxu0 0
      %3540 = vmatmul.mubr.bf16.gmra.mrb[0].mxu0 %v3421
      %v3541 = vpop.f32.mrb[0].mxu0
      %v3542 = vadd.f32 0.0, %v3541
      %v3543 = vpop.f32.mrb[0].mxu0
      %v3544 = vpop.f32.mrb[0].mxu0
      %v3545 = vadd.f32 0.0, %v3544
      %v3546 = vpop.f32.mrb[0].mxu0
      %3547 = vdwg.mxu0
      %v3548 = vadd.f32 %v3369, %v3510
      %v3549 = vadd.f32 %v3370, %v3513
      %v3550 = vadd.f32 %v3371, %v3518
      %v3551 = vadd.f32 %v3372, %v3521
      %v3552 = vadd.f32 %v3373, %v3526
      %v3553 = vadd.f32 %v3374, %v3529
      %v3554 = vadd.f32 %v3375, %v3534
      %v3555 = vadd.f32 %v3376, %v3537
      %v3556 = vadd.f32 %v3377, %v3542
      %v3557 = vadd.f32 %v3378, %v3545
      %s3558 = scalar_lea.vmem %s3, 256
      %v3559 = vld [vmem:[%s3558] sm:$0xf]
      %v3560 = vld [vmem:[%s3558 + $0x4] sm:$0xf]
      %v3561 = vld [vmem:[%s3558 + $0x8] sm:$0xf]
      %v3562 = vld [vmem:[%s3558 + $0xc] sm:$0xf]
      %v3563 = vld [vmem:[%s3558 + $0x10] sm:$0xf]
      %v3564 = vld [vmem:[%s3558 + $0x14] sm:$0xf]
      %v3565 = vld [vmem:[%s3558 + $0x18] sm:$0xf]
      %v3566 = vld [vmem:[%s3558 + $0x1c] sm:$0xf]
      %v3567 = vld [vmem:[%s3558 + $0x20] sm:$0xf]
      %v3568 = vld [vmem:[%s3558 + $0x24] sm:$0xf]
      %v3569 = vld [vmem:[%s3558 + $0x28] sm:$0xf]
      %v3570 = vld [vmem:[%s3558 + $0x2c] sm:$0xf]
      %v3571 = vld [vmem:[%s3558 + $0x30] sm:$0xf]
      %v3572 = vld [vmem:[%s3558 + $0x34] sm:$0xf]
      %v3573 = vld [vmem:[%s3558 + $0x38] sm:$0xf]
      %v3574 = vld [vmem:[%s3558 + $0x3c] sm:$0xf]
      %v3591 = vunpack.c.l.b16 %v3559
      %v3592 = vunpack.c.l.b16 %v3560
      %v3593 = vunpack.c.l.b16 %v3561
      %v3594 = vunpack.c.l.b16 %v3562
      %v3595 = vunpack.c.l.b16 %v3563
      %v3596 = vunpack.c.l.b16 %v3564
      %v3597 = vunpack.c.l.b16 %v3565
      %v3598 = vunpack.c.l.b16 %v3566
      %v3599 = vunpack.c.l.b16 %v3567
      %v3600 = vunpack.c.l.b16 %v3568
      %v3601 = vunpack.c.l.b16 %v3569
      %v3602 = vunpack.c.l.b16 %v3570
      %v3603 = vunpack.c.l.b16 %v3571
      %v3604 = vunpack.c.l.b16 %v3572
      %v3605 = vunpack.c.l.b16 %v3573
      %v3606 = vunpack.c.l.b16 %v3574
      %v3607 = vpack.c.b16 %v3592, %v3591
      %v3608 = vpack.c.b16 %v3594, %v3593
      %v3609 = vpack.c.b16 %v3596, %v3595
      %v3610 = vpack.c.b16 %v3598, %v3597
      %v3611 = vpack.c.b16 %v3600, %v3599
      %v3612 = vpack.c.b16 %v3602, %v3601
      %v3613 = vpack.c.b16 %v3604, %v3603
      %v3614 = vpack.c.b16 %v3606, %v3605
      %3623 = vmatprep.subr.bf16.mxu0 0
      %3624 = vmatpush1.bf16.msra.mxu0 %v3607
      %3625 = vmatprep.subr.bf16.mxu0 0
      %3626 = vmatpush1.bf16.msra.mxu0 %v3608
      %3627 = vmatprep.subr.bf16.mxu0 0
      %3628 = vmatpush1.bf16.msra.mxu0 %v3609
      %3629 = vmatprep.subr.bf16.mxu0 0
      %3630 = vmatpush1.bf16.msra.mxu0 %v3610
      %3631 = vmatprep.subr.bf16.mxu0 0
      %3632 = vmatpush1.bf16.msra.mxu0 %v3611
      %3633 = vmatprep.subr.bf16.mxu0 0
      %3634 = vmatpush1.bf16.msra.mxu0 %v3612
      %3635 = vmatprep.subr.bf16.mxu0 0
      %3636 = vmatpush1.bf16.msra.mxu0 %v3613
      %3637 = vmatprep.subr.bf16.mxu0 0
      %3638 = vmatpush1.bf16.msra.mxu0 %v3614
      %3639 = vmatprep.subr.bf16.mxu0 0
      %3640 = vmatpush1.bf16.msra.mxu0 0
      %3641 = vmatprep.subr.bf16.mxu0 0
      %3642 = vmatpush1.bf16.msra.mxu0 0
      %3643 = vmatprep.subr.bf16.mxu0 0
      %3644 = vmatpush1.bf16.msra.mxu0 0
      %3645 = vmatprep.subr.bf16.mxu0 0
      %3646 = vmatpush1.bf16.msra.mxu0 0
      %3647 = vmatprep.subr.bf16.mxu0 0
      %3648 = vmatpush1.bf16.msra.mxu0 0
      %3649 = vmatprep.subr.bf16.mxu0 0
      %3650 = vmatpush1.bf16.msra.mxu0 0
      %3651 = vmatprep.subr.bf16.mxu0 0
      %3652 = vmatpush1.bf16.msra.mxu0 0
      %3653 = vmatprep.subr.bf16.mxu0 0
      %3654 = vmatpush1.bf16.msra.mxu0 0
      %3655 = vmatprep.mubr.bf16.mxu0 0
      %3656 = vmatmul.mubr.bf16.gmra.mrb[0].mxu0 %v2831
      %v3657 = vpop.f32.mrb[0].mxu0
      %v3658 = vadd.f32 0.0, %v3657
      %v3659 = vpop.f32.mrb[0].mxu0
      %v3660 = vpop.f32.mrb[0].mxu0
      %v3661 = vadd.f32 0.0, %v3660
      %v3662 = vpop.f32.mrb[0].mxu0
      %3663 = vmatprep.mubr.bf16.mxu0 0
      %3664 = vmatmul.mubr.bf16.gmra.mrb[0].mxu0 %v2832
      %v3665 = vpop.f32.mrb[0].mxu0
      %v3666 = vadd.f32 0.0, %v3665
      %v3667 = vpop.f32.mrb[0].mxu0
      %v3668 = vpop.f32.mrb[0].mxu0
      %v3669 = vadd.f32 0.0, %v3668
      %v3670 = vpop.f32.mrb[0].mxu0
      %3671 = vmatprep.mubr.bf16.mxu0 0
      %3672 = vmatmul.mubr.bf16.gmra.mrb[0].mxu0 %v2833
      %v3673 = vpop.f32.mrb[0].mxu0
      %v3674 = vadd.f32 0.0, %v3673
      %v3675 = vpop.f32.mrb[0].mxu0
      %v3676 = vpop.f32.mrb[0].mxu0
      %v3677 = vadd.f32 0.0, %v3676
      %v3678 = vpop.f32.mrb[0].mxu0
      %3679 = vmatprep.mubr.bf16.mxu0 0
      %3680 = vmatmul.mubr.bf16.gmra.mrb[0].mxu0 %v2834
      %v3681 = vpop.f32.mrb[0].mxu0
      %v3682 = vadd.f32 0.0, %v3681
      %v3683 = vpop.f32.mrb[0].mxu0
      %v3684 = vpop.f32.mrb[0].mxu0
      %v3685 = vadd.f32 0.0, %v3684
      %v3686 = vpop.f32.mrb[0].mxu0
      %3687 = vmatprep.mubr.bf16.mxu0 0
      %3688 = vmatmul.mubr.bf16.gmra.mrb[0].mxu0 %v3380
      %v3689 = vpop.f32.mrb[0].mxu0
      %v3690 = vadd.f32 0.0, %v3689
      %v3691 = vpop.f32.mrb[0].mxu0
      %v3692 = vpop.f32.mrb[0].mxu0
      %v3693 = vadd.f32 0.0, %v3692
      %v3694 = vpop.f32.mrb[0].mxu0
      %3695 = vdwg.mxu0
      %v3696 = vadd.f32 %v3548, %v3658
      %v3697 = vadd.f32 %v3549, %v3661
      %v3698 = vadd.f32 %v3550, %v3666
      %v3699 = vadd.f32 %v3551, %v3669
      %v3700 = vadd.f32 %v3552, %v3674
      %v3701 = vadd.f32 %v3553, %v3677
      %v3702 = vadd.f32 %v3554, %v3682
      %v3703 = vadd.f32 %v3555, %v3685
      %v3704 = vadd.f32 %v3556, %v3690
      %v3705 = vadd.f32 %v3557, %v3693
      %v3706 = vld [vmem:[#allocation2 + $0x8] sm:$0xff]
      %v3707 = vld [vmem:[#allocation2 + $0x10] sm:$0xff]
      %v3708 = vld [vmem:[#allocation2 + $0x18] sm:$0xff]
      %v3709 = vld [vmem:[#allocation2 + $0x20] sm:$0xff]
      %v3710 = vld [vmem:[#allocation2 + $0x28] sm:$0xff]
      %v3711 = vld [vmem:[#allocation2 + $0x30] sm:$0x1]
      %s3712 = scalar_lea.vmem %s3, 320
      %v3713 = vld [vmem:[%s3712] sm:$0xf]
      %v3714 = vld [vmem:[%s3712 + $0x4] sm:$0xf]
      %v3715 = vld [vmem:[%s3712 + $0x8] sm:$0xf]
      %v3716 = vld [vmem:[%s3712 + $0xc] sm:$0xf]
      %v3717 = vld [vmem:[%s3712 + $0x10] sm:$0xf]
      %v3718 = vld [vmem:[%s3712 + $0x14] sm:$0xf]
      %v3719 = vld [vmem:[%s3712 + $0x18] sm:$0xf]
      %v3720 = vld [vmem:[%s3712 + $0x1c] sm:$0xf]
      %v3721 = vld [vmem:[%s3712 + $0x20] sm:$0xf]
      %v3722 = vld [vmem:[%s3712 + $0x24] sm:$0xf]
      %v3723 = vld [vmem:[%s3712 + $0x28] sm:$0xf]
      %v3724 = vld [vmem:[%s3712 + $0x2c] sm:$0xf]
      %v3725 = vld [vmem:[%s3712 + $0x30] sm:$0xf]
      %v3726 = vld [vmem:[%s3712 + $0x34] sm:$0xf]
      %v3727 = vld [vmem:[%s3712 + $0x38] sm:$0xf]
      %v3728 = vld [vmem:[%s3712 + $0x3c] sm:$0xf]
      %v3730 = vshrl.u32 %v3706, 16
      %v3732 = vshll.u32 %v3706, 16
      %v3734 = vrot.slane %v3732, 1
      %v3735 = vor.u32 %v3730, %v3734
      %v3737 = vshll.u32 %v3707, 16
      %v3739 = vrot.slane %v3737, 1
      %v3740 = vsel %vm348, %v3735, %v3739
      %v3741 = vshrl.u32 %v3707, 16
      %v3743 = vor.u32 %v3741, %v3739
      %v3745 = vshll.u32 %v3708, 16
      %v3747 = vrot.slane %v3745, 1
      %v3748 = vsel %vm348, %v3743, %v3747
      %v3749 = vshrl.u32 %v3708, 16
      %v3751 = vor.u32 %v3749, %v3747
      %v3753 = vshll.u32 %v3709, 16
      %v3755 = vrot.slane %v3753, 1
      %v3756 = vsel %vm348, %v3751, %v3755
      %v3757 = vshrl.u32 %v3709, 16
      %v3759 = vor.u32 %v3757, %v3755
      %v3761 = vshll.u32 %v3710, 16
      %v3763 = vrot.slane %v3761, 1
      %v3764 = vsel %vm348, %v3759, %v3763
      %v3765 = vshrl.u32 %v3710, 16
      %v3767 = vor.u32 %v3765, %v3763
      %v3769 = vshll.u32 %v3711, 16
      %v3771 = vrot.slane %v3769, 1
      %v3772 = vsel %vm348, %v3767, %v3771
      %v3794 = vunpack.c.l.b16 %v3713
      %v3795 = vunpack.c.l.b16 %v3714
      %v3796 = vunpack.c.l.b16 %v3715
      %v3797 = vunpack.c.l.b16 %v3716
      %v3798 = vunpack.c.l.b16 %v3717
      %v3799 = vunpack.c.l.b16 %v3718
      %v3800 = vunpack.c.l.b16 %v3719
      %v3801 = vunpack.c.l.b16 %v3720
      %v3802 = vunpack.c.l.b16 %v3721
      %v3803 = vunpack.c.l.b16 %v3722
      %v3804 = vunpack.c.l.b16 %v3723
      %v3805 = vunpack.c.l.b16 %v3724
      %v3806 = vunpack.c.l.b16 %v3725
      %v3807 = vunpack.c.l.b16 %v3726
      %v3808 = vunpack.c.l.b16 %v3727
      %v3809 = vunpack.c.l.b16 %v3728
      %v3810 = vpack.c.b16 %v3795, %v3794
      %v3811 = vpack.c.b16 %v3797, %v3796
      %v3812 = vpack.c.b16 %v3799, %v3798
      %v3813 = vpack.c.b16 %v3801, %v3800
      %v3814 = vpack.c.b16 %v3803, %v3802
      %v3815 = vpack.c.b16 %v3805, %v3804
      %v3816 = vpack.c.b16 %v3807, %v3806
      %v3817 = vpack.c.b16 %v3809, %v3808
      %3826 = vmatprep.subr.bf16.mxu0 0
      %3827 = vmatpush1.bf16.msra.mxu0 %v3810
      %3828 = vmatprep.subr.bf16.mxu0 0
      %3829 = vmatpush1.bf16.msra.mxu0 %v3811
      %3830 = vmatprep.subr.bf16.mxu0 0
      %3831 = vmatpush1.bf16.msra.mxu0 %v3812
      %3832 = vmatprep.subr.bf16.mxu0 0
      %3833 = vmatpush1.bf16.msra.mxu0 %v3813
      %3834 = vmatprep.subr.bf16.mxu0 0
      %3835 = vmatpush1.bf16.msra.mxu0 %v3814
      %3836 = vmatprep.subr.bf16.mxu0 0
      %3837 = vmatpush1.bf16.msra.mxu0 %v3815
      %3838 = vmatprep.subr.bf16.mxu0 0
      %3839 = vmatpush1.bf16.msra.mxu0 %v3816
      %3840 = vmatprep.subr.bf16.mxu0 0
      %3841 = vmatpush1.bf16.msra.mxu0 %v3817
      %3842 = vmatprep.subr.bf16.mxu0 0
      %3843 = vmatpush1.bf16.msra.mxu0 0
      %3844 = vmatprep.subr.bf16.mxu0 0
      %3845 = vmatpush1.bf16.msra.mxu0 0
      %3846 = vmatprep.subr.bf16.mxu0 0
      %3847 = vmatpush1.bf16.msra.mxu0 0
      %3848 = vmatprep.subr.bf16.mxu0 0
      %3849 = vmatpush1.bf16.msra.mxu0 0
      %3850 = vmatprep.subr.bf16.mxu0 0
      %3851 = vmatpush1.bf16.msra.mxu0 0
      %3852 = vmatprep.subr.bf16.mxu0 0
      %3853 = vmatpush1.bf16.msra.mxu0 0
      %3854 = vmatprep.subr.bf16.mxu0 0
      %3855 = vmatpush1.bf16.msra.mxu0 0
      %3856 = vmatprep.subr.bf16.mxu0 0
      %3857 = vmatpush1.bf16.msra.mxu0 0
      %3858 = vmatprep.mubr.bf16.mxu0 0
      %3859 = vmatmul.mubr.bf16.gmra.mrb[0].mxu0 %v3740
      %v3860 = vpop.f32.mrb[0].mxu0
      %v3861 = vadd.f32 0.0, %v3860
      %v3862 = vpop.f32.mrb[0].mxu0
      %v3863 = vpop.f32.mrb[0].mxu0
      %v3864 = vadd.f32 0.0, %v3863
      %v3865 = vpop.f32.mrb[0].mxu0
      %3866 = vmatprep.mubr.bf16.mxu0 0
      %3867 = vmatmul.mubr.bf16.gmra.mrb[0].mxu0 %v3748
      %v3868 = vpop.f32.mrb[0].mxu0
      %v3869 = vadd.f32 0.0, %v3868
      %v3870 = vpop.f32.mrb[0].mxu0
      %v3871 = vpop.f32.mrb[0].mxu0
      %v3872 = vadd.f32 0.0, %v3871
      %v3873 = vpop.f32.mrb[0].mxu0
      %3874 = vmatprep.mubr.bf16.mxu0 0
      %3875 = vmatmul.mubr.bf16.gmra.mrb[0].mxu0 %v3756
      %v3876 = vpop.f32.mrb[0].mxu0
      %v3877 = vadd.f32 0.0, %v3876
      %v3878 = vpop.f32.mrb[0].mxu0
      %v3879 = vpop.f32.mrb[0].mxu0
      %v3880 = vadd.f32 0.0, %v3879
      %v3881 = vpop.f32.mrb[0].mxu0
      %3882 = vmatprep.mubr.bf16.mxu0 0
      %3883 = vmatmul.mubr.bf16.gmra.mrb[0].mxu0 %v3764
      %v3884 = vpop.f32.mrb[0].mxu0
      %v3885 = vadd.f32 0.0, %v3884
      %v3886 = vpop.f32.mrb[0].mxu0
      %v3887 = vpop.f32.mrb[0].mxu0
      %v3888 = vadd.f32 0.0, %v3887
      %v3889 = vpop.f32.mrb[0].mxu0
      %3890 = vmatprep.mubr.bf16.mxu0 0
      %3891 = vmatmul.mubr.bf16.gmra.mrb[0].mxu0 %v3772
      %v3892 = vpop.f32.mrb[0].mxu0
      %v3893 = vadd.f32 0.0, %v3892
      %v3894 = vpop.f32.mrb[0].mxu0
      %v3895 = vpop.f32.mrb[0].mxu0
      %v3896 = vadd.f32 0.0, %v3895
      %v3897 = vpop.f32.mrb[0].mxu0
      %3898 = vdwg.mxu0
      %v3899 = vadd.f32 %v3696, %v3861
      %v3900 = vadd.f32 %v3697, %v3864
      %v3901 = vadd.f32 %v3698, %v3869
      %v3902 = vadd.f32 %v3699, %v3872
      %v3903 = vadd.f32 %v3700, %v3877
      %v3904 = vadd.f32 %v3701, %v3880
      %v3905 = vadd.f32 %v3702, %v3885
      %v3906 = vadd.f32 %v3703, %v3888
      %v3907 = vadd.f32 %v3704, %v3893
      %v3908 = vadd.f32 %v3705, %v3896
      %v3909 = vld [vmem:[#allocation2 + $0x8] sm:$0xf0]
      %v3910 = vld [vmem:[#allocation2 + $0x30] sm:$0x1f]
      %s3911 = scalar_lea.vmem %s3, 384
      %v3912 = vld [vmem:[%s3911] sm:$0xf]
      %v3913 = vld [vmem:[%s3911 + $0x4] sm:$0xf]
      %v3914 = vld [vmem:[%s3911 + $0x8] sm:$0xf]
      %v3915 = vld [vmem:[%s3911 + $0xc] sm:$0xf]
      %v3916 = vld [vmem:[%s3911 + $0x10] sm:$0xf]
      %v3917 = vld [vmem:[%s3911 + $0x14] sm:$0xf]
      %v3918 = vld [vmem:[%s3911 + $0x18] sm:$0xf]
      %v3919 = vld [vmem:[%s3911 + $0x1c] sm:$0xf]
      %v3920 = vld [vmem:[%s3911 + $0x20] sm:$0xf]
      %v3921 = vld [vmem:[%s3911 + $0x24] sm:$0xf]
      %v3922 = vld [vmem:[%s3911 + $0x28] sm:$0xf]
      %v3923 = vld [vmem:[%s3911 + $0x2c] sm:$0xf]
      %v3924 = vld [vmem:[%s3911 + $0x30] sm:$0xf]
      %v3925 = vld [vmem:[%s3911 + $0x34] sm:$0xf]
      %v3926 = vld [vmem:[%s3911 + $0x38] sm:$0xf]
      %v3927 = vld [vmem:[%s3911 + $0x3c] sm:$0xf]
      %v3929 = vshrl.u32 %v3909, 16
      %v3931 = vrot.slane %v3929, 4
      %v3932 = vshll.u32 %v3909, 16
      %v3934 = vrot.slane %v3932, 5
      %v3935 = vor.u32 %v3931, %v3934
      %v3936 = vrot.slane %v3741, 4
      %v3937 = vrot.slane %v3737, 5
      %v3938 = vor.u32 %v3936, %v3937
      %v3939 = vsel %vm2256, %v3935, %v3938
      %v3940 = vrot.slane %v3749, 4
      %v3941 = vrot.slane %v3745, 5
      %v3942 = vor.u32 %v3940, %v3941
      %v3943 = vsel %vm2256, %v3938, %v3942
      %v3944 = vrot.slane %v3757, 4
      %v3945 = vrot.slane %v3753, 5
      %v3946 = vor.u32 %v3944, %v3945
      %v3947 = vsel %vm2256, %v3942, %v3946
      %v3948 = vrot.slane %v3765, 4
      %v3949 = vrot.slane %v3761, 5
      %v3950 = vor.u32 %v3948, %v3949
      %v3951 = vsel %vm2256, %v3946, %v3950
      %v3953 = vshrl.u32 %v3910, 16
      %v3955 = vrot.slane %v3953, 4
      %v3956 = vshll.u32 %v3910, 16
      %v3958 = vrot.slane %v3956, 5
      %v3959 = vor.u32 %v3955, %v3958
      %v3960 = vsel %vm2256, %v3950, %v3959
      %v3982 = vunpack.c.l.b16 %v3912
      %v3983 = vunpack.c.l.b16 %v3913
      %v3984 = vunpack.c.l.b16 %v3914
      %v3985 = vunpack.c.l.b16 %v3915
      %v3986 = vunpack.c.l.b16 %v3916
      %v3987 = vunpack.c.l.b16 %v3917
      %v3988 = vunpack.c.l.b16 %v3918
      %v3989 = vunpack.c.l.b16 %v3919
      %v3990 = vunpack.c.l.b16 %v3920
      %v3991 = vunpack.c.l.b16 %v3921
      %v3992 = vunpack.c.l.b16 %v3922
      %v3993 = vunpack.c.l.b16 %v3923
      %v3994 = vunpack.c.l.b16 %v3924
      %v3995 = vunpack.c.l.b16 %v3925
      %v3996 = vunpack.c.l.b16 %v3926
      %v3997 = vunpack.c.l.b16 %v3927
      %v3998 = vpack.c.b16 %v3983, %v3982
      %v3999 = vpack.c.b16 %v3985, %v3984
      %v4000 = vpack.c.b16 %v3987, %v3986
      %v4001 = vpack.c.b16 %v3989, %v3988
      %v4002 = vpack.c.b16 %v3991, %v3990
      %v4003 = vpack.c.b16 %v3993, %v3992
      %v4004 = vpack.c.b16 %v3995, %v3994
      %v4005 = vpack.c.b16 %v3997, %v3996
      %4014 = vmatprep.subr.bf16.mxu0 0
      %4015 = vmatpush1.bf16.msra.mxu0 %v3998
      %4016 = vmatprep.subr.bf16.mxu0 0
      %4017 = vmatpush1.bf16.msra.mxu0 %v3999
      %4018 = vmatprep.subr.bf16.mxu0 0
      %4019 = vmatpush1.bf16.msra.mxu0 %v4000
      %4020 = vmatprep.subr.bf16.mxu0 0
      %4021 = vmatpush1.bf16.msra.mxu0 %v4001
      %4022 = vmatprep.subr.bf16.mxu0 0
      %4023 = vmatpush1.bf16.msra.mxu0 %v4002
      %4024 = vmatprep.subr.bf16.mxu0 0
      %4025 = vmatpush1.bf16.msra.mxu0 %v4003
      %4026 = vmatprep.subr.bf16.mxu0 0
      %4027 = vmatpush1.bf16.msra.mxu0 %v4004
      %4028 = vmatprep.subr.bf16.mxu0 0
      %4029 = vmatpush1.bf16.msra.mxu0 %v4005
      %4030 = vmatprep.subr.bf16.mxu0 0
      %4031 = vmatpush1.bf16.msra.mxu0 0
      %4032 = vmatprep.subr.bf16.mxu0 0
      %4033 = vmatpush1.bf16.msra.mxu0 0
      %4034 = vmatprep.subr.bf16.mxu0 0
      %4035 = vmatpush1.bf16.msra.mxu0 0
      %4036 = vmatprep.subr.bf16.mxu0 0
      %4037 = vmatpush1.bf16.msra.mxu0 0
      %4038 = vmatprep.subr.bf16.mxu0 0
      %4039 = vmatpush1.bf16.msra.mxu0 0
      %4040 = vmatprep.subr.bf16.mxu0 0
      %4041 = vmatpush1.bf16.msra.mxu0 0
      %4042 = vmatprep.subr.bf16.mxu0 0
      %4043 = vmatpush1.bf16.msra.mxu0 0
      %4044 = vmatprep.subr.bf16.mxu0 0
      %4045 = vmatpush1.bf16.msra.mxu0 0
      %4046 = vmatprep.mubr.bf16.mxu0 0
      %4047 = vmatmul.mubr.bf16.gmra.mrb[0].mxu0 %v3939
      %v4048 = vpop.f32.mrb[0].mxu0
      %v4049 = vadd.f32 0.0, %v4048
      %v4050 = vpop.f32.mrb[0].mxu0
      %v4051 = vpop.f32.mrb[0].mxu0
      %v4052 = vadd.f32 0.0, %v4051
      %v4053 = vpop.f32.mrb[0].mxu0
      %4054 = vmatprep.mubr.bf16.mxu0 0
      %4055 = vmatmul.mubr.bf16.gmra.mrb[0].mxu0 %v3943
      %v4056 = vpop.f32.mrb[0].mxu0
      %v4057 = vadd.f32 0.0, %v4056
      %v4058 = vpop.f32.mrb[0].mxu0
      %v4059 = vpop.f32.mrb[0].mxu0
      %v4060 = vadd.f32 0.0, %v4059
      %v4061 = vpop.f32.mrb[0].mxu0
      %4062 = vmatprep.mubr.bf16.mxu0 0
      %4063 = vmatmul.mubr.bf16.gmra.mrb[0].mxu0 %v3947
      %v4064 = vpop.f32.mrb[0].mxu0
      %v4065 = vadd.f32 0.0, %v4064
      %v4066 = vpop.f32.mrb[0].mxu0
      %v4067 = vpop.f32.mrb[0].mxu0
      %v4068 = vadd.f32 0.0, %v4067
      %v4069 = vpop.f32.mrb[0].mxu0
      %4070 = vmatprep.mubr.bf16.mxu0 0
      %4071 = vmatmul.mubr.bf16.gmra.mrb[0].mxu0 %v3951
      %v4072 = vpop.f32.mrb[0].mxu0
      %v4073 = vadd.f32 0.0, %v4072
      %v4074 = vpop.f32.mrb[0].mxu0
      %v4075 = vpop.f32.mrb[0].mxu0
      %v4076 = vadd.f32 0.0, %v4075
      %v4077 = vpop.f32.mrb[0].mxu0
      %4078 = vmatprep.mubr.bf16.mxu0 0
      %4079 = vmatmul.mubr.bf16.gmra.mrb[0].mxu0 %v3960
      %v4080 = vpop.f32.mrb[0].mxu0
      %v4081 = vadd.f32 0.0, %v4080
      %v4082 = vpop.f32.mrb[0].mxu0
      %v4083 = vpop.f32.mrb[0].mxu0
      %v4084 = vadd.f32 0.0, %v4083
      %v4085 = vpop.f32.mrb[0].mxu0
      %4086 = vdwg.mxu0
      %v4087 = vadd.f32 %v3899, %v4049
      %v4088 = vadd.f32 %v3900, %v4052
      %v4089 = vadd.f32 %v3901, %v4057
      %v4090 = vadd.f32 %v3902, %v4060
      %v4091 = vadd.f32 %v3903, %v4065
      %v4092 = vadd.f32 %v3904, %v4068
      %v4093 = vadd.f32 %v3905, %v4073
      %v4094 = vadd.f32 %v3906, %v4076
      %v4095 = vadd.f32 %v3907, %v4081
      %v4096 = vadd.f32 %v3908, %v4084
      %v4097 = vld [vmem:[#allocation2 + $0x8] sm:$0xe0]
      %s4098 = scalar_lea.vmem %s3, 448
      %v4099 = vld [vmem:[%s4098] sm:$0xf]
      %v4100 = vld [vmem:[%s4098 + $0x4] sm:$0xf]
      %v4101 = vld [vmem:[%s4098 + $0x8] sm:$0xf]
      %v4102 = vld [vmem:[%s4098 + $0xc] sm:$0xf]
      %v4103 = vld [vmem:[%s4098 + $0x10] sm:$0xf]
      %v4104 = vld [vmem:[%s4098 + $0x14] sm:$0xf]
      %v4105 = vld [vmem:[%s4098 + $0x18] sm:$0xf]
      %v4106 = vld [vmem:[%s4098 + $0x1c] sm:$0xf]
      %v4107 = vld [vmem:[%s4098 + $0x20] sm:$0xf]
      %v4108 = vld [vmem:[%s4098 + $0x24] sm:$0xf]
      %v4109 = vld [vmem:[%s4098 + $0x28] sm:$0xf]
      %v4110 = vld [vmem:[%s4098 + $0x2c] sm:$0xf]
      %v4111 = vld [vmem:[%s4098 + $0x30] sm:$0xf]
      %v4112 = vld [vmem:[%s4098 + $0x34] sm:$0xf]
      %v4113 = vld [vmem:[%s4098 + $0x38] sm:$0xf]
      %v4114 = vld [vmem:[%s4098 + $0x3c] sm:$0xf]
      %v4121 = vrot.slane %v4097, 5
      %v4122 = vrot.slane %v3707, 5
      %v4123 = vsel %vm2450, %v4121, %v4122
      %v4124 = vrot.slane %v3708, 5
      %v4125 = vsel %vm2450, %v4122, %v4124
      %v4126 = vrot.slane %v3709, 5
      %v4127 = vsel %vm2450, %v4124, %v4126
      %v4128 = vrot.slane %v3710, 5
      %v4129 = vsel %vm2450, %v4126, %v4128
      %v4130 = vrot.slane %v3910, 5
      %v4131 = vsel %vm2450, %v4128, %v4130
      %v4153 = vunpack.c.l.b16 %v4099
      %v4154 = vunpack.c.l.b16 %v4100
      %v4155 = vunpack.c.l.b16 %v4101
      %v4156 = vunpack.c.l.b16 %v4102
      %v4157 = vunpack.c.l.b16 %v4103
      %v4158 = vunpack.c.l.b16 %v4104
      %v4159 = vunpack.c.l.b16 %v4105
      %v4160 = vunpack.c.l.b16 %v4106
      %v4161 = vunpack.c.l.b16 %v4107
      %v4162 = vunpack.c.l.b16 %v4108
      %v4163 = vunpack.c.l.b16 %v4109
      %v4164 = vunpack.c.l.b16 %v4110
      %v4165 = vunpack.c.l.b16 %v4111
      %v4166 = vunpack.c.l.b16 %v4112
      %v4167 = vunpack.c.l.b16 %v4113
      %v4168 = vunpack.c.l.b16 %v4114
      %v4169 = vpack.c.b16 %v4154, %v4153
      %v4170 = vpack.c.b16 %v4156, %v4155
      %v4171 = vpack.c.b16 %v4158, %v4157
      %v4172 = vpack.c.b16 %v4160, %v4159
      %v4173 = vpack.c.b16 %v4162, %v4161
      %v4174 = vpack.c.b16 %v4164, %v4163
      %v4175 = vpack.c.b16 %v4166, %v4165
      %v4176 = vpack.c.b16 %v4168, %v4167
      %4185 = vmatprep.subr.bf16.mxu0 0
      %4186 = vmatpush1.bf16.msra.mxu0 %v4169
      %4187 = vmatprep.subr.bf16.mxu0 0
      %4188 = vmatpush1.bf16.msra.mxu0 %v4170
      %4189 = vmatprep.subr.bf16.mxu0 0
      %4190 = vmatpush1.bf16.msra.mxu0 %v4171
      %4191 = vmatprep.subr.bf16.mxu0 0
      %4192 = vmatpush1.bf16.msra.mxu0 %v4172
      %4193 = vmatprep.subr.bf16.mxu0 0
      %4194 = vmatpush1.bf16.msra.mxu0 %v4173
      %4195 = vmatprep.subr.bf16.mxu0 0
      %4196 = vmatpush1.bf16.msra.mxu0 %v4174
      %4197 = vmatprep.subr.bf16.mxu0 0
      %4198 = vmatpush1.bf16.msra.mxu0 %v4175
      %4199 = vmatprep.subr.bf16.mxu0 0
      %4200 = vmatpush1.bf16.msra.mxu0 %v4176
      %4201 = vmatprep.subr.bf16.mxu0 0
      %4202 = vmatpush1.bf16.msra.mxu0 0
      %4203 = vmatprep.subr.bf16.mxu0 0
      %4204 = vmatpush1.bf16.msra.mxu0 0
      %4205 = vmatprep.subr.bf16.mxu0 0
      %4206 = vmatpush1.bf16.msra.mxu0 0
      %4207 = vmatprep.subr.bf16.mxu0 0
      %4208 = vmatpush1.bf16.msra.mxu0 0
      %4209 = vmatprep.subr.bf16.mxu0 0
      %4210 = vmatpush1.bf16.msra.mxu0 0
      %4211 = vmatprep.subr.bf16.mxu0 0
      %4212 = vmatpush1.bf16.msra.mxu0 0
      %4213 = vmatprep.subr.bf16.mxu0 0
      %4214 = vmatpush1.bf16.msra.mxu0 0
      %4215 = vmatprep.subr.bf16.mxu0 0
      %4216 = vmatpush1.bf16.msra.mxu0 0
      %4217 = vmatprep.mubr.bf16.mxu0 0
      %4218 = vmatmul.mubr.bf16.gmra.mrb[0].mxu0 %v4123
      %v4219 = vpop.f32.mrb[0].mxu0
      %v4220 = vadd.f32 0.0, %v4219
      %v4221 = vpop.f32.mrb[0].mxu0
      %v4222 = vpop.f32.mrb[0].mxu0
      %v4223 = vadd.f32 0.0, %v4222
      %v4224 = vpop.f32.mrb[0].mxu0
      %4225 = vmatprep.mubr.bf16.mxu0 0
      %4226 = vmatmul.mubr.bf16.gmra.mrb[0].mxu0 %v4125
      %v4227 = vpop.f32.mrb[0].mxu0
      %v4228 = vadd.f32 0.0, %v4227
      %v4229 = vpop.f32.mrb[0].mxu0
      %v4230 = vpop.f32.mrb[0].mxu0
      %v4231 = vadd.f32 0.0, %v4230
      %v4232 = vpop.f32.mrb[0].mxu0
      %4233 = vmatprep.mubr.bf16.mxu0 0
      %4234 = vmatmul.mubr.bf16.gmra.mrb[0].mxu0 %v4127
      %v4235 = vpop.f32.mrb[0].mxu0
      %v4236 = vadd.f32 0.0, %v4235
      %v4237 = vpop.f32.mrb[0].mxu0
      %v4238 = vpop.f32.mrb[0].mxu0
      %v4239 = vadd.f32 0.0, %v4238
      %v4240 = vpop.f32.mrb[0].mxu0
      %4241 = vmatprep.mubr.bf16.mxu0 0
      %4242 = vmatmul.mubr.bf16.gmra.mrb[0].mxu0 %v4129
      %v4243 = vpop.f32.mrb[0].mxu0
      %v4244 = vadd.f32 0.0, %v4243
      %v4245 = vpop.f32.mrb[0].mxu0
      %v4246 = vpop.f32.mrb[0].mxu0
      %v4247 = vadd.f32 0.0, %v4246
      %v4248 = vpop.f32.mrb[0].mxu0
      %4249 = vmatprep.mubr.bf16.mxu0 0
      %4250 = vmatmul.mubr.bf16.gmra.mrb[0].mxu0 %v4131
      %v4251 = vpop.f32.mrb[0].mxu0
      %v4252 = vadd.f32 0.0, %v4251
      %v4253 = vpop.f32.mrb[0].mxu0
      %v4254 = vpop.f32.mrb[0].mxu0
      %v4255 = vadd.f32 0.0, %v4254
      %v4256 = vpop.f32.mrb[0].mxu0
      %4257 = vdwg.mxu0
      %v4258 = vadd.f32 %v4087, %v4220
      %v4259 = vadd.f32 %v4088, %v4223
      %v4260 = vadd.f32 %v4089, %v4228
      %v4261 = vadd.f32 %v4090, %v4231
      %v4262 = vadd.f32 %v4091, %v4236
      %v4263 = vadd.f32 %v4092, %v4239
      %v4264 = vadd.f32 %v4093, %v4244
      %v4265 = vadd.f32 %v4094, %v4247
      %v4266 = vadd.f32 %v4095, %v4252
      %v4267 = vadd.f32 %v4096, %v4255
      %v4268 = vld [vmem:[#allocation2 + $0x30] sm:$0x3f]
      %s4269 = scalar_lea.vmem %s3, 512
      %v4270 = vld [vmem:[%s4269] sm:$0xf]
      %v4271 = vld [vmem:[%s4269 + $0x4] sm:$0xf]
      %v4272 = vld [vmem:[%s4269 + $0x8] sm:$0xf]
      %v4273 = vld [vmem:[%s4269 + $0xc] sm:$0xf]
      %v4274 = vld [vmem:[%s4269 + $0x10] sm:$0xf]
      %v4275 = vld [vmem:[%s4269 + $0x14] sm:$0xf]
      %v4276 = vld [vmem:[%s4269 + $0x18] sm:$0xf]
      %v4277 = vld [vmem:[%s4269 + $0x1c] sm:$0xf]
      %v4278 = vld [vmem:[%s4269 + $0x20] sm:$0xf]
      %v4279 = vld [vmem:[%s4269 + $0x24] sm:$0xf]
      %v4280 = vld [vmem:[%s4269 + $0x28] sm:$0xf]
      %v4281 = vld [vmem:[%s4269 + $0x2c] sm:$0xf]
      %v4282 = vld [vmem:[%s4269 + $0x30] sm:$0xf]
      %v4283 = vld [vmem:[%s4269 + $0x34] sm:$0xf]
      %v4284 = vld [vmem:[%s4269 + $0x38] sm:$0xf]
      %v4285 = vld [vmem:[%s4269 + $0x3c] sm:$0xf]
      %v4287 = vshrl.u32 %v4097, 16
      %v4289 = vrot.slane %v4287, 5
      %v4290 = vshll.u32 %v4097, 16
      %v4292 = vrot.slane %v4290, 6
      %v4293 = vor.u32 %v4289, %v4292
      %v4294 = vrot.slane %v3741, 5
      %v4295 = vrot.slane %v3737, 6
      %v4296 = vor.u32 %v4294, %v4295
      %v4297 = vsel %vm2616, %v4293, %v4296
      %v4298 = vrot.slane %v3749, 5
      %v4299 = vrot.slane %v3745, 6
      %v4300 = vor.u32 %v4298, %v4299
      %v4301 = vsel %vm2616, %v4296, %v4300
      %v4302 = vrot.slane %v3757, 5
      %v4303 = vrot.slane %v3753, 6
      %v4304 = vor.u32 %v4302, %v4303
      %v4305 = vsel %vm2616, %v4300, %v4304
      %v4306 = vrot.slane %v3765, 5
      %v4307 = vrot.slane %v3761, 6
      %v4308 = vor.u32 %v4306, %v4307
      %v4309 = vsel %vm2616, %v4304, %v4308
      %v4311 = vshrl.u32 %v4268, 16
      %v4313 = vrot.slane %v4311, 5
      %v4314 = vshll.u32 %v4268, 16
      %v4316 = vrot.slane %v4314, 6
      %v4317 = vor.u32 %v4313, %v4316
      %v4318 = vsel %vm2616, %v4308, %v4317
      %v4340 = vunpack.c.l.b16 %v4270
      %v4341 = vunpack.c.l.b16 %v4271
      %v4342 = vunpack.c.l.b16 %v4272
      %v4343 = vunpack.c.l.b16 %v4273
      %v4344 = vunpack.c.l.b16 %v4274
      %v4345 = vunpack.c.l.b16 %v4275
      %v4346 = vunpack.c.l.b16 %v4276
      %v4347 = vunpack.c.l.b16 %v4277
      %v4348 = vunpack.c.l.b16 %v4278
      %v4349 = vunpack.c.l.b16 %v4279
      %v4350 = vunpack.c.l.b16 %v4280
      %v4351 = vunpack.c.l.b16 %v4281
      %v4352 = vunpack.c.l.b16 %v4282
      %v4353 = vunpack.c.l.b16 %v4283
      %v4354 = vunpack.c.l.b16 %v4284
      %v4355 = vunpack.c.l.b16 %v4285
      %v4356 = vpack.c.b16 %v4341, %v4340
      %v4357 = vpack.c.b16 %v4343, %v4342
      %v4358 = vpack.c.b16 %v4345, %v4344
      %v4359 = vpack.c.b16 %v4347, %v4346
      %v4360 = vpack.c.b16 %v4349, %v4348
      %v4361 = vpack.c.b16 %v4351, %v4350
      %v4362 = vpack.c.b16 %v4353, %v4352
      %v4363 = vpack.c.b16 %v4355, %v4354
      %4372 = vmatprep.subr.bf16.mxu0 0
      %4373 = vmatpush1.bf16.msra.mxu0 %v4356
      %4374 = vmatprep.subr.bf16.mxu0 0
      %4375 = vmatpush1.bf16.msra.mxu0 %v4357
      %4376 = vmatprep.subr.bf16.mxu0 0
      %4377 = vmatpush1.bf16.msra.mxu0 %v4358
      %4378 = vmatprep.subr.bf16.mxu0 0
      %4379 = vmatpush1.bf16.msra.mxu0 %v4359
      %4380 = vmatprep.subr.bf16.mxu0 0
      %4381 = vmatpush1.bf16.msra.mxu0 %v4360
      %4382 = vmatprep.subr.bf16.mxu0 0
      %4383 = vmatpush1.bf16.msra.mxu0 %v4361
      %4384 = vmatprep.subr.bf16.mxu0 0
      %4385 = vmatpush1.bf16.msra.mxu0 %v4362
      %4386 = vmatprep.subr.bf16.mxu0 0
      %4387 = vmatpush1.bf16.msra.mxu0 %v4363
      %4388 = vmatprep.subr.bf16.mxu0 0
      %4389 = vmatpush1.bf16.msra.mxu0 0
      %4390 = vmatprep.subr.bf16.mxu0 0
      %4391 = vmatpush1.bf16.msra.mxu0 0
      %4392 = vmatprep.subr.bf16.mxu0 0
      %4393 = vmatpush1.bf16.msra.mxu0 0
      %4394 = vmatprep.subr.bf16.mxu0 0
      %4395 = vmatpush1.bf16.msra.mxu0 0
      %4396 = vmatprep.subr.bf16.mxu0 0
      %4397 = vmatpush1.bf16.msra.mxu0 0
      %4398 = vmatprep.subr.bf16.mxu0 0
      %4399 = vmatpush1.bf16.msra.mxu0 0
      %4400 = vmatprep.subr.bf16.mxu0 0
      %4401 = vmatpush1.bf16.msra.mxu0 0
      %4402 = vmatprep.subr.bf16.mxu0 0
      %4403 = vmatpush1.bf16.msra.mxu0 0
      %4404 = vmatprep.mubr.bf16.mxu0 0
      %4405 = vmatmul.mubr.bf16.gmra.mrb[0].mxu0 %v4297
      %v4406 = vpop.f32.mrb[0].mxu0
      %v4407 = vadd.f32 0.0, %v4406
      %v4408 = vpop.f32.mrb[0].mxu0
      %v4409 = vpop.f32.mrb[0].mxu0
      %v4410 = vadd.f32 0.0, %v4409
      %v4411 = vpop.f32.mrb[0].mxu0
      %4412 = vmatprep.mubr.bf16.mxu0 0
      %4413 = vmatmul.mubr.bf16.gmra.mrb[0].mxu0 %v4301
      %v4414 = vpop.f32.mrb[0].mxu0
      %v4415 = vadd.f32 0.0, %v4414
      %v4416 = vpop.f32.mrb[0].mxu0
      %v4417 = vpop.f32.mrb[0].mxu0
      %v4418 = vadd.f32 0.0, %v4417
      %v4419 = vpop.f32.mrb[0].mxu0
      %4420 = vmatprep.mubr.bf16.mxu0 0
      %4421 = vmatmul.mubr.bf16.gmra.mrb[0].mxu0 %v4305
      %v4422 = vpop.f32.mrb[0].mxu0
      %v4423 = vadd.f32 0.0, %v4422
      %v4424 = vpop.f32.mrb[0].mxu0
      %v4425 = vpop.f32.mrb[0].mxu0
      %v4426 = vadd.f32 0.0, %v4425
      %v4427 = vpop.f32.mrb[0].mxu0
      %4428 = vmatprep.mubr.bf16.mxu0 0
      %4429 = vmatmul.mubr.bf16.gmra.mrb[0].mxu0 %v4309
      %v4430 = vpop.f32.mrb[0].mxu0
      %v4431 = vadd.f32 0.0, %v4430
      %v4432 = vpop.f32.mrb[0].mxu0
      %v4433 = vpop.f32.mrb[0].mxu0
      %v4434 = vadd.f32 0.0, %v4433
      %v4435 = vpop.f32.mrb[0].mxu0
      %4436 = vmatprep.mubr.bf16.mxu0 0
      %4437 = vmatmul.mubr.bf16.gmra.mrb[0].mxu0 %v4318
      %v4438 = vpop.f32.mrb[0].mxu0
      %v4439 = vadd.f32 0.0, %v4438
      %v4440 = vpop.f32.mrb[0].mxu0
      %v4441 = vpop.f32.mrb[0].mxu0
      %v4442 = vadd.f32 0.0, %v4441
      %v4443 = vpop.f32.mrb[0].mxu0
      %4444 = vdwg.mxu0
      %v4445 = vadd.f32 %v4258, %v4407
      %v4446 = vadd.f32 %v4259, %v4410
      %v4447 = vadd.f32 %v4260, %v4415
      %v4448 = vadd.f32 %v4261, %v4418
      %v4449 = vadd.f32 %v4262, %v4423
      %v4450 = vadd.f32 %v4263, %v4426
      %v4451 = vadd.f32 %v4264, %v4431
      %v4452 = vadd.f32 %v4265, %v4434
      %v4453 = vadd.f32 %v4266, %v4439
      %v4454 = vadd.f32 %v4267, %v4442
      %v4455 = vlaneseq
      %v4456 = vshrl.u32 %v4455, 7
      %v4457 = vsub.s32 2, %v4456
      %v4458 = vrot.slane %v255, %v4457
      %v4459 = vadd.f32 %v4445, %v4458
      %v4460 = vadd.f32 %v4446, %v4458
      %v4461 = vadd.f32 %v4447, %v4458
      %v4462 = vadd.f32 %v4448, %v4458
      %v4463 = vadd.f32 %v4449, %v4458
      %v4464 = vadd.f32 %v4450, %v4458
      %v4465 = vadd.f32 %v4451, %v4458
      %v4466 = vadd.f32 %v4452, %v4458
      %v4467 = vadd.f32 %v4453, %v4458
      %v4468 = vadd.f32 %v4454, %v4458
      %v4469 = vadd.f32 %v4459, %v1134
      %v4470 = vadd.f32 %v4460, %v1135
      %v4471 = vadd.f32 %v4461, %v1136
      %v4472 = vadd.f32 %v4462, %v1137
      %v4473 = vadd.f32 %v4463, %v1138
      %v4474 = vadd.f32 %v4464, %v1139
      %v4475 = vadd.f32 %v4465, %v1140
      %v4476 = vadd.f32 %v4466, %v1141
      %v4477 = vadd.f32 %v4467, %v1142
      %v4478 = vadd.f32 %v4468, %v1143
      %v4479 = vmax.f32 %v4469, 0.0
      %v4480 = vmax.f32 %v4470, 0.0
      %v4481 = vmax.f32 %v4471, 0.0
      %v4482 = vmax.f32 %v4472, 0.0
      %v4483 = vmax.f32 %v4473, 0.0
      %v4484 = vmax.f32 %v4474, 0.0
      %v4485 = vmax.f32 %v4475, 0.0
      %v4486 = vmax.f32 %v4476, 0.0
      %v4487 = vmax.f32 %v4477, 0.0
      %v4488 = vmax.f32 %v4478, 0.0
      %v4489 = vsel %vm1124, %v4479, 0.0
      %v4490 = vsel %vm1125, %v4480, 0.0
      %v4491 = vsel %vm1126, %v4481, 0.0
      %v4492 = vsel %vm1127, %v4482, 0.0
      %v4493 = vsel %vm1128, %v4483, 0.0
      %v4494 = vsel %vm1129, %v4484, 0.0
      %v4495 = vsel %vm1130, %v4485, 0.0
      %v4496 = vsel %vm1131, %v4486, 0.0
      %v4497 = vsel %vm1132, %v4487, 0.0
      %v4498 = vsel %vm1133, %v4488, 0.0
      %v4499 = vpack.c.bf16 %v4490, %v4489
      %v4500 = vpack.c.bf16 %v4492, %v4491
      %v4501 = vpack.c.bf16 %v4494, %v4493
      %v4502 = vpack.c.bf16 %v4496, %v4495
      %v4503 = vpack.c.bf16 %v4498, %v4497
      %v4509 = vunpack.c.l.b16 %v4499
      %v4510 = vunpack.c.h.b16 %v4499
      %v4511 = vunpack.c.l.b16 %v4500
      %v4512 = vunpack.c.h.b16 %v4500
      %v4513 = vunpack.c.l.b16 %v4501
      %v4514 = vunpack.c.h.b16 %v4501
      %v4515 = vunpack.c.l.b16 %v4502
      %v4516 = vunpack.c.h.b16 %v4502
      %v4517 = vunpack.c.l.b16 %v4503
      %v4518 = vunpack.c.h.b16 %v4503
      %v4519 = vpack.c.b16 %v4509, %v4509
      %v4520 = vpack.c.b16 %v4510, %v4510
      %v4521 = vpack.c.b16 %v4511, %v4511
      %v4522 = vpack.c.b16 %v4512, %v4512
      %v4523 = vpack.c.b16 %v4513, %v4513
      %v4524 = vpack.c.b16 %v4514, %v4514
      %v4525 = vpack.c.b16 %v4515, %v4515
      %v4526 = vpack.c.b16 %v4516, %v4516
      %v4527 = vpack.c.b16 %v4517, %v4517
      %v4528 = vpack.c.b16 %v4518, %v4518
      %4539 = vst [vmem:[%s251] sm:$0xf] %v4519
      %4540 = vst [vmem:[%s251 + $0x4] sm:$0xf] %v4520
      %4541 = vst [vmem:[%s251 + $0x8] sm:$0xf] %v4521
      %4542 = vst [vmem:[%s251 + $0xc] sm:$0xf] %v4522
      %4543 = vst [vmem:[%s251 + $0x10] sm:$0xf] %v4523
      %4544 = vst [vmem:[%s251 + $0x14] sm:$0xf] %v4524
      %4545 = vst [vmem:[%s251 + $0x18] sm:$0xf] %v4525
      %4546 = vst [vmem:[%s251 + $0x1c] sm:$0xf] %v4526
      %4547 = vst [vmem:[%s251 + $0x20] sm:$0xf] %v4527
      %4548 = vst [vmem:[%s251 + $0x24] sm:$0xf] %v4528
      %p4549 = scmp.lt.s32.totalorder %s17, 1
      %s4550 = scalar_select %p4549, %s17, 1
      %s4551 = smul.addr %s4550, 10
      %s4552 = smul.addr %s4551, 4
      %s4553 = scalar_lea.vmem %s6, %s4552
      // Predicated region
      $region45: #{encoder_flow.3} parent=43 // pred_check
        %p4554 = pneg %p166
      $region46: #{encoder_flow.3} parent=43 // pred_check_branch
        %4556 = sbr.rel (%p4554) target = $region48
      $region47: #{encoder_flow.3} parent=43 // pred_region
        _
      $region48: #{encoder_flow.3} parent=43 // pred_fallthru
        _
    $region44: #{encoder_flow.3} parent=5 // pred_fallthru
      _
    %p4557 = scmp.le.s32.totalorder 2, %s12
    // Predicated region
    $region49: #{encoder_flow.3} parent=5 // pred_check
      %p4558 = pneg %p4557
    $region50: #{encoder_flow.3} parent=5 // pred_check_branch
      %4560 = sbr.rel (%p4558) target = $region52
    $region51: #{encoder_flow.3} parent=5 // pred_region
      %s4561 = ssub.s32 %s12, 2
      // Predicated region
      $region53: #{encoder_flow.3} parent=51 // pred_check
        %p4562 = pneg %p172
      $region54: #{encoder_flow.3} parent=51 // pred_check_branch
        %4564 = sbr.rel (%p4562) target = $region56
      $region55: #{encoder_flow.3} parent=51 // pred_region
        %p4565 = scmp.lt.s32.totalorder %s18, 1
        %s4566 = scalar_select %p4565, %s18, 1
        %s4567 = smul.addr %s4566, 10
        %s4568 = smul.addr %s4567, 4
        %s4569 = scalar_lea.vmem %s6, %s4568
      $region56: #{encoder_flow.3} parent=51 // pred_fallthru
        _
    $region52: #{encoder_flow.3} parent=5 // pred_fallthru
      _
  $region6: #{encoder_flow.3} parent=0 // loop_footer
    %s16 = sadd.s32 1, %s12
  $region7: #{encoder_flow.3} parent=0 // loop_footer_branch
    %11 = sbr.rel target = $region3
  $region8: #{encoder_flow.3} parent=0 // loop_exit
    _

// kernel: encoder_flow.5
$region0: #{encoder_flow.5}
  #allocation0 [shape = 'u32[]', space=smem, size = 0x4, offset = 0x4, fixed_abs, tag = 'smem constant byte address 0x4 - core index']
  #allocation1 [shape = 'u32[144,128]{1,0:T(1,128)}', space=vmem, size = 0x12000, scoped, tag = 'internal scratch']
  #allocation2 [shape = 'bf16[32,128]{1,0:T(16,128)(2,1)}', space=vmem, size = 0x2000, scoped, tag = 'scratch operand']
  %s0 = inlined_call_operand.vmem [shape: bf16[2,16,128], index: 0, kind: input, shape index: {}]
  %s1 = inlined_call_operand.vmem [shape: bf16[4,128,128], index: 1, kind: input, shape index: {}]
  %s2 = inlined_call_operand.vmem [shape: bf16[9,128,128], index: 2, kind: input, shape index: {}]
  %s3 = inlined_call_operand.vmem [shape: bf16[9,128,128], index: 3, kind: input, shape index: {}]
  %s4 = inlined_call_operand.vmem [shape: f32[3,128], index: 4, kind: input, shape index: {}]
  %s5 = inlined_call_operand.vmem [shape: f32[8,1], index: 5, kind: input, shape index: {}]
  %s6 = inlined_call_operand.vmem [shape: bf16[2,8,128], index: 6, kind: output, shape index: {}]
  %s7 = sld [smem:[#allocation0]]
  $region57: #{encoder_flow.5} parent=0
    _
  %s9 = ssub.s32 1, %s7
  %s10 = scalar_select 0, %s9, %s7
  loop: start=0, step=1, limit=4
  $region2: #{encoder_flow.5} parent=0 // loop_pre_header
    _
  $region3: #{encoder_flow.5} parent=0 // loop_header
    %s12 = sphi 0, %s16
    %p13 = scmp.ge.s32.totalorder %s12, 4
    %s22 = sphi 0, %s24
    %s25 = sphi 0, %s22
    %s26 = sphi 0, %s25
    %s42 = sphi 0, %s26
    %s46 = sphi 0, %s46
    %s48 = sphi 0, %s46
    %s49 = sphi 0, %s48
    %s63 = sphi 0, %s49
    %s67 = sphi 0, %s67
    %s69 = sphi 0, %s67
    %s70 = sphi 0, %s69
    %s84 = sphi 0, %s70
    %s88 = sphi 0, %s88
    %s90 = sphi 0, %s88
    %s91 = sphi 0, %s90
    %s105 = sphi 0, %s91
    %s109 = sphi 0, %s109
    %s111 = sphi 0, %s109
    %s112 = sphi 0, %s111
    %s126 = sphi 0, %s112
    %s130 = sphi 0, %s130
    %s132 = sphi 0, %s130
    %s133 = sphi 0, %s132
    %s147 = sphi 0, %s133
    %s153 = sphi 0, %s155
    %s156 = sphi 0, %s153
    %s157 = sphi 0, %s156
    %s173 = sphi 0, %s157
  $region4: #{encoder_flow.5} parent=0 // loop_header_branch
    %15 = sbr.rel (%p13) target = $region8
  $region5: #{encoder_flow.5} parent=0 // loop_body
    %s17 = ssub.s32 %s12, 1
    %s18 = ssub.s32 %s12, 2
    %s19 = sadd.s32 %s12, 1
    %s20 = ssub.s32 %s12, %s19
    %p21 = scmp.eq.s32.totalorder %s20, 0
    %s23 = sadd.s32 %s22, 1
    %s24 = scalar_select %p21, %s22, %s23
    %p27 = pneg %p21
    %p28 = scmp.eq.s32.totalorder %s12, 1
    %p29 = por %p27, %p28
    %p30 = scmp.ne.s32.totalorder %s22, %s25
    %p31 = scmp.eq.s32.totalorder %s12, 0
    %p32 = por %p30, %p31
    %p33 = scmp.ne.s32.totalorder %s22, %s25
    %p34 = scmp.eq.s32.totalorder %s17, 1
    %p35 = por %p33, %p34
    %p36 = scmp.ne.s32.totalorder %s25, %s26
    %p37 = scmp.eq.s32.totalorder %s17, 0
    %p38 = por %p36, %p37
    %p39 = scmp.ne.s32.totalorder %s25, %s26
    %p40 = scmp.eq.s32.totalorder %s18, 1
    %p41 = por %p39, %p40
    %p43 = scmp.ne.s32.totalorder %s26, %s42
    %p44 = scmp.eq.s32.totalorder %s18, 0
    %p45 = por %p43, %p44
    %s47 = sadd.s32 %s46, 1
    %p50 = scmp.eq.s32.totalorder %s12, 1
    %p51 = scmp.ne.s32.totalorder %s46, %s48
    %p52 = scmp.eq.s32.totalorder %s12, 0
    %p53 = por %p51, %p52
    %p54 = scmp.ne.s32.totalorder %s46, %s48
    %p55 = scmp.eq.s32.totalorder %s17, 1
    %p56 = por %p54, %p55
    %p57 = scmp.ne.s32.totalorder %s48, %s49
    %p58 = scmp.eq.s32.totalorder %s17, 0
    %p59 = por %p57, %p58
    %p60 = scmp.ne.s32.totalorder %s48, %s49
    %p61 = scmp.eq.s32.totalorder %s18, 1
    %p62 = por %p60, %p61
    %p64 = scmp.ne.s32.totalorder %s49, %s63
    %p65 = scmp.eq.s32.totalorder %s18, 0
    %p66 = por %p64, %p65
    %s68 = sadd.s32 %s67, 1
    %p71 = scmp.eq.s32.totalorder %s12, 1
    %p72 = scmp.ne.s32.totalorder %s67, %s69
    %p73 = scmp.eq.s32.totalorder %s12, 0
    %p74 = por %p72, %p73
    %p75 = scmp.ne.s32.totalorder %s67, %s69
    %p76 = scmp.eq.s32.totalorder %s17, 1
    %p77 = por %p75, %p76
    %p78 = scmp.ne.s32.totalorder %s69, %s70
    %p79 = scmp.eq.s32.totalorder %s17, 0
    %p80 = por %p78, %p79
    %p81 = scmp.ne.s32.totalorder %s69, %s70
    %p82 = scmp.eq.s32.totalorder %s18, 1
    %p83 = por %p81, %p82
    %p85 = scmp.ne.s32.totalorder %s70, %s84
    %p86 = scmp.eq.s32.totalorder %s18, 0
    %p87 = por %p85, %p86
    %s89 = sadd.s32 %s88, 1
    %p92 = scmp.eq.s32.totalorder %s12, 1
    %p93 = scmp.ne.s32.totalorder %s88, %s90
    %p94 = scmp.eq.s32.totalorder %s12, 0
    %p95 = por %p93, %p94
    %p96 = scmp.ne.s32.totalorder %s88, %s90
    %p97 = scmp.eq.s32.totalorder %s17, 1
    %p98 = por %p96, %p97
    %p99 = scmp.ne.s32.totalorder %s90, %s91
    %p100 = scmp.eq.s32.totalorder %s17, 0
    %p101 = por %p99, %p100
    %p102 = scmp.ne.s32.totalorder %s90, %s91
    %p103 = scmp.eq.s32.totalorder %s18, 1
    %p104 = por %p102, %p103
    %p106 = scmp.ne.s32.totalorder %s91, %s105
    %p107 = scmp.eq.s32.totalorder %s18, 0
    %p108 = por %p106, %p107
    %s110 = sadd.s32 %s109, 1
    %p113 = scmp.eq.s32.totalorder %s12, 1
    %p114 = scmp.ne.s32.totalorder %s109, %s111
    %p115 = scmp.eq.s32.totalorder %s12, 0
    %p116 = por %p114, %p115
    %p117 = scmp.ne.s32.totalorder %s109, %s111
    %p118 = scmp.eq.s32.totalorder %s17, 1
    %p119 = por %p117, %p118
    %p120 = scmp.ne.s32.totalorder %s111, %s112
    %p121 = scmp.eq.s32.totalorder %s17, 0
    %p122 = por %p120, %p121
    %p123 = scmp.ne.s32.totalorder %s111, %s112
    %p124 = scmp.eq.s32.totalorder %s18, 1
    %p125 = por %p123, %p124
    %p127 = scmp.ne.s32.totalorder %s112, %s126
    %p128 = scmp.eq.s32.totalorder %s18, 0
    %p129 = por %p127, %p128
    %s131 = sadd.s32 %s130, 1
    %p134 = scmp.eq.s32.totalorder %s12, 1
    %p135 = scmp.ne.s32.totalorder %s130, %s132
    %p136 = scmp.eq.s32.totalorder %s12, 0
    %p137 = por %p135, %p136
    %p138 = scmp.ne.s32.totalorder %s130, %s132
    %p139 = scmp.eq.s32.totalorder %s17, 1
    %p140 = por %p138, %p139
    %p141 = scmp.ne.s32.totalorder %s132, %s133
    %p142 = scmp.eq.s32.totalorder %s17, 0
    %p143 = por %p141, %p142
    %p144 = scmp.ne.s32.totalorder %s132, %s133
    %p145 = scmp.eq.s32.totalorder %s18, 1
    %p146 = por %p144, %p145
    %p148 = scmp.ne.s32.totalorder %s133, %s147
    %p149 = scmp.eq.s32.totalorder %s18, 0
    %p150 = por %p148, %p149
    %s151 = ssub.s32 %s12, %s19
    %p152 = scmp.eq.s32.totalorder %s151, 0
    %s154 = sadd.s32 %s153, 1
    %s155 = scalar_select %p152, %s153, %s154
    %p158 = pneg %p152
    %p159 = scmp.eq.s32.totalorder %s12, 1
    %p160 = por %p158, %p159
    %p161 = scmp.ne.s32.totalorder %s153, %s156
    %p162 = scmp.eq.s32.totalorder %s12, 0
    %p163 = por %p161, %p162
    %p164 = scmp.ne.s32.totalorder %s153, %s156
    %p165 = scmp.eq.s32.totalorder %s17, 1
    %p166 = por %p164, %p165
    %p167 = scmp.ne.s32.totalorder %s156, %s157
    %p168 = scmp.eq.s32.totalorder %s17, 0
    %p169 = por %p167, %p168
    %p170 = scmp.ne.s32.totalorder %s156, %s157
    %p171 = scmp.eq.s32.totalorder %s18, 1
    %p172 = por %p170, %p171
    %p174 = scmp.ne.s32.totalorder %s157, %s173
    %p175 = scmp.eq.s32.totalorder %s18, 0
    %p176 = por %p174, %p175
    %p177 = scmp.le.s32.totalorder 1, %s12
    %p178 = scmp.lt.s32.totalorder %s12, 3
    %p179 = pnand %p177, %p178
    %p180 = pneg %p179
    // Predicated region
    $region9: #{encoder_flow.5} parent=5 // pred_check
      _
    $region10: #{encoder_flow.5} parent=5 // pred_check_branch
      %182 = sbr.rel (%p179) target = $region12
    $region11: #{encoder_flow.5} parent=5 // pred_region
      %s183 = ssub.s32 %s12, 1
      // Predicated region
      $region13: #{encoder_flow.5} parent=11 // pred_check
        %p184 = pneg %p59
      $region14: #{encoder_flow.5} parent=11 // pred_check_branch
        %186 = sbr.rel (%p184) target = $region16
      $region15: #{encoder_flow.5} parent=11 // pred_region
        _
      $region16: #{encoder_flow.5} parent=11 // pred_fallthru
        _
      // Predicated region
      $region17: #{encoder_flow.5} parent=11 // pred_check
        %p187 = pneg %p80
      $region18: #{encoder_flow.5} parent=11 // pred_check_branch
        %189 = sbr.rel (%p187) target = $region20
      $region19: #{encoder_flow.5} parent=11 // pred_region
        _
      $region20: #{encoder_flow.5} parent=11 // pred_fallthru
        _
      // Predicated region
      $region21: #{encoder_flow.5} parent=11 // pred_check
        %p190 = pneg %p101
      $region22: #{encoder_flow.5} parent=11 // pred_check_branch
        %192 = sbr.rel (%p190) target = $region24
      $region23: #{encoder_flow.5} parent=11 // pred_region
        _
      $region24: #{encoder_flow.5} parent=11 // pred_fallthru
        _
      // Predicated region
      $region25: #{encoder_flow.5} parent=11 // pred_check
        %p193 = pneg %p122
      $region26: #{encoder_flow.5} parent=11 // pred_check_branch
        %195 = sbr.rel (%p193) target = $region28
      $region27: #{encoder_flow.5} parent=11 // pred_region
        _
      $region28: #{encoder_flow.5} parent=11 // pred_fallthru
        _
      // Predicated region
      $region29: #{encoder_flow.5} parent=11 // pred_check
        %p196 = pneg %p143
      $region30: #{encoder_flow.5} parent=11 // pred_check_branch
        %198 = sbr.rel (%p196) target = $region32
      $region31: #{encoder_flow.5} parent=11 // pred_region
        _
      $region32: #{encoder_flow.5} parent=11 // pred_fallthru
        _
    $region12: #{encoder_flow.5} parent=5 // pred_fallthru
      _
    %p199 = scmp.lt.s32.totalorder %s12, 2
    // Predicated region
    $region33: #{encoder_flow.5} parent=5 // pred_check
      %p200 = pneg %p199
    $region34: #{encoder_flow.5} parent=5 // pred_check_branch
      %202 = sbr.rel (%p200) target = $region36
    $region35: #{encoder_flow.5} parent=5 // pred_region
      // Predicated region
      $region37: #{encoder_flow.5} parent=35 // pred_check
        %p203 = pneg %p32
      $region38: #{encoder_flow.5} parent=35 // pred_check_branch
        %205 = sbr.rel (%p203) target = $region40
      $region39: #{encoder_flow.5} parent=35 // pred_region
        %p206 = scmp.lt.s32.totalorder %s12, 1
        %s207 = scalar_select %p206, %s12, 1
        %s208 = smul.addr %s207, 2
        %s209 = smul.addr %s208, 4
        %s210 = scalar_lea.vmem %s0, %s209
      $region40: #{encoder_flow.5} parent=35 // pred_fallthru
        _
    $region36: #{encoder_flow.5} parent=5 // pred_fallthru
      _
    %p211 = scmp.le.s32.totalorder 1, %s12
    %p212 = scmp.lt.s32.totalorder %s12, 3
    %p213 = pnand %p211, %p212
    %p214 = pneg %p213
    // Predicated region
    $region41: #{encoder_flow.5} parent=5 // pred_check
      _
    $region42: #{encoder_flow.5} parent=5 // pred_check_branch
      %216 = sbr.rel (%p213) target = $region44
    $region43: #{encoder_flow.5} parent=5 // pred_region
      %s217 = ssub.s32 %s12, 1
      %p218 = scmp.lt.s32.totalorder %s17, 1
      %s219 = scalar_select %p218, %s17, 1
      %s220 = smul.addr %s219, 2
      %s221 = smul.addr %s220, 4
      %s222 = scalar_lea.vmem %s0, %s221
      %p223 = pneg %p38
      %p224 = pneg %p35
      %p225 = pneg %p59
      %p226 = pneg %p56
      %p227 = pneg %p80
      %p228 = pneg %p77
      %p229 = pneg %p101
      %p230 = pneg %p98
      %p231 = pneg %p122
      %p232 = pneg %p119
      %p233 = pneg %p143
      %p234 = pneg %p140
      %p235 = pneg %p169
      %p236 = pneg %p166
      %p237 = scmp.lt.s32.totalorder %s17, 1
      %s238 = scalar_select %p237, %s17, 1
      %s239 = smul.addr %s238, 4
      %s240 = scalar_lea.vmem %s6, %s239
      %p241 = scmp.lt.s32.totalorder %s17, 1
      %s242 = scalar_select %p241, %s17, 1
      %s243 = smul.addr %s242, 2
      %s244 = smul.addr %s243, 4
      %s245 = scalar_lea.vmem %s0, %s244
      %p246 = scmp.lt.s32.totalorder %s17, 1
      %s247 = scalar_select %p246, %s17, 1
      %s248 = smul.addr %s247, 4
      %s249 = scalar_lea.vmem %s6, %s248
      %251 = vst [vmem:[#allocation2] sm:$0xff] 0
      %252 = vst [vmem:[#allocation2 + $0x8] sm:$0xff] 0
      %v253 = vld [vmem:[%s4] sm:$0x7]
      %v254 = vld [vmem:[%s5] sm:$0xff]
      %vm255 = vcmp.gt.f32.partialorder %v254, 0.0
      %v256 = vld [vmem:[%s245] sm:$0xf]
      %v257 = vld [vmem:[%s1] sm:$0xf]
      %v258 = vld [vmem:[%s1 + $0x4] sm:$0xf]
      %v259 = vld [vmem:[%s1 + $0x8] sm:$0xf]
      %v260 = vld [vmem:[%s1 + $0xc] sm:$0xf]
      %v261 = vld [vmem:[%s1 + $0x10] sm:$0xf]
      %v262 = vld [vmem:[%s1 + $0x14] sm:$0xf]
      %v263 = vld [vmem:[%s1 + $0x18] sm:$0xf]
      %v264 = vld [vmem:[%s1 + $0x1c] sm:$0xf]
      %v265 = vld [vmem:[%s1 + $0x20] sm:$0xf]
      %v266 = vld [vmem:[%s1 + $0x24] sm:$0xf]
      %v267 = vld [vmem:[%s1 + $0x28] sm:$0xf]
      %v268 = vld [vmem:[%s1 + $0x2c] sm:$0xf]
      %v269 = vld [vmem:[%s1 + $0x30] sm:$0xf]
      %v270 = vld [vmem:[%s1 + $0x34] sm:$0xf]
      %v271 = vld [vmem:[%s1 + $0x38] sm:$0xf]
      %v272 = vld [vmem:[%s1 + $0x3c] sm:$0xf]
      %v273 = vld [vmem:[%s245] sm:$0xf]
      %v274 = vld [vmem:[%s245 + $0x4] sm:$0x1]
      %s275 = scalar_lea.vmem %s1, 64
      %v276 = vld [vmem:[%s275] sm:$0xf]
      %v277 = vld [vmem:[%s275 + $0x4] sm:$0xf]
      %v278 = vld [vmem:[%s275 + $0x8] sm:$0xf]
      %v279 = vld [vmem:[%s275 + $0xc] sm:$0xf]
      %v280 = vld [vmem:[%s275 + $0x10] sm:$0xf]
      %v281 = vld [vmem:[%s275 + $0x14] sm:$0xf]
      %v282 = vld [vmem:[%s275 + $0x18] sm:$0xf]
      %v283 = vld [vmem:[%s275 + $0x1c] sm:$0xf]
      %v284 = vld [vmem:[%s275 + $0x20] sm:$0xf]
      %v285 = vld [vmem:[%s275 + $0x24] sm:$0xf]
      %v286 = vld [vmem:[%s275 + $0x28] sm:$0xf]
      %v287 = vld [vmem:[%s275 + $0x2c] sm:$0xf]
      %v288 = vld [vmem:[%s275 + $0x30] sm:$0xf]
      %v289 = vld [vmem:[%s275 + $0x34] sm:$0xf]
      %v290 = vld [vmem:[%s275 + $0x38] sm:$0xf]
      %v291 = vld [vmem:[%s275 + $0x3c] sm:$0xf]
      %v294 = vunpack.c.l.b16 %v273
      %v295 = vunpack.c.l.b16 %v274
      %v296 = vpack.c.b16 %v295, %v294
      %v298 = vshrl.u32 %v296, 16
      %v300 = vshll.u32 %v296, 16
      %v302 = vrot.slane %v300, 1
      %v303 = vor.u32 %v298, %v302
      %v321 = vunpack.c.l.b16 %v276
      %v322 = vunpack.c.l.b16 %v277
      %v323 = vunpack.c.l.b16 %v278
      %v324 = vunpack.c.l.b16 %v279
      %v325 = vunpack.c.l.b16 %v280
      %v326 = vunpack.c.l.b16 %v281
      %v327 = vunpack.c.l.b16 %v282
      %v328 = vunpack.c.l.b16 %v283
      %v329 = vunpack.c.l.b16 %v284
      %v330 = vunpack.c.l.b16 %v285
      %v331 = vunpack.c.l.b16 %v286
      %v332 = vunpack.c.l.b16 %v287
      %v333 = vunpack.c.l.b16 %v288
      %v334 = vunpack.c.l.b16 %v289
      %v335 = vunpack.c.l.b16 %v290
      %v336 = vunpack.c.l.b16 %v291
      %v337 = vpack.c.b16 %v322, %v321
      %v338 = vpack.c.b16 %v324, %v323
      %v339 = vpack.c.b16 %v326, %v325
      %v340 = vpack.c.b16 %v328, %v327
      %v341 = vpack.c.b16 %v330, %v329
      %v342 = vpack.c.b16 %v332, %v331
      %v343 = vpack.c.b16 %v334, %v333
      %v344 = vpack.c.b16 %v336, %v335
      %353 = vmatprep.subr.bf16.mxu0 0
      %354 = vmatpush1.bf16.msra.mxu0 %v337
      %355 = vmatprep.subr.bf16.mxu0 0
      %356 = vmatpush1.bf16.msra.mxu0 %v338
      %357 = vmatprep.subr.bf16.mxu0 0
      %358 = vmatpush1.bf16.msra.mxu0 %v339
      %359 = vmatprep.subr.bf16.mxu0 0
      %360 = vmatpush1.bf16.msra.mxu0 %v340
      %361 = vmatprep.subr.bf16.mxu0 0
      %362 = vmatpush1.bf16.msra.mxu0 %v341
      %363 = vmatprep.subr.bf16.mxu0 0
      %364 = vmatpush1.bf16.msra.mxu0 %v342
      %365 = vmatprep.subr.bf16.mxu0 0
      %366 = vmatpush1.bf16.msra.mxu0 %v343
      %367 = vmatprep.subr.bf16.mxu0 0
      %368 = vmatpush1.bf16.msra.mxu0 %v344
      %369 = vmatprep.subr.bf16.mxu0 0
      %370 = vmatpush1.bf16.msra.mxu0 0
      %371 = vmatprep.subr.bf16.mxu0 0
      %372 = vmatpush1.bf16.msra.mxu0 0
      %373 = vmatprep.subr.bf16.mxu0 0
      %374 = vmatpush1.bf16.msra.mxu0 0
      %375 = vmatprep.subr.bf16.mxu0 0
      %376 = vmatpush1.bf16.msra.mxu0 0
      %377 = vmatprep.subr.bf16.mxu0 0
      %378 = vmatpush1.bf16.msra.mxu0 0
      %379 = vmatprep.subr.bf16.mxu0 0
      %380 = vmatpush1.bf16.msra.mxu0 0
      %381 = vmatprep.subr.bf16.mxu0 0
      %382 = vmatpush1.bf16.msra.mxu0 0
      %383 = vmatprep.subr.bf16.mxu0 0
      %384 = vmatpush1.bf16.msra.mxu0 0
      %385 = vmatprep.mubr.bf16.mxu0 0
      %386 = vmatmul.mubr.bf16.gmra.mrb[0].mxu0 %v303
      %v387 = vpop.f32.mrb[0].mxu0
      %v388 = vadd.f32 0.0, %v387
      %v389 = vpop.f32.mrb[0].mxu0
      %v390 = vpop.f32.mrb[0].mxu0
      %v391 = vpop.f32.mrb[0].mxu0
      %392 = vdwg.mxu0
      %v409 = vunpack.c.l.b16 %v257
      %v410 = vunpack.c.l.b16 %v258
      %v411 = vunpack.c.l.b16 %v259
      %v412 = vunpack.c.l.b16 %v260
      %v413 = vunpack.c.l.b16 %v261
      %v414 = vunpack.c.l.b16 %v262
      %v415 = vunpack.c.l.b16 %v263
      %v416 = vunpack.c.l.b16 %v264
      %v417 = vunpack.c.l.b16 %v265
      %v418 = vunpack.c.l.b16 %v266
      %v419 = vunpack.c.l.b16 %v267
      %v420 = vunpack.c.l.b16 %v268
      %v421 = vunpack.c.l.b16 %v269
      %v422 = vunpack.c.l.b16 %v270
      %v423 = vunpack.c.l.b16 %v271
      %v424 = vunpack.c.l.b16 %v272
      %v425 = vpack.c.b16 %v410, %v409
      %v426 = vpack.c.b16 %v412, %v411
      %v427 = vpack.c.b16 %v414, %v413
      %v428 = vpack.c.b16 %v416, %v415
      %v429 = vpack.c.b16 %v418, %v417
      %v430 = vpack.c.b16 %v420, %v419
      %v431 = vpack.c.b16 %v422, %v421
      %v432 = vpack.c.b16 %v424, %v423
      %441 = vmatprep.subr.bf16.mxu0 0
      %442 = vmatpush1.bf16.msra.mxu0 %v425
      %443 = vmatprep.subr.bf16.mxu0 0
      %444 = vmatpush1.bf16.msra.mxu0 %v426
      %445 = vmatprep.subr.bf16.mxu0 0
      %446 = vmatpush1.bf16.msra.mxu0 %v427
      %447 = vmatprep.subr.bf16.mxu0 0
      %448 = vmatpush1.bf16.msra.mxu0 %v428
      %449 = vmatprep.subr.bf16.mxu0 0
      %450 = vmatpush1.bf16.msra.mxu0 %v429
      %451 = vmatprep.subr.bf16.mxu0 0
      %452 = vmatpush1.bf16.msra.mxu0 %v430
      %453 = vmatprep.subr.bf16.mxu0 0
      %454 = vmatpush1.bf16.msra.mxu0 %v431
      %455 = vmatprep.subr.bf16.mxu0 0
      %456 = vmatpush1.bf16.msra.mxu0 %v432
      %457 = vmatprep.subr.bf16.mxu0 0
      %458 = vmatpush1.bf16.msra.mxu0 0
      %459 = vmatprep.subr.bf16.mxu0 0
      %460 = vmatpush1.bf16.msra.mxu0 0
      %461 = vmatprep.subr.bf16.mxu0 0
      %462 = vmatpush1.bf16.msra.mxu0 0
      %463 = vmatprep.subr.bf16.mxu0 0
      %464 = vmatpush1.bf16.msra.mxu0 0
      %465 = vmatprep.subr.bf16.mxu0 0
      %466 = vmatpush1.bf16.msra.mxu0 0
      %467 = vmatprep.subr.bf16.mxu0 0
      %468 = vmatpush1.bf16.msra.mxu0 0
      %469 = vmatprep.subr.bf16.mxu0 0
      %470 = vmatpush1.bf16.msra.mxu0 0
      %471 = vmatprep.subr.bf16.mxu0 0
      %472 = vmatpush1.bf16.msra.mxu0 0
      %473 = vmatprep.mubr.bf16.mxu0 0
      %474 = vmatmul.mubr.bf16.gmra.mrb[0].mxu0 %v256
      %v475 = vpop.f32.mrb[0].mxu0
      %v476 = vadd.f32 %v388, %v475
      %v477 = vpop.f32.mrb[0].mxu0
      %v478 = vpop.f32.mrb[0].mxu0
      %v479 = vpop.f32.mrb[0].mxu0
      %480 = vdwg.mxu0
      %v481 = vld [vmem:[%s245] sm:$0xc]
      %v482 = vld [vmem:[%s245 + $0x4] sm:$0x3]
      %s483 = scalar_lea.vmem %s1, 128
      %v484 = vld [vmem:[%s483] sm:$0xf]
      %v485 = vld [vmem:[%s483 + $0x4] sm:$0xf]
      %v486 = vld [vmem:[%s483 + $0x8] sm:$0xf]
      %v487 = vld [vmem:[%s483 + $0xc] sm:$0xf]
      %v488 = vld [vmem:[%s483 + $0x10] sm:$0xf]
      %v489 = vld [vmem:[%s483 + $0x14] sm:$0xf]
      %v490 = vld [vmem:[%s483 + $0x18] sm:$0xf]
      %v491 = vld [vmem:[%s483 + $0x1c] sm:$0xf]
      %v492 = vld [vmem:[%s483 + $0x20] sm:$0xf]
      %v493 = vld [vmem:[%s483 + $0x24] sm:$0xf]
      %v494 = vld [vmem:[%s483 + $0x28] sm:$0xf]
      %v495 = vld [vmem:[%s483 + $0x2c] sm:$0xf]
      %v496 = vld [vmem:[%s483 + $0x30] sm:$0xf]
      %v497 = vld [vmem:[%s483 + $0x34] sm:$0xf]
      %v498 = vld [vmem:[%s483 + $0x38] sm:$0xf]
      %v499 = vld [vmem:[%s483 + $0x3c] sm:$0xf]
      %v502 = vunpack.c.l.b16 %v481
      %v503 = vunpack.c.l.b16 %v482
      %v504 = vpack.c.b16 %v503, %v502
      %v505 = vrot.slane %v504, 2
      %v523 = vunpack.c.l.b16 %v484
      %v524 = vunpack.c.l.b16 %v485
      %v525 = vunpack.c.l.b16 %v486
      %v526 = vunpack.c.l.b16 %v487
      %v527 = vunpack.c.l.b16 %v488
      %v528 = vunpack.c.l.b16 %v489
      %v529 = vunpack.c.l.b16 %v490
      %v530 = vunpack.c.l.b16 %v491
      %v531 = vunpack.c.l.b16 %v492
      %v532 = vunpack.c.l.b16 %v493
      %v533 = vunpack.c.l.b16 %v494
      %v534 = vunpack.c.l.b16 %v495
      %v535 = vunpack.c.l.b16 %v496
      %v536 = vunpack.c.l.b16 %v497
      %v537 = vunpack.c.l.b16 %v498
      %v538 = vunpack.c.l.b16 %v499
      %v539 = vpack.c.b16 %v524, %v523
      %v540 = vpack.c.b16 %v526, %v525
      %v541 = vpack.c.b16 %v528, %v527
      %v542 = vpack.c.b16 %v530, %v529
      %v543 = vpack.c.b16 %v532, %v531
      %v544 = vpack.c.b16 %v534, %v533
      %v545 = vpack.c.b16 %v536, %v535
      %v546 = vpack.c.b16 %v538, %v537
      %555 = vmatprep.subr.bf16.mxu0 0
      %556 = vmatpush1.bf16.msra.mxu0 %v539
      %557 = vmatprep.subr.bf16.mxu0 0
      %558 = vmatpush1.bf16.msra.mxu0 %v540
      %559 = vmatprep.subr.bf16.mxu0 0
      %560 = vmatpush1.bf16.msra.mxu0 %v541
      %561 = vmatprep.subr.bf16.mxu0 0
      %562 = vmatpush1.bf16.msra.mxu0 %v542
      %563 = vmatprep.subr.bf16.mxu0 0
      %564 = vmatpush1.bf16.msra.mxu0 %v543
      %565 = vmatprep.subr.bf16.mxu0 0
      %566 = vmatpush1.bf16.msra.mxu0 %v544
      %567 = vmatprep.subr.bf16.mxu0 0
      %568 = vmatpush1.bf16.msra.mxu0 %v545
      %569 = vmatprep.subr.bf16.mxu0 0
      %570 = vmatpush1.bf16.msra.mxu0 %v546
      %571 = vmatprep.subr.bf16.mxu0 0
      %572 = vmatpush1.bf16.msra.mxu0 0
      %573 = vmatprep.subr.bf16.mxu0 0
      %574 = vmatpush1.bf16.msra.mxu0 0
      %575 = vmatprep.subr.bf16.mxu0 0
      %576 = vmatpush1.bf16.msra.mxu0 0
      %577 = vmatprep.subr.bf16.mxu0 0
      %578 = vmatpush1.bf16.msra.mxu0 0
      %579 = vmatprep.subr.bf16.mxu0 0
      %580 = vmatpush1.bf16.msra.mxu0 0
      %581 = vmatprep.subr.bf16.mxu0 0
      %582 = vmatpush1.bf16.msra.mxu0 0
      %583 = vmatprep.subr.bf16.mxu0 0
      %584 = vmatpush1.bf16.msra.mxu0 0
      %585 = vmatprep.subr.bf16.mxu0 0
      %586 = vmatpush1.bf16.msra.mxu0 0
      %587 = vmatprep.mubr.bf16.mxu0 0
      %588 = vmatmul.mubr.bf16.gmra.mrb[0].mxu0 %v505
      %v589 = vpop.f32.mrb[0].mxu0
      %v590 = vadd.f32 0.0, %v589
      %v591 = vpop.f32.mrb[0].mxu0
      %v592 = vpop.f32.mrb[0].mxu0
      %v593 = vpop.f32.mrb[0].mxu0
      %594 = vdwg.mxu0
      %v595 = vadd.f32 %v476, %v590
      %v596 = vld [vmem:[%s245 + $0x4] sm:$0x7]
      %s597 = scalar_lea.vmem %s1, 192
      %v598 = vld [vmem:[%s597] sm:$0xf]
      %v599 = vld [vmem:[%s597 + $0x4] sm:$0xf]
      %v600 = vld [vmem:[%s597 + $0x8] sm:$0xf]
      %v601 = vld [vmem:[%s597 + $0xc] sm:$0xf]
      %v602 = vld [vmem:[%s597 + $0x10] sm:$0xf]
      %v603 = vld [vmem:[%s597 + $0x14] sm:$0xf]
      %v604 = vld [vmem:[%s597 + $0x18] sm:$0xf]
      %v605 = vld [vmem:[%s597 + $0x1c] sm:$0xf]
      %v606 = vld [vmem:[%s597 + $0x20] sm:$0xf]
      %v607 = vld [vmem:[%s597 + $0x24] sm:$0xf]
      %v608 = vld [vmem:[%s597 + $0x28] sm:$0xf]
      %v609 = vld [vmem:[%s597 + $0x2c] sm:$0xf]
      %v610 = vld [vmem:[%s597 + $0x30] sm:$0xf]
      %v611 = vld [vmem:[%s597 + $0x34] sm:$0xf]
      %v612 = vld [vmem:[%s597 + $0x38] sm:$0xf]
      %v613 = vld [vmem:[%s597 + $0x3c] sm:$0xf]
      %v615 = vunpack.c.l.b16 %v596
      %v616 = vpack.c.b16 %v615, %v502
      %v618 = vshrl.u32 %v616, 16
      %v620 = vrot.slane %v618, 2
      %v621 = vshll.u32 %v616, 16
      %v623 = vrot.slane %v621, 3
      %v624 = vor.u32 %v620, %v623
      %v642 = vunpack.c.l.b16 %v598
      %v643 = vunpack.c.l.b16 %v599
      %v644 = vunpack.c.l.b16 %v600
      %v645 = vunpack.c.l.b16 %v601
      %v646 = vunpack.c.l.b16 %v602
      %v647 = vunpack.c.l.b16 %v603
      %v648 = vunpack.c.l.b16 %v604
      %v649 = vunpack.c.l.b16 %v605
      %v650 = vunpack.c.l.b16 %v606
      %v651 = vunpack.c.l.b16 %v607
      %v652 = vunpack.c.l.b16 %v608
      %v653 = vunpack.c.l.b16 %v609
      %v654 = vunpack.c.l.b16 %v610
      %v655 = vunpack.c.l.b16 %v611
      %v656 = vunpack.c.l.b16 %v612
      %v657 = vunpack.c.l.b16 %v613
      %v658 = vpack.c.b16 %v643, %v642
      %v659 = vpack.c.b16 %v645, %v644
      %v660 = vpack.c.b16 %v647, %v646
      %v661 = vpack.c.b16 %v649, %v648
      %v662 = vpack.c.b16 %v651, %v650
      %v663 = vpack.c.b16 %v653, %v652
      %v664 = vpack.c.b16 %v655, %v654
      %v665 = vpack.c.b16 %v657, %v656
      %674 = vmatprep.subr.bf16.mxu0 0
      %675 = vmatpush1.bf16.msra.mxu0 %v658
      %676 = vmatprep.subr.bf16.mxu0 0
      %677 = vmatpush1.bf16.msra.mxu0 %v659
      %678 = vmatprep.subr.bf16.mxu0 0
      %679 = vmatpush1.bf16.msra.mxu0 %v660
      %680 = vmatprep.subr.bf16.mxu0 0
      %681 = vmatpush1.bf16.msra.mxu0 %v661
      %682 = vmatprep.subr.bf16.mxu0 0
      %683 = vmatpush1.bf16.msra.mxu0 %v662
      %684 = vmatprep.subr.bf16.mxu0 0
      %685 = vmatpush1.bf16.msra.mxu0 %v663
      %686 = vmatprep.subr.bf16.mxu0 0
      %687 = vmatpush1.bf16.msra.mxu0 %v664
      %688 = vmatprep.subr.bf16.mxu0 0
      %689 = vmatpush1.bf16.msra.mxu0 %v665
      %690 = vmatprep.subr.bf16.mxu0 0
      %691 = vmatpush1.bf16.msra.mxu0 0
      %692 = vmatprep.subr.bf16.mxu0 0
      %693 = vmatpush1.bf16.msra.mxu0 0
      %694 = vmatprep.subr.bf16.mxu0 0
      %695 = vmatpush1.bf16.msra.mxu0 0
      %696 = vmatprep.subr.bf16.mxu0 0
      %697 = vmatpush1.bf16.msra.mxu0 0
      %698 = vmatprep.subr.bf16.mxu0 0
      %699 = vmatpush1.bf16.msra.mxu0 0
      %700 = vmatprep.subr.bf16.mxu0 0
      %701 = vmatpush1.bf16.msra.mxu0 0
      %702 = vmatprep.subr.bf16.mxu0 0
      %703 = vmatpush1.bf16.msra.mxu0 0
      %704 = vmatprep.subr.bf16.mxu0 0
      %705 = vmatpush1.bf16.msra.mxu0 0
      %706 = vmatprep.mubr.bf16.mxu0 0
      %707 = vmatmul.mubr.bf16.gmra.mrb[0].mxu0 %v624
      %v708 = vpop.f32.mrb[0].mxu0
      %v709 = vadd.f32 0.0, %v708
      %v710 = vpop.f32.mrb[0].mxu0
      %v711 = vpop.f32.mrb[0].mxu0
      %v712 = vpop.f32.mrb[0].mxu0
      %713 = vdwg.mxu0
      %v714 = vadd.f32 %v595, %v709
      %v715 = vlaneseq
      %v716 = vshrl.u32 %v715, 7
      %v717 = vsub.s32 0, %v716
      %v718 = vrot.slane %v253, %v717
      %v719 = vadd.f32 %v714, %v718
      %v720 = vmax.f32 %v719, 0.0
      %v721 = vsel %vm255, 1, 0
      %722 = vset.pattern.permute.xlu0 0
      %723 = vperm.xlu0 %722, %v721
      %v724 = vpop.permute.xlu0 %723
      %vm725 = vcmp.eq.s32.totalorder %v724, 1
      %v726 = vsel %vm725, %v720, 0.0
      %v727 = vpack.c.bf16 %v726, %v726
      %728 = vst [vmem:[#allocation2 + $0x8] sm:$0xf] %v727
      %v729 = vld [vmem:[#allocation2] sm:$0xe0]
      %v730 = vld [vmem:[#allocation2 + $0x8] sm:$0x3]
      %v731 = vld [vmem:[%s2] sm:$0xf]
      %v732 = vld [vmem:[%s2 + $0x4] sm:$0xf]
      %v733 = vld [vmem:[%s2 + $0x8] sm:$0xf]
      %v734 = vld [vmem:[%s2 + $0xc] sm:$0xf]
      %v735 = vld [vmem:[%s2 + $0x10] sm:$0xf]
      %v736 = vld [vmem:[%s2 + $0x14] sm:$0xf]
      %v737 = vld [vmem:[%s2 + $0x18] sm:$0xf]
      %v738 = vld [vmem:[%s2 + $0x1c] sm:$0xf]
      %v739 = vld [vmem:[%s2 + $0x20] sm:$0xf]
      %v740 = vld [vmem:[%s2 + $0x24] sm:$0xf]
      %v741 = vld [vmem:[%s2 + $0x28] sm:$0xf]
      %v742 = vld [vmem:[%s2 + $0x2c] sm:$0xf]
      %v743 = vld [vmem:[%s2 + $0x30] sm:$0xf]
      %v744 = vld [vmem:[%s2 + $0x34] sm:$0xf]
      %v745 = vld [vmem:[%s2 + $0x38] sm:$0xf]
      %v746 = vld [vmem:[%s2 + $0x3c] sm:$0xf]
      %v747 = vld [vmem:[#allocation2] sm:$0xc0]
      %s748 = scalar_lea.vmem %s2, 64
      %v749 = vld [vmem:[%s748] sm:$0xf]
      %v750 = vld [vmem:[%s748 + $0x4] sm:$0xf]
      %v751 = vld [vmem:[%s748 + $0x8] sm:$0xf]
      %v752 = vld [vmem:[%s748 + $0xc] sm:$0xf]
      %v753 = vld [vmem:[%s748 + $0x10] sm:$0xf]
      %v754 = vld [vmem:[%s748 + $0x14] sm:$0xf]
      %v755 = vld [vmem:[%s748 + $0x18] sm:$0xf]
      %v756 = vld [vmem:[%s748 + $0x1c] sm:$0xf]
      %v757 = vld [vmem:[%s748 + $0x20] sm:$0xf]
      %v758 = vld [vmem:[%s748 + $0x24] sm:$0xf]
      %v759 = vld [vmem:[%s748 + $0x28] sm:$0xf]
      %v760 = vld [vmem:[%s748 + $0x2c] sm:$0xf]
      %v761 = vld [vmem:[%s748 + $0x30] sm:$0xf]
      %v762 = vld [vmem:[%s748 + $0x34] sm:$0xf]
      %v763 = vld [vmem:[%s748 + $0x38] sm:$0xf]
      %v764 = vld [vmem:[%s748 + $0x3c] sm:$0xf]
      %vm767 = vcmask 1041408
      %v768 = vrot.slane %v747, 6
      %v769 = vrot.slane %v730, 6
      %v770 = vsel %vm767, %v768, %v769
      %v788 = vunpack.c.l.b16 %v749
      %v789 = vunpack.c.l.b16 %v750
      %v790 = vunpack.c.l.b16 %v751
      %v791 = vunpack.c.l.b16 %v752
      %v792 = vunpack.c.l.b16 %v753
      %v793 = vunpack.c.l.b16 %v754
      %v794 = vunpack.c.l.b16 %v755
      %v795 = vunpack.c.l.b16 %v756
      %v796 = vunpack.c.l.b16 %v757
      %v797 = vunpack.c.l.b16 %v758
      %v798 = vunpack.c.l.b16 %v759
      %v799 = vunpack.c.l.b16 %v760
      %v800 = vunpack.c.l.b16 %v761
      %v801 = vunpack.c.l.b16 %v762
      %v802 = vunpack.c.l.b16 %v763
      %v803 = vunpack.c.l.b16 %v764
      %v804 = vpack.c.b16 %v789, %v788
      %v805 = vpack.c.b16 %v791, %v790
      %v806 = vpack.c.b16 %v793, %v792
      %v807 = vpack.c.b16 %v795, %v794
      %v808 = vpack.c.b16 %v797, %v796
      %v809 = vpack.c.b16 %v799, %v798
      %v810 = vpack.c.b16 %v801, %v800
      %v811 = vpack.c.b16 %v803, %v802
      %820 = vmatprep.subr.bf16.mxu0 0
      %821 = vmatpush1.bf16.msra.mxu0 %v804
      %822 = vmatprep.subr.bf16.mxu0 0
      %823 = vmatpush1.bf16.msra.mxu0 %v805
      %824 = vmatprep.subr.bf16.mxu0 0
      %825 = vmatpush1.bf16.msra.mxu0 %v806
      %826 = vmatprep.subr.bf16.mxu0 0
      %827 = vmatpush1.bf16.msra.mxu0 %v807
      %828 = vmatprep.subr.bf16.mxu0 0
      %829 = vmatpush1.bf16.msra.mxu0 %v808
      %830 = vmatprep.subr.bf16.mxu0 0
      %831 = vmatpush1.bf16.msra.mxu0 %v809
      %832 = vmatprep.subr.bf16.mxu0 0
      %833 = vmatpush1.bf16.msra.mxu0 %v810
      %834 = vmatprep.subr.bf16.mxu0 0
      %835 = vmatpush1.bf16.msra.mxu0 %v811
      %836 = vmatprep.subr.bf16.mxu0 0
      %837 = vmatpush1.bf16.msra.mxu0 0
      %838 = vmatprep.subr.bf16.mxu0 0
      %839 = vmatpush1.bf16.msra.mxu0 0
      %840 = vmatprep.subr.bf16.mxu0 0
      %841 = vmatpush1.bf16.msra.mxu0 0
      %842 = vmatprep.subr.bf16.mxu0 0
      %843 = vmatpush1.bf16.msra.mxu0 0
      %844 = vmatprep.subr.bf16.mxu0 0
      %845 = vmatpush1.bf16.msra.mxu0 0
      %846 = vmatprep.subr.bf16.mxu0 0
      %847 = vmatpush1.bf16.msra.mxu0 0
      %848 = vmatprep.subr.bf16.mxu0 0
      %849 = vmatpush1.bf16.msra.mxu0 0
      %850 = vmatprep.subr.bf16.mxu0 0
      %851 = vmatpush1.bf16.msra.mxu0 0
      %852 = vmatprep.mubr.bf16.mxu0 0
      %853 = vmatmul.mubr.bf16.gmra.mrb[0].mxu0 %v770
      %v854 = vpop.f32.mrb[0].mxu0
      %v855 = vadd.f32 0.0, %v854
      %v856 = vpop.f32.mrb[0].mxu0
      %v857 = vpop.f32.mrb[0].mxu0
      %v858 = vpop.f32.mrb[0].mxu0
      %859 = vdwg.mxu0
      %vm860 = vsmask.f32 2304
      %v862 = vshrl.u32 %v729, 16
      %v864 = vrot.slane %v862, 5
      %v865 = vshll.u32 %v729, 16
      %v867 = vrot.slane %v865, 6
      %v868 = vor.u32 %v864, %v867
      %v870 = vshrl.u32 %v730, 16
      %v872 = vrot.slane %v870, 5
      %v873 = vshll.u32 %v730, 16
      %v875 = vrot.slane %v873, 6
      %v876 = vor.u32 %v872, %v875
      %v877 = vsel %vm860, %v868, %v876
      %v895 = vunpack.c.l.b16 %v731
      %v896 = vunpack.c.l.b16 %v732
      %v897 = vunpack.c.l.b16 %v733
      %v898 = vunpack.c.l.b16 %v734
      %v899 = vunpack.c.l.b16 %v735
      %v900 = vunpack.c.l.b16 %v736
      %v901 = vunpack.c.l.b16 %v737
      %v902 = vunpack.c.l.b16 %v738
      %v903 = vunpack.c.l.b16 %v739
      %v904 = vunpack.c.l.b16 %v740
      %v905 = vunpack.c.l.b16 %v741
      %v906 = vunpack.c.l.b16 %v742
      %v907 = vunpack.c.l.b16 %v743
      %v908 = vunpack.c.l.b16 %v744
      %v909 = vunpack.c.l.b16 %v745
      %v910 = vunpack.c.l.b16 %v746
      %v911 = vpack.c.b16 %v896, %v895
      %v912 = vpack.c.b16 %v898, %v897
      %v913 = vpack.c.b16 %v900, %v899
      %v914 = vpack.c.b16 %v902, %v901
      %v915 = vpack.c.b16 %v904, %v903
      %v916 = vpack.c.b16 %v906, %v905
      %v917 = vpack.c.b16 %v908, %v907
      %v918 = vpack.c.b16 %v910, %v909
      %927 = vmatprep.subr.bf16.mxu0 0
      %928 = vmatpush1.bf16.msra.mxu0 %v911
      %929 = vmatprep.subr.bf16.mxu0 0
      %930 = vmatpush1.bf16.msra.mxu0 %v912
      %931 = vmatprep.subr.bf16.mxu0 0
      %932 = vmatpush1.bf16.msra.mxu0 %v913
      %933 = vmatprep.subr.bf16.mxu0 0
      %934 = vmatpush1.bf16.msra.mxu0 %v914
      %935 = vmatprep.subr.bf16.mxu0 0
      %936 = vmatpush1.bf16.msra.mxu0 %v915
      %937 = vmatprep.subr.bf16.mxu0 0
      %938 = vmatpush1.bf16.msra.mxu0 %v916
      %939 = vmatprep.subr.bf16.mxu0 0
      %940 = vmatpush1.bf16.msra.mxu0 %v917
      %941 = vmatprep.subr.bf16.mxu0 0
      %942 = vmatpush1.bf16.msra.mxu0 %v918
      %943 = vmatprep.subr.bf16.mxu0 0
      %944 = vmatpush1.bf16.msra.mxu0 0
      %945 = vmatprep.subr.bf16.mxu0 0
      %946 = vmatpush1.bf16.msra.mxu0 0
      %947 = vmatprep.subr.bf16.mxu0 0
      %948 = vmatpush1.bf16.msra.mxu0 0
      %949 = vmatprep.subr.bf16.mxu0 0
      %950 = vmatpush1.bf16.msra.mxu0 0
      %951 = vmatprep.subr.bf16.mxu0 0
      %952 = vmatpush1.bf16.msra.mxu0 0
      %953 = vmatprep.subr.bf16.mxu0 0
      %954 = vmatpush1.bf16.msra.mxu0 0
      %955 = vmatprep.subr.bf16.mxu0 0
      %956 = vmatpush1.bf16.msra.mxu0 0
      %957 = vmatprep.subr.bf16.mxu0 0
      %958 = vmatpush1.bf16.msra.mxu0 0
      %959 = vmatprep.mubr.bf16.mxu0 0
      %960 = vmatmul.mubr.bf16.gmra.mrb[0].mxu0 %v877
      %v961 = vpop.f32.mrb[0].mxu0
      %v962 = vadd.f32 %v855, %v961
      %v963 = vpop.f32.mrb[0].mxu0
      %v964 = vpop.f32.mrb[0].mxu0
      %v965 = vpop.f32.mrb[0].mxu0
      %966 = vdwg.mxu0
      %v967 = vld [vmem:[#allocation2 + $0x8] sm:$0x7]
      %s968 = scalar_lea.vmem %s2, 128
      %v969 = vld [vmem:[%s968] sm:$0xf]
      %v970 = vld [vmem:[%s968 + $0x4] sm:$0xf]
      %v971 = vld [vmem:[%s968 + $0x8] sm:$0xf]
      %v972 = vld [vmem:[%s968 + $0xc] sm:$0xf]
      %v973 = vld [vmem:[%s968 + $0x10] sm:$0xf]
      %v974 = vld [vmem:[%s968 + $0x14] sm:$0xf]
      %v975 = vld [vmem:[%s968 + $0x18] sm:$0xf]
      %v976 = vld [vmem:[%s968 + $0x1c] sm:$0xf]
      %v977 = vld [vmem:[%s968 + $0x20] sm:$0xf]
      %v978 = vld [vmem:[%s968 + $0x24] sm:$0xf]
      %v979 = vld [vmem:[%s968 + $0x28] sm:$0xf]
      %v980 = vld [vmem:[%s968 + $0x2c] sm:$0xf]
      %v981 = vld [vmem:[%s968 + $0x30] sm:$0xf]
      %v982 = vld [vmem:[%s968 + $0x34] sm:$0xf]
      %v983 = vld [vmem:[%s968 + $0x38] sm:$0xf]
      %v984 = vld [vmem:[%s968 + $0x3c] sm:$0xf]
      %vm985 = vsmask.f32 1280
      %v987 = vshrl.u32 %v747, 16
      %v989 = vrot.slane %v987, 6
      %v990 = vshll.u32 %v747, 16
      %v992 = vrot.slane %v990, 7
      %v993 = vor.u32 %v989, %v992
      %v995 = vshrl.u32 %v967, 16
      %v997 = vrot.slane %v995, 6
      %v998 = vshll.u32 %v967, 16
      %v1000 = vrot.slane %v998, 7
      %v1001 = vor.u32 %v997, %v1000
      %v1002 = vsel %vm985, %v993, %v1001
      %v1020 = vunpack.c.l.b16 %v969
      %v1021 = vunpack.c.l.b16 %v970
      %v1022 = vunpack.c.l.b16 %v971
      %v1023 = vunpack.c.l.b16 %v972
      %v1024 = vunpack.c.l.b16 %v973
      %v1025 = vunpack.c.l.b16 %v974
      %v1026 = vunpack.c.l.b16 %v975
      %v1027 = vunpack.c.l.b16 %v976
      %v1028 = vunpack.c.l.b16 %v977
      %v1029 = vunpack.c.l.b16 %v978
      %v1030 = vunpack.c.l.b16 %v979
      %v1031 = vunpack.c.l.b16 %v980
      %v1032 = vunpack.c.l.b16 %v981
      %v1033 = vunpack.c.l.b16 %v982
      %v1034 = vunpack.c.l.b16 %v983
      %v1035 = vunpack.c.l.b16 %v984
      %v1036 = vpack.c.b16 %v1021, %v1020
      %v1037 = vpack.c.b16 %v1023, %v1022
      %v1038 = vpack.c.b16 %v1025, %v1024
      %v1039 = vpack.c.b16 %v1027, %v1026
      %v1040 = vpack.c.b16 %v1029, %v1028
      %v1041 = vpack.c.b16 %v1031, %v1030
      %v1042 = vpack.c.b16 %v1033, %v1032
      %v1043 = vpack.c.b16 %v1035, %v1034
      %1052 = vmatprep.subr.bf16.mxu0 0
      %1053 = vmatpush1.bf16.msra.mxu0 %v1036
      %1054 = vmatprep.subr.bf16.mxu0 0
      %1055 = vmatpush1.bf16.msra.mxu0 %v1037
      %1056 = vmatprep.subr.bf16.mxu0 0
      %1057 = vmatpush1.bf16.msra.mxu0 %v1038
      %1058 = vmatprep.subr.bf16.mxu0 0
      %1059 = vmatpush1.bf16.msra.mxu0 %v1039
      %1060 = vmatprep.subr.bf16.mxu0 0
      %1061 = vmatpush1.bf16.msra.mxu0 %v1040
      %1062 = vmatprep.subr.bf16.mxu0 0
      %1063 = vmatpush1.bf16.msra.mxu0 %v1041
      %1064 = vmatprep.subr.bf16.mxu0 0
      %1065 = vmatpush1.bf16.msra.mxu0 %v1042
      %1066 = vmatprep.subr.bf16.mxu0 0
      %1067 = vmatpush1.bf16.msra.mxu0 %v1043
      %1068 = vmatprep.subr.bf16.mxu0 0
      %1069 = vmatpush1.bf16.msra.mxu0 0
      %1070 = vmatprep.subr.bf16.mxu0 0
      %1071 = vmatpush1.bf16.msra.mxu0 0
      %1072 = vmatprep.subr.bf16.mxu0 0
      %1073 = vmatpush1.bf16.msra.mxu0 0
      %1074 = vmatprep.subr.bf16.mxu0 0
      %1075 = vmatpush1.bf16.msra.mxu0 0
      %1076 = vmatprep.subr.bf16.mxu0 0
      %1077 = vmatpush1.bf16.msra.mxu0 0
      %1078 = vmatprep.subr.bf16.mxu0 0
      %1079 = vmatpush1.bf16.msra.mxu0 0
      %1080 = vmatprep.subr.bf16.mxu0 0
      %1081 = vmatpush1.bf16.msra.mxu0 0
      %1082 = vmatprep.subr.bf16.mxu0 0
      %1083 = vmatpush1.bf16.msra.mxu0 0
      %1084 = vmatprep.mubr.bf16.mxu0 0
      %1085 = vmatmul.mubr.bf16.gmra.mrb[0].mxu0 %v1002
      %v1086 = vpop.f32.mrb[0].mxu0
      %v1087 = vadd.f32 0.0, %v1086
      %v1088 = vpop.f32.mrb[0].mxu0
      %v1089 = vpop.f32.mrb[0].mxu0
      %v1090 = vpop.f32.mrb[0].mxu0
      %1091 = vdwg.mxu0
      %v1092 = vadd.f32 %v962, %v1087
      %v1093 = vld [vmem:[#allocation2] sm:$0x80]
      %v1094 = vld [vmem:[#allocation2 + $0x8] sm:$0xf]
      %s1095 = scalar_lea.vmem %s2, 192
      %v1096 = vld [vmem:[%s1095] sm:$0xf]
      %v1097 = vld [vmem:[%s1095 + $0x4] sm:$0xf]
      %v1098 = vld [vmem:[%s1095 + $0x8] sm:$0xf]
      %v1099 = vld [vmem:[%s1095 + $0xc] sm:$0xf]
      %v1100 = vld [vmem:[%s1095 + $0x10] sm:$0xf]
      %v1101 = vld [vmem:[%s1095 + $0x14] sm:$0xf]
      %v1102 = vld [vmem:[%s1095 + $0x18] sm:$0xf]
      %v1103 = vld [vmem:[%s1095 + $0x1c] sm:$0xf]
      %v1104 = vld [vmem:[%s1095 + $0x20] sm:$0xf]
      %v1105 = vld [vmem:[%s1095 + $0x24] sm:$0xf]
      %v1106 = vld [vmem:[%s1095 + $0x28] sm:$0xf]
      %v1107 = vld [vmem:[%s1095 + $0x2c] sm:$0xf]
      %v1108 = vld [vmem:[%s1095 + $0x30] sm:$0xf]
      %v1109 = vld [vmem:[%s1095 + $0x34] sm:$0xf]
      %v1110 = vld [vmem:[%s1095 + $0x38] sm:$0xf]
      %v1111 = vld [vmem:[%s1095 + $0x3c] sm:$0xf]
      %vm1112 = vsmask.f32 256
      %v1114 = vshrl.u32 %v1093, 16
      %v1116 = vrot.slane %v1114, 7
      %v1118 = vshrl.u32 %v1094, 16
      %v1120 = vrot.slane %v1118, 7
      %v1121 = vshll.u32 %v1094, 16
      %v1123 = vor.u32 %v1120, %v1121
      %v1124 = vsel %vm1112, %v1116, %v1123
      %v1142 = vunpack.c.l.b16 %v1096
      %v1143 = vunpack.c.l.b16 %v1097
      %v1144 = vunpack.c.l.b16 %v1098
      %v1145 = vunpack.c.l.b16 %v1099
      %v1146 = vunpack.c.l.b16 %v1100
      %v1147 = vunpack.c.l.b16 %v1101
      %v1148 = vunpack.c.l.b16 %v1102
      %v1149 = vunpack.c.l.b16 %v1103
      %v1150 = vunpack.c.l.b16 %v1104
      %v1151 = vunpack.c.l.b16 %v1105
      %v1152 = vunpack.c.l.b16 %v1106
      %v1153 = vunpack.c.l.b16 %v1107
      %v1154 = vunpack.c.l.b16 %v1108
      %v1155 = vunpack.c.l.b16 %v1109
      %v1156 = vunpack.c.l.b16 %v1110
      %v1157 = vunpack.c.l.b16 %v1111
      %v1158 = vpack.c.b16 %v1143, %v1142
      %v1159 = vpack.c.b16 %v1145, %v1144
      %v1160 = vpack.c.b16 %v1147, %v1146
      %v1161 = vpack.c.b16 %v1149, %v1148
      %v1162 = vpack.c.b16 %v1151, %v1150
      %v1163 = vpack.c.b16 %v1153, %v1152
      %v1164 = vpack.c.b16 %v1155, %v1154
      %v1165 = vpack.c.b16 %v1157, %v1156
      %1174 = vmatprep.subr.bf16.mxu0 0
      %1175 = vmatpush1.bf16.msra.mxu0 %v1158
      %1176 = vmatprep.subr.bf16.mxu0 0
      %1177 = vmatpush1.bf16.msra.mxu0 %v1159
      %1178 = vmatprep.subr.bf16.mxu0 0
      %1179 = vmatpush1.bf16.msra.mxu0 %v1160
      %1180 = vmatprep.subr.bf16.mxu0 0
      %1181 = vmatpush1.bf16.msra.mxu0 %v1161
      %1182 = vmatprep.subr.bf16.mxu0 0
      %1183 = vmatpush1.bf16.msra.mxu0 %v1162
      %1184 = vmatprep.subr.bf16.mxu0 0
      %1185 = vmatpush1.bf16.msra.mxu0 %v1163
      %1186 = vmatprep.subr.bf16.mxu0 0
      %1187 = vmatpush1.bf16.msra.mxu0 %v1164
      %1188 = vmatprep.subr.bf16.mxu0 0
      %1189 = vmatpush1.bf16.msra.mxu0 %v1165
      %1190 = vmatprep.subr.bf16.mxu0 0
      %1191 = vmatpush1.bf16.msra.mxu0 0
      %1192 = vmatprep.subr.bf16.mxu0 0
      %1193 = vmatpush1.bf16.msra.mxu0 0
      %1194 = vmatprep.subr.bf16.mxu0 0
      %1195 = vmatpush1.bf16.msra.mxu0 0
      %1196 = vmatprep.subr.bf16.mxu0 0
      %1197 = vmatpush1.bf16.msra.mxu0 0
      %1198 = vmatprep.subr.bf16.mxu0 0
      %1199 = vmatpush1.bf16.msra.mxu0 0
      %1200 = vmatprep.subr.bf16.mxu0 0
      %1201 = vmatpush1.bf16.msra.mxu0 0
      %1202 = vmatprep.subr.bf16.mxu0 0
      %1203 = vmatpush1.bf16.msra.mxu0 0
      %1204 = vmatprep.subr.bf16.mxu0 0
      %1205 = vmatpush1.bf16.msra.mxu0 0
      %1206 = vmatprep.mubr.bf16.mxu0 0
      %1207 = vmatmul.mubr.bf16.gmra.mrb[0].mxu0 %v1124
      %v1208 = vpop.f32.mrb[0].mxu0
      %v1209 = vadd.f32 0.0, %v1208
      %v1210 = vpop.f32.mrb[0].mxu0
      %v1211 = vpop.f32.mrb[0].mxu0
      %v1212 = vpop.f32.mrb[0].mxu0
      %1213 = vdwg.mxu0
      %v1214 = vadd.f32 %v1092, %v1209
      %s1215 = scalar_lea.vmem %s2, 256
      %v1216 = vld [vmem:[%s1215] sm:$0xf]
      %v1217 = vld [vmem:[%s1215 + $0x4] sm:$0xf]
      %v1218 = vld [vmem:[%s1215 + $0x8] sm:$0xf]
      %v1219 = vld [vmem:[%s1215 + $0xc] sm:$0xf]
      %v1220 = vld [vmem:[%s1215 + $0x10] sm:$0xf]
      %v1221 = vld [vmem:[%s1215 + $0x14] sm:$0xf]
      %v1222 = vld [vmem:[%s1215 + $0x18] sm:$0xf]
      %v1223 = vld [vmem:[%s1215 + $0x1c] sm:$0xf]
      %v1224 = vld [vmem:[%s1215 + $0x20] sm:$0xf]
      %v1225 = vld [vmem:[%s1215 + $0x24] sm:$0xf]
      %v1226 = vld [vmem:[%s1215 + $0x28] sm:$0xf]
      %v1227 = vld [vmem:[%s1215 + $0x2c] sm:$0xf]
      %v1228 = vld [vmem:[%s1215 + $0x30] sm:$0xf]
      %v1229 = vld [vmem:[%s1215 + $0x34] sm:$0xf]
      %v1230 = vld [vmem:[%s1215 + $0x38] sm:$0xf]
      %v1231 = vld [vmem:[%s1215 + $0x3c] sm:$0xf]
      %v1248 = vunpack.c.l.b16 %v1216
      %v1249 = vunpack.c.l.b16 %v1217
      %v1250 = vunpack.c.l.b16 %v1218
      %v1251 = vunpack.c.l.b16 %v1219
      %v1252 = vunpack.c.l.b16 %v1220
      %v1253 = vunpack.c.l.b16 %v1221
      %v1254 = vunpack.c.l.b16 %v1222
      %v1255 = vunpack.c.l.b16 %v1223
      %v1256 = vunpack.c.l.b16 %v1224
      %v1257 = vunpack.c.l.b16 %v1225
      %v1258 = vunpack.c.l.b16 %v1226
      %v1259 = vunpack.c.l.b16 %v1227
      %v1260 = vunpack.c.l.b16 %v1228
      %v1261 = vunpack.c.l.b16 %v1229
      %v1262 = vunpack.c.l.b16 %v1230
      %v1263 = vunpack.c.l.b16 %v1231
      %v1264 = vpack.c.b16 %v1249, %v1248
      %v1265 = vpack.c.b16 %v1251, %v1250
      %v1266 = vpack.c.b16 %v1253, %v1252
      %v1267 = vpack.c.b16 %v1255, %v1254
      %v1268 = vpack.c.b16 %v1257, %v1256
      %v1269 = vpack.c.b16 %v1259, %v1258
      %v1270 = vpack.c.b16 %v1261, %v1260
      %v1271 = vpack.c.b16 %v1263, %v1262
      %1280 = vmatprep.subr.bf16.mxu0 0
      %1281 = vmatpush1.bf16.msra.mxu0 %v1264
      %1282 = vmatprep.subr.bf16.mxu0 0
      %1283 = vmatpush1.bf16.msra.mxu0 %v1265
      %1284 = vmatprep.subr.bf16.mxu0 0
      %1285 = vmatpush1.bf16.msra.mxu0 %v1266
      %1286 = vmatprep.subr.bf16.mxu0 0
      %1287 = vmatpush1.bf16.msra.mxu0 %v1267
      %1288 = vmatprep.subr.bf16.mxu0 0
      %1289 = vmatpush1.bf16.msra.mxu0 %v1268
      %1290 = vmatprep.subr.bf16.mxu0 0
      %1291 = vmatpush1.bf16.msra.mxu0 %v1269
      %1292 = vmatprep.subr.bf16.mxu0 0
      %1293 = vmatpush1.bf16.msra.mxu0 %v1270
      %1294 = vmatprep.subr.bf16.mxu0 0
      %1295 = vmatpush1.bf16.msra.mxu0 %v1271
      %1296 = vmatprep.subr.bf16.mxu0 0
      %1297 = vmatpush1.bf16.msra.mxu0 0
      %1298 = vmatprep.subr.bf16.mxu0 0
      %1299 = vmatpush1.bf16.msra.mxu0 0
      %1300 = vmatprep.subr.bf16.mxu0 0
      %1301 = vmatpush1.bf16.msra.mxu0 0
      %1302 = vmatprep.subr.bf16.mxu0 0
      %1303 = vmatpush1.bf16.msra.mxu0 0
      %1304 = vmatprep.subr.bf16.mxu0 0
      %1305 = vmatpush1.bf16.msra.mxu0 0
      %1306 = vmatprep.subr.bf16.mxu0 0
      %1307 = vmatpush1.bf16.msra.mxu0 0
      %1308 = vmatprep.subr.bf16.mxu0 0
      %1309 = vmatpush1.bf16.msra.mxu0 0
      %1310 = vmatprep.subr.bf16.mxu0 0
      %1311 = vmatpush1.bf16.msra.mxu0 0
      %1312 = vmatprep.mubr.bf16.mxu0 0
      %1313 = vmatmul.mubr.bf16.gmra.mrb[0].mxu0 %v1094
      %v1314 = vpop.f32.mrb[0].mxu0
      %v1315 = vadd.f32 0.0, %v1314
      %v1316 = vpop.f32.mrb[0].mxu0
      %v1317 = vpop.f32.mrb[0].mxu0
      %v1318 = vpop.f32.mrb[0].mxu0
      %1319 = vdwg.mxu0
      %v1320 = vadd.f32 %v1214, %v1315
      %v1321 = vld [vmem:[#allocation2 + $0x8] sm:$0x1f]
      %s1322 = scalar_lea.vmem %s2, 320
      %v1323 = vld [vmem:[%s1322] sm:$0xf]
      %v1324 = vld [vmem:[%s1322 + $0x4] sm:$0xf]
      %v1325 = vld [vmem:[%s1322 + $0x8] sm:$0xf]
      %v1326 = vld [vmem:[%s1322 + $0xc] sm:$0xf]
      %v1327 = vld [vmem:[%s1322 + $0x10] sm:$0xf]
      %v1328 = vld [vmem:[%s1322 + $0x14] sm:$0xf]
      %v1329 = vld [vmem:[%s1322 + $0x18] sm:$0xf]
      %v1330 = vld [vmem:[%s1322 + $0x1c] sm:$0xf]
      %v1331 = vld [vmem:[%s1322 + $0x20] sm:$0xf]
      %v1332 = vld [vmem:[%s1322 + $0x24] sm:$0xf]
      %v1333 = vld [vmem:[%s1322 + $0x28] sm:$0xf]
      %v1334 = vld [vmem:[%s1322 + $0x2c] sm:$0xf]
      %v1335 = vld [vmem:[%s1322 + $0x30] sm:$0xf]
      %v1336 = vld [vmem:[%s1322 + $0x34] sm:$0xf]
      %v1337 = vld [vmem:[%s1322 + $0x38] sm:$0xf]
      %v1338 = vld [vmem:[%s1322 + $0x3c] sm:$0xf]
      %v1340 = vshrl.u32 %v1321, 16
      %v1342 = vshll.u32 %v1321, 16
      %v1344 = vrot.slane %v1342, 1
      %v1345 = vor.u32 %v1340, %v1344
      %v1363 = vunpack.c.l.b16 %v1323
      %v1364 = vunpack.c.l.b16 %v1324
      %v1365 = vunpack.c.l.b16 %v1325
      %v1366 = vunpack.c.l.b16 %v1326
      %v1367 = vunpack.c.l.b16 %v1327
      %v1368 = vunpack.c.l.b16 %v1328
      %v1369 = vunpack.c.l.b16 %v1329
      %v1370 = vunpack.c.l.b16 %v1330
      %v1371 = vunpack.c.l.b16 %v1331
      %v1372 = vunpack.c.l.b16 %v1332
      %v1373 = vunpack.c.l.b16 %v1333
      %v1374 = vunpack.c.l.b16 %v1334
      %v1375 = vunpack.c.l.b16 %v1335
      %v1376 = vunpack.c.l.b16 %v1336
      %v1377 = vunpack.c.l.b16 %v1337
      %v1378 = vunpack.c.l.b16 %v1338
      %v1379 = vpack.c.b16 %v1364, %v1363
      %v1380 = vpack.c.b16 %v1366, %v1365
      %v1381 = vpack.c.b16 %v1368, %v1367
      %v1382 = vpack.c.b16 %v1370, %v1369
      %v1383 = vpack.c.b16 %v1372, %v1371
      %v1384 = vpack.c.b16 %v1374, %v1373
      %v1385 = vpack.c.b16 %v1376, %v1375
      %v1386 = vpack.c.b16 %v1378, %v1377
      %1395 = vmatprep.subr.bf16.mxu0 0
      %1396 = vmatpush1.bf16.msra.mxu0 %v1379
      %1397 = vmatprep.subr.bf16.mxu0 0
      %1398 = vmatpush1.bf16.msra.mxu0 %v1380
      %1399 = vmatprep.subr.bf16.mxu0 0
      %1400 = vmatpush1.bf16.msra.mxu0 %v1381
      %1401 = vmatprep.subr.bf16.mxu0 0
      %1402 = vmatpush1.bf16.msra.mxu0 %v1382
      %1403 = vmatprep.subr.bf16.mxu0 0
      %1404 = vmatpush1.bf16.msra.mxu0 %v1383
      %1405 = vmatprep.subr.bf16.mxu0 0
      %1406 = vmatpush1.bf16.msra.mxu0 %v1384
      %1407 = vmatprep.subr.bf16.mxu0 0
      %1408 = vmatpush1.bf16.msra.mxu0 %v1385
      %1409 = vmatprep.subr.bf16.mxu0 0
      %1410 = vmatpush1.bf16.msra.mxu0 %v1386
      %1411 = vmatprep.subr.bf16.mxu0 0
      %1412 = vmatpush1.bf16.msra.mxu0 0
      %1413 = vmatprep.subr.bf16.mxu0 0
      %1414 = vmatpush1.bf16.msra.mxu0 0
      %1415 = vmatprep.subr.bf16.mxu0 0
      %1416 = vmatpush1.bf16.msra.mxu0 0
      %1417 = vmatprep.subr.bf16.mxu0 0
      %1418 = vmatpush1.bf16.msra.mxu0 0
      %1419 = vmatprep.subr.bf16.mxu0 0
      %1420 = vmatpush1.bf16.msra.mxu0 0
      %1421 = vmatprep.subr.bf16.mxu0 0
      %1422 = vmatpush1.bf16.msra.mxu0 0
      %1423 = vmatprep.subr.bf16.mxu0 0
      %1424 = vmatpush1.bf16.msra.mxu0 0
      %1425 = vmatprep.subr.bf16.mxu0 0
      %1426 = vmatpush1.bf16.msra.mxu0 0
      %1427 = vmatprep.mubr.bf16.mxu0 0
      %1428 = vmatmul.mubr.bf16.gmra.mrb[0].mxu0 %v1345
      %v1429 = vpop.f32.mrb[0].mxu0
      %v1430 = vadd.f32 0.0, %v1429
      %v1431 = vpop.f32.mrb[0].mxu0
      %v1432 = vpop.f32.mrb[0].mxu0
      %v1433 = vpop.f32.mrb[0].mxu0
      %1434 = vdwg.mxu0
      %v1435 = vadd.f32 %v1320, %v1430
      %v1436 = vld [vmem:[#allocation2 + $0x8] sm:$0x3e]
      %s1437 = scalar_lea.vmem %s2, 384
      %v1438 = vld [vmem:[%s1437] sm:$0xf]
      %v1439 = vld [vmem:[%s1437 + $0x4] sm:$0xf]
      %v1440 = vld [vmem:[%s1437 + $0x8] sm:$0xf]
      %v1441 = vld [vmem:[%s1437 + $0xc] sm:$0xf]
      %v1442 = vld [vmem:[%s1437 + $0x10] sm:$0xf]
      %v1443 = vld [vmem:[%s1437 + $0x14] sm:$0xf]
      %v1444 = vld [vmem:[%s1437 + $0x18] sm:$0xf]
      %v1445 = vld [vmem:[%s1437 + $0x1c] sm:$0xf]
      %v1446 = vld [vmem:[%s1437 + $0x20] sm:$0xf]
      %v1447 = vld [vmem:[%s1437 + $0x24] sm:$0xf]
      %v1448 = vld [vmem:[%s1437 + $0x28] sm:$0xf]
      %v1449 = vld [vmem:[%s1437 + $0x2c] sm:$0xf]
      %v1450 = vld [vmem:[%s1437 + $0x30] sm:$0xf]
      %v1451 = vld [vmem:[%s1437 + $0x34] sm:$0xf]
      %v1452 = vld [vmem:[%s1437 + $0x38] sm:$0xf]
      %v1453 = vld [vmem:[%s1437 + $0x3c] sm:$0xf]
      %v1455 = vshrl.u32 %v1436, 16
      %v1457 = vrot.slane %v1455, 1
      %v1458 = vshll.u32 %v1436, 16
      %v1460 = vrot.slane %v1458, 2
      %v1461 = vor.u32 %v1457, %v1460
      %v1479 = vunpack.c.l.b16 %v1438
      %v1480 = vunpack.c.l.b16 %v1439
      %v1481 = vunpack.c.l.b16 %v1440
      %v1482 = vunpack.c.l.b16 %v1441
      %v1483 = vunpack.c.l.b16 %v1442
      %v1484 = vunpack.c.l.b16 %v1443
      %v1485 = vunpack.c.l.b16 %v1444
      %v1486 = vunpack.c.l.b16 %v1445
      %v1487 = vunpack.c.l.b16 %v1446
      %v1488 = vunpack.c.l.b16 %v1447
      %v1489 = vunpack.c.l.b16 %v1448
      %v1490 = vunpack.c.l.b16 %v1449
      %v1491 = vunpack.c.l.b16 %v1450
      %v1492 = vunpack.c.l.b16 %v1451
      %v1493 = vunpack.c.l.b16 %v1452
      %v1494 = vunpack.c.l.b16 %v1453
      %v1495 = vpack.c.b16 %v1480, %v1479
      %v1496 = vpack.c.b16 %v1482, %v1481
      %v1497 = vpack.c.b16 %v1484, %v1483
      %v1498 = vpack.c.b16 %v1486, %v1485
      %v1499 = vpack.c.b16 %v1488, %v1487
      %v1500 = vpack.c.b16 %v1490, %v1489
      %v1501 = vpack.c.b16 %v1492, %v1491
      %v1502 = vpack.c.b16 %v1494, %v1493
      %1511 = vmatprep.subr.bf16.mxu0 0
      %1512 = vmatpush1.bf16.msra.mxu0 %v1495
      %1513 = vmatprep.subr.bf16.mxu0 0
      %1514 = vmatpush1.bf16.msra.mxu0 %v1496
      %1515 = vmatprep.subr.bf16.mxu0 0
      %1516 = vmatpush1.bf16.msra.mxu0 %v1497
      %1517 = vmatprep.subr.bf16.mxu0 0
      %1518 = vmatpush1.bf16.msra.mxu0 %v1498
      %1519 = vmatprep.subr.bf16.mxu0 0
      %1520 = vmatpush1.bf16.msra.mxu0 %v1499
      %1521 = vmatprep.subr.bf16.mxu0 0
      %1522 = vmatpush1.bf16.msra.mxu0 %v1500
      %1523 = vmatprep.subr.bf16.mxu0 0
      %1524 = vmatpush1.bf16.msra.mxu0 %v1501
      %1525 = vmatprep.subr.bf16.mxu0 0
      %1526 = vmatpush1.bf16.msra.mxu0 %v1502
      %1527 = vmatprep.subr.bf16.mxu0 0
      %1528 = vmatpush1.bf16.msra.mxu0 0
      %1529 = vmatprep.subr.bf16.mxu0 0
      %1530 = vmatpush1.bf16.msra.mxu0 0
      %1531 = vmatprep.subr.bf16.mxu0 0
      %1532 = vmatpush1.bf16.msra.mxu0 0
      %1533 = vmatprep.subr.bf16.mxu0 0
      %1534 = vmatpush1.bf16.msra.mxu0 0
      %1535 = vmatprep.subr.bf16.mxu0 0
      %1536 = vmatpush1.bf16.msra.mxu0 0
      %1537 = vmatprep.subr.bf16.mxu0 0
      %1538 = vmatpush1.bf16.msra.mxu0 0
      %1539 = vmatprep.subr.bf16.mxu0 0
      %1540 = vmatpush1.bf16.msra.mxu0 0
      %1541 = vmatprep.subr.bf16.mxu0 0
      %1542 = vmatpush1.bf16.msra.mxu0 0
      %1543 = vmatprep.mubr.bf16.mxu0 0
      %1544 = vmatmul.mubr.bf16.gmra.mrb[0].mxu0 %v1461
      %v1545 = vpop.f32.mrb[0].mxu0
      %v1546 = vadd.f32 0.0, %v1545
      %v1547 = vpop.f32.mrb[0].mxu0
      %v1548 = vpop.f32.mrb[0].mxu0
      %v1549 = vpop.f32.mrb[0].mxu0
      %1550 = vdwg.mxu0
      %v1551 = vadd.f32 %v1435, %v1546
      %v1552 = vld [vmem:[#allocation2 + $0x8] sm:$0x3c]
      %s1553 = scalar_lea.vmem %s2, 448
      %v1554 = vld [vmem:[%s1553] sm:$0xf]
      %v1555 = vld [vmem:[%s1553 + $0x4] sm:$0xf]
      %v1556 = vld [vmem:[%s1553 + $0x8] sm:$0xf]
      %v1557 = vld [vmem:[%s1553 + $0xc] sm:$0xf]
      %v1558 = vld [vmem:[%s1553 + $0x10] sm:$0xf]
      %v1559 = vld [vmem:[%s1553 + $0x14] sm:$0xf]
      %v1560 = vld [vmem:[%s1553 + $0x18] sm:$0xf]
      %v1561 = vld [vmem:[%s1553 + $0x1c] sm:$0xf]
      %v1562 = vld [vmem:[%s1553 + $0x20] sm:$0xf]
      %v1563 = vld [vmem:[%s1553 + $0x24] sm:$0xf]
      %v1564 = vld [vmem:[%s1553 + $0x28] sm:$0xf]
      %v1565 = vld [vmem:[%s1553 + $0x2c] sm:$0xf]
      %v1566 = vld [vmem:[%s1553 + $0x30] sm:$0xf]
      %v1567 = vld [vmem:[%s1553 + $0x34] sm:$0xf]
      %v1568 = vld [vmem:[%s1553 + $0x38] sm:$0xf]
      %v1569 = vld [vmem:[%s1553 + $0x3c] sm:$0xf]
      %v1571 = vrot.slane %v1552, 2
      %v1589 = vunpack.c.l.b16 %v1554
      %v1590 = vunpack.c.l.b16 %v1555
      %v1591 = vunpack.c.l.b16 %v1556
      %v1592 = vunpack.c.l.b16 %v1557
      %v1593 = vunpack.c.l.b16 %v1558
      %v1594 = vunpack.c.l.b16 %v1559
      %v1595 = vunpack.c.l.b16 %v1560
      %v1596 = vunpack.c.l.b16 %v1561
      %v1597 = vunpack.c.l.b16 %v1562
      %v1598 = vunpack.c.l.b16 %v1563
      %v1599 = vunpack.c.l.b16 %v1564
      %v1600 = vunpack.c.l.b16 %v1565
      %v1601 = vunpack.c.l.b16 %v1566
      %v1602 = vunpack.c.l.b16 %v1567
      %v1603 = vunpack.c.l.b16 %v1568
      %v1604 = vunpack.c.l.b16 %v1569
      %v1605 = vpack.c.b16 %v1590, %v1589
      %v1606 = vpack.c.b16 %v1592, %v1591
      %v1607 = vpack.c.b16 %v1594, %v1593
      %v1608 = vpack.c.b16 %v1596, %v1595
      %v1609 = vpack.c.b16 %v1598, %v1597
      %v1610 = vpack.c.b16 %v1600, %v1599
      %v1611 = vpack.c.b16 %v1602, %v1601
      %v1612 = vpack.c.b16 %v1604, %v1603
      %1621 = vmatprep.subr.bf16.mxu0 0
      %1622 = vmatpush1.bf16.msra.mxu0 %v1605
      %1623 = vmatprep.subr.bf16.mxu0 0
      %1624 = vmatpush1.bf16.msra.mxu0 %v1606
      %1625 = vmatprep.subr.bf16.mxu0 0
      %1626 = vmatpush1.bf16.msra.mxu0 %v1607
      %1627 = vmatprep.subr.bf16.mxu0 0
      %1628 = vmatpush1.bf16.msra.mxu0 %v1608
      %1629 = vmatprep.subr.bf16.mxu0 0
      %1630 = vmatpush1.bf16.msra.mxu0 %v1609
      %1631 = vmatprep.subr.bf16.mxu0 0
      %1632 = vmatpush1.bf16.msra.mxu0 %v1610
      %1633 = vmatprep.subr.bf16.mxu0 0
      %1634 = vmatpush1.bf16.msra.mxu0 %v1611
      %1635 = vmatprep.subr.bf16.mxu0 0
      %1636 = vmatpush1.bf16.msra.mxu0 %v1612
      %1637 = vmatprep.subr.bf16.mxu0 0
      %1638 = vmatpush1.bf16.msra.mxu0 0
      %1639 = vmatprep.subr.bf16.mxu0 0
      %1640 = vmatpush1.bf16.msra.mxu0 0
      %1641 = vmatprep.subr.bf16.mxu0 0
      %1642 = vmatpush1.bf16.msra.mxu0 0
      %1643 = vmatprep.subr.bf16.mxu0 0
      %1644 = vmatpush1.bf16.msra.mxu0 0
      %1645 = vmatprep.subr.bf16.mxu0 0
      %1646 = vmatpush1.bf16.msra.mxu0 0
      %1647 = vmatprep.subr.bf16.mxu0 0
      %1648 = vmatpush1.bf16.msra.mxu0 0
      %1649 = vmatprep.subr.bf16.mxu0 0
      %1650 = vmatpush1.bf16.msra.mxu0 0
      %1651 = vmatprep.subr.bf16.mxu0 0
      %1652 = vmatpush1.bf16.msra.mxu0 0
      %1653 = vmatprep.mubr.bf16.mxu0 0
      %1654 = vmatmul.mubr.bf16.gmra.mrb[0].mxu0 %v1571
      %v1655 = vpop.f32.mrb[0].mxu0
      %v1656 = vadd.f32 0.0, %v1655
      %v1657 = vpop.f32.mrb[0].mxu0
      %v1658 = vpop.f32.mrb[0].mxu0
      %v1659 = vpop.f32.mrb[0].mxu0
      %1660 = vdwg.mxu0
      %v1661 = vadd.f32 %v1551, %v1656
      %v1662 = vld [vmem:[#allocation2 + $0x8] sm:$0x7c]
      %s1663 = scalar_lea.vmem %s2, 512
      %v1664 = vld [vmem:[%s1663] sm:$0xf]
      %v1665 = vld [vmem:[%s1663 + $0x4] sm:$0xf]
      %v1666 = vld [vmem:[%s1663 + $0x8] sm:$0xf]
      %v1667 = vld [vmem:[%s1663 + $0xc] sm:$0xf]
      %v1668 = vld [vmem:[%s1663 + $0x10] sm:$0xf]
      %v1669 = vld [vmem:[%s1663 + $0x14] sm:$0xf]
      %v1670 = vld [vmem:[%s1663 + $0x18] sm:$0xf]
      %v1671 = vld [vmem:[%s1663 + $0x1c] sm:$0xf]
      %v1672 = vld [vmem:[%s1663 + $0x20] sm:$0xf]
      %v1673 = vld [vmem:[%s1663 + $0x24] sm:$0xf]
      %v1674 = vld [vmem:[%s1663 + $0x28] sm:$0xf]
      %v1675 = vld [vmem:[%s1663 + $0x2c] sm:$0xf]
      %v1676 = vld [vmem:[%s1663 + $0x30] sm:$0xf]
      %v1677 = vld [vmem:[%s1663 + $0x34] sm:$0xf]
      %v1678 = vld [vmem:[%s1663 + $0x38] sm:$0xf]
      %v1679 = vld [vmem:[%s1663 + $0x3c] sm:$0xf]
      %v1681 = vshrl.u32 %v1662, 16
      %v1683 = vrot.slane %v1681, 2
      %v1684 = vshll.u32 %v1662, 16
      %v1686 = vrot.slane %v1684, 3
      %v1687 = vor.u32 %v1683, %v1686
      %v1705 = vunpack.c.l.b16 %v1664
      %v1706 = vunpack.c.l.b16 %v1665
      %v1707 = vunpack.c.l.b16 %v1666
      %v1708 = vunpack.c.l.b16 %v1667
      %v1709 = vunpack.c.l.b16 %v1668
      %v1710 = vunpack.c.l.b16 %v1669
      %v1711 = vunpack.c.l.b16 %v1670
      %v1712 = vunpack.c.l.b16 %v1671
      %v1713 = vunpack.c.l.b16 %v1672
      %v1714 = vunpack.c.l.b16 %v1673
      %v1715 = vunpack.c.l.b16 %v1674
      %v1716 = vunpack.c.l.b16 %v1675
      %v1717 = vunpack.c.l.b16 %v1676
      %v1718 = vunpack.c.l.b16 %v1677
      %v1719 = vunpack.c.l.b16 %v1678
      %v1720 = vunpack.c.l.b16 %v1679
      %v1721 = vpack.c.b16 %v1706, %v1705
      %v1722 = vpack.c.b16 %v1708, %v1707
      %v1723 = vpack.c.b16 %v1710, %v1709
      %v1724 = vpack.c.b16 %v1712, %v1711
      %v1725 = vpack.c.b16 %v1714, %v1713
      %v1726 = vpack.c.b16 %v1716, %v1715
      %v1727 = vpack.c.b16 %v1718, %v1717
      %v1728 = vpack.c.b16 %v1720, %v1719
      %1737 = vmatprep.subr.bf16.mxu0 0
      %1738 = vmatpush1.bf16.msra.mxu0 %v1721
      %1739 = vmatprep.subr.bf16.mxu0 0
      %1740 = vmatpush1.bf16.msra.mxu0 %v1722
      %1741 = vmatprep.subr.bf16.mxu0 0
      %1742 = vmatpush1.bf16.msra.mxu0 %v1723
      %1743 = vmatprep.subr.bf16.mxu0 0
      %1744 = vmatpush1.bf16.msra.mxu0 %v1724
      %1745 = vmatprep.subr.bf16.mxu0 0
      %1746 = vmatpush1.bf16.msra.mxu0 %v1725
      %1747 = vmatprep.subr.bf16.mxu0 0
      %1748 = vmatpush1.bf16.msra.mxu0 %v1726
      %1749 = vmatprep.subr.bf16.mxu0 0
      %1750 = vmatpush1.bf16.msra.mxu0 %v1727
      %1751 = vmatprep.subr.bf16.mxu0 0
      %1752 = vmatpush1.bf16.msra.mxu0 %v1728
      %1753 = vmatprep.subr.bf16.mxu0 0
      %1754 = vmatpush1.bf16.msra.mxu0 0
      %1755 = vmatprep.subr.bf16.mxu0 0
      %1756 = vmatpush1.bf16.msra.mxu0 0
      %1757 = vmatprep.subr.bf16.mxu0 0
      %1758 = vmatpush1.bf16.msra.mxu0 0
      %1759 = vmatprep.subr.bf16.mxu0 0
      %1760 = vmatpush1.bf16.msra.mxu0 0
      %1761 = vmatprep.subr.bf16.mxu0 0
      %1762 = vmatpush1.bf16.msra.mxu0 0
      %1763 = vmatprep.subr.bf16.mxu0 0
      %1764 = vmatpush1.bf16.msra.mxu0 0
      %1765 = vmatprep.subr.bf16.mxu0 0
      %1766 = vmatpush1.bf16.msra.mxu0 0
      %1767 = vmatprep.subr.bf16.mxu0 0
      %1768 = vmatpush1.bf16.msra.mxu0 0
      %1769 = vmatprep.mubr.bf16.mxu0 0
      %1770 = vmatmul.mubr.bf16.gmra.mrb[0].mxu0 %v1687
      %v1771 = vpop.f32.mrb[0].mxu0
      %v1772 = vadd.f32 0.0, %v1771
      %v1773 = vpop.f32.mrb[0].mxu0
      %v1774 = vpop.f32.mrb[0].mxu0
      %v1775 = vpop.f32.mrb[0].mxu0
      %1776 = vdwg.mxu0
      %v1777 = vadd.f32 %v1661, %v1772
      %v1778 = vlaneseq
      %v1779 = vshrl.u32 %v1778, 7
      %v1780 = vsub.s32 1, %v1779
      %v1781 = vrot.slane %v253, %v1780
      %v1782 = vadd.f32 %v1777, %v1781
      %v1783 = vmax.f32 %v1782, 0.0
      %v1784 = vsel %vm725, %v1783, 0.0
      %v1785 = vpack.c.bf16 %v1784, %v1784
      %1786 = vst [vmem:[#allocation2 + $0x8] sm:$0xf] %v1785
      %v1787 = vld [vmem:[#allocation2] sm:$0xe0]
      %v1788 = vld [vmem:[#allocation2 + $0x8] sm:$0x3]
      %v1789 = vld [vmem:[%s3] sm:$0xf]
      %v1790 = vld [vmem:[%s3 + $0x4] sm:$0xf]
      %v1791 = vld [vmem:[%s3 + $0x8] sm:$0xf]
      %v1792 = vld [vmem:[%s3 + $0xc] sm:$0xf]
      %v1793 = vld [vmem:[%s3 + $0x10] sm:$0xf]
      %v1794 = vld [vmem:[%s3 + $0x14] sm:$0xf]
      %v1795 = vld [vmem:[%s3 + $0x18] sm:$0xf]
      %v1796 = vld [vmem:[%s3 + $0x1c] sm:$0xf]
      %v1797 = vld [vmem:[%s3 + $0x20] sm:$0xf]
      %v1798 = vld [vmem:[%s3 + $0x24] sm:$0xf]
      %v1799 = vld [vmem:[%s3 + $0x28] sm:$0xf]
      %v1800 = vld [vmem:[%s3 + $0x2c] sm:$0xf]
      %v1801 = vld [vmem:[%s3 + $0x30] sm:$0xf]
      %v1802 = vld [vmem:[%s3 + $0x34] sm:$0xf]
      %v1803 = vld [vmem:[%s3 + $0x38] sm:$0xf]
      %v1804 = vld [vmem:[%s3 + $0x3c] sm:$0xf]
      %v1805 = vld [vmem:[#allocation2] sm:$0xc0]
      %s1806 = scalar_lea.vmem %s3, 64
      %v1807 = vld [vmem:[%s1806] sm:$0xf]
      %v1808 = vld [vmem:[%s1806 + $0x4] sm:$0xf]
      %v1809 = vld [vmem:[%s1806 + $0x8] sm:$0xf]
      %v1810 = vld [vmem:[%s1806 + $0xc] sm:$0xf]
      %v1811 = vld [vmem:[%s1806 + $0x10] sm:$0xf]
      %v1812 = vld [vmem:[%s1806 + $0x14] sm:$0xf]
      %v1813 = vld [vmem:[%s1806 + $0x18] sm:$0xf]
      %v1814 = vld [vmem:[%s1806 + $0x1c] sm:$0xf]
      %v1815 = vld [vmem:[%s1806 + $0x20] sm:$0xf]
      %v1816 = vld [vmem:[%s1806 + $0x24] sm:$0xf]
      %v1817 = vld [vmem:[%s1806 + $0x28] sm:$0xf]
      %v1818 = vld [vmem:[%s1806 + $0x2c] sm:$0xf]
      %v1819 = vld [vmem:[%s1806 + $0x30] sm:$0xf]
      %v1820 = vld [vmem:[%s1806 + $0x34] sm:$0xf]
      %v1821 = vld [vmem:[%s1806 + $0x38] sm:$0xf]
      %v1822 = vld [vmem:[%s1806 + $0x3c] sm:$0xf]
      %v1825 = vrot.slane %v1805, 6
      %v1826 = vrot.slane %v1788, 6
      %v1827 = vsel %vm767, %v1825, %v1826
      %v1845 = vunpack.c.l.b16 %v1807
      %v1846 = vunpack.c.l.b16 %v1808
      %v1847 = vunpack.c.l.b16 %v1809
      %v1848 = vunpack.c.l.b16 %v1810
      %v1849 = vunpack.c.l.b16 %v1811
      %v1850 = vunpack.c.l.b16 %v1812
      %v1851 = vunpack.c.l.b16 %v1813
      %v1852 = vunpack.c.l.b16 %v1814
      %v1853 = vunpack.c.l.b16 %v1815
      %v1854 = vunpack.c.l.b16 %v1816
      %v1855 = vunpack.c.l.b16 %v1817
      %v1856 = vunpack.c.l.b16 %v1818
      %v1857 = vunpack.c.l.b16 %v1819
      %v1858 = vunpack.c.l.b16 %v1820
      %v1859 = vunpack.c.l.b16 %v1821
      %v1860 = vunpack.c.l.b16 %v1822
      %v1861 = vpack.c.b16 %v1846, %v1845
      %v1862 = vpack.c.b16 %v1848, %v1847
      %v1863 = vpack.c.b16 %v1850, %v1849
      %v1864 = vpack.c.b16 %v1852, %v1851
      %v1865 = vpack.c.b16 %v1854, %v1853
      %v1866 = vpack.c.b16 %v1856, %v1855
      %v1867 = vpack.c.b16 %v1858, %v1857
      %v1868 = vpack.c.b16 %v1860, %v1859
      %1877 = vmatprep.subr.bf16.mxu0 0
      %1878 = vmatpush1.bf16.msra.mxu0 %v1861
      %1879 = vmatprep.subr.bf16.mxu0 0
      %1880 = vmatpush1.bf16.msra.mxu0 %v1862
      %1881 = vmatprep.subr.bf16.mxu0 0
      %1882 = vmatpush1.bf16.msra.mxu0 %v1863
      %1883 = vmatprep.subr.bf16.mxu0 0
      %1884 = vmatpush1.bf16.msra.mxu0 %v1864
      %1885 = vmatprep.subr.bf16.mxu0 0
      %1886 = vmatpush1.bf16.msra.mxu0 %v1865
      %1887 = vmatprep.subr.bf16.mxu0 0
      %1888 = vmatpush1.bf16.msra.mxu0 %v1866
      %1889 = vmatprep.subr.bf16.mxu0 0
      %1890 = vmatpush1.bf16.msra.mxu0 %v1867
      %1891 = vmatprep.subr.bf16.mxu0 0
      %1892 = vmatpush1.bf16.msra.mxu0 %v1868
      %1893 = vmatprep.subr.bf16.mxu0 0
      %1894 = vmatpush1.bf16.msra.mxu0 0
      %1895 = vmatprep.subr.bf16.mxu0 0
      %1896 = vmatpush1.bf16.msra.mxu0 0
      %1897 = vmatprep.subr.bf16.mxu0 0
      %1898 = vmatpush1.bf16.msra.mxu0 0
      %1899 = vmatprep.subr.bf16.mxu0 0
      %1900 = vmatpush1.bf16.msra.mxu0 0
      %1901 = vmatprep.subr.bf16.mxu0 0
      %1902 = vmatpush1.bf16.msra.mxu0 0
      %1903 = vmatprep.subr.bf16.mxu0 0
      %1904 = vmatpush1.bf16.msra.mxu0 0
      %1905 = vmatprep.subr.bf16.mxu0 0
      %1906 = vmatpush1.bf16.msra.mxu0 0
      %1907 = vmatprep.subr.bf16.mxu0 0
      %1908 = vmatpush1.bf16.msra.mxu0 0
      %1909 = vmatprep.mubr.bf16.mxu0 0
      %1910 = vmatmul.mubr.bf16.gmra.mrb[0].mxu0 %v1827
      %v1911 = vpop.f32.mrb[0].mxu0
      %v1912 = vadd.f32 0.0, %v1911
      %v1913 = vpop.f32.mrb[0].mxu0
      %v1914 = vpop.f32.mrb[0].mxu0
      %v1915 = vpop.f32.mrb[0].mxu0
      %1916 = vdwg.mxu0
      %v1918 = vshrl.u32 %v1787, 16
      %v1920 = vrot.slane %v1918, 5
      %v1921 = vshll.u32 %v1787, 16
      %v1923 = vrot.slane %v1921, 6
      %v1924 = vor.u32 %v1920, %v1923
      %v1926 = vshrl.u32 %v1788, 16
      %v1928 = vrot.slane %v1926, 5
      %v1929 = vshll.u32 %v1788, 16
      %v1931 = vrot.slane %v1929, 6
      %v1932 = vor.u32 %v1928, %v1931
      %v1933 = vsel %vm860, %v1924, %v1932
      %v1951 = vunpack.c.l.b16 %v1789
      %v1952 = vunpack.c.l.b16 %v1790
      %v1953 = vunpack.c.l.b16 %v1791
      %v1954 = vunpack.c.l.b16 %v1792
      %v1955 = vunpack.c.l.b16 %v1793
      %v1956 = vunpack.c.l.b16 %v1794
      %v1957 = vunpack.c.l.b16 %v1795
      %v1958 = vunpack.c.l.b16 %v1796
      %v1959 = vunpack.c.l.b16 %v1797
      %v1960 = vunpack.c.l.b16 %v1798
      %v1961 = vunpack.c.l.b16 %v1799
      %v1962 = vunpack.c.l.b16 %v1800
      %v1963 = vunpack.c.l.b16 %v1801
      %v1964 = vunpack.c.l.b16 %v1802
      %v1965 = vunpack.c.l.b16 %v1803
      %v1966 = vunpack.c.l.b16 %v1804
      %v1967 = vpack.c.b16 %v1952, %v1951
      %v1968 = vpack.c.b16 %v1954, %v1953
      %v1969 = vpack.c.b16 %v1956, %v1955
      %v1970 = vpack.c.b16 %v1958, %v1957
      %v1971 = vpack.c.b16 %v1960, %v1959
      %v1972 = vpack.c.b16 %v1962, %v1961
      %v1973 = vpack.c.b16 %v1964, %v1963
      %v1974 = vpack.c.b16 %v1966, %v1965
      %1983 = vmatprep.subr.bf16.mxu0 0
      %1984 = vmatpush1.bf16.msra.mxu0 %v1967
      %1985 = vmatprep.subr.bf16.mxu0 0
      %1986 = vmatpush1.bf16.msra.mxu0 %v1968
      %1987 = vmatprep.subr.bf16.mxu0 0
      %1988 = vmatpush1.bf16.msra.mxu0 %v1969
      %1989 = vmatprep.subr.bf16.mxu0 0
      %1990 = vmatpush1.bf16.msra.mxu0 %v1970
      %1991 = vmatprep.subr.bf16.mxu0 0
      %1992 = vmatpush1.bf16.msra.mxu0 %v1971
      %1993 = vmatprep.subr.bf16.mxu0 0
      %1994 = vmatpush1.bf16.msra.mxu0 %v1972
      %1995 = vmatprep.subr.bf16.mxu0 0
      %1996 = vmatpush1.bf16.msra.mxu0 %v1973
      %1997 = vmatprep.subr.bf16.mxu0 0
      %1998 = vmatpush1.bf16.msra.mxu0 %v1974
      %1999 = vmatprep.subr.bf16.mxu0 0
      %2000 = vmatpush1.bf16.msra.mxu0 0
      %2001 = vmatprep.subr.bf16.mxu0 0
      %2002 = vmatpush1.bf16.msra.mxu0 0
      %2003 = vmatprep.subr.bf16.mxu0 0
      %2004 = vmatpush1.bf16.msra.mxu0 0
      %2005 = vmatprep.subr.bf16.mxu0 0
      %2006 = vmatpush1.bf16.msra.mxu0 0
      %2007 = vmatprep.subr.bf16.mxu0 0
      %2008 = vmatpush1.bf16.msra.mxu0 0
      %2009 = vmatprep.subr.bf16.mxu0 0
      %2010 = vmatpush1.bf16.msra.mxu0 0
      %2011 = vmatprep.subr.bf16.mxu0 0
      %2012 = vmatpush1.bf16.msra.mxu0 0
      %2013 = vmatprep.subr.bf16.mxu0 0
      %2014 = vmatpush1.bf16.msra.mxu0 0
      %2015 = vmatprep.mubr.bf16.mxu0 0
      %2016 = vmatmul.mubr.bf16.gmra.mrb[0].mxu0 %v1933
      %v2017 = vpop.f32.mrb[0].mxu0
      %v2018 = vadd.f32 %v1912, %v2017
      %v2019 = vpop.f32.mrb[0].mxu0
      %v2020 = vpop.f32.mrb[0].mxu0
      %v2021 = vpop.f32.mrb[0].mxu0
      %2022 = vdwg.mxu0
      %v2023 = vld [vmem:[#allocation2 + $0x8] sm:$0x7]
      %s2024 = scalar_lea.vmem %s3, 128
      %v2025 = vld [vmem:[%s2024] sm:$0xf]
      %v2026 = vld [vmem:[%s2024 + $0x4] sm:$0xf]
      %v2027 = vld [vmem:[%s2024 + $0x8] sm:$0xf]
      %v2028 = vld [vmem:[%s2024 + $0xc] sm:$0xf]
      %v2029 = vld [vmem:[%s2024 + $0x10] sm:$0xf]
      %v2030 = vld [vmem:[%s2024 + $0x14] sm:$0xf]
      %v2031 = vld [vmem:[%s2024 + $0x18] sm:$0xf]
      %v2032 = vld [vmem:[%s2024 + $0x1c] sm:$0xf]
      %v2033 = vld [vmem:[%s2024 + $0x20] sm:$0xf]
      %v2034 = vld [vmem:[%s2024 + $0x24] sm:$0xf]
      %v2035 = vld [vmem:[%s2024 + $0x28] sm:$0xf]
      %v2036 = vld [vmem:[%s2024 + $0x2c] sm:$0xf]
      %v2037 = vld [vmem:[%s2024 + $0x30] sm:$0xf]
      %v2038 = vld [vmem:[%s2024 + $0x34] sm:$0xf]
      %v2039 = vld [vmem:[%s2024 + $0x38] sm:$0xf]
      %v2040 = vld [vmem:[%s2024 + $0x3c] sm:$0xf]
      %v2042 = vshrl.u32 %v1805, 16
      %v2044 = vrot.slane %v2042, 6
      %v2045 = vshll.u32 %v1805, 16
      %v2047 = vrot.slane %v2045, 7
      %v2048 = vor.u32 %v2044, %v2047
      %v2050 = vshrl.u32 %v2023, 16
      %v2052 = vrot.slane %v2050, 6
      %v2053 = vshll.u32 %v2023, 16
      %v2055 = vrot.slane %v2053, 7
      %v2056 = vor.u32 %v2052, %v2055
      %v2057 = vsel %vm985, %v2048, %v2056
      %v2075 = vunpack.c.l.b16 %v2025
      %v2076 = vunpack.c.l.b16 %v2026
      %v2077 = vunpack.c.l.b16 %v2027
      %v2078 = vunpack.c.l.b16 %v2028
      %v2079 = vunpack.c.l.b16 %v2029
      %v2080 = vunpack.c.l.b16 %v2030
      %v2081 = vunpack.c.l.b16 %v2031
      %v2082 = vunpack.c.l.b16 %v2032
      %v2083 = vunpack.c.l.b16 %v2033
      %v2084 = vunpack.c.l.b16 %v2034
      %v2085 = vunpack.c.l.b16 %v2035
      %v2086 = vunpack.c.l.b16 %v2036
      %v2087 = vunpack.c.l.b16 %v2037
      %v2088 = vunpack.c.l.b16 %v2038
      %v2089 = vunpack.c.l.b16 %v2039
      %v2090 = vunpack.c.l.b16 %v2040
      %v2091 = vpack.c.b16 %v2076, %v2075
      %v2092 = vpack.c.b16 %v2078, %v2077
      %v2093 = vpack.c.b16 %v2080, %v2079
      %v2094 = vpack.c.b16 %v2082, %v2081
      %v2095 = vpack.c.b16 %v2084, %v2083
      %v2096 = vpack.c.b16 %v2086, %v2085
      %v2097 = vpack.c.b16 %v2088, %v2087
      %v2098 = vpack.c.b16 %v2090, %v2089
      %2107 = vmatprep.subr.bf16.mxu0 0
      %2108 = vmatpush1.bf16.msra.mxu0 %v2091
      %2109 = vmatprep.subr.bf16.mxu0 0
      %2110 = vmatpush1.bf16.msra.mxu0 %v2092
      %2111 = vmatprep.subr.bf16.mxu0 0
      %2112 = vmatpush1.bf16.msra.mxu0 %v2093
      %2113 = vmatprep.subr.bf16.mxu0 0
      %2114 = vmatpush1.bf16.msra.mxu0 %v2094
      %2115 = vmatprep.subr.bf16.mxu0 0
      %2116 = vmatpush1.bf16.msra.mxu0 %v2095
      %2117 = vmatprep.subr.bf16.mxu0 0
      %2118 = vmatpush1.bf16.msra.mxu0 %v2096
      %2119 = vmatprep.subr.bf16.mxu0 0
      %2120 = vmatpush1.bf16.msra.mxu0 %v2097
      %2121 = vmatprep.subr.bf16.mxu0 0
      %2122 = vmatpush1.bf16.msra.mxu0 %v2098
      %2123 = vmatprep.subr.bf16.mxu0 0
      %2124 = vmatpush1.bf16.msra.mxu0 0
      %2125 = vmatprep.subr.bf16.mxu0 0
      %2126 = vmatpush1.bf16.msra.mxu0 0
      %2127 = vmatprep.subr.bf16.mxu0 0
      %2128 = vmatpush1.bf16.msra.mxu0 0
      %2129 = vmatprep.subr.bf16.mxu0 0
      %2130 = vmatpush1.bf16.msra.mxu0 0
      %2131 = vmatprep.subr.bf16.mxu0 0
      %2132 = vmatpush1.bf16.msra.mxu0 0
      %2133 = vmatprep.subr.bf16.mxu0 0
      %2134 = vmatpush1.bf16.msra.mxu0 0
      %2135 = vmatprep.subr.bf16.mxu0 0
      %2136 = vmatpush1.bf16.msra.mxu0 0
      %2137 = vmatprep.subr.bf16.mxu0 0
      %2138 = vmatpush1.bf16.msra.mxu0 0
      %2139 = vmatprep.mubr.bf16.mxu0 0
      %2140 = vmatmul.mubr.bf16.gmra.mrb[0].mxu0 %v2057
      %v2141 = vpop.f32.mrb[0].mxu0
      %v2142 = vadd.f32 0.0, %v2141
      %v2143 = vpop.f32.mrb[0].mxu0
      %v2144 = vpop.f32.mrb[0].mxu0
      %v2145 = vpop.f32.mrb[0].mxu0
      %2146 = vdwg.mxu0
      %v2147 = vadd.f32 %v2018, %v2142
      %v2148 = vld [vmem:[#allocation2] sm:$0x80]
      %v2149 = vld [vmem:[#allocation2 + $0x8] sm:$0xf]
      %s2150 = scalar_lea.vmem %s3, 192
      %v2151 = vld [vmem:[%s2150] sm:$0xf]
      %v2152 = vld [vmem:[%s2150 + $0x4] sm:$0xf]
      %v2153 = vld [vmem:[%s2150 + $0x8] sm:$0xf]
      %v2154 = vld [vmem:[%s2150 + $0xc] sm:$0xf]
      %v2155 = vld [vmem:[%s2150 + $0x10] sm:$0xf]
      %v2156 = vld [vmem:[%s2150 + $0x14] sm:$0xf]
      %v2157 = vld [vmem:[%s2150 + $0x18] sm:$0xf]
      %v2158 = vld [vmem:[%s2150 + $0x1c] sm:$0xf]
      %v2159 = vld [vmem:[%s2150 + $0x20] sm:$0xf]
      %v2160 = vld [vmem:[%s2150 + $0x24] sm:$0xf]
      %v2161 = vld [vmem:[%s2150 + $0x28] sm:$0xf]
      %v2162 = vld [vmem:[%s2150 + $0x2c] sm:$0xf]
      %v2163 = vld [vmem:[%s2150 + $0x30] sm:$0xf]
      %v2164 = vld [vmem:[%s2150 + $0x34] sm:$0xf]
      %v2165 = vld [vmem:[%s2150 + $0x38] sm:$0xf]
      %v2166 = vld [vmem:[%s2150 + $0x3c] sm:$0xf]
      %v2168 = vshrl.u32 %v2148, 16
      %v2170 = vrot.slane %v2168, 7
      %v2172 = vshrl.u32 %v2149, 16
      %v2174 = vrot.slane %v2172, 7
      %v2175 = vshll.u32 %v2149, 16
      %v2177 = vor.u32 %v2174, %v2175
      %v2178 = vsel %vm1112, %v2170, %v2177
      %v2196 = vunpack.c.l.b16 %v2151
      %v2197 = vunpack.c.l.b16 %v2152
      %v2198 = vunpack.c.l.b16 %v2153
      %v2199 = vunpack.c.l.b16 %v2154
      %v2200 = vunpack.c.l.b16 %v2155
      %v2201 = vunpack.c.l.b16 %v2156
      %v2202 = vunpack.c.l.b16 %v2157
      %v2203 = vunpack.c.l.b16 %v2158
      %v2204 = vunpack.c.l.b16 %v2159
      %v2205 = vunpack.c.l.b16 %v2160
      %v2206 = vunpack.c.l.b16 %v2161
      %v2207 = vunpack.c.l.b16 %v2162
      %v2208 = vunpack.c.l.b16 %v2163
      %v2209 = vunpack.c.l.b16 %v2164
      %v2210 = vunpack.c.l.b16 %v2165
      %v2211 = vunpack.c.l.b16 %v2166
      %v2212 = vpack.c.b16 %v2197, %v2196
      %v2213 = vpack.c.b16 %v2199, %v2198
      %v2214 = vpack.c.b16 %v2201, %v2200
      %v2215 = vpack.c.b16 %v2203, %v2202
      %v2216 = vpack.c.b16 %v2205, %v2204
      %v2217 = vpack.c.b16 %v2207, %v2206
      %v2218 = vpack.c.b16 %v2209, %v2208
      %v2219 = vpack.c.b16 %v2211, %v2210
      %2228 = vmatprep.subr.bf16.mxu0 0
      %2229 = vmatpush1.bf16.msra.mxu0 %v2212
      %2230 = vmatprep.subr.bf16.mxu0 0
      %2231 = vmatpush1.bf16.msra.mxu0 %v2213
      %2232 = vmatprep.subr.bf16.mxu0 0
      %2233 = vmatpush1.bf16.msra.mxu0 %v2214
      %2234 = vmatprep.subr.bf16.mxu0 0
      %2235 = vmatpush1.bf16.msra.mxu0 %v2215
      %2236 = vmatprep.subr.bf16.mxu0 0
      %2237 = vmatpush1.bf16.msra.mxu0 %v2216
      %2238 = vmatprep.subr.bf16.mxu0 0
      %2239 = vmatpush1.bf16.msra.mxu0 %v2217
      %2240 = vmatprep.subr.bf16.mxu0 0
      %2241 = vmatpush1.bf16.msra.mxu0 %v2218
      %2242 = vmatprep.subr.bf16.mxu0 0
      %2243 = vmatpush1.bf16.msra.mxu0 %v2219
      %2244 = vmatprep.subr.bf16.mxu0 0
      %2245 = vmatpush1.bf16.msra.mxu0 0
      %2246 = vmatprep.subr.bf16.mxu0 0
      %2247 = vmatpush1.bf16.msra.mxu0 0
      %2248 = vmatprep.subr.bf16.mxu0 0
      %2249 = vmatpush1.bf16.msra.mxu0 0
      %2250 = vmatprep.subr.bf16.mxu0 0
      %2251 = vmatpush1.bf16.msra.mxu0 0
      %2252 = vmatprep.subr.bf16.mxu0 0
      %2253 = vmatpush1.bf16.msra.mxu0 0
      %2254 = vmatprep.subr.bf16.mxu0 0
      %2255 = vmatpush1.bf16.msra.mxu0 0
      %2256 = vmatprep.subr.bf16.mxu0 0
      %2257 = vmatpush1.bf16.msra.mxu0 0
      %2258 = vmatprep.subr.bf16.mxu0 0
      %2259 = vmatpush1.bf16.msra.mxu0 0
      %2260 = vmatprep.mubr.bf16.mxu0 0
      %2261 = vmatmul.mubr.bf16.gmra.mrb[0].mxu0 %v2178
      %v2262 = vpop.f32.mrb[0].mxu0
      %v2263 = vadd.f32 0.0, %v2262
      %v2264 = vpop.f32.mrb[0].mxu0
      %v2265 = vpop.f32.mrb[0].mxu0
      %v2266 = vpop.f32.mrb[0].mxu0
      %2267 = vdwg.mxu0
      %v2268 = vadd.f32 %v2147, %v2263
      %s2269 = scalar_lea.vmem %s3, 256
      %v2270 = vld [vmem:[%s2269] sm:$0xf]
      %v2271 = vld [vmem:[%s2269 + $0x4] sm:$0xf]
      %v2272 = vld [vmem:[%s2269 + $0x8] sm:$0xf]
      %v2273 = vld [vmem:[%s2269 + $0xc] sm:$0xf]
      %v2274 = vld [vmem:[%s2269 + $0x10] sm:$0xf]
      %v2275 = vld [vmem:[%s2269 + $0x14] sm:$0xf]
      %v2276 = vld [vmem:[%s2269 + $0x18] sm:$0xf]
      %v2277 = vld [vmem:[%s2269 + $0x1c] sm:$0xf]
      %v2278 = vld [vmem:[%s2269 + $0x20] sm:$0xf]
      %v2279 = vld [vmem:[%s2269 + $0x24] sm:$0xf]
      %v2280 = vld [vmem:[%s2269 + $0x28] sm:$0xf]
      %v2281 = vld [vmem:[%s2269 + $0x2c] sm:$0xf]
      %v2282 = vld [vmem:[%s2269 + $0x30] sm:$0xf]
      %v2283 = vld [vmem:[%s2269 + $0x34] sm:$0xf]
      %v2284 = vld [vmem:[%s2269 + $0x38] sm:$0xf]
      %v2285 = vld [vmem:[%s2269 + $0x3c] sm:$0xf]
      %v2302 = vunpack.c.l.b16 %v2270
      %v2303 = vunpack.c.l.b16 %v2271
      %v2304 = vunpack.c.l.b16 %v2272
      %v2305 = vunpack.c.l.b16 %v2273
      %v2306 = vunpack.c.l.b16 %v2274
      %v2307 = vunpack.c.l.b16 %v2275
      %v2308 = vunpack.c.l.b16 %v2276
      %v2309 = vunpack.c.l.b16 %v2277
      %v2310 = vunpack.c.l.b16 %v2278
      %v2311 = vunpack.c.l.b16 %v2279
      %v2312 = vunpack.c.l.b16 %v2280
      %v2313 = vunpack.c.l.b16 %v2281
      %v2314 = vunpack.c.l.b16 %v2282
      %v2315 = vunpack.c.l.b16 %v2283
      %v2316 = vunpack.c.l.b16 %v2284
      %v2317 = vunpack.c.l.b16 %v2285
      %v2318 = vpack.c.b16 %v2303, %v2302
      %v2319 = vpack.c.b16 %v2305, %v2304
      %v2320 = vpack.c.b16 %v2307, %v2306
      %v2321 = vpack.c.b16 %v2309, %v2308
      %v2322 = vpack.c.b16 %v2311, %v2310
      %v2323 = vpack.c.b16 %v2313, %v2312
      %v2324 = vpack.c.b16 %v2315, %v2314
      %v2325 = vpack.c.b16 %v2317, %v2316
      %2334 = vmatprep.subr.bf16.mxu0 0
      %2335 = vmatpush1.bf16.msra.mxu0 %v2318
      %2336 = vmatprep.subr.bf16.mxu0 0
      %2337 = vmatpush1.bf16.msra.mxu0 %v2319
      %2338 = vmatprep.subr.bf16.mxu0 0
      %2339 = vmatpush1.bf16.msra.mxu0 %v2320
      %2340 = vmatprep.subr.bf16.mxu0 0
      %2341 = vmatpush1.bf16.msra.mxu0 %v2321
      %2342 = vmatprep.subr.bf16.mxu0 0
      %2343 = vmatpush1.bf16.msra.mxu0 %v2322
      %2344 = vmatprep.subr.bf16.mxu0 0
      %2345 = vmatpush1.bf16.msra.mxu0 %v2323
      %2346 = vmatprep.subr.bf16.mxu0 0
      %2347 = vmatpush1.bf16.msra.mxu0 %v2324
      %2348 = vmatprep.subr.bf16.mxu0 0
      %2349 = vmatpush1.bf16.msra.mxu0 %v2325
      %2350 = vmatprep.subr.bf16.mxu0 0
      %2351 = vmatpush1.bf16.msra.mxu0 0
      %2352 = vmatprep.subr.bf16.mxu0 0
      %2353 = vmatpush1.bf16.msra.mxu0 0
      %2354 = vmatprep.subr.bf16.mxu0 0
      %2355 = vmatpush1.bf16.msra.mxu0 0
      %2356 = vmatprep.subr.bf16.mxu0 0
      %2357 = vmatpush1.bf16.msra.mxu0 0
      %2358 = vmatprep.subr.bf16.mxu0 0
      %2359 = vmatpush1.bf16.msra.mxu0 0
      %2360 = vmatprep.subr.bf16.mxu0 0
      %2361 = vmatpush1.bf16.msra.mxu0 0
      %2362 = vmatprep.subr.bf16.mxu0 0
      %2363 = vmatpush1.bf16.msra.mxu0 0
      %2364 = vmatprep.subr.bf16.mxu0 0
      %2365 = vmatpush1.bf16.msra.mxu0 0
      %2366 = vmatprep.mubr.bf16.mxu0 0
      %2367 = vmatmul.mubr.bf16.gmra.mrb[0].mxu0 %v2149
      %v2368 = vpop.f32.mrb[0].mxu0
      %v2369 = vadd.f32 0.0, %v2368
      %v2370 = vpop.f32.mrb[0].mxu0
      %v2371 = vpop.f32.mrb[0].mxu0
      %v2372 = vpop.f32.mrb[0].mxu0
      %2373 = vdwg.mxu0
      %v2374 = vadd.f32 %v2268, %v2369
      %v2375 = vld [vmem:[#allocation2 + $0x8] sm:$0x1f]
      %s2376 = scalar_lea.vmem %s3, 320
      %v2377 = vld [vmem:[%s2376] sm:$0xf]
      %v2378 = vld [vmem:[%s2376 + $0x4] sm:$0xf]
      %v2379 = vld [vmem:[%s2376 + $0x8] sm:$0xf]
      %v2380 = vld [vmem:[%s2376 + $0xc] sm:$0xf]
      %v2381 = vld [vmem:[%s2376 + $0x10] sm:$0xf]
      %v2382 = vld [vmem:[%s2376 + $0x14] sm:$0xf]
      %v2383 = vld [vmem:[%s2376 + $0x18] sm:$0xf]
      %v2384 = vld [vmem:[%s2376 + $0x1c] sm:$0xf]
      %v2385 = vld [vmem:[%s2376 + $0x20] sm:$0xf]
      %v2386 = vld [vmem:[%s2376 + $0x24] sm:$0xf]
      %v2387 = vld [vmem:[%s2376 + $0x28] sm:$0xf]
      %v2388 = vld [vmem:[%s2376 + $0x2c] sm:$0xf]
      %v2389 = vld [vmem:[%s2376 + $0x30] sm:$0xf]
      %v2390 = vld [vmem:[%s2376 + $0x34] sm:$0xf]
      %v2391 = vld [vmem:[%s2376 + $0x38] sm:$0xf]
      %v2392 = vld [vmem:[%s2376 + $0x3c] sm:$0xf]
      %v2394 = vshrl.u32 %v2375, 16
      %v2396 = vshll.u32 %v2375, 16
      %v2398 = vrot.slane %v2396, 1
      %v2399 = vor.u32 %v2394, %v2398
      %v2417 = vunpack.c.l.b16 %v2377
      %v2418 = vunpack.c.l.b16 %v2378
      %v2419 = vunpack.c.l.b16 %v2379
      %v2420 = vunpack.c.l.b16 %v2380
      %v2421 = vunpack.c.l.b16 %v2381
      %v2422 = vunpack.c.l.b16 %v2382
      %v2423 = vunpack.c.l.b16 %v2383
      %v2424 = vunpack.c.l.b16 %v2384
      %v2425 = vunpack.c.l.b16 %v2385
      %v2426 = vunpack.c.l.b16 %v2386
      %v2427 = vunpack.c.l.b16 %v2387
      %v2428 = vunpack.c.l.b16 %v2388
      %v2429 = vunpack.c.l.b16 %v2389
      %v2430 = vunpack.c.l.b16 %v2390
      %v2431 = vunpack.c.l.b16 %v2391
      %v2432 = vunpack.c.l.b16 %v2392
      %v2433 = vpack.c.b16 %v2418, %v2417
      %v2434 = vpack.c.b16 %v2420, %v2419
      %v2435 = vpack.c.b16 %v2422, %v2421
      %v2436 = vpack.c.b16 %v2424, %v2423
      %v2437 = vpack.c.b16 %v2426, %v2425
      %v2438 = vpack.c.b16 %v2428, %v2427
      %v2439 = vpack.c.b16 %v2430, %v2429
      %v2440 = vpack.c.b16 %v2432, %v2431
      %2449 = vmatprep.subr.bf16.mxu0 0
      %2450 = vmatpush1.bf16.msra.mxu0 %v2433
      %2451 = vmatprep.subr.bf16.mxu0 0
      %2452 = vmatpush1.bf16.msra.mxu0 %v2434
      %2453 = vmatprep.subr.bf16.mxu0 0
      %2454 = vmatpush1.bf16.msra.mxu0 %v2435
      %2455 = vmatprep.subr.bf16.mxu0 0
      %2456 = vmatpush1.bf16.msra.mxu0 %v2436
      %2457 = vmatprep.subr.bf16.mxu0 0
      %2458 = vmatpush1.bf16.msra.mxu0 %v2437
      %2459 = vmatprep.subr.bf16.mxu0 0
      %2460 = vmatpush1.bf16.msra.mxu0 %v2438
      %2461 = vmatprep.subr.bf16.mxu0 0
      %2462 = vmatpush1.bf16.msra.mxu0 %v2439
      %2463 = vmatprep.subr.bf16.mxu0 0
      %2464 = vmatpush1.bf16.msra.mxu0 %v2440
      %2465 = vmatprep.subr.bf16.mxu0 0
      %2466 = vmatpush1.bf16.msra.mxu0 0
      %2467 = vmatprep.subr.bf16.mxu0 0
      %2468 = vmatpush1.bf16.msra.mxu0 0
      %2469 = vmatprep.subr.bf16.mxu0 0
      %2470 = vmatpush1.bf16.msra.mxu0 0
      %2471 = vmatprep.subr.bf16.mxu0 0
      %2472 = vmatpush1.bf16.msra.mxu0 0
      %2473 = vmatprep.subr.bf16.mxu0 0
      %2474 = vmatpush1.bf16.msra.mxu0 0
      %2475 = vmatprep.subr.bf16.mxu0 0
      %2476 = vmatpush1.bf16.msra.mxu0 0
      %2477 = vmatprep.subr.bf16.mxu0 0
      %2478 = vmatpush1.bf16.msra.mxu0 0
      %2479 = vmatprep.subr.bf16.mxu0 0
      %2480 = vmatpush1.bf16.msra.mxu0 0
      %2481 = vmatprep.mubr.bf16.mxu0 0
      %2482 = vmatmul.mubr.bf16.gmra.mrb[0].mxu0 %v2399
      %v2483 = vpop.f32.mrb[0].mxu0
      %v2484 = vadd.f32 0.0, %v2483
      %v2485 = vpop.f32.mrb[0].mxu0
      %v2486 = vpop.f32.mrb[0].mxu0
      %v2487 = vpop.f32.mrb[0].mxu0
      %2488 = vdwg.mxu0
      %v2489 = vadd.f32 %v2374, %v2484
      %v2490 = vld [vmem:[#allocation2 + $0x8] sm:$0x3e]
      %s2491 = scalar_lea.vmem %s3, 384
      %v2492 = vld [vmem:[%s2491] sm:$0xf]
      %v2493 = vld [vmem:[%s2491 + $0x4] sm:$0xf]
      %v2494 = vld [vmem:[%s2491 + $0x8] sm:$0xf]
      %v2495 = vld [vmem:[%s2491 + $0xc] sm:$0xf]
      %v2496 = vld [vmem:[%s2491 + $0x10] sm:$0xf]
      %v2497 = vld [vmem:[%s2491 + $0x14] sm:$0xf]
      %v2498 = vld [vmem:[%s2491 + $0x18] sm:$0xf]
      %v2499 = vld [vmem:[%s2491 + $0x1c] sm:$0xf]
      %v2500 = vld [vmem:[%s2491 + $0x20] sm:$0xf]
      %v2501 = vld [vmem:[%s2491 + $0x24] sm:$0xf]
      %v2502 = vld [vmem:[%s2491 + $0x28] sm:$0xf]
      %v2503 = vld [vmem:[%s2491 + $0x2c] sm:$0xf]
      %v2504 = vld [vmem:[%s2491 + $0x30] sm:$0xf]
      %v2505 = vld [vmem:[%s2491 + $0x34] sm:$0xf]
      %v2506 = vld [vmem:[%s2491 + $0x38] sm:$0xf]
      %v2507 = vld [vmem:[%s2491 + $0x3c] sm:$0xf]
      %v2509 = vshrl.u32 %v2490, 16
      %v2511 = vrot.slane %v2509, 1
      %v2512 = vshll.u32 %v2490, 16
      %v2514 = vrot.slane %v2512, 2
      %v2515 = vor.u32 %v2511, %v2514
      %v2533 = vunpack.c.l.b16 %v2492
      %v2534 = vunpack.c.l.b16 %v2493
      %v2535 = vunpack.c.l.b16 %v2494
      %v2536 = vunpack.c.l.b16 %v2495
      %v2537 = vunpack.c.l.b16 %v2496
      %v2538 = vunpack.c.l.b16 %v2497
      %v2539 = vunpack.c.l.b16 %v2498
      %v2540 = vunpack.c.l.b16 %v2499
      %v2541 = vunpack.c.l.b16 %v2500
      %v2542 = vunpack.c.l.b16 %v2501
      %v2543 = vunpack.c.l.b16 %v2502
      %v2544 = vunpack.c.l.b16 %v2503
      %v2545 = vunpack.c.l.b16 %v2504
      %v2546 = vunpack.c.l.b16 %v2505
      %v2547 = vunpack.c.l.b16 %v2506
      %v2548 = vunpack.c.l.b16 %v2507
      %v2549 = vpack.c.b16 %v2534, %v2533
      %v2550 = vpack.c.b16 %v2536, %v2535
      %v2551 = vpack.c.b16 %v2538, %v2537
      %v2552 = vpack.c.b16 %v2540, %v2539
      %v2553 = vpack.c.b16 %v2542, %v2541
      %v2554 = vpack.c.b16 %v2544, %v2543
      %v2555 = vpack.c.b16 %v2546, %v2545
      %v2556 = vpack.c.b16 %v2548, %v2547
      %2565 = vmatprep.subr.bf16.mxu0 0
      %2566 = vmatpush1.bf16.msra.mxu0 %v2549
      %2567 = vmatprep.subr.bf16.mxu0 0
      %2568 = vmatpush1.bf16.msra.mxu0 %v2550
      %2569 = vmatprep.subr.bf16.mxu0 0
      %2570 = vmatpush1.bf16.msra.mxu0 %v2551
      %2571 = vmatprep.subr.bf16.mxu0 0
      %2572 = vmatpush1.bf16.msra.mxu0 %v2552
      %2573 = vmatprep.subr.bf16.mxu0 0
      %2574 = vmatpush1.bf16.msra.mxu0 %v2553
      %2575 = vmatprep.subr.bf16.mxu0 0
      %2576 = vmatpush1.bf16.msra.mxu0 %v2554
      %2577 = vmatprep.subr.bf16.mxu0 0
      %2578 = vmatpush1.bf16.msra.mxu0 %v2555
      %2579 = vmatprep.subr.bf16.mxu0 0
      %2580 = vmatpush1.bf16.msra.mxu0 %v2556
      %2581 = vmatprep.subr.bf16.mxu0 0
      %2582 = vmatpush1.bf16.msra.mxu0 0
      %2583 = vmatprep.subr.bf16.mxu0 0
      %2584 = vmatpush1.bf16.msra.mxu0 0
      %2585 = vmatprep.subr.bf16.mxu0 0
      %2586 = vmatpush1.bf16.msra.mxu0 0
      %2587 = vmatprep.subr.bf16.mxu0 0
      %2588 = vmatpush1.bf16.msra.mxu0 0
      %2589 = vmatprep.subr.bf16.mxu0 0
      %2590 = vmatpush1.bf16.msra.mxu0 0
      %2591 = vmatprep.subr.bf16.mxu0 0
      %2592 = vmatpush1.bf16.msra.mxu0 0
      %2593 = vmatprep.subr.bf16.mxu0 0
      %2594 = vmatpush1.bf16.msra.mxu0 0
      %2595 = vmatprep.subr.bf16.mxu0 0
      %2596 = vmatpush1.bf16.msra.mxu0 0
      %2597 = vmatprep.mubr.bf16.mxu0 0
      %2598 = vmatmul.mubr.bf16.gmra.mrb[0].mxu0 %v2515
      %v2599 = vpop.f32.mrb[0].mxu0
      %v2600 = vadd.f32 0.0, %v2599
      %v2601 = vpop.f32.mrb[0].mxu0
      %v2602 = vpop.f32.mrb[0].mxu0
      %v2603 = vpop.f32.mrb[0].mxu0
      %2604 = vdwg.mxu0
      %v2605 = vadd.f32 %v2489, %v2600
      %v2606 = vld [vmem:[#allocation2 + $0x8] sm:$0x3c]
      %s2607 = scalar_lea.vmem %s3, 448
      %v2608 = vld [vmem:[%s2607] sm:$0xf]
      %v2609 = vld [vmem:[%s2607 + $0x4] sm:$0xf]
      %v2610 = vld [vmem:[%s2607 + $0x8] sm:$0xf]
      %v2611 = vld [vmem:[%s2607 + $0xc] sm:$0xf]
      %v2612 = vld [vmem:[%s2607 + $0x10] sm:$0xf]
      %v2613 = vld [vmem:[%s2607 + $0x14] sm:$0xf]
      %v2614 = vld [vmem:[%s2607 + $0x18] sm:$0xf]
      %v2615 = vld [vmem:[%s2607 + $0x1c] sm:$0xf]
      %v2616 = vld [vmem:[%s2607 + $0x20] sm:$0xf]
      %v2617 = vld [vmem:[%s2607 + $0x24] sm:$0xf]
      %v2618 = vld [vmem:[%s2607 + $0x28] sm:$0xf]
      %v2619 = vld [vmem:[%s2607 + $0x2c] sm:$0xf]
      %v2620 = vld [vmem:[%s2607 + $0x30] sm:$0xf]
      %v2621 = vld [vmem:[%s2607 + $0x34] sm:$0xf]
      %v2622 = vld [vmem:[%s2607 + $0x38] sm:$0xf]
      %v2623 = vld [vmem:[%s2607 + $0x3c] sm:$0xf]
      %v2625 = vrot.slane %v2606, 2
      %v2643 = vunpack.c.l.b16 %v2608
      %v2644 = vunpack.c.l.b16 %v2609
      %v2645 = vunpack.c.l.b16 %v2610
      %v2646 = vunpack.c.l.b16 %v2611
      %v2647 = vunpack.c.l.b16 %v2612
      %v2648 = vunpack.c.l.b16 %v2613
      %v2649 = vunpack.c.l.b16 %v2614
      %v2650 = vunpack.c.l.b16 %v2615
      %v2651 = vunpack.c.l.b16 %v2616
      %v2652 = vunpack.c.l.b16 %v2617
      %v2653 = vunpack.c.l.b16 %v2618
      %v2654 = vunpack.c.l.b16 %v2619
      %v2655 = vunpack.c.l.b16 %v2620
      %v2656 = vunpack.c.l.b16 %v2621
      %v2657 = vunpack.c.l.b16 %v2622
      %v2658 = vunpack.c.l.b16 %v2623
      %v2659 = vpack.c.b16 %v2644, %v2643
      %v2660 = vpack.c.b16 %v2646, %v2645
      %v2661 = vpack.c.b16 %v2648, %v2647
      %v2662 = vpack.c.b16 %v2650, %v2649
      %v2663 = vpack.c.b16 %v2652, %v2651
      %v2664 = vpack.c.b16 %v2654, %v2653
      %v2665 = vpack.c.b16 %v2656, %v2655
      %v2666 = vpack.c.b16 %v2658, %v2657
      %2675 = vmatprep.subr.bf16.mxu0 0
      %2676 = vmatpush1.bf16.msra.mxu0 %v2659
      %2677 = vmatprep.subr.bf16.mxu0 0
      %2678 = vmatpush1.bf16.msra.mxu0 %v2660
      %2679 = vmatprep.subr.bf16.mxu0 0
      %2680 = vmatpush1.bf16.msra.mxu0 %v2661
      %2681 = vmatprep.subr.bf16.mxu0 0
      %2682 = vmatpush1.bf16.msra.mxu0 %v2662
      %2683 = vmatprep.subr.bf16.mxu0 0
      %2684 = vmatpush1.bf16.msra.mxu0 %v2663
      %2685 = vmatprep.subr.bf16.mxu0 0
      %2686 = vmatpush1.bf16.msra.mxu0 %v2664
      %2687 = vmatprep.subr.bf16.mxu0 0
      %2688 = vmatpush1.bf16.msra.mxu0 %v2665
      %2689 = vmatprep.subr.bf16.mxu0 0
      %2690 = vmatpush1.bf16.msra.mxu0 %v2666
      %2691 = vmatprep.subr.bf16.mxu0 0
      %2692 = vmatpush1.bf16.msra.mxu0 0
      %2693 = vmatprep.subr.bf16.mxu0 0
      %2694 = vmatpush1.bf16.msra.mxu0 0
      %2695 = vmatprep.subr.bf16.mxu0 0
      %2696 = vmatpush1.bf16.msra.mxu0 0
      %2697 = vmatprep.subr.bf16.mxu0 0
      %2698 = vmatpush1.bf16.msra.mxu0 0
      %2699 = vmatprep.subr.bf16.mxu0 0
      %2700 = vmatpush1.bf16.msra.mxu0 0
      %2701 = vmatprep.subr.bf16.mxu0 0
      %2702 = vmatpush1.bf16.msra.mxu0 0
      %2703 = vmatprep.subr.bf16.mxu0 0
      %2704 = vmatpush1.bf16.msra.mxu0 0
      %2705 = vmatprep.subr.bf16.mxu0 0
      %2706 = vmatpush1.bf16.msra.mxu0 0
      %2707 = vmatprep.mubr.bf16.mxu0 0
      %2708 = vmatmul.mubr.bf16.gmra.mrb[0].mxu0 %v2625
      %v2709 = vpop.f32.mrb[0].mxu0
      %v2710 = vadd.f32 0.0, %v2709
      %v2711 = vpop.f32.mrb[0].mxu0
      %v2712 = vpop.f32.mrb[0].mxu0
      %v2713 = vpop.f32.mrb[0].mxu0
      %2714 = vdwg.mxu0
      %v2715 = vadd.f32 %v2605, %v2710
      %v2716 = vld [vmem:[#allocation2 + $0x8] sm:$0x7c]
      %s2717 = scalar_lea.vmem %s3, 512
      %v2718 = vld [vmem:[%s2717] sm:$0xf]
      %v2719 = vld [vmem:[%s2717 + $0x4] sm:$0xf]
      %v2720 = vld [vmem:[%s2717 + $0x8] sm:$0xf]
      %v2721 = vld [vmem:[%s2717 + $0xc] sm:$0xf]
      %v2722 = vld [vmem:[%s2717 + $0x10] sm:$0xf]
      %v2723 = vld [vmem:[%s2717 + $0x14] sm:$0xf]
      %v2724 = vld [vmem:[%s2717 + $0x18] sm:$0xf]
      %v2725 = vld [vmem:[%s2717 + $0x1c] sm:$0xf]
      %v2726 = vld [vmem:[%s2717 + $0x20] sm:$0xf]
      %v2727 = vld [vmem:[%s2717 + $0x24] sm:$0xf]
      %v2728 = vld [vmem:[%s2717 + $0x28] sm:$0xf]
      %v2729 = vld [vmem:[%s2717 + $0x2c] sm:$0xf]
      %v2730 = vld [vmem:[%s2717 + $0x30] sm:$0xf]
      %v2731 = vld [vmem:[%s2717 + $0x34] sm:$0xf]
      %v2732 = vld [vmem:[%s2717 + $0x38] sm:$0xf]
      %v2733 = vld [vmem:[%s2717 + $0x3c] sm:$0xf]
      %v2735 = vshrl.u32 %v2716, 16
      %v2737 = vrot.slane %v2735, 2
      %v2738 = vshll.u32 %v2716, 16
      %v2740 = vrot.slane %v2738, 3
      %v2741 = vor.u32 %v2737, %v2740
      %v2759 = vunpack.c.l.b16 %v2718
      %v2760 = vunpack.c.l.b16 %v2719
      %v2761 = vunpack.c.l.b16 %v2720
      %v2762 = vunpack.c.l.b16 %v2721
      %v2763 = vunpack.c.l.b16 %v2722
      %v2764 = vunpack.c.l.b16 %v2723
      %v2765 = vunpack.c.l.b16 %v2724
      %v2766 = vunpack.c.l.b16 %v2725
      %v2767 = vunpack.c.l.b16 %v2726
      %v2768 = vunpack.c.l.b16 %v2727
      %v2769 = vunpack.c.l.b16 %v2728
      %v2770 = vunpack.c.l.b16 %v2729
      %v2771 = vunpack.c.l.b16 %v2730
      %v2772 = vunpack.c.l.b16 %v2731
      %v2773 = vunpack.c.l.b16 %v2732
      %v2774 = vunpack.c.l.b16 %v2733
      %v2775 = vpack.c.b16 %v2760, %v2759
      %v2776 = vpack.c.b16 %v2762, %v2761
      %v2777 = vpack.c.b16 %v2764, %v2763
      %v2778 = vpack.c.b16 %v2766, %v2765
      %v2779 = vpack.c.b16 %v2768, %v2767
      %v2780 = vpack.c.b16 %v2770, %v2769
      %v2781 = vpack.c.b16 %v2772, %v2771
      %v2782 = vpack.c.b16 %v2774, %v2773
      %2791 = vmatprep.subr.bf16.mxu0 0
      %2792 = vmatpush1.bf16.msra.mxu0 %v2775
      %2793 = vmatprep.subr.bf16.mxu0 0
      %2794 = vmatpush1.bf16.msra.mxu0 %v2776
      %2795 = vmatprep.subr.bf16.mxu0 0
      %2796 = vmatpush1.bf16.msra.mxu0 %v2777
      %2797 = vmatprep.subr.bf16.mxu0 0
      %2798 = vmatpush1.bf16.msra.mxu0 %v2778
      %2799 = vmatprep.subr.bf16.mxu0 0
      %2800 = vmatpush1.bf16.msra.mxu0 %v2779
      %2801 = vmatprep.subr.bf16.mxu0 0
      %2802 = vmatpush1.bf16.msra.mxu0 %v2780
      %2803 = vmatprep.subr.bf16.mxu0 0
      %2804 = vmatpush1.bf16.msra.mxu0 %v2781
      %2805 = vmatprep.subr.bf16.mxu0 0
      %2806 = vmatpush1.bf16.msra.mxu0 %v2782
      %2807 = vmatprep.subr.bf16.mxu0 0
      %2808 = vmatpush1.bf16.msra.mxu0 0
      %2809 = vmatprep.subr.bf16.mxu0 0
      %2810 = vmatpush1.bf16.msra.mxu0 0
      %2811 = vmatprep.subr.bf16.mxu0 0
      %2812 = vmatpush1.bf16.msra.mxu0 0
      %2813 = vmatprep.subr.bf16.mxu0 0
      %2814 = vmatpush1.bf16.msra.mxu0 0
      %2815 = vmatprep.subr.bf16.mxu0 0
      %2816 = vmatpush1.bf16.msra.mxu0 0
      %2817 = vmatprep.subr.bf16.mxu0 0
      %2818 = vmatpush1.bf16.msra.mxu0 0
      %2819 = vmatprep.subr.bf16.mxu0 0
      %2820 = vmatpush1.bf16.msra.mxu0 0
      %2821 = vmatprep.subr.bf16.mxu0 0
      %2822 = vmatpush1.bf16.msra.mxu0 0
      %2823 = vmatprep.mubr.bf16.mxu0 0
      %2824 = vmatmul.mubr.bf16.gmra.mrb[0].mxu0 %v2741
      %v2825 = vpop.f32.mrb[0].mxu0
      %v2826 = vadd.f32 0.0, %v2825
      %v2827 = vpop.f32.mrb[0].mxu0
      %v2828 = vpop.f32.mrb[0].mxu0
      %v2829 = vpop.f32.mrb[0].mxu0
      %2830 = vdwg.mxu0
      %v2831 = vadd.f32 %v2715, %v2826
      %v2832 = vlaneseq
      %v2833 = vshrl.u32 %v2832, 7
      %v2834 = vsub.s32 2, %v2833
      %v2835 = vrot.slane %v253, %v2834
      %v2836 = vadd.f32 %v2831, %v2835
      %v2837 = vadd.f32 %v2836, %v726
      %v2838 = vmax.f32 %v2837, 0.0
      %v2839 = vsel %vm725, %v2838, 0.0
      %v2840 = vpack.c.bf16 %v2839, %v2839
      %2841 = vst [vmem:[%s249] sm:$0xf] %v2840
      %p2842 = scmp.lt.s32.totalorder %s17, 1
      %s2843 = scalar_select %p2842, %s17, 1
      %s2844 = smul.addr %s2843, 4
      %s2845 = scalar_lea.vmem %s6, %s2844
      // Predicated region
      $region45: #{encoder_flow.5} parent=43 // pred_check
        %p2846 = pneg %p166
      $region46: #{encoder_flow.5} parent=43 // pred_check_branch
        %2848 = sbr.rel (%p2846) target = $region48
      $region47: #{encoder_flow.5} parent=43 // pred_region
        _
      $region48: #{encoder_flow.5} parent=43 // pred_fallthru
        _
    $region44: #{encoder_flow.5} parent=5 // pred_fallthru
      _
    %p2849 = scmp.le.s32.totalorder 2, %s12
    // Predicated region
    $region49: #{encoder_flow.5} parent=5 // pred_check
      %p2850 = pneg %p2849
    $region50: #{encoder_flow.5} parent=5 // pred_check_branch
      %2852 = sbr.rel (%p2850) target = $region52
    $region51: #{encoder_flow.5} parent=5 // pred_region
      %s2853 = ssub.s32 %s12, 2
      // Predicated region
      $region53: #{encoder_flow.5} parent=51 // pred_check
        %p2854 = pneg %p172
      $region54: #{encoder_flow.5} parent=51 // pred_check_branch
        %2856 = sbr.rel (%p2854) target = $region56
      $region55: #{encoder_flow.5} parent=51 // pred_region
        %p2857 = scmp.lt.s32.totalorder %s18, 1
        %s2858 = scalar_select %p2857, %s18, 1
        %s2859 = smul.addr %s2858, 4
        %s2860 = scalar_lea.vmem %s6, %s2859
      $region56: #{encoder_flow.5} parent=51 // pred_fallthru
        _
    $region52: #{encoder_flow.5} parent=5 // pred_fallthru
      _
  $region6: #{encoder_flow.5} parent=0 // loop_footer
    %s16 = sadd.s32 1, %s12
  $region7: #{encoder_flow.5} parent=0 // loop_footer_branch
    %11 = sbr.rel target = $region3
  $region8: #{encoder_flow.5} parent=0 // loop_exit
    _

</llo_original>
